<compile_context>
chip_gen: v5e
topology: v5e:2x2
jax: 0.10.0
libtpu: 0.0.40
codegen_flags: <defaults>
</compile_context>

<pallas_src>
import math

import jax
import jax.numpy as jnp
from jax.experimental import pallas as pl
from jax.experimental.pallas import tpu as pltpu


# ----------------------------------------------------------------------------- #
# Small helpers
# ----------------------------------------------------------------------------- #
def _full_spec(a):
    """BlockSpec covering the whole (small) array; constant block index."""
    nd = a.ndim
    return pl.BlockSpec(a.shape, lambda *_: (0,) * nd)


def _ln(x, g, b, eps=1e-5):
    """LayerNorm over last dim in f32 (nn.LayerNorm default eps). g,b: [1, D]."""
    mean = jnp.mean(x, axis=-1, keepdims=True)
    xc = x - mean
    var = jnp.mean(xc * xc, axis=-1, keepdims=True)
    return xc * jax.lax.rsqrt(var + eps) * g + b


def _conv1d_same(x, w_flat_ref, b_ref, ksize):
    """'same' 1-D conv along the time axis as ONE folded matmul.

    x: [T, Cin] f32/bf16, w_flat_ref: [ksize*Cin, Cout] bf16, b_ref: [1, Cout] f32.
    Shifted copies (zero padded at the boundaries) are concatenated along lanes into
    [T, ksize*Cin] so the whole conv is a single MXU matmul of depth ksize*Cin.
    """
    pad = (ksize - 1) // 2
    xb = x.astype(jnp.bfloat16)
    T, cin = xb.shape
    parts = []
    for j in range(ksize):
        d = j - pad                                    # row t of the part holds x[t + d]
        if d == 0:
            parts.append(xb)
        elif d > 0:
            parts.append(jnp.concatenate(
                [xb[d:, :], jnp.zeros((d, cin), xb.dtype)], axis=0))
        else:
            parts.append(jnp.concatenate(
                [jnp.zeros((-d, cin), xb.dtype), xb[:T + d, :]], axis=0))
    x_cat = jnp.concatenate(parts, axis=1)             # [T, ksize*Cin]
    return jnp.dot(x_cat, w_flat_ref[...],
                   preferred_element_type=jnp.float32) + b_ref[...]


def positional_encoding_table(max_len, dim):
    pos = jnp.arange(max_len, dtype=jnp.float32)[:, None]
    i = jnp.arange(0, dim, 2, dtype=jnp.float32)
    div = jnp.exp(-math.log(10000.0) * i / dim)
    pe = jnp.zeros((max_len, dim), dtype=jnp.float32)
    pe = pe.at[:, 0::2].set(jnp.sin(pos * div))
    pe = pe.at[:, 1::2].set(jnp.cos(pos * div))
    return pe


# ----------------------------------------------------------------------------- #
# Stage 1 kernel: embedding + token prenet + encoder (+ final LN), per-batch grid
# ----------------------------------------------------------------------------- #
def _make_stage1_kernel(n_toks, n_conv, ksize, n_blocks, n_heads, dk, dv, hid, out_v,
                        d_model):
    neg = -1e30
    scale = 1.0 / math.sqrt(dk)
    bf16 = jnp.bfloat16

    def kernel(*refs):
        tok_lens_ref = refs[0]                              # SMEM prefetch [B]
        ids_ref = refs[1]                                   # [T, 1] int32
        emb_ref = refs[2]                                   # [n_toks, E] f32
        conv_refs = refs[3:3 + 2 * n_conv]
        idx = 3 + 2 * n_conv
        projw_ref, projb_ref, pos_ref = refs[idx:idx + 3]
        idx += 3
        (ln1g, ln1b, wqkv, bqkv, wo, bo,
         ln2g, ln2b, w1, b1, w2, b2, fng, fnb) = refs[idx:idx + 14]
        o_ref = refs[idx + 14]

        tlen = tok_lens_ref[pl.program_id(0)]
        ids = ids_ref[...]                                  # [T, 1] int32
        T = ids.shape[0]

        # --- embedding lookup fused as a one-hot MXU matmul (pad row is zero) ---
        onehot = (jax.lax.broadcasted_iota(jnp.int32, (T, n_toks), 1) == ids).astype(bf16)
        x = jnp.dot(onehot, emb_ref[...].astype(bf16),
                    preferred_element_type=jnp.float32)     # [T, E] f32

        # --- conv prenet (folded-shift matmuls) ---
        # TODO(synk): BatchNorm in TokenPrenet conv stack treated as identity.
        for li in range(n_conv):
            x = jnp.maximum(
                _conv1d_same(x, conv_refs[2 * li], conv_refs[2 * li + 1], ksize), 0.0)

        x = jnp.dot(x.astype(bf16), projw_ref[...],
                    preferred_element_type=jnp.float32) + projb_ref[...]
        x = x + pos_ref[...]                                # positional encoding

        key_mask = jax.lax.broadcasted_iota(jnp.int32, (T, T), 1) >= tlen
        row_mask = jax.lax.broadcasted_iota(jnp.int32, (T, 1), 0) >= tlen

        for l in range(n_blocks):
            # --- pre-norm self attention (fused QKV, merged head output proj) ---
            y = _ln(x, ln1g[l], ln1b[l])
            qkv = jnp.dot(y.astype(bf16), wqkv[l],
                          preferred_element_type=jnp.float32) + bqkv[l]
            ctxs = []
            for h in range(n_heads):
                q = qkv[:, h * dk:(h + 1) * dk].astype(bf16)
                k = qkv[:, hid + h * dk:hid + (h + 1) * dk].astype(bf16)
                v = qkv[:, 2 * hid + h * dv:2 * hid + (h + 1) * dv].astype(bf16)
                s = jax.lax.dot_general(q, k, (((1,), (1,)), ((), ())),
                                        preferred_element_type=jnp.float32) * scale
                s = jnp.where(key_mask, neg, s)
                m = jnp.max(s, axis=-1, keepdims=True)
                e = jnp.exp(s - m)
                pr = e * pl.reciprocal(jnp.sum(e, axis=-1, keepdims=True), approx=True)
                pr = jnp.where(row_mask, 0.0, pr)
                ctxs.append(jnp.dot(pr.astype(bf16), v,
                                    preferred_element_type=jnp.float32))
            ctx = jnp.concatenate(ctxs, axis=1).astype(bf16)          # [T, out_v]
            x = x + jnp.dot(ctx, wo[l], preferred_element_type=jnp.float32) + bo[l]

            # --- pre-norm FFN ---
            y = _ln(x, ln2g[l], ln2b[l])
            h1 = jnp.maximum(
                jnp.dot(y.astype(bf16), w1[l],
                        preferred_element_type=jnp.float32) + b1[l], 0.0)
            x = x + jnp.dot(h1.astype(bf16), w2[l],
                            preferred_element_type=jnp.float32) + b2[l]

        # final encoder LayerNorm; write encoder memory in bf16 (halved HBM traffic)
        o_ref[...] = _ln(x, fng[...], fnb[...]).astype(o_ref.dtype)

    return kernel


def run_stage1(params, cfg, X_tok, tok_lens, pos_tok):
    tp = params["tok_prenet"]
    ep = params["encoder"]
    enc = cfg["encoder"]
    B, Ttok = X_tok.shape
    n_toks = tp["emb"].shape[0]
    n_conv = len(tp["convs"])
    ksize = cfg["tok_prenet"]["conv_k_size"]
    D = enc["att_in_dim_q"]
    H = enc["att_n_heads"]
    hid = enc["att_hid_dim"]
    out_v = enc["att_out_dim_v"]
    L = enc["n_blocks"]

    kernel = _make_stage1_kernel(n_toks, n_conv, ksize, L, H, hid // H, out_v // H,
                                 hid, out_v, D)

    ids = X_tok.astype(jnp.int32)[..., None]                         # [B, Ttok, 1]
    args = [ids, tp["emb"]]
    in_specs = [pl.BlockSpec((None, Ttok, 1), lambda i, *_: (i, 0, 0)),
                _full_spec(tp["emb"])]
    for c in tp["convs"]:
        args += [c["w"], c["b"]]
        in_specs += [_full_spec(c["w"]), _full_spec(c["b"])]
    args += [tp["proj_w"], tp["proj_b"], pos_tok]
    in_specs += [_full_spec(tp["proj_w"]), _full_spec(tp["proj_b"]), _full_spec(pos_tok)]

    enc_names = ("ln1_g", "ln1_b", "wqkv", "bqkv", "wo", "bo",
                 "ln2_g", "ln2_b", "w1", "b1", "w2", "b2", "norm_g", "norm_b")
    enc_w = [ep[k] for k in enc_names]
    args += enc_w
    in_specs += [_full_spec(w) for w in enc_w]

    grid_spec = pltpu.PrefetchScalarGridSpec(
        num_scalar_prefetch=1,
        grid=(B,),
        in_specs=in_specs,
        out_specs=pl.BlockSpec((None, Ttok, D), lambda i, *_: (i, 0, 0)),
    )
    return pl.pallas_call(
        kernel,
        out_shape=jax.ShapeDtypeStruct((B, Ttok, D), jnp.bfloat16),
        grid_spec=grid_spec,
        compiler_params=pltpu.CompilerParams(dimension_semantics=("parallel",)),
    )(tok_lens, *args)


# ----------------------------------------------------------------------------- #
# Stage 2 kernel: mel prenet + decoder + fused mel/stop head + postnet + masking
# ----------------------------------------------------------------------------- #
def _make_stage2_kernel(n_pre, n_blocks, n_heads, dk, dv, hid, out_v, d_model,
                        n_post, ksize_post, n_mels, mask_output):
    neg = -1e30
    scale = 1.0 / math.sqrt(dk)
    bf16 = jnp.bfloat16

    def kernel(*refs):
        tok_lens_ref, mel_lens_ref = refs[0], refs[1]        # SMEM prefetch [B]
        xmel_ref, mem_ref = refs[2], refs[3]                 # [Tm, n_mels] f32, [Tt, De] bf16
        idx = 4
        pre_refs = refs[idx:idx + 2 * n_pre]
        idx += 2 * n_pre
        pos_ref = refs[idx]
        idx += 1
        (ln1g, ln1b, wqkv, bqkv, wo, bo,
         lncg, lncb, wqc, bqc, wkvc, bkvc, woc, boc,
         ln2g, ln2b, w1, b1, w2, b2, fng, fnb, headw, headb) = refs[idx:idx + 24]
        idx += 24
        post_refs = refs[idx:idx + 2 * n_post]
        idx += 2 * n_post
        mel_ref, post_ref, stp_ref = refs[idx], refs[idx + 1], refs[idx + 2]

        b_idx = pl.program_id(0)
        tlen = tok_lens_ref[b_idx]
        mlen = mel_lens_ref[b_idx]

        xmel = xmel_ref[...]                                 # [Tm, n_mels] f32
        Tm = xmel.shape[0]
        mem_b = mem_ref[...]                                 # [Tt, De] bf16
        Tt = mem_b.shape[0]

        # --- teacher-forcing shift: x[0] = 0, x[t] = mel[t-1] (fused, no HBM concat) ---
        x = jnp.concatenate(
            [jnp.zeros((1, n_mels), xmel.dtype), xmel[:Tm - 1, :]], axis=0)

        # --- mel prenet (LinearNet) + positional encoding ---
        # TODO(synk): LinearNet internals assumed Linear+ReLU per layer; dropout omitted.
        for i in range(n_pre):
            w = pre_refs[2 * i][...]
            b = pre_refs[2 * i + 1][...]
            x = jnp.maximum(
                jnp.dot(x.astype(bf16), w, preferred_element_type=jnp.float32) + b, 0.0)
        x = x + pos_ref[...]

        key_i = jax.lax.broadcasted_iota(jnp.int32, (Tm, Tm), 1)
        row_i = jax.lax.broadcasted_iota(jnp.int32, (Tm, Tm), 0)
        self_key_mask = (key_i >= mlen) | (key_i > row_i)              # padded OR future
        cros_key_mask = jax.lax.broadcasted_iota(jnp.int32, (Tm, Tt), 1) >= tlen
        q_row_mask = jax.lax.broadcasted_iota(jnp.int32, (Tm, 1), 0) >= mlen

        def attend(q, k, v, key_mask):
            s = jax.lax.dot_general(q, k, (((1,), (1,)), ((), ())),
                                    preferred_element_type=jnp.float32) * scale
            s = jnp.where(key_mask, neg, s)
            m = jnp.max(s, axis=-1, keepdims=True)
            e = jnp.exp(s - m)
            pr = e * pl.reciprocal(jnp.sum(e, axis=-1, keepdims=True), approx=True)
            pr = jnp.where(q_row_mask, 0.0, pr)
            return jnp.dot(pr.astype(bf16), v, preferred_element_type=jnp.float32)

        for l in range(n_blocks):
            # --- masked (causal) self attention, fused QKV, merged head output proj ---
            y = _ln(x, ln1g[l], ln1b[l])
            qkv = jnp.dot(y.astype(bf16), wqkv[l],
                          preferred_element_type=jnp.float32) + bqkv[l]
            ctxs = []
            for h in range(n_heads):
                q = qkv[:, h * dk:(h + 1) * dk].astype(bf16)
                k = qkv[:, hid + h * dk:hid + (h + 1) * dk].astype(bf16)
                v = qkv[:, 2 * hid + h * dv:2 * hid + (h + 1) * dv].astype(bf16)
                ctxs.append(attend(q, k, v, self_key_mask))
            ctx = jnp.concatenate(ctxs, axis=1).astype(bf16)           # [Tm, out_v]
            x = x + jnp.dot(ctx, wo[l], preferred_element_type=jnp.float32) + bo[l]

            # --- cross attention over encoder memory, fused KV, merged output proj ---
            y = _ln(x, lncg[l], lncb[l])
            q_all = jnp.dot(y.astype(bf16), wqc[l],
                            preferred_element_type=jnp.float32) + bqc[l]
            kv = jnp.dot(mem_b, wkvc[l],
                         preferred_element_type=jnp.float32) + bkvc[l]
            ctxs = []
            for h in range(n_heads):
                q = q_all[:, h * dk:(h + 1) * dk].astype(bf16)
                k = kv[:, h * dk:(h + 1) * dk].astype(bf16)
                v = kv[:, hid + h * dv:hid + (h + 1) * dv].astype(bf16)
                ctxs.append(attend(q, k, v, cros_key_mask))
            ctx = jnp.concatenate(ctxs, axis=1).astype(bf16)
            x = x + jnp.dot(ctx, woc[l], preferred_element_type=jnp.float32) + boc[l]

            # --- pre-norm FFN ---
            y = _ln(x, ln2g[l], ln2b[l])
            h1 = jnp.maximum(
                jnp.dot(y.astype(bf16), w1[l],
                        preferred_element_type=jnp.float32) + b1[l], 0.0)
            x = x + jnp.dot(h1.astype(bf16), w2[l],
                            preferred_element_type=jnp.float32) + b2[l]

        # --- final decoder LayerNorm + fused mel/stop head ---
        x = _ln(x, fng[...], fnb[...])
        head = jnp.dot(x.astype(bf16), headw[...],
                       preferred_element_type=jnp.float32) + headb[...]
        mel = head[:, :n_mels]
        stp = head[:, n_mels:n_mels + 1]

        # --- mel postnet (folded-shift convs, tanh except last, per-layer mask) ---
        p = mel
        for li in range(n_post):
            h2 = _conv1d_same(p, post_refs[2 * li], post_refs[2 * li + 1], ksize_post)
            if li < n_post - 1:
                h2 = jnp.tanh(h2)
            # TODO(synk): MelPostnet internals assumed: mask_fill(0) after each conv layer.
            p = jnp.where(q_row_mask, 0.0, h2)
        post = mel + p                                       # residual

        if mask_output:
            mel = jnp.where(q_row_mask, 0.0, mel)
            post = jnp.where(q_row_mask, 0.0, post)
            stp = jnp.where(q_row_mask, 1000.0, stp)

        mel_ref[...] = mel
        post_ref[...] = post
        stp_ref[...] = stp

    return kernel


def run_stage2(params, cfg, X_mel, mem, tok_lens, mel_lens, pos_mel, mask_output):
    dec = cfg["decoder"]
    pn = cfg["mel_postnet"]
    B, Tmel, n_mels = X_mel.shape
    Ttok, Denc = mem.shape[1], mem.shape[2]
    D = dec["att_in_dim_q"]
    H = dec["att_n_heads"]
    hid = dec["att_hid_dim"]
    out_v = dec["att_out_dim_v"]
    L = dec["n_blocks"]
    pre_layers = params["mel_prenet"]
    post_layers = params["mel_postnet"]
    n_pre, n_post = len(pre_layers), len(post_layers)
    ksize_post = pn["conv_k_size"]

    kernel = _make_stage2_kernel(n_pre, L, H, hid // H, out_v // H, hid, out_v, D,
                                 n_post, ksize_post, n_mels, mask_output)

    dp = params["decoder"]
    dec_names = ("ln1_g", "ln1_b", "wqkv", "bqkv", "wo", "bo",
                 "lnc_g", "lnc_b", "wq_c", "bq_c", "wkv_c", "bkv_c", "wo_c", "bo_c",
                 "ln2_g", "ln2_b", "w1", "b1", "w2", "b2", "norm_g", "norm_b")
    dec_w = [dp[k] for k in dec_names] + [params["head_w"], params["head_b"]]

    args = [X_mel, mem]
    in_specs = [pl.BlockSpec((None, Tmel, n_mels), lambda i, *_: (i, 0, 0)),
                pl.BlockSpec((None, Ttok, Denc), lambda i, *_: (i, 0, 0))]
    for lyr in pre_layers:
        args += [lyr["w"], lyr["b"]]
        in_specs += [_full_spec(lyr["w"]), _full_spec(lyr["b"])]
    args.append(pos_mel)
    in_specs.append(_full_spec(pos_mel))
    args += dec_w
    in_specs += [_full_spec(w) for w in dec_w]
    for lyr in post_layers:
        args += [lyr["w"], lyr["b"]]
        in_specs += [_full_spec(lyr["w"]), _full_spec(lyr["b"])]

    grid_spec = pltpu.PrefetchScalarGridSpec(
        num_scalar_prefetch=2,
        grid=(B,),
        in_specs=in_specs,
        out_specs=[pl.BlockSpec((None, Tmel, n_mels), lambda i, *_: (i, 0, 0)),
                   pl.BlockSpec((None, Tmel, n_mels), lambda i, *_: (i, 0, 0)),
                   pl.BlockSpec((None, Tmel, 1), lambda i, *_: (i, 0, 0))],
    )
    out_shape = (jax.ShapeDtypeStruct((B, Tmel, n_mels), jnp.float32),
                 jax.ShapeDtypeStruct((B, Tmel, n_mels), jnp.float32),
                 jax.ShapeDtypeStruct((B, Tmel, 1), jnp.float32))
    return pl.pallas_call(
        kernel,
        out_shape=out_shape,
        grid_spec=grid_spec,
        compiler_params=pltpu.CompilerParams(dimension_semantics=("parallel",)),
    )(tok_lens, mel_lens, *args)


# ----------------------------------------------------------------------------- #
# Parameters (deterministic synthetic init; matmul weights stored in bf16)
# ----------------------------------------------------------------------------- #
CFG = {
    "tok_prenet": dict(max_tok_len=32, n_toks=40, embed_dim=32, pad_idx=0,
                       conv_n_layers=2, conv_k_size=3, conv_hid_dim=32),
    "mel_prenet": dict(max_mel_len=32, n_mels=8, n_layers=2, hid_dim=32),
    "encoder": dict(n_blocks=2, att_n_heads=2, att_in_dim_q=32, att_hid_dim=32,
                    att_out_dim_v=32, ffn_hid_dim=64, norm_first=True),
    "decoder": dict(n_blocks=2, att_n_heads=2, att_in_dim_q=32, att_hid_dim=32,
                    att_out_dim_v=32, ffn_hid_dim=64, norm_first=True),
    "mel_postnet": dict(conv_n_layers=2, conv_k_size=3, conv_hid_dim=32),
}


def build_params(cfg, key):
    keys = iter(jax.random.split(key, 256))
    nk = lambda: next(keys)

    def rnd(shape, dtype=jnp.float32):
        return (0.1 * jax.random.normal(nk(), shape, dtype=jnp.float32)).astype(dtype)

    zeros = lambda shape: jnp.zeros(shape, jnp.float32)
    ones = lambda shape: jnp.ones(shape, jnp.float32)
    bf = jnp.bfloat16

    tp, mp, enc, dec, pn = (cfg["tok_prenet"], cfg["mel_prenet"],
                            cfg["encoder"], cfg["decoder"], cfg["mel_postnet"])
    P = {}

    # token prenet: Embedding -> conv stack (weights pre-flattened to [k*Cin, Cout]) -> Linear
    emb = 0.1 * jax.random.normal(nk(), (tp["n_toks"], tp["embed_dim"]), dtype=jnp.float32)
    if tp["pad_idx"] is not None:
        emb = emb.at[tp["pad_idx"]].set(0.0)
    convs, cin = [], tp["embed_dim"]
    for _ in range(tp["conv_n_layers"]):
        convs.append({"w": rnd((tp["conv_k_size"] * cin, tp["conv_hid_dim"]), bf),
                      "b": zeros((1, tp["conv_hid_dim"]))})
        cin = tp["conv_hid_dim"]
    P["tok_prenet"] = {"emb": emb, "convs": convs,
                       "proj_w": rnd((cin, enc["att_in_dim_q"]), bf),
                       "proj_b": zeros((1, enc["att_in_dim_q"]))}

    # mel prenet (LinearNet)
    dims = [mp["n_mels"]] + [mp["hid_dim"]] * (mp["n_layers"] - 1) + [dec["att_in_dim_q"]]
    P["mel_prenet"] = [{"w": rnd((dims[i], dims[i + 1]), bf), "b": zeros((1, dims[i + 1]))}
                       for i in range(len(dims) - 1)]

    # positional encoding table + alphas
    P["pe"] = positional_encoding_table(max(tp["max_tok_len"], mp["max_mel_len"]),
                                        max(enc["att_in_dim_q"], dec["att_in_dim_q"]))
    P["tok_pos_alpha"] = jnp.array(1.0, dtype=jnp.float32)
    P["mel_pos_alpha"] = jnp.array(1.0, dtype=jnp.float32)

    def coder_params(c, cross_dim):
        L = c["n_blocks"]
        D = c["att_in_dim_q"]
        hid = c["att_hid_dim"]
        out_v = c["att_out_dim_v"]
        F = c["ffn_hid_dim"]
        blk = {
            "ln1_g": ones((L, 1, D)), "ln1_b": zeros((L, 1, D)),
            "wqkv": rnd((L, D, 2 * hid + out_v), bf), "bqkv": zeros((L, 1, 2 * hid + out_v)),
            "wo": rnd((L, out_v, D), bf), "bo": zeros((L, 1, D)),      # merged head out-proj
            "ln2_g": ones((L, 1, D)), "ln2_b": zeros((L, 1, D)),
            "w1": rnd((L, D, F), bf), "b1": zeros((L, 1, F)),
            "w2": rnd((L, F, D), bf), "b2": zeros((L, 1, D)),
            "norm_g": ones((1, D)), "norm_b": zeros((1, D)),
        }
        if cross_dim is not None:
            blk.update({
                "lnc_g": ones((L, 1, D)), "lnc_b": zeros((L, 1, D)),
                "wq_c": rnd((L, D, hid), bf), "bq_c": zeros((L, 1, hid)),
                "wkv_c": rnd((L, cross_dim, hid + out_v), bf),
                "bkv_c": zeros((L, 1, hid + out_v)),
                "wo_c": rnd((L, out_v, D), bf), "bo_c": zeros((L, 1, D)),
            })
        return blk

    P["encoder"] = coder_params(enc, None)
    P["decoder"] = coder_params(dec, enc["att_in_dim_q"])

    # fused output head: mel_proj (D -> n_mels) + stp_proj (D -> 1)
    D = dec["att_in_dim_q"]
    P["head_w"] = rnd((D, mp["n_mels"] + 1), bf)
    P["head_b"] = zeros((1, mp["n_mels"] + 1))

    # mel postnet conv stack (weights pre-flattened to [k*Cin, Cout])
    chans = [mp["n_mels"]] + [pn["conv_hid_dim"]] * (pn["conv_n_layers"] - 1) + [mp["n_mels"]]
    P["mel_postnet"] = [{"w": rnd((pn["conv_k_size"] * chans[i], chans[i + 1]), bf),
                         "b": zeros((1, chans[i + 1]))} for i in range(pn["conv_n_layers"])]
    return P


# ----------------------------------------------------------------------------- #
# Forward pass (mirrors TransformerTTS.forward) — 2 fused pallas_calls total
# ----------------------------------------------------------------------------- #
def transformer_tts_forward(params, cfg, tok_lens, X_tok, mel_lens, X_mel, mask_output=True):
    tp, mpcfg, enc, dec = cfg["tok_prenet"], cfg["mel_prenet"], cfg["encoder"], cfg["decoder"]

    if X_tok.shape[-1] > tp["max_tok_len"]:
        X_tok = X_tok[:, :tp["max_tok_len"]]
        tok_lens = jnp.minimum(tok_lens, tp["max_tok_len"])
    if X_mel.shape[-2] > mpcfg["max_mel_len"]:
        X_mel = X_mel[:, :mpcfg["max_mel_len"]]
        mel_lens = jnp.minimum(mel_lens, mpcfg["max_mel_len"])

    Ttok = X_tok.shape[1]
    Tmel = X_mel.shape[1]
    tok_lens = tok_lens.astype(jnp.int32)
    mel_lens = mel_lens.astype(jnp.int32)

    pos_tok = params["tok_pos_alpha"] * params["pe"][:Ttok, :enc["att_in_dim_q"]]
    pos_mel = params["mel_pos_alpha"] * params["pe"][:Tmel, :dec["att_in_dim_q"]]

    # ---- stage 1: embedding + token prenet + encoder (+ final norm) ----
    x_enc = run_stage1(params, cfg, X_tok, tok_lens, pos_tok)         # [B, Ttok, D] bf16

    # ---- stage 2: mel prenet + decoder + heads + postnet + output masking ----
    mel_out, mel_out_post, stp = run_stage2(params, cfg, X_mel, x_enc, tok_lens, mel_lens,
                                            pos_mel, mask_output)
    stp_out = stp[..., 0]                                             # [B, Tmel]

    # TODO(synk): need_attns / need_block_outs collection not requested -> empty dicts.
    attns = {"enc_self": {}, "dec_self": {}, "dec_cros": {}}
    block_outs = {"encoder": {}, "decoder": {}}
    return mel_out, mel_out_post, stp_out, attns, block_outs


# ----------------------------------------------------------------------------- #
# Main
# ----------------------------------------------------------------------------- #
if __name__ == "__main__":
    key = jax.random.PRNGKey(0)
    k_param, k_tok, k_mel = jax.random.split(key, 3)

    params = build_params(CFG, k_param)

    B, Ttok, Tmel = 2, 12, 16
    n_mels = CFG["mel_prenet"]["n_mels"]
    tok_lens = jnp.array([12, 9], dtype=jnp.int32)
    mel_lens = jnp.array([16, 11], dtype=jnp.int32)
    X_tok = jax.random.randint(k_tok, (B, Ttok), 1, CFG["tok_prenet"]["n_toks"], dtype=jnp.int32)
    X_tok = jnp.where(jnp.arange(Ttok)[None, :] >= tok_lens[:, None], 0, X_tok)  # pad with pad_idx
    X_mel = jax.random.normal(k_mel, (B, Tmel, n_mels), dtype=jnp.float32)

    fwd = jax.jit(lambda p, tl, xt, ml, xm: transformer_tts_forward(p, CFG, tl, xt, ml, xm))
    mel_out, mel_out_post, stp_out, attns, block_outs = fwd(params, tok_lens, X_tok, mel_lens, X_mel)
    jax.block_until_ready((mel_out, mel_out_post, stp_out))

    assert mel_out.shape == (B, Tmel, n_mels)
    assert mel_out_post.shape == (B, Tmel, n_mels)
    assert stp_out.shape == (B, Tmel)
    assert bool(jnp.all(jnp.isfinite(mel_out))) and bool(jnp.all(jnp.isfinite(mel_out_post)))
    assert bool(jnp.all(jnp.isfinite(stp_out)))
    print("KERNEL_OK")
</pallas_src>

<mosaic_0001>
module attributes {stable_mosaic.version = 11 : i64} {
  func.func @kernel(%arg0: i32, %arg1: memref<2xi32, #tpu.memory_space<smem>>, %arg2: memref<1x12x1xi32, #tpu.memory_space<vmem>>, %arg3: memref<40x32xf32, #tpu.memory_space<vmem>>, %arg4: memref<96x32xbf16, #tpu.memory_space<vmem>>, %arg5: memref<1x32xf32, #tpu.memory_space<vmem>>, %arg6: memref<96x32xbf16, #tpu.memory_space<vmem>>, %arg7: memref<1x32xf32, #tpu.memory_space<vmem>>, %arg8: memref<32x32xbf16, #tpu.memory_space<vmem>>, %arg9: memref<1x32xf32, #tpu.memory_space<vmem>>, %arg10: memref<12x32xf32, #tpu.memory_space<vmem>>, %arg11: memref<2x1x32xf32, #tpu.memory_space<vmem>>, %arg12: memref<2x1x32xf32, #tpu.memory_space<vmem>>, %arg13: memref<2x32x96xbf16, #tpu.memory_space<vmem>>, %arg14: memref<2x1x96xf32, #tpu.memory_space<vmem>>, %arg15: memref<2x32x32xbf16, #tpu.memory_space<vmem>>, %arg16: memref<2x1x32xf32, #tpu.memory_space<vmem>>, %arg17: memref<2x1x32xf32, #tpu.memory_space<vmem>>, %arg18: memref<2x1x32xf32, #tpu.memory_space<vmem>>, %arg19: memref<2x32x64xbf16, #tpu.memory_space<vmem>>, %arg20: memref<2x1x64xf32, #tpu.memory_space<vmem>>, %arg21: memref<2x64x32xbf16, #tpu.memory_space<vmem>>, %arg22: memref<2x1x32xf32, #tpu.memory_space<vmem>>, %arg23: memref<1x32xf32, #tpu.memory_space<vmem>>, %arg24: memref<1x32xf32, #tpu.memory_space<vmem>>, %arg25: memref<1x12x32xbf16, #tpu.memory_space<vmem>>) attributes {dimension_semantics = [#tpu.dimension_semantics<parallel>], iteration_bounds = array<i64: 2>, scalar_prefetch = 1 : i64, scratch_operands = 0 : i64, tpu.core_type = #tpu.core_type<tc>, window_params = [{transform_indices = @transform_0, window_bounds = array<i64: 1, 12, 1>}, {pipeline_mode = #tpu.pipeline_mode<synchronous>, transform_indices = @transform_1, window_bounds = array<i64: 40, 32>}, {pipeline_mode = #tpu.pipeline_mode<synchronous>, transform_indices = @transform_2, window_bounds = array<i64: 96, 32>}, {pipeline_mode = #tpu.pipeline_mode<synchronous>, transform_indices = @transform_3, window_bounds = array<i64: 1, 32>}, {pipeline_mode = #tpu.pipeline_mode<synchronous>, transform_indices = @transform_4, window_bounds = array<i64: 96, 32>}, {pipeline_mode = #tpu.pipeline_mode<synchronous>, transform_indices = @transform_5, window_bounds = array<i64: 1, 32>}, {pipeline_mode = #tpu.pipeline_mode<synchronous>, transform_indices = @transform_6, window_bounds = array<i64: 32, 32>}, {pipeline_mode = #tpu.pipeline_mode<synchronous>, transform_indices = @transform_7, window_bounds = array<i64: 1, 32>}, {pipeline_mode = #tpu.pipeline_mode<synchronous>, transform_indices = @transform_8, window_bounds = array<i64: 12, 32>}, {pipeline_mode = #tpu.pipeline_mode<synchronous>, transform_indices = @transform_9, window_bounds = array<i64: 2, 1, 32>}, {pipeline_mode = #tpu.pipeline_mode<synchronous>, transform_indices = @transform_10, window_bounds = array<i64: 2, 1, 32>}, {pipeline_mode = #tpu.pipeline_mode<synchronous>, transform_indices = @transform_11, window_bounds = array<i64: 2, 32, 96>}, {pipeline_mode = #tpu.pipeline_mode<synchronous>, transform_indices = @transform_12, window_bounds = array<i64: 2, 1, 96>}, {pipeline_mode = #tpu.pipeline_mode<synchronous>, transform_indices = @transform_13, window_bounds = array<i64: 2, 32, 32>}, {pipeline_mode = #tpu.pipeline_mode<synchronous>, transform_indices = @transform_14, window_bounds = array<i64: 2, 1, 32>}, {pipeline_mode = #tpu.pipeline_mode<synchronous>, transform_indices = @transform_15, window_bounds = array<i64: 2, 1, 32>}, {pipeline_mode = #tpu.pipeline_mode<synchronous>, transform_indices = @transform_16, window_bounds = array<i64: 2, 1, 32>}, {pipeline_mode = #tpu.pipeline_mode<synchronous>, transform_indices = @transform_17, window_bounds = array<i64: 2, 32, 64>}, {pipeline_mode = #tpu.pipeline_mode<synchronous>, transform_indices = @transform_18, window_bounds = array<i64: 2, 1, 64>}, {pipeline_mode = #tpu.pipeline_mode<synchronous>, transform_indices = @transform_19, window_bounds = array<i64: 2, 64, 32>}, {pipeline_mode = #tpu.pipeline_mode<synchronous>, transform_indices = @transform_20, window_bounds = array<i64: 2, 1, 32>}, {pipeline_mode = #tpu.pipeline_mode<synchronous>, transform_indices = @transform_21, window_bounds = array<i64: 1, 32>}, {pipeline_mode = #tpu.pipeline_mode<synchronous>, transform_indices = @transform_22, window_bounds = array<i64: 1, 32>}, {transform_indices = @transform_23, window_bounds = array<i64: 1, 12, 32>}]} {
    %0 = arith.index_cast %arg0 : i32 to index
    %1 = memref.load %arg1[%0] : memref<2xi32, #tpu.memory_space<smem>>
    %c0 = arith.constant 0 : index
    %c0_0 = arith.constant 0 : index
    %c0_1 = arith.constant 0 : index
    %2 = vector.load %arg2[%c0, %c0_0, %c0_1] : memref<1x12x1xi32, #tpu.memory_space<vmem>>, vector<1x12x1xi32>
    %3 = vector.shape_cast %2 : vector<1x12x1xi32> to vector<12x1xi32>
    %4 = tpu.iota {dimensions = array<i32: 1>} : vector<12x40xi32>
    %5 = vector.broadcast %3 : vector<12x1xi32> to vector<12x40xi32>
    %6 = arith.cmpi eq, %4, %5 : vector<12x40xi32>
    %7 = arith.extui %6 : vector<12x40xi1> to vector<12x40xi32>
    %8 = arith.sitofp %7 : vector<12x40xi32> to vector<12x40xf32>
    %9 = arith.truncf %8 : vector<12x40xf32> to vector<12x40xbf16>
    %c0_2 = arith.constant 0 : index
    %c0_3 = arith.constant 0 : index
    %10 = vector.load %arg3[%c0_2, %c0_3] : memref<40x32xf32, #tpu.memory_space<vmem>>, vector<40x32xf32>
    %11 = arith.truncf %10 : vector<40x32xf32> to vector<40x32xbf16>
    %cst = arith.constant dense<0.000000e+00> : vector<12x32xf32>
    %12 = tpu.matmul %9, %11, %cst {dimension_numbers = #tpu.dot_dimension_numbers<[1], [0], [0], [1], [0, 0, 1, 1], [], []>} : vector<12x40xbf16>, vector<40x32xbf16>, vector<12x32xf32> -> vector<12x32xf32>
    %13 = arith.truncf %12 : vector<12x32xf32> to vector<12x32xbf16>
    %cst_4 = arith.constant 0.000000e+00 : bf16
    %14 = vector.broadcast %cst_4 : bf16 to vector<1x32xbf16>
    %15 = vector.extract_strided_slice %13 {offsets = [0, 0], sizes = [11, 32], strides = [1, 1]} : vector<12x32xbf16> to vector<11x32xbf16>
    %16 = tpu.concatenate %14, %15 in 0 : vector<1x32xbf16>, vector<11x32xbf16> -> vector<12x32xbf16>
    %17 = vector.extract_strided_slice %13 {offsets = [1, 0], sizes = [11, 32], strides = [1, 1]} : vector<12x32xbf16> to vector<11x32xbf16>
    %cst_5 = arith.constant 0.000000e+00 : bf16
    %18 = vector.broadcast %cst_5 : bf16 to vector<1x32xbf16>
    %19 = tpu.concatenate %17, %18 in 0 : vector<11x32xbf16>, vector<1x32xbf16> -> vector<12x32xbf16>
    %20 = tpu.concatenate %16, %13, %19 in 1 : vector<12x32xbf16>, vector<12x32xbf16>, vector<12x32xbf16> -> vector<12x96xbf16>
    %c0_6 = arith.constant 0 : index
    %c0_7 = arith.constant 0 : index
    %21 = vector.load %arg4[%c0_6, %c0_7] : memref<96x32xbf16, #tpu.memory_space<vmem>>, vector<96x32xbf16>
    %cst_8 = arith.constant dense<0.000000e+00> : vector<12x32xf32>
    %22 = tpu.matmul %20, %21, %cst_8 {dimension_numbers = #tpu.dot_dimension_numbers<[1], [0], [0], [1], [0, 0, 1, 1], [], []>} : vector<12x96xbf16>, vector<96x32xbf16>, vector<12x32xf32> -> vector<12x32xf32>
    %c0_9 = arith.constant 0 : index
    %c0_10 = arith.constant 0 : index
    %23 = vector.load %arg5[%c0_9, %c0_10] : memref<1x32xf32, #tpu.memory_space<vmem>>, vector<1x32xf32>
    %24 = vector.broadcast %23 : vector<1x32xf32> to vector<12x32xf32>
    %25 = arith.addf %22, %24 : vector<12x32xf32>
    %cst_11 = arith.constant 0.000000e+00 : f32
    %26 = vector.broadcast %cst_11 : f32 to vector<12x32xf32>
    %27 = arith.maximumf %25, %26 : vector<12x32xf32>
    %28 = arith.truncf %27 : vector<12x32xf32> to vector<12x32xbf16>
    %cst_12 = arith.constant 0.000000e+00 : bf16
    %29 = vector.broadcast %cst_12 : bf16 to vector<1x32xbf16>
    %30 = vector.extract_strided_slice %28 {offsets = [0, 0], sizes = [11, 32], strides = [1, 1]} : vector<12x32xbf16> to vector<11x32xbf16>
    %31 = tpu.concatenate %29, %30 in 0 : vector<1x32xbf16>, vector<11x32xbf16> -> vector<12x32xbf16>
    %32 = vector.extract_strided_slice %28 {offsets = [1, 0], sizes = [11, 32], strides = [1, 1]} : vector<12x32xbf16> to vector<11x32xbf16>
    %cst_13 = arith.constant 0.000000e+00 : bf16
    %33 = vector.broadcast %cst_13 : bf16 to vector<1x32xbf16>
    %34 = tpu.concatenate %32, %33 in 0 : vector<11x32xbf16>, vector<1x32xbf16> -> vector<12x32xbf16>
    %35 = tpu.concatenate %31, %28, %34 in 1 : vector<12x32xbf16>, vector<12x32xbf16>, vector<12x32xbf16> -> vector<12x96xbf16>
    %c0_14 = arith.constant 0 : index
    %c0_15 = arith.constant 0 : index
    %36 = vector.load %arg6[%c0_14, %c0_15] : memref<96x32xbf16, #tpu.memory_space<vmem>>, vector<96x32xbf16>
    %cst_16 = arith.constant dense<0.000000e+00> : vector<12x32xf32>
    %37 = tpu.matmul %35, %36, %cst_16 {dimension_numbers = #tpu.dot_dimension_numbers<[1], [0], [0], [1], [0, 0, 1, 1], [], []>} : vector<12x96xbf16>, vector<96x32xbf16>, vector<12x32xf32> -> vector<12x32xf32>
    %c0_17 = arith.constant 0 : index
    %c0_18 = arith.constant 0 : index
    %38 = vector.load %arg7[%c0_17, %c0_18] : memref<1x32xf32, #tpu.memory_space<vmem>>, vector<1x32xf32>
    %39 = vector.broadcast %38 : vector<1x32xf32> to vector<12x32xf32>
    %40 = arith.addf %37, %39 : vector<12x32xf32>
    %cst_19 = arith.constant 0.000000e+00 : f32
    %41 = vector.broadcast %cst_19 : f32 to vector<12x32xf32>
    %42 = arith.maximumf %40, %41 : vector<12x32xf32>
    %43 = arith.truncf %42 : vector<12x32xf32> to vector<12x32xbf16>
    %c0_20 = arith.constant 0 : index
    %c0_21 = arith.constant 0 : index
    %44 = vector.load %arg8[%c0_20, %c0_21] : memref<32x32xbf16, #tpu.memory_space<vmem>>, vector<32x32xbf16>
    %cst_22 = arith.constant dense<0.000000e+00> : vector<12x32xf32>
    %45 = tpu.matmul %43, %44, %cst_22 {dimension_numbers = #tpu.dot_dimension_numbers<[1], [0], [0], [1], [0, 0, 1, 1], [], []>} : vector<12x32xbf16>, vector<32x32xbf16>, vector<12x32xf32> -> vector<12x32xf32>
    %c0_23 = arith.constant 0 : index
    %c0_24 = arith.constant 0 : index
    %46 = vector.load %arg9[%c0_23, %c0_24] : memref<1x32xf32, #tpu.memory_space<vmem>>, vector<1x32xf32>
    %47 = vector.broadcast %46 : vector<1x32xf32> to vector<12x32xf32>
    %48 = arith.addf %45, %47 : vector<12x32xf32>
    %c0_25 = arith.constant 0 : index
    %c0_26 = arith.constant 0 : index
    %49 = vector.load %arg10[%c0_25, %c0_26] : memref<12x32xf32, #tpu.memory_space<vmem>>, vector<12x32xf32>
    %50 = arith.addf %48, %49 : vector<12x32xf32>
    %51 = tpu.iota {dimensions = array<i32: 1>} : vector<12x12xi32>
    %52 = vector.broadcast %1 : i32 to vector<12x12xi32>
    %53 = arith.cmpi sge, %51, %52 : vector<12x12xi32>
    %54 = tpu.iota {dimensions = array<i32: 0>} : vector<12x1xi32>
    %55 = vector.broadcast %1 : i32 to vector<12x1xi32>
    %56 = arith.cmpi sge, %54, %55 : vector<12x1xi32>
    %c0_27 = arith.constant 0 : index
    %c0_28 = arith.constant 0 : index
    %c0_29 = arith.constant 0 : index
    %57 = vector.load %arg11[%c0_27, %c0_28, %c0_29] : memref<2x1x32xf32, #tpu.memory_space<vmem>>, vector<1x1x32xf32>
    %58 = vector.shape_cast %57 : vector<1x1x32xf32> to vector<1x32xf32>
    %c0_30 = arith.constant 0 : index
    %c0_31 = arith.constant 0 : index
    %c0_32 = arith.constant 0 : index
    %59 = vector.load %arg12[%c0_30, %c0_31, %c0_32] : memref<2x1x32xf32, #tpu.memory_space<vmem>>, vector<1x1x32xf32>
    %60 = vector.shape_cast %59 : vector<1x1x32xf32> to vector<1x32xf32>
    %cst_33 = arith.constant dense<0.000000e+00> : vector<12xf32>
    %61 = vector.multi_reduction <add>, %50, %cst_33 [1] : vector<12x32xf32> to vector<12xf32>
    %62 = vector.shape_cast %61 : vector<12xf32> to vector<12x1xf32>
    %cst_34 = arith.constant 3.200000e+01 : f32
    %63 = vector.broadcast %cst_34 : f32 to vector<12x1xf32>
    %64 = arith.divf %62, %63 : vector<12x1xf32>
    %65 = vector.broadcast %64 : vector<12x1xf32> to vector<12x32xf32>
    %66 = arith.subf %50, %65 : vector<12x32xf32>
    %67 = arith.mulf %66, %66 : vector<12x32xf32>
    %cst_35 = arith.constant dense<0.000000e+00> : vector<12xf32>
    %68 = vector.multi_reduction <add>, %67, %cst_35 [1] : vector<12x32xf32> to vector<12xf32>
    %69 = vector.shape_cast %68 : vector<12xf32> to vector<12x1xf32>
    %cst_36 = arith.constant 3.200000e+01 : f32
    %70 = vector.broadcast %cst_36 : f32 to vector<12x1xf32>
    %71 = arith.divf %69, %70 : vector<12x1xf32>
    %cst_37 = arith.constant 9.99999974E-6 : f32
    %72 = vector.broadcast %cst_37 : f32 to vector<12x1xf32>
    %73 = arith.addf %71, %72 : vector<12x1xf32>
    %74 = math.rsqrt %73 : vector<12x1xf32>
    %75 = vector.broadcast %74 : vector<12x1xf32> to vector<12x32xf32>
    %76 = arith.mulf %66, %75 : vector<12x32xf32>
    %77 = vector.broadcast %58 : vector<1x32xf32> to vector<12x32xf32>
    %78 = arith.mulf %76, %77 : vector<12x32xf32>
    %79 = vector.broadcast %60 : vector<1x32xf32> to vector<12x32xf32>
    %80 = arith.addf %78, %79 : vector<12x32xf32>
    %81 = arith.truncf %80 : vector<12x32xf32> to vector<12x32xbf16>
    %c0_38 = arith.constant 0 : index
    %c0_39 = arith.constant 0 : index
    %c0_40 = arith.constant 0 : index
    %82 = vector.load %arg13[%c0_38, %c0_39, %c0_40] : memref<2x32x96xbf16, #tpu.memory_space<vmem>>, vector<1x32x96xbf16>
    %83 = vector.shape_cast %82 : vector<1x32x96xbf16> to vector<32x96xbf16>
    %cst_41 = arith.constant dense<0.000000e+00> : vector<12x96xf32>
    %84 = tpu.matmul %81, %83, %cst_41 {dimension_numbers = #tpu.dot_dimension_numbers<[1], [0], [0], [1], [0, 0, 1, 1], [], []>} : vector<12x32xbf16>, vector<32x96xbf16>, vector<12x96xf32> -> vector<12x96xf32>
    %c0_42 = arith.constant 0 : index
    %c0_43 = arith.constant 0 : index
    %c0_44 = arith.constant 0 : index
    %85 = vector.load %arg14[%c0_42, %c0_43, %c0_44] : memref<2x1x96xf32, #tpu.memory_space<vmem>>, vector<1x1x96xf32>
    %86 = vector.shape_cast %85 : vector<1x1x96xf32> to vector<1x96xf32>
    %87 = vector.broadcast %86 : vector<1x96xf32> to vector<12x96xf32>
    %88 = arith.addf %84, %87 : vector<12x96xf32>
    %89 = vector.extract_strided_slice %88 {offsets = [0, 0], sizes = [12, 16], strides = [1, 1]} : vector<12x96xf32> to vector<12x16xf32>
    %90 = arith.truncf %89 : vector<12x16xf32> to vector<12x16xbf16>
    %91 = vector.extract_strided_slice %88 {offsets = [0, 32], sizes = [12, 16], strides = [1, 1]} : vector<12x96xf32> to vector<12x16xf32>
    %92 = arith.truncf %91 : vector<12x16xf32> to vector<12x16xbf16>
    %93 = vector.extract_strided_slice %88 {offsets = [0, 64], sizes = [12, 16], strides = [1, 1]} : vector<12x96xf32> to vector<12x16xf32>
    %94 = arith.truncf %93 : vector<12x16xf32> to vector<12x16xbf16>
    %cst_45 = arith.constant dense<0.000000e+00> : vector<12x12xf32>
    %95 = tpu.matmul %90, %92, %cst_45 {dimension_numbers = #tpu.dot_dimension_numbers<[1], [1], [0], [0], [0, 0, 1, 0], [], []>} : vector<12x16xbf16>, vector<12x16xbf16>, vector<12x12xf32> -> vector<12x12xf32>
    %cst_46 = arith.constant 2.500000e-01 : f32
    %96 = vector.broadcast %cst_46 : f32 to vector<12x12xf32>
    %97 = arith.mulf %95, %96 : vector<12x12xf32>
    %cst_47 = arith.constant -1.000000e+30 : f32
    %98 = vector.broadcast %cst_47 : f32 to vector<12x12xf32>
    %99 = arith.select %53, %98, %97 : vector<12x12xi1>, vector<12x12xf32>
    %cst_48 = arith.constant dense<0xFF800000> : vector<12xf32>
    %100 = vector.multi_reduction <maximumf>, %99, %cst_48 [1] : vector<12x12xf32> to vector<12xf32>
    %101 = vector.shape_cast %100 : vector<12xf32> to vector<12x1xf32>
    %102 = vector.broadcast %101 : vector<12x1xf32> to vector<12x12xf32>
    %103 = arith.subf %99, %102 : vector<12x12xf32>
    %104 = math.exp %103 : vector<12x12xf32>
    %cst_49 = arith.constant dense<0.000000e+00> : vector<12xf32>
    %105 = vector.multi_reduction <add>, %104, %cst_49 [1] : vector<12x12xf32> to vector<12xf32>
    %106 = vector.shape_cast %105 : vector<12xf32> to vector<12x1xf32>
    %107 = tpu.reciprocal %106 {approx = true} : vector<12x1xf32> -> vector<12x1xf32>
    %108 = vector.broadcast %107 : vector<12x1xf32> to vector<12x12xf32>
    %109 = arith.mulf %104, %108 : vector<12x12xf32>
    %cst_50 = arith.constant 0.000000e+00 : f32
    %110 = vector.shape_cast %56 : vector<12x1xi1> to vector<12x1xi1>
    %111 = vector.broadcast %110 : vector<12x1xi1> to vector<12x12xi1>
    %112 = vector.broadcast %cst_50 : f32 to vector<12x12xf32>
    %113 = arith.select %111, %112, %109 : vector<12x12xi1>, vector<12x12xf32>
    %114 = arith.truncf %113 : vector<12x12xf32> to vector<12x12xbf16>
    %cst_51 = arith.constant dense<0.000000e+00> : vector<12x16xf32>
    %115 = tpu.matmul %114, %94, %cst_51 {dimension_numbers = #tpu.dot_dimension_numbers<[1], [0], [0], [1], [0, 0, 1, 1], [], []>} : vector<12x12xbf16>, vector<12x16xbf16>, vector<12x16xf32> -> vector<12x16xf32>
    %116 = vector.extract_strided_slice %88 {offsets = [0, 16], sizes = [12, 16], strides = [1, 1]} : vector<12x96xf32> to vector<12x16xf32>
    %117 = arith.truncf %116 : vector<12x16xf32> to vector<12x16xbf16>
    %118 = vector.extract_strided_slice %88 {offsets = [0, 48], sizes = [12, 16], strides = [1, 1]} : vector<12x96xf32> to vector<12x16xf32>
    %119 = arith.truncf %118 : vector<12x16xf32> to vector<12x16xbf16>
    %120 = vector.extract_strided_slice %88 {offsets = [0, 80], sizes = [12, 16], strides = [1, 1]} : vector<12x96xf32> to vector<12x16xf32>
    %121 = arith.truncf %120 : vector<12x16xf32> to vector<12x16xbf16>
    %cst_52 = arith.constant dense<0.000000e+00> : vector<12x12xf32>
    %122 = tpu.matmul %117, %119, %cst_52 {dimension_numbers = #tpu.dot_dimension_numbers<[1], [1], [0], [0], [0, 0, 1, 0], [], []>} : vector<12x16xbf16>, vector<12x16xbf16>, vector<12x12xf32> -> vector<12x12xf32>
    %cst_53 = arith.constant 2.500000e-01 : f32
    %123 = vector.broadcast %cst_53 : f32 to vector<12x12xf32>
    %124 = arith.mulf %122, %123 : vector<12x12xf32>
    %cst_54 = arith.constant -1.000000e+30 : f32
    %125 = vector.broadcast %cst_54 : f32 to vector<12x12xf32>
    %126 = arith.select %53, %125, %124 : vector<12x12xi1>, vector<12x12xf32>
    %cst_55 = arith.constant dense<0xFF800000> : vector<12xf32>
    %127 = vector.multi_reduction <maximumf>, %126, %cst_55 [1] : vector<12x12xf32> to vector<12xf32>
    %128 = vector.shape_cast %127 : vector<12xf32> to vector<12x1xf32>
    %129 = vector.broadcast %128 : vector<12x1xf32> to vector<12x12xf32>
    %130 = arith.subf %126, %129 : vector<12x12xf32>
    %131 = math.exp %130 : vector<12x12xf32>
    %cst_56 = arith.constant dense<0.000000e+00> : vector<12xf32>
    %132 = vector.multi_reduction <add>, %131, %cst_56 [1] : vector<12x12xf32> to vector<12xf32>
    %133 = vector.shape_cast %132 : vector<12xf32> to vector<12x1xf32>
    %134 = tpu.reciprocal %133 {approx = true} : vector<12x1xf32> -> vector<12x1xf32>
    %135 = vector.broadcast %134 : vector<12x1xf32> to vector<12x12xf32>
    %136 = arith.mulf %131, %135 : vector<12x12xf32>
    %cst_57 = arith.constant 0.000000e+00 : f32
    %137 = vector.shape_cast %56 : vector<12x1xi1> to vector<12x1xi1>
    %138 = vector.broadcast %137 : vector<12x1xi1> to vector<12x12xi1>
    %139 = vector.broadcast %cst_57 : f32 to vector<12x12xf32>
    %140 = arith.select %138, %139, %136 : vector<12x12xi1>, vector<12x12xf32>
    %141 = arith.truncf %140 : vector<12x12xf32> to vector<12x12xbf16>
    %cst_58 = arith.constant dense<0.000000e+00> : vector<12x16xf32>
    %142 = tpu.matmul %141, %121, %cst_58 {dimension_numbers = #tpu.dot_dimension_numbers<[1], [0], [0], [1], [0, 0, 1, 1], [], []>} : vector<12x12xbf16>, vector<12x16xbf16>, vector<12x16xf32> -> vector<12x16xf32>
    %143 = tpu.concatenate %115, %142 in 1 : vector<12x16xf32>, vector<12x16xf32> -> vector<12x32xf32>
    %144 = arith.truncf %143 : vector<12x32xf32> to vector<12x32xbf16>
    %c0_59 = arith.constant 0 : index
    %c0_60 = arith.constant 0 : index
    %c0_61 = arith.constant 0 : index
    %145 = vector.load %arg15[%c0_59, %c0_60, %c0_61] : memref<2x32x32xbf16, #tpu.memory_space<vmem>>, vector<1x32x32xbf16>
    %146 = vector.shape_cast %145 : vector<1x32x32xbf16> to vector<32x32xbf16>
    %cst_62 = arith.constant dense<0.000000e+00> : vector<12x32xf32>
    %147 = tpu.matmul %144, %146, %cst_62 {dimension_numbers = #tpu.dot_dimension_numbers<[1], [0], [0], [1], [0, 0, 1, 1], [], []>} : vector<12x32xbf16>, vector<32x32xbf16>, vector<12x32xf32> -> vector<12x32xf32>
    %148 = arith.addf %50, %147 : vector<12x32xf32>
    %c0_63 = arith.constant 0 : index
    %c0_64 = arith.constant 0 : index
    %c0_65 = arith.constant 0 : index
    %149 = vector.load %arg16[%c0_63, %c0_64, %c0_65] : memref<2x1x32xf32, #tpu.memory_space<vmem>>, vector<1x1x32xf32>
    %150 = vector.shape_cast %149 : vector<1x1x32xf32> to vector<1x32xf32>
    %151 = vector.broadcast %150 : vector<1x32xf32> to vector<12x32xf32>
    %152 = arith.addf %148, %151 : vector<12x32xf32>
    %c0_66 = arith.constant 0 : index
    %c0_67 = arith.constant 0 : index
    %c0_68 = arith.constant 0 : index
    %153 = vector.load %arg17[%c0_66, %c0_67, %c0_68] : memref<2x1x32xf32, #tpu.memory_space<vmem>>, vector<1x1x32xf32>
    %154 = vector.shape_cast %153 : vector<1x1x32xf32> to vector<1x32xf32>
    %c0_69 = arith.constant 0 : index
    %c0_70 = arith.constant 0 : index
    %c0_71 = arith.constant 0 : index
    %155 = vector.load %arg18[%c0_69, %c0_70, %c0_71] : memref<2x1x32xf32, #tpu.memory_space<vmem>>, vector<1x1x32xf32>
    %156 = vector.shape_cast %155 : vector<1x1x32xf32> to vector<1x32xf32>
    %cst_72 = arith.constant dense<0.000000e+00> : vector<12xf32>
    %157 = vector.multi_reduction <add>, %152, %cst_72 [1] : vector<12x32xf32> to vector<12xf32>
    %158 = vector.shape_cast %157 : vector<12xf32> to vector<12x1xf32>
    %cst_73 = arith.constant 3.200000e+01 : f32
    %159 = vector.broadcast %cst_73 : f32 to vector<12x1xf32>
    %160 = arith.divf %158, %159 : vector<12x1xf32>
    %161 = vector.broadcast %160 : vector<12x1xf32> to vector<12x32xf32>
    %162 = arith.subf %152, %161 : vector<12x32xf32>
    %163 = arith.mulf %162, %162 : vector<12x32xf32>
    %cst_74 = arith.constant dense<0.000000e+00> : vector<12xf32>
    %164 = vector.multi_reduction <add>, %163, %cst_74 [1] : vector<12x32xf32> to vector<12xf32>
    %165 = vector.shape_cast %164 : vector<12xf32> to vector<12x1xf32>
    %cst_75 = arith.constant 3.200000e+01 : f32
    %166 = vector.broadcast %cst_75 : f32 to vector<12x1xf32>
    %167 = arith.divf %165, %166 : vector<12x1xf32>
    %cst_76 = arith.constant 9.99999974E-6 : f32
    %168 = vector.broadcast %cst_76 : f32 to vector<12x1xf32>
    %169 = arith.addf %167, %168 : vector<12x1xf32>
    %170 = math.rsqrt %169 : vector<12x1xf32>
    %171 = vector.broadcast %170 : vector<12x1xf32> to vector<12x32xf32>
    %172 = arith.mulf %162, %171 : vector<12x32xf32>
    %173 = vector.broadcast %154 : vector<1x32xf32> to vector<12x32xf32>
    %174 = arith.mulf %172, %173 : vector<12x32xf32>
    %175 = vector.broadcast %156 : vector<1x32xf32> to vector<12x32xf32>
    %176 = arith.addf %174, %175 : vector<12x32xf32>
    %177 = arith.truncf %176 : vector<12x32xf32> to vector<12x32xbf16>
    %c0_77 = arith.constant 0 : index
    %c0_78 = arith.constant 0 : index
    %c0_79 = arith.constant 0 : index
    %178 = vector.load %arg19[%c0_77, %c0_78, %c0_79] : memref<2x32x64xbf16, #tpu.memory_space<vmem>>, vector<1x32x64xbf16>
    %179 = vector.shape_cast %178 : vector<1x32x64xbf16> to vector<32x64xbf16>
    %cst_80 = arith.constant dense<0.000000e+00> : vector<12x64xf32>
    %180 = tpu.matmul %177, %179, %cst_80 {dimension_numbers = #tpu.dot_dimension_numbers<[1], [0], [0], [1], [0, 0, 1, 1], [], []>} : vector<12x32xbf16>, vector<32x64xbf16>, vector<12x64xf32> -> vector<12x64xf32>
    %c0_81 = arith.constant 0 : index
    %c0_82 = arith.constant 0 : index
    %c0_83 = arith.constant 0 : index
    %181 = vector.load %arg20[%c0_81, %c0_82, %c0_83] : memref<2x1x64xf32, #tpu.memory_space<vmem>>, vector<1x1x64xf32>
    %182 = vector.shape_cast %181 : vector<1x1x64xf32> to vector<1x64xf32>
    %183 = vector.broadcast %182 : vector<1x64xf32> to vector<12x64xf32>
    %184 = arith.addf %180, %183 : vector<12x64xf32>
    %cst_84 = arith.constant 0.000000e+00 : f32
    %185 = vector.broadcast %cst_84 : f32 to vector<12x64xf32>
    %186 = arith.maximumf %184, %185 : vector<12x64xf32>
    %187 = arith.truncf %186 : vector<12x64xf32> to vector<12x64xbf16>
    %c0_85 = arith.constant 0 : index
    %c0_86 = arith.constant 0 : index
    %c0_87 = arith.constant 0 : index
    %188 = vector.load %arg21[%c0_85, %c0_86, %c0_87] : memref<2x64x32xbf16, #tpu.memory_space<vmem>>, vector<1x64x32xbf16>
    %189 = vector.shape_cast %188 : vector<1x64x32xbf16> to vector<64x32xbf16>
    %cst_88 = arith.constant dense<0.000000e+00> : vector<12x32xf32>
    %190 = tpu.matmul %187, %189, %cst_88 {dimension_numbers = #tpu.dot_dimension_numbers<[1], [0], [0], [1], [0, 0, 1, 1], [], []>} : vector<12x64xbf16>, vector<64x32xbf16>, vector<12x32xf32> -> vector<12x32xf32>
    %191 = arith.addf %152, %190 : vector<12x32xf32>
    %c0_89 = arith.constant 0 : index
    %c0_90 = arith.constant 0 : index
    %c0_91 = arith.constant 0 : index
    %192 = vector.load %arg22[%c0_89, %c0_90, %c0_91] : memref<2x1x32xf32, #tpu.memory_space<vmem>>, vector<1x1x32xf32>
    %193 = vector.shape_cast %192 : vector<1x1x32xf32> to vector<1x32xf32>
    %194 = vector.broadcast %193 : vector<1x32xf32> to vector<12x32xf32>
    %195 = arith.addf %191, %194 : vector<12x32xf32>
    %c1 = arith.constant 1 : index
    %c0_92 = arith.constant 0 : index
    %c0_93 = arith.constant 0 : index
    %196 = vector.load %arg11[%c1, %c0_92, %c0_93] : memref<2x1x32xf32, #tpu.memory_space<vmem>>, vector<1x1x32xf32>
    %197 = vector.shape_cast %196 : vector<1x1x32xf32> to vector<1x32xf32>
    %c1_94 = arith.constant 1 : index
    %c0_95 = arith.constant 0 : index
    %c0_96 = arith.constant 0 : index
    %198 = vector.load %arg12[%c1_94, %c0_95, %c0_96] : memref<2x1x32xf32, #tpu.memory_space<vmem>>, vector<1x1x32xf32>
    %199 = vector.shape_cast %198 : vector<1x1x32xf32> to vector<1x32xf32>
    %cst_97 = arith.constant dense<0.000000e+00> : vector<12xf32>
    %200 = vector.multi_reduction <add>, %195, %cst_97 [1] : vector<12x32xf32> to vector<12xf32>
    %201 = vector.shape_cast %200 : vector<12xf32> to vector<12x1xf32>
    %cst_98 = arith.constant 3.200000e+01 : f32
    %202 = vector.broadcast %cst_98 : f32 to vector<12x1xf32>
    %203 = arith.divf %201, %202 : vector<12x1xf32>
    %204 = vector.broadcast %203 : vector<12x1xf32> to vector<12x32xf32>
    %205 = arith.subf %195, %204 : vector<12x32xf32>
    %206 = arith.mulf %205, %205 : vector<12x32xf32>
    %cst_99 = arith.constant dense<0.000000e+00> : vector<12xf32>
    %207 = vector.multi_reduction <add>, %206, %cst_99 [1] : vector<12x32xf32> to vector<12xf32>
    %208 = vector.shape_cast %207 : vector<12xf32> to vector<12x1xf32>
    %cst_100 = arith.constant 3.200000e+01 : f32
    %209 = vector.broadcast %cst_100 : f32 to vector<12x1xf32>
    %210 = arith.divf %208, %209 : vector<12x1xf32>
    %cst_101 = arith.constant 9.99999974E-6 : f32
    %211 = vector.broadcast %cst_101 : f32 to vector<12x1xf32>
    %212 = arith.addf %210, %211 : vector<12x1xf32>
    %213 = math.rsqrt %212 : vector<12x1xf32>
    %214 = vector.broadcast %213 : vector<12x1xf32> to vector<12x32xf32>
    %215 = arith.mulf %205, %214 : vector<12x32xf32>
    %216 = vector.broadcast %197 : vector<1x32xf32> to vector<12x32xf32>
    %217 = arith.mulf %215, %216 : vector<12x32xf32>
    %218 = vector.broadcast %199 : vector<1x32xf32> to vector<12x32xf32>
    %219 = arith.addf %217, %218 : vector<12x32xf32>
    %220 = arith.truncf %219 : vector<12x32xf32> to vector<12x32xbf16>
    %c1_102 = arith.constant 1 : index
    %c0_103 = arith.constant 0 : index
    %c0_104 = arith.constant 0 : index
    %221 = vector.load %arg13[%c1_102, %c0_103, %c0_104] : memref<2x32x96xbf16, #tpu.memory_space<vmem>>, vector<1x32x96xbf16>
    %222 = vector.shape_cast %221 : vector<1x32x96xbf16> to vector<32x96xbf16>
    %cst_105 = arith.constant dense<0.000000e+00> : vector<12x96xf32>
    %223 = tpu.matmul %220, %222, %cst_105 {dimension_numbers = #tpu.dot_dimension_numbers<[1], [0], [0], [1], [0, 0, 1, 1], [], []>} : vector<12x32xbf16>, vector<32x96xbf16>, vector<12x96xf32> -> vector<12x96xf32>
    %c1_106 = arith.constant 1 : index
    %c0_107 = arith.constant 0 : index
    %c0_108 = arith.constant 0 : index
    %224 = vector.load %arg14[%c1_106, %c0_107, %c0_108] : memref<2x1x96xf32, #tpu.memory_space<vmem>>, vector<1x1x96xf32>
    %225 = vector.shape_cast %224 : vector<1x1x96xf32> to vector<1x96xf32>
    %226 = vector.broadcast %225 : vector<1x96xf32> to vector<12x96xf32>
    %227 = arith.addf %223, %226 : vector<12x96xf32>
    %228 = vector.extract_strided_slice %227 {offsets = [0, 0], sizes = [12, 16], strides = [1, 1]} : vector<12x96xf32> to vector<12x16xf32>
    %229 = arith.truncf %228 : vector<12x16xf32> to vector<12x16xbf16>
    %230 = vector.extract_strided_slice %227 {offsets = [0, 32], sizes = [12, 16], strides = [1, 1]} : vector<12x96xf32> to vector<12x16xf32>
    %231 = arith.truncf %230 : vector<12x16xf32> to vector<12x16xbf16>
    %232 = vector.extract_strided_slice %227 {offsets = [0, 64], sizes = [12, 16], strides = [1, 1]} : vector<12x96xf32> to vector<12x16xf32>
    %233 = arith.truncf %232 : vector<12x16xf32> to vector<12x16xbf16>
    %cst_109 = arith.constant dense<0.000000e+00> : vector<12x12xf32>
    %234 = tpu.matmul %229, %231, %cst_109 {dimension_numbers = #tpu.dot_dimension_numbers<[1], [1], [0], [0], [0, 0, 1, 0], [], []>} : vector<12x16xbf16>, vector<12x16xbf16>, vector<12x12xf32> -> vector<12x12xf32>
    %cst_110 = arith.constant 2.500000e-01 : f32
    %235 = vector.broadcast %cst_110 : f32 to vector<12x12xf32>
    %236 = arith.mulf %234, %235 : vector<12x12xf32>
    %cst_111 = arith.constant -1.000000e+30 : f32
    %237 = vector.broadcast %cst_111 : f32 to vector<12x12xf32>
    %238 = arith.select %53, %237, %236 : vector<12x12xi1>, vector<12x12xf32>
    %cst_112 = arith.constant dense<0xFF800000> : vector<12xf32>
    %239 = vector.multi_reduction <maximumf>, %238, %cst_112 [1] : vector<12x12xf32> to vector<12xf32>
    %240 = vector.shape_cast %239 : vector<12xf32> to vector<12x1xf32>
    %241 = vector.broadcast %240 : vector<12x1xf32> to vector<12x12xf32>
    %242 = arith.subf %238, %241 : vector<12x12xf32>
    %243 = math.exp %242 : vector<12x12xf32>
    %cst_113 = arith.constant dense<0.000000e+00> : vector<12xf32>
    %244 = vector.multi_reduction <add>, %243, %cst_113 [1] : vector<12x12xf32> to vector<12xf32>
    %245 = vector.shape_cast %244 : vector<12xf32> to vector<12x1xf32>
    %246 = tpu.reciprocal %245 {approx = true} : vector<12x1xf32> -> vector<12x1xf32>
    %247 = vector.broadcast %246 : vector<12x1xf32> to vector<12x12xf32>
    %248 = arith.mulf %243, %247 : vector<12x12xf32>
    %cst_114 = arith.constant 0.000000e+00 : f32
    %249 = vector.shape_cast %56 : vector<12x1xi1> to vector<12x1xi1>
    %250 = vector.broadcast %249 : vector<12x1xi1> to vector<12x12xi1>
    %251 = vector.broadcast %cst_114 : f32 to vector<12x12xf32>
    %252 = arith.select %250, %251, %248 : vector<12x12xi1>, vector<12x12xf32>
    %253 = arith.truncf %252 : vector<12x12xf32> to vector<12x12xbf16>
    %cst_115 = arith.constant dense<0.000000e+00> : vector<12x16xf32>
    %254 = tpu.matmul %253, %233, %cst_115 {dimension_numbers = #tpu.dot_dimension_numbers<[1], [0], [0], [1], [0, 0, 1, 1], [], []>} : vector<12x12xbf16>, vector<12x16xbf16>, vector<12x16xf32> -> vector<12x16xf32>
    %255 = vector.extract_strided_slice %227 {offsets = [0, 16], sizes = [12, 16], strides = [1, 1]} : vector<12x96xf32> to vector<12x16xf32>
    %256 = arith.truncf %255 : vector<12x16xf32> to vector<12x16xbf16>
    %257 = vector.extract_strided_slice %227 {offsets = [0, 48], sizes = [12, 16], strides = [1, 1]} : vector<12x96xf32> to vector<12x16xf32>
    %258 = arith.truncf %257 : vector<12x16xf32> to vector<12x16xbf16>
    %259 = vector.extract_strided_slice %227 {offsets = [0, 80], sizes = [12, 16], strides = [1, 1]} : vector<12x96xf32> to vector<12x16xf32>
    %260 = arith.truncf %259 : vector<12x16xf32> to vector<12x16xbf16>
    %cst_116 = arith.constant dense<0.000000e+00> : vector<12x12xf32>
    %261 = tpu.matmul %256, %258, %cst_116 {dimension_numbers = #tpu.dot_dimension_numbers<[1], [1], [0], [0], [0, 0, 1, 0], [], []>} : vector<12x16xbf16>, vector<12x16xbf16>, vector<12x12xf32> -> vector<12x12xf32>
    %cst_117 = arith.constant 2.500000e-01 : f32
    %262 = vector.broadcast %cst_117 : f32 to vector<12x12xf32>
    %263 = arith.mulf %261, %262 : vector<12x12xf32>
    %cst_118 = arith.constant -1.000000e+30 : f32
    %264 = vector.broadcast %cst_118 : f32 to vector<12x12xf32>
    %265 = arith.select %53, %264, %263 : vector<12x12xi1>, vector<12x12xf32>
    %cst_119 = arith.constant dense<0xFF800000> : vector<12xf32>
    %266 = vector.multi_reduction <maximumf>, %265, %cst_119 [1] : vector<12x12xf32> to vector<12xf32>
    %267 = vector.shape_cast %266 : vector<12xf32> to vector<12x1xf32>
    %268 = vector.broadcast %267 : vector<12x1xf32> to vector<12x12xf32>
    %269 = arith.subf %265, %268 : vector<12x12xf32>
    %270 = math.exp %269 : vector<12x12xf32>
    %cst_120 = arith.constant dense<0.000000e+00> : vector<12xf32>
    %271 = vector.multi_reduction <add>, %270, %cst_120 [1] : vector<12x12xf32> to vector<12xf32>
    %272 = vector.shape_cast %271 : vector<12xf32> to vector<12x1xf32>
    %273 = tpu.reciprocal %272 {approx = true} : vector<12x1xf32> -> vector<12x1xf32>
    %274 = vector.broadcast %273 : vector<12x1xf32> to vector<12x12xf32>
    %275 = arith.mulf %270, %274 : vector<12x12xf32>
    %cst_121 = arith.constant 0.000000e+00 : f32
    %276 = vector.shape_cast %56 : vector<12x1xi1> to vector<12x1xi1>
    %277 = vector.broadcast %276 : vector<12x1xi1> to vector<12x12xi1>
    %278 = vector.broadcast %cst_121 : f32 to vector<12x12xf32>
    %279 = arith.select %277, %278, %275 : vector<12x12xi1>, vector<12x12xf32>
    %280 = arith.truncf %279 : vector<12x12xf32> to vector<12x12xbf16>
    %cst_122 = arith.constant dense<0.000000e+00> : vector<12x16xf32>
    %281 = tpu.matmul %280, %260, %cst_122 {dimension_numbers = #tpu.dot_dimension_numbers<[1], [0], [0], [1], [0, 0, 1, 1], [], []>} : vector<12x12xbf16>, vector<12x16xbf16>, vector<12x16xf32> -> vector<12x16xf32>
    %282 = tpu.concatenate %254, %281 in 1 : vector<12x16xf32>, vector<12x16xf32> -> vector<12x32xf32>
    %283 = arith.truncf %282 : vector<12x32xf32> to vector<12x32xbf16>
    %c1_123 = arith.constant 1 : index
    %c0_124 = arith.constant 0 : index
    %c0_125 = arith.constant 0 : index
    %284 = vector.load %arg15[%c1_123, %c0_124, %c0_125] : memref<2x32x32xbf16, #tpu.memory_space<vmem>>, vector<1x32x32xbf16>
    %285 = vector.shape_cast %284 : vector<1x32x32xbf16> to vector<32x32xbf16>
    %cst_126 = arith.constant dense<0.000000e+00> : vector<12x32xf32>
    %286 = tpu.matmul %283, %285, %cst_126 {dimension_numbers = #tpu.dot_dimension_numbers<[1], [0], [0], [1], [0, 0, 1, 1], [], []>} : vector<12x32xbf16>, vector<32x32xbf16>, vector<12x32xf32> -> vector<12x32xf32>
    %287 = arith.addf %195, %286 : vector<12x32xf32>
    %c1_127 = arith.constant 1 : index
    %c0_128 = arith.constant 0 : index
    %c0_129 = arith.constant 0 : index
    %288 = vector.load %arg16[%c1_127, %c0_128, %c0_129] : memref<2x1x32xf32, #tpu.memory_space<vmem>>, vector<1x1x32xf32>
    %289 = vector.shape_cast %288 : vector<1x1x32xf32> to vector<1x32xf32>
    %290 = vector.broadcast %289 : vector<1x32xf32> to vector<12x32xf32>
    %291 = arith.addf %287, %290 : vector<12x32xf32>
    %c1_130 = arith.constant 1 : index
    %c0_131 = arith.constant 0 : index
    %c0_132 = arith.constant 0 : index
    %292 = vector.load %arg17[%c1_130, %c0_131, %c0_132] : memref<2x1x32xf32, #tpu.memory_space<vmem>>, vector<1x1x32xf32>
    %293 = vector.shape_cast %292 : vector<1x1x32xf32> to vector<1x32xf32>
    %c1_133 = arith.constant 1 : index
    %c0_134 = arith.constant 0 : index
    %c0_135 = arith.constant 0 : index
    %294 = vector.load %arg18[%c1_133, %c0_134, %c0_135] : memref<2x1x32xf32, #tpu.memory_space<vmem>>, vector<1x1x32xf32>
    %295 = vector.shape_cast %294 : vector<1x1x32xf32> to vector<1x32xf32>
    %cst_136 = arith.constant dense<0.000000e+00> : vector<12xf32>
    %296 = vector.multi_reduction <add>, %291, %cst_136 [1] : vector<12x32xf32> to vector<12xf32>
    %297 = vector.shape_cast %296 : vector<12xf32> to vector<12x1xf32>
    %cst_137 = arith.constant 3.200000e+01 : f32
    %298 = vector.broadcast %cst_137 : f32 to vector<12x1xf32>
    %299 = arith.divf %297, %298 : vector<12x1xf32>
    %300 = vector.broadcast %299 : vector<12x1xf32> to vector<12x32xf32>
    %301 = arith.subf %291, %300 : vector<12x32xf32>
    %302 = arith.mulf %301, %301 : vector<12x32xf32>
    %cst_138 = arith.constant dense<0.000000e+00> : vector<12xf32>
    %303 = vector.multi_reduction <add>, %302, %cst_138 [1] : vector<12x32xf32> to vector<12xf32>
    %304 = vector.shape_cast %303 : vector<12xf32> to vector<12x1xf32>
    %cst_139 = arith.constant 3.200000e+01 : f32
    %305 = vector.broadcast %cst_139 : f32 to vector<12x1xf32>
    %306 = arith.divf %304, %305 : vector<12x1xf32>
    %cst_140 = arith.constant 9.99999974E-6 : f32
    %307 = vector.broadcast %cst_140 : f32 to vector<12x1xf32>
    %308 = arith.addf %306, %307 : vector<12x1xf32>
    %309 = math.rsqrt %308 : vector<12x1xf32>
    %310 = vector.broadcast %309 : vector<12x1xf32> to vector<12x32xf32>
    %311 = arith.mulf %301, %310 : vector<12x32xf32>
    %312 = vector.broadcast %293 : vector<1x32xf32> to vector<12x32xf32>
    %313 = arith.mulf %311, %312 : vector<12x32xf32>
    %314 = vector.broadcast %295 : vector<1x32xf32> to vector<12x32xf32>
    %315 = arith.addf %313, %314 : vector<12x32xf32>
    %316 = arith.truncf %315 : vector<12x32xf32> to vector<12x32xbf16>
    %c1_141 = arith.constant 1 : index
    %c0_142 = arith.constant 0 : index
    %c0_143 = arith.constant 0 : index
    %317 = vector.load %arg19[%c1_141, %c0_142, %c0_143] : memref<2x32x64xbf16, #tpu.memory_space<vmem>>, vector<1x32x64xbf16>
    %318 = vector.shape_cast %317 : vector<1x32x64xbf16> to vector<32x64xbf16>
    %cst_144 = arith.constant dense<0.000000e+00> : vector<12x64xf32>
    %319 = tpu.matmul %316, %318, %cst_144 {dimension_numbers = #tpu.dot_dimension_numbers<[1], [0], [0], [1], [0, 0, 1, 1], [], []>} : vector<12x32xbf16>, vector<32x64xbf16>, vector<12x64xf32> -> vector<12x64xf32>
    %c1_145 = arith.constant 1 : index
    %c0_146 = arith.constant 0 : index
    %c0_147 = arith.constant 0 : index
    %320 = vector.load %arg20[%c1_145, %c0_146, %c0_147] : memref<2x1x64xf32, #tpu.memory_space<vmem>>, vector<1x1x64xf32>
    %321 = vector.shape_cast %320 : vector<1x1x64xf32> to vector<1x64xf32>
    %322 = vector.broadcast %321 : vector<1x64xf32> to vector<12x64xf32>
    %323 = arith.addf %319, %322 : vector<12x64xf32>
    %cst_148 = arith.constant 0.000000e+00 : f32
    %324 = vector.broadcast %cst_148 : f32 to vector<12x64xf32>
    %325 = arith.maximumf %323, %324 : vector<12x64xf32>
    %326 = arith.truncf %325 : vector<12x64xf32> to vector<12x64xbf16>
    %c1_149 = arith.constant 1 : index
    %c0_150 = arith.constant 0 : index
    %c0_151 = arith.constant 0 : index
    %327 = vector.load %arg21[%c1_149, %c0_150, %c0_151] : memref<2x64x32xbf16, #tpu.memory_space<vmem>>, vector<1x64x32xbf16>
    %328 = vector.shape_cast %327 : vector<1x64x32xbf16> to vector<64x32xbf16>
    %cst_152 = arith.constant dense<0.000000e+00> : vector<12x32xf32>
    %329 = tpu.matmul %326, %328, %cst_152 {dimension_numbers = #tpu.dot_dimension_numbers<[1], [0], [0], [1], [0, 0, 1, 1], [], []>} : vector<12x64xbf16>, vector<64x32xbf16>, vector<12x32xf32> -> vector<12x32xf32>
    %330 = arith.addf %291, %329 : vector<12x32xf32>
    %c1_153 = arith.constant 1 : index
    %c0_154 = arith.constant 0 : index
    %c0_155 = arith.constant 0 : index
    %331 = vector.load %arg22[%c1_153, %c0_154, %c0_155] : memref<2x1x32xf32, #tpu.memory_space<vmem>>, vector<1x1x32xf32>
    %332 = vector.shape_cast %331 : vector<1x1x32xf32> to vector<1x32xf32>
    %333 = vector.broadcast %332 : vector<1x32xf32> to vector<12x32xf32>
    %334 = arith.addf %330, %333 : vector<12x32xf32>
    %c0_156 = arith.constant 0 : index
    %c0_157 = arith.constant 0 : index
    %335 = vector.load %arg23[%c0_156, %c0_157] : memref<1x32xf32, #tpu.memory_space<vmem>>, vector<1x32xf32>
    %c0_158 = arith.constant 0 : index
    %c0_159 = arith.constant 0 : index
    %336 = vector.load %arg24[%c0_158, %c0_159] : memref<1x32xf32, #tpu.memory_space<vmem>>, vector<1x32xf32>
    %cst_160 = arith.constant dense<0.000000e+00> : vector<12xf32>
    %337 = vector.multi_reduction <add>, %334, %cst_160 [1] : vector<12x32xf32> to vector<12xf32>
    %338 = vector.shape_cast %337 : vector<12xf32> to vector<12x1xf32>
    %cst_161 = arith.constant 3.200000e+01 : f32
    %339 = vector.broadcast %cst_161 : f32 to vector<12x1xf32>
    %340 = arith.divf %338, %339 : vector<12x1xf32>
    %341 = vector.broadcast %340 : vector<12x1xf32> to vector<12x32xf32>
    %342 = arith.subf %334, %341 : vector<12x32xf32>
    %343 = arith.mulf %342, %342 : vector<12x32xf32>
    %cst_162 = arith.constant dense<0.000000e+00> : vector<12xf32>
    %344 = vector.multi_reduction <add>, %343, %cst_162 [1] : vector<12x32xf32> to vector<12xf32>
    %345 = vector.shape_cast %344 : vector<12xf32> to vector<12x1xf32>
    %cst_163 = arith.constant 3.200000e+01 : f32
    %346 = vector.broadcast %cst_163 : f32 to vector<12x1xf32>
    %347 = arith.divf %345, %346 : vector<12x1xf32>
    %cst_164 = arith.constant 9.99999974E-6 : f32
    %348 = vector.broadcast %cst_164 : f32 to vector<12x1xf32>
    %349 = arith.addf %347, %348 : vector<12x1xf32>
    %350 = math.rsqrt %349 : vector<12x1xf32>
    %351 = vector.broadcast %350 : vector<12x1xf32> to vector<12x32xf32>
    %352 = arith.mulf %342, %351 : vector<12x32xf32>
    %353 = vector.broadcast %335 : vector<1x32xf32> to vector<12x32xf32>
    %354 = arith.mulf %352, %353 : vector<12x32xf32>
    %355 = vector.broadcast %336 : vector<1x32xf32> to vector<12x32xf32>
    %356 = arith.addf %354, %355 : vector<12x32xf32>
    %357 = arith.truncf %356 : vector<12x32xf32> to vector<12x32xbf16>
    %c0_165 = arith.constant 0 : index
    %c0_166 = arith.constant 0 : index
    %c0_167 = arith.constant 0 : index
    %358 = vector.load %arg25[%c0_165, %c0_166, %c0_167] : memref<1x12x32xbf16, #tpu.memory_space<vmem>>, vector<1x12x32xbf16>
    %359 = vector.shape_cast %358 : vector<1x12x32xbf16> to vector<12x32xbf16>
    %360 = vector.shape_cast %357 : vector<12x32xbf16> to vector<1x12x32xbf16>
    tpu.vector_store %arg25[%c0_165, %c0_166, %c0_167], %360 {strides = array<i32>} : memref<1x12x32xbf16, #tpu.memory_space<vmem>>, vector<1x12x32xbf16>,
    return
  }
  func.func @transform_0(%arg0: i32, %arg1: memref<2xi32, #tpu.memory_space<smem>>) -> (i32, i32, i32) {
    %c0_i32 = arith.constant 0 : i32
    %c0_i32_0 = arith.constant 0 : i32
    %c0_i32_1 = arith.constant 0 : i32
    return %arg0, %c0_i32, %c0_i32_0 : i32, i32, i32
  }
  func.func @transform_1(%arg0: i32, %arg1: memref<2xi32, #tpu.memory_space<smem>>) -> (i32, i32) {
    %c0_i32 = arith.constant 0 : i32
    %c0_i32_0 = arith.constant 0 : i32
    %c0_i32_1 = arith.constant 0 : i32
    return %c0_i32, %c0_i32_0 : i32, i32
  }
  func.func @transform_2(%arg0: i32, %arg1: memref<2xi32, #tpu.memory_space<smem>>) -> (i32, i32) {
    %c0_i32 = arith.constant 0 : i32
    %c0_i32_0 = arith.constant 0 : i32
    %c0_i32_1 = arith.constant 0 : i32
    return %c0_i32, %c0_i32_0 : i32, i32
  }
  func.func @transform_3(%arg0: i32, %arg1: memref<2xi32, #tpu.memory_space<smem>>) -> (i32, i32) {
    %c0_i32 = arith.constant 0 : i32
    %c0_i32_0 = arith.constant 0 : i32
    %c0_i32_1 = arith.constant 0 : i32
    return %c0_i32, %c0_i32_0 : i32, i32
  }
  func.func @transform_4(%arg0: i32, %arg1: memref<2xi32, #tpu.memory_space<smem>>) -> (i32, i32) {
    %c0_i32 = arith.constant 0 : i32
    %c0_i32_0 = arith.constant 0 : i32
    %c0_i32_1 = arith.constant 0 : i32
    return %c0_i32, %c0_i32_0 : i32, i32
  }
  func.func @transform_5(%arg0: i32, %arg1: memref<2xi32, #tpu.memory_space<smem>>) -> (i32, i32) {
    %c0_i32 = arith.constant 0 : i32
    %c0_i32_0 = arith.constant 0 : i32
    %c0_i32_1 = arith.constant 0 : i32
    return %c0_i32, %c0_i32_0 : i32, i32
  }
  func.func @transform_6(%arg0: i32, %arg1: memref<2xi32, #tpu.memory_space<smem>>) -> (i32, i32) {
    %c0_i32 = arith.constant 0 : i32
    %c0_i32_0 = arith.constant 0 : i32
    %c0_i32_1 = arith.constant 0 : i32
    return %c0_i32, %c0_i32_0 : i32, i32
  }
  func.func @transform_7(%arg0: i32, %arg1: memref<2xi32, #tpu.memory_space<smem>>) -> (i32, i32) {
    %c0_i32 = arith.constant 0 : i32
    %c0_i32_0 = arith.constant 0 : i32
    %c0_i32_1 = arith.constant 0 : i32
    return %c0_i32, %c0_i32_0 : i32, i32
  }
  func.func @transform_8(%arg0: i32, %arg1: memref<2xi32, #tpu.memory_space<smem>>) -> (i32, i32) {
    %c0_i32 = arith.constant 0 : i32
    %c0_i32_0 = arith.constant 0 : i32
    %c0_i32_1 = arith.constant 0 : i32
    return %c0_i32, %c0_i32_0 : i32, i32
  }
  func.func @transform_9(%arg0: i32, %arg1: memref<2xi32, #tpu.memory_space<smem>>) -> (i32, i32, i32) {
    %c0_i32 = arith.constant 0 : i32
    %c0_i32_0 = arith.constant 0 : i32
    %c0_i32_1 = arith.constant 0 : i32
    %c0_i32_2 = arith.constant 0 : i32
    return %c0_i32, %c0_i32_0, %c0_i32_1 : i32, i32, i32
  }
  func.func @transform_10(%arg0: i32, %arg1: memref<2xi32, #tpu.memory_space<smem>>) -> (i32, i32, i32) {
    %c0_i32 = arith.constant 0 : i32
    %c0_i32_0 = arith.constant 0 : i32
    %c0_i32_1 = arith.constant 0 : i32
    %c0_i32_2 = arith.constant 0 : i32
    return %c0_i32, %c0_i32_0, %c0_i32_1 : i32, i32, i32
  }
  func.func @transform_11(%arg0: i32, %arg1: memref<2xi32, #tpu.memory_space<smem>>) -> (i32, i32, i32) {
    %c0_i32 = arith.constant 0 : i32
    %c0_i32_0 = arith.constant 0 : i32
    %c0_i32_1 = arith.constant 0 : i32
    %c0_i32_2 = arith.constant 0 : i32
    return %c0_i32, %c0_i32_0, %c0_i32_1 : i32, i32, i32
  }
  func.func @transform_12(%arg0: i32, %arg1: memref<2xi32, #tpu.memory_space<smem>>) -> (i32, i32, i32) {
    %c0_i32 = arith.constant 0 : i32
    %c0_i32_0 = arith.constant 0 : i32
    %c0_i32_1 = arith.constant 0 : i32
    %c0_i32_2 = arith.constant 0 : i32
    return %c0_i32, %c0_i32_0, %c0_i32_1 : i32, i32, i32
  }
  func.func @transform_13(%arg0: i32, %arg1: memref<2xi32, #tpu.memory_space<smem>>) -> (i32, i32, i32) {
    %c0_i32 = arith.constant 0 : i32
    %c0_i32_0 = arith.constant 0 : i32
    %c0_i32_1 = arith.constant 0 : i32
    %c0_i32_2 = arith.constant 0 : i32
    return %c0_i32, %c0_i32_0, %c0_i32_1 : i32, i32, i32
  }
  func.func @transform_14(%arg0: i32, %arg1: memref<2xi32, #tpu.memory_space<smem>>) -> (i32, i32, i32) {
    %c0_i32 = arith.constant 0 : i32
    %c0_i32_0 = arith.constant 0 : i32
    %c0_i32_1 = arith.constant 0 : i32
    %c0_i32_2 = arith.constant 0 : i32
    return %c0_i32, %c0_i32_0, %c0_i32_1 : i32, i32, i32
  }
  func.func @transform_15(%arg0: i32, %arg1: memref<2xi32, #tpu.memory_space<smem>>) -> (i32, i32, i32) {
    %c0_i32 = arith.constant 0 : i32
    %c0_i32_0 = arith.constant 0 : i32
    %c0_i32_1 = arith.constant 0 : i32
    %c0_i32_2 = arith.constant 0 : i32
    return %c0_i32, %c0_i32_0, %c0_i32_1 : i32, i32, i32
  }
  func.func @transform_16(%arg0: i32, %arg1: memref<2xi32, #tpu.memory_space<smem>>) -> (i32, i32, i32) {
    %c0_i32 = arith.constant 0 : i32
    %c0_i32_0 = arith.constant 0 : i32
    %c0_i32_1 = arith.constant 0 : i32
    %c0_i32_2 = arith.constant 0 : i32
    return %c0_i32, %c0_i32_0, %c0_i32_1 : i32, i32, i32
  }
  func.func @transform_17(%arg0: i32, %arg1: memref<2xi32, #tpu.memory_space<smem>>) -> (i32, i32, i32) {
    %c0_i32 = arith.constant 0 : i32
    %c0_i32_0 = arith.constant 0 : i32
    %c0_i32_1 = arith.constant 0 : i32
    %c0_i32_2 = arith.constant 0 : i32
    return %c0_i32, %c0_i32_0, %c0_i32_1 : i32, i32, i32
  }
  func.func @transform_18(%arg0: i32, %arg1: memref<2xi32, #tpu.memory_space<smem>>) -> (i32, i32, i32) {
    %c0_i32 = arith.constant 0 : i32
    %c0_i32_0 = arith.constant 0 : i32
    %c0_i32_1 = arith.constant 0 : i32
    %c0_i32_2 = arith.constant 0 : i32
    return %c0_i32, %c0_i32_0, %c0_i32_1 : i32, i32, i32
  }
  func.func @transform_19(%arg0: i32, %arg1: memref<2xi32, #tpu.memory_space<smem>>) -> (i32, i32, i32) {
    %c0_i32 = arith.constant 0 : i32
    %c0_i32_0 = arith.constant 0 : i32
    %c0_i32_1 = arith.constant 0 : i32
    %c0_i32_2 = arith.constant 0 : i32
    return %c0_i32, %c0_i32_0, %c0_i32_1 : i32, i32, i32
  }
  func.func @transform_20(%arg0: i32, %arg1: memref<2xi32, #tpu.memory_space<smem>>) -> (i32, i32, i32) {
    %c0_i32 = arith.constant 0 : i32
    %c0_i32_0 = arith.constant 0 : i32
    %c0_i32_1 = arith.constant 0 : i32
    %c0_i32_2 = arith.constant 0 : i32
    return %c0_i32, %c0_i32_0, %c0_i32_1 : i32, i32, i32
  }
  func.func @transform_21(%arg0: i32, %arg1: memref<2xi32, #tpu.memory_space<smem>>) -> (i32, i32) {
    %c0_i32 = arith.constant 0 : i32
    %c0_i32_0 = arith.constant 0 : i32
    %c0_i32_1 = arith.constant 0 : i32
    return %c0_i32, %c0_i32_0 : i32, i32
  }
  func.func @transform_22(%arg0: i32, %arg1: memref<2xi32, #tpu.memory_space<smem>>) -> (i32, i32) {
    %c0_i32 = arith.constant 0 : i32
    %c0_i32_0 = arith.constant 0 : i32
    %c0_i32_1 = arith.constant 0 : i32
    return %c0_i32, %c0_i32_0 : i32, i32
  }
  func.func @transform_23(%arg0: i32, %arg1: memref<2xi32, #tpu.memory_space<smem>>) -> (i32, i32, i32) {
    %c0_i32 = arith.constant 0 : i32
    %c0_i32_0 = arith.constant 0 : i32
    %c0_i32_1 = arith.constant 0 : i32
    return %arg0, %c0_i32, %c0_i32_0 : i32, i32, i32
  }
}

module attributes {stable_mosaic.version = 11 : i64} {
  func.func @kernel(%arg0: i32, %arg1: memref<2xi32, #tpu.memory_space<smem>>, %arg2: memref<2xi32, #tpu.memory_space<smem>>, %arg3: memref<1x16x8xf32, #tpu.memory_space<vmem>>, %arg4: memref<1x12x32xbf16, #tpu.memory_space<vmem>>, %arg5: memref<8x32xbf16, #tpu.memory_space<vmem>>, %arg6: memref<1x32xf32, #tpu.memory_space<vmem>>, %arg7: memref<32x32xbf16, #tpu.memory_space<vmem>>, %arg8: memref<1x32xf32, #tpu.memory_space<vmem>>, %arg9: memref<16x32xf32, #tpu.memory_space<vmem>>, %arg10: memref<2x1x32xf32, #tpu.memory_space<vmem>>, %arg11: memref<2x1x32xf32, #tpu.memory_space<vmem>>, %arg12: memref<2x32x96xbf16, #tpu.memory_space<vmem>>, %arg13: memref<2x1x96xf32, #tpu.memory_space<vmem>>, %arg14: memref<2x32x32xbf16, #tpu.memory_space<vmem>>, %arg15: memref<2x1x32xf32, #tpu.memory_space<vmem>>, %arg16: memref<2x1x32xf32, #tpu.memory_space<vmem>>, %arg17: memref<2x1x32xf32, #tpu.memory_space<vmem>>, %arg18: memref<2x32x32xbf16, #tpu.memory_space<vmem>>, %arg19: memref<2x1x32xf32, #tpu.memory_space<vmem>>, %arg20: memref<2x32x64xbf16, #tpu.memory_space<vmem>>, %arg21: memref<2x1x64xf32, #tpu.memory_space<vmem>>, %arg22: memref<2x32x32xbf16, #tpu.memory_space<vmem>>, %arg23: memref<2x1x32xf32, #tpu.memory_space<vmem>>, %arg24: memref<2x1x32xf32, #tpu.memory_space<vmem>>, %arg25: memref<2x1x32xf32, #tpu.memory_space<vmem>>, %arg26: memref<2x32x64xbf16, #tpu.memory_space<vmem>>, %arg27: memref<2x1x64xf32, #tpu.memory_space<vmem>>, %arg28: memref<2x64x32xbf16, #tpu.memory_space<vmem>>, %arg29: memref<2x1x32xf32, #tpu.memory_space<vmem>>, %arg30: memref<1x32xf32, #tpu.memory_space<vmem>>, %arg31: memref<1x32xf32, #tpu.memory_space<vmem>>, %arg32: memref<32x9xbf16, #tpu.memory_space<vmem>>, %arg33: memref<1x9xf32, #tpu.memory_space<vmem>>, %arg34: memref<24x32xbf16, #tpu.memory_space<vmem>>, %arg35: memref<1x32xf32, #tpu.memory_space<vmem>>, %arg36: memref<96x8xbf16, #tpu.memory_space<vmem>>, %arg37: memref<1x8xf32, #tpu.memory_space<vmem>>, %arg38: memref<1x16x8xf32, #tpu.memory_space<vmem>>, %arg39: memref<1x16x8xf32, #tpu.memory_space<vmem>>, %arg40: memref<1x16x1xf32, #tpu.memory_space<vmem>>) attributes {dimension_semantics = [#tpu.dimension_semantics<parallel>], iteration_bounds = array<i64: 2>, scalar_prefetch = 2 : i64, scratch_operands = 0 : i64, tpu.core_type = #tpu.core_type<tc>, window_params = [{transform_indices = @transform_0, window_bounds = array<i64: 1, 16, 8>}, {transform_indices = @transform_1, window_bounds = array<i64: 1, 12, 32>}, {pipeline_mode = #tpu.pipeline_mode<synchronous>, transform_indices = @transform_2, window_bounds = array<i64: 8, 32>}, {pipeline_mode = #tpu.pipeline_mode<synchronous>, transform_indices = @transform_3, window_bounds = array<i64: 1, 32>}, {pipeline_mode = #tpu.pipeline_mode<synchronous>, transform_indices = @transform_4, window_bounds = array<i64: 32, 32>}, {pipeline_mode = #tpu.pipeline_mode<synchronous>, transform_indices = @transform_5, window_bounds = array<i64: 1, 32>}, {pipeline_mode = #tpu.pipeline_mode<synchronous>, transform_indices = @transform_6, window_bounds = array<i64: 16, 32>}, {pipeline_mode = #tpu.pipeline_mode<synchronous>, transform_indices = @transform_7, window_bounds = array<i64: 2, 1, 32>}, {pipeline_mode = #tpu.pipeline_mode<synchronous>, transform_indices = @transform_8, window_bounds = array<i64: 2, 1, 32>}, {pipeline_mode = #tpu.pipeline_mode<synchronous>, transform_indices = @transform_9, window_bounds = array<i64: 2, 32, 96>}, {pipeline_mode = #tpu.pipeline_mode<synchronous>, transform_indices = @transform_10, window_bounds = array<i64: 2, 1, 96>}, {pipeline_mode = #tpu.pipeline_mode<synchronous>, transform_indices = @transform_11, window_bounds = array<i64: 2, 32, 32>}, {pipeline_mode = #tpu.pipeline_mode<synchronous>, transform_indices = @transform_12, window_bounds = array<i64: 2, 1, 32>}, {pipeline_mode = #tpu.pipeline_mode<synchronous>, transform_indices = @transform_13, window_bounds = array<i64: 2, 1, 32>}, {pipeline_mode = #tpu.pipeline_mode<synchronous>, transform_indices = @transform_14, window_bounds = array<i64: 2, 1, 32>}, {pipeline_mode = #tpu.pipeline_mode<synchronous>, transform_indices = @transform_15, window_bounds = array<i64: 2, 32, 32>}, {pipeline_mode = #tpu.pipeline_mode<synchronous>, transform_indices = @transform_16, window_bounds = array<i64: 2, 1, 32>}, {pipeline_mode = #tpu.pipeline_mode<synchronous>, transform_indices = @transform_17, window_bounds = array<i64: 2, 32, 64>}, {pipeline_mode = #tpu.pipeline_mode<synchronous>, transform_indices = @transform_18, window_bounds = array<i64: 2, 1, 64>}, {pipeline_mode = #tpu.pipeline_mode<synchronous>, transform_indices = @transform_19, window_bounds = array<i64: 2, 32, 32>}, {pipeline_mode = #tpu.pipeline_mode<synchronous>, transform_indices = @transform_20, window_bounds = array<i64: 2, 1, 32>}, {pipeline_mode = #tpu.pipeline_mode<synchronous>, transform_indices = @transform_21, window_bounds = array<i64: 2, 1, 32>}, {pipeline_mode = #tpu.pipeline_mode<synchronous>, transform_indices = @transform_22, window_bounds = array<i64: 2, 1, 32>}, {pipeline_mode = #tpu.pipeline_mode<synchronous>, transform_indices = @transform_23, window_bounds = array<i64: 2, 32, 64>}, {pipeline_mode = #tpu.pipeline_mode<synchronous>, transform_indices = @transform_24, window_bounds = array<i64: 2, 1, 64>}, {pipeline_mode = #tpu.pipeline_mode<synchronous>, transform_indices = @transform_25, window_bounds = array<i64: 2, 64, 32>}, {pipeline_mode = #tpu.pipeline_mode<synchronous>, transform_indices = @transform_26, window_bounds = array<i64: 2, 1, 32>}, {pipeline_mode = #tpu.pipeline_mode<synchronous>, transform_indices = @transform_27, window_bounds = array<i64: 1, 32>}, {pipeline_mode = #tpu.pipeline_mode<synchronous>, transform_indices = @transform_28, window_bounds = array<i64: 1, 32>}, {pipeline_mode = #tpu.pipeline_mode<synchronous>, transform_indices = @transform_29, window_bounds = array<i64: 32, 9>}, {pipeline_mode = #tpu.pipeline_mode<synchronous>, transform_indices = @transform_30, window_bounds = array<i64: 1, 9>}, {pipeline_mode = #tpu.pipeline_mode<synchronous>, transform_indices = @transform_31, window_bounds = array<i64: 24, 32>}, {pipeline_mode = #tpu.pipeline_mode<synchronous>, transform_indices = @transform_32, window_bounds = array<i64: 1, 32>}, {pipeline_mode = #tpu.pipeline_mode<synchronous>, transform_indices = @transform_33, window_bounds = array<i64: 96, 8>}, {pipeline_mode = #tpu.pipeline_mode<synchronous>, transform_indices = @transform_34, window_bounds = array<i64: 1, 8>}, {transform_indices = @transform_35, window_bounds = array<i64: 1, 16, 8>}, {transform_indices = @transform_36, window_bounds = array<i64: 1, 16, 8>}, {transform_indices = @transform_37, window_bounds = array<i64: 1, 16, 1>}]} {
    %0 = arith.index_cast %arg0 : i32 to index
    %1 = memref.load %arg1[%0] : memref<2xi32, #tpu.memory_space<smem>>
    %2 = arith.index_cast %arg0 : i32 to index
    %3 = memref.load %arg2[%2] : memref<2xi32, #tpu.memory_space<smem>>
    %c0 = arith.constant 0 : index
    %c0_0 = arith.constant 0 : index
    %c0_1 = arith.constant 0 : index
    %4 = vector.load %arg3[%c0, %c0_0, %c0_1] : memref<1x16x8xf32, #tpu.memory_space<vmem>>, vector<1x16x8xf32>
    %5 = vector.shape_cast %4 : vector<1x16x8xf32> to vector<16x8xf32>
    %c0_2 = arith.constant 0 : index
    %c0_3 = arith.constant 0 : index
    %c0_4 = arith.constant 0 : index
    %6 = vector.load %arg4[%c0_2, %c0_3, %c0_4] : memref<1x12x32xbf16, #tpu.memory_space<vmem>>, vector<1x12x32xbf16>
    %7 = vector.shape_cast %6 : vector<1x12x32xbf16> to vector<12x32xbf16>
    %cst = arith.constant 0.000000e+00 : f32
    %8 = vector.broadcast %cst : f32 to vector<1x8xf32>
    %9 = vector.extract_strided_slice %5 {offsets = [0, 0], sizes = [15, 8], strides = [1, 1]} : vector<16x8xf32> to vector<15x8xf32>
    %10 = tpu.concatenate %8, %9 in 0 : vector<1x8xf32>, vector<15x8xf32> -> vector<16x8xf32>
    %c0_5 = arith.constant 0 : index
    %c0_6 = arith.constant 0 : index
    %11 = vector.load %arg5[%c0_5, %c0_6] : memref<8x32xbf16, #tpu.memory_space<vmem>>, vector<8x32xbf16>
    %c0_7 = arith.constant 0 : index
    %c0_8 = arith.constant 0 : index
    %12 = vector.load %arg6[%c0_7, %c0_8] : memref<1x32xf32, #tpu.memory_space<vmem>>, vector<1x32xf32>
    %13 = arith.truncf %10 : vector<16x8xf32> to vector<16x8xbf16>
    %cst_9 = arith.constant dense<0.000000e+00> : vector<16x32xf32>
    %14 = tpu.matmul %13, %11, %cst_9 {dimension_numbers = #tpu.dot_dimension_numbers<[1], [0], [0], [1], [0, 0, 1, 1], [], []>} : vector<16x8xbf16>, vector<8x32xbf16>, vector<16x32xf32> -> vector<16x32xf32>
    %15 = vector.broadcast %12 : vector<1x32xf32> to vector<16x32xf32>
    %16 = arith.addf %14, %15 : vector<16x32xf32>
    %cst_10 = arith.constant 0.000000e+00 : f32
    %17 = vector.broadcast %cst_10 : f32 to vector<16x32xf32>
    %18 = arith.maximumf %16, %17 : vector<16x32xf32>
    %c0_11 = arith.constant 0 : index
    %c0_12 = arith.constant 0 : index
    %19 = vector.load %arg7[%c0_11, %c0_12] : memref<32x32xbf16, #tpu.memory_space<vmem>>, vector<32x32xbf16>
    %c0_13 = arith.constant 0 : index
    %c0_14 = arith.constant 0 : index
    %20 = vector.load %arg8[%c0_13, %c0_14] : memref<1x32xf32, #tpu.memory_space<vmem>>, vector<1x32xf32>
    %21 = arith.truncf %18 : vector<16x32xf32> to vector<16x32xbf16>
    %cst_15 = arith.constant dense<0.000000e+00> : vector<16x32xf32>
    %22 = tpu.matmul %21, %19, %cst_15 {dimension_numbers = #tpu.dot_dimension_numbers<[1], [0], [0], [1], [0, 0, 1, 1], [], []>} : vector<16x32xbf16>, vector<32x32xbf16>, vector<16x32xf32> -> vector<16x32xf32>
    %23 = vector.broadcast %20 : vector<1x32xf32> to vector<16x32xf32>
    %24 = arith.addf %22, %23 : vector<16x32xf32>
    %cst_16 = arith.constant 0.000000e+00 : f32
    %25 = vector.broadcast %cst_16 : f32 to vector<16x32xf32>
    %26 = arith.maximumf %24, %25 : vector<16x32xf32>
    %c0_17 = arith.constant 0 : index
    %c0_18 = arith.constant 0 : index
    %27 = vector.load %arg9[%c0_17, %c0_18] : memref<16x32xf32, #tpu.memory_space<vmem>>, vector<16x32xf32>
    %28 = arith.addf %26, %27 : vector<16x32xf32>
    %29 = tpu.iota {dimensions = array<i32: 1>} : vector<16x16xi32>
    %30 = tpu.iota {dimensions = array<i32: 0>} : vector<16x16xi32>
    %31 = vector.broadcast %3 : i32 to vector<16x16xi32>
    %32 = arith.cmpi sge, %29, %31 : vector<16x16xi32>
    %33 = arith.cmpi sgt, %29, %30 : vector<16x16xi32>
    %34 = arith.ori %32, %33 : vector<16x16xi1>
    %35 = tpu.iota {dimensions = array<i32: 1>} : vector<16x12xi32>
    %36 = vector.broadcast %1 : i32 to vector<16x12xi32>
    %37 = arith.cmpi sge, %35, %36 : vector<16x12xi32>
    %38 = tpu.iota {dimensions = array<i32: 0>} : vector<16x1xi32>
    %39 = vector.broadcast %3 : i32 to vector<16x1xi32>
    %40 = arith.cmpi sge, %38, %39 : vector<16x1xi32>
    %c0_19 = arith.constant 0 : index
    %c0_20 = arith.constant 0 : index
    %c0_21 = arith.constant 0 : index
    %41 = vector.load %arg10[%c0_19, %c0_20, %c0_21] : memref<2x1x32xf32, #tpu.memory_space<vmem>>, vector<1x1x32xf32>
    %42 = vector.shape_cast %41 : vector<1x1x32xf32> to vector<1x32xf32>
    %c0_22 = arith.constant 0 : index
    %c0_23 = arith.constant 0 : index
    %c0_24 = arith.constant 0 : index
    %43 = vector.load %arg11[%c0_22, %c0_23, %c0_24] : memref<2x1x32xf32, #tpu.memory_space<vmem>>, vector<1x1x32xf32>
    %44 = vector.shape_cast %43 : vector<1x1x32xf32> to vector<1x32xf32>
    %cst_25 = arith.constant dense<0.000000e+00> : vector<16xf32>
    %45 = vector.multi_reduction <add>, %28, %cst_25 [1] : vector<16x32xf32> to vector<16xf32>
    %46 = vector.shape_cast %45 : vector<16xf32> to vector<16x1xf32>
    %cst_26 = arith.constant 3.200000e+01 : f32
    %47 = vector.broadcast %cst_26 : f32 to vector<16x1xf32>
    %48 = arith.divf %46, %47 : vector<16x1xf32>
    %49 = vector.broadcast %48 : vector<16x1xf32> to vector<16x32xf32>
    %50 = arith.subf %28, %49 : vector<16x32xf32>
    %51 = arith.mulf %50, %50 : vector<16x32xf32>
    %cst_27 = arith.constant dense<0.000000e+00> : vector<16xf32>
    %52 = vector.multi_reduction <add>, %51, %cst_27 [1] : vector<16x32xf32> to vector<16xf32>
    %53 = vector.shape_cast %52 : vector<16xf32> to vector<16x1xf32>
    %cst_28 = arith.constant 3.200000e+01 : f32
    %54 = vector.broadcast %cst_28 : f32 to vector<16x1xf32>
    %55 = arith.divf %53, %54 : vector<16x1xf32>
    %cst_29 = arith.constant 9.99999974E-6 : f32
    %56 = vector.broadcast %cst_29 : f32 to vector<16x1xf32>
    %57 = arith.addf %55, %56 : vector<16x1xf32>
    %58 = math.rsqrt %57 : vector<16x1xf32>
    %59 = vector.broadcast %58 : vector<16x1xf32> to vector<16x32xf32>
    %60 = arith.mulf %50, %59 : vector<16x32xf32>
    %61 = vector.broadcast %42 : vector<1x32xf32> to vector<16x32xf32>
    %62 = arith.mulf %60, %61 : vector<16x32xf32>
    %63 = vector.broadcast %44 : vector<1x32xf32> to vector<16x32xf32>
    %64 = arith.addf %62, %63 : vector<16x32xf32>
    %65 = arith.truncf %64 : vector<16x32xf32> to vector<16x32xbf16>
    %c0_30 = arith.constant 0 : index
    %c0_31 = arith.constant 0 : index
    %c0_32 = arith.constant 0 : index
    %66 = vector.load %arg12[%c0_30, %c0_31, %c0_32] : memref<2x32x96xbf16, #tpu.memory_space<vmem>>, vector<1x32x96xbf16>
    %67 = vector.shape_cast %66 : vector<1x32x96xbf16> to vector<32x96xbf16>
    %cst_33 = arith.constant dense<0.000000e+00> : vector<16x96xf32>
    %68 = tpu.matmul %65, %67, %cst_33 {dimension_numbers = #tpu.dot_dimension_numbers<[1], [0], [0], [1], [0, 0, 1, 1], [], []>} : vector<16x32xbf16>, vector<32x96xbf16>, vector<16x96xf32> -> vector<16x96xf32>
    %c0_34 = arith.constant 0 : index
    %c0_35 = arith.constant 0 : index
    %c0_36 = arith.constant 0 : index
    %69 = vector.load %arg13[%c0_34, %c0_35, %c0_36] : memref<2x1x96xf32, #tpu.memory_space<vmem>>, vector<1x1x96xf32>
    %70 = vector.shape_cast %69 : vector<1x1x96xf32> to vector<1x96xf32>
    %71 = vector.broadcast %70 : vector<1x96xf32> to vector<16x96xf32>
    %72 = arith.addf %68, %71 : vector<16x96xf32>
    %73 = vector.extract_strided_slice %72 {offsets = [0, 0], sizes = [16, 16], strides = [1, 1]} : vector<16x96xf32> to vector<16x16xf32>
    %74 = arith.truncf %73 : vector<16x16xf32> to vector<16x16xbf16>
    %75 = vector.extract_strided_slice %72 {offsets = [0, 32], sizes = [16, 16], strides = [1, 1]} : vector<16x96xf32> to vector<16x16xf32>
    %76 = arith.truncf %75 : vector<16x16xf32> to vector<16x16xbf16>
    %77 = vector.extract_strided_slice %72 {offsets = [0, 64], sizes = [16, 16], strides = [1, 1]} : vector<16x96xf32> to vector<16x16xf32>
    %78 = arith.truncf %77 : vector<16x16xf32> to vector<16x16xbf16>
    %cst_37 = arith.constant dense<0.000000e+00> : vector<16x16xf32>
    %79 = tpu.matmul %74, %76, %cst_37 {dimension_numbers = #tpu.dot_dimension_numbers<[1], [1], [0], [0], [0, 0, 1, 0], [], []>} : vector<16x16xbf16>, vector<16x16xbf16>, vector<16x16xf32> -> vector<16x16xf32>
    %cst_38 = arith.constant 2.500000e-01 : f32
    %80 = vector.broadcast %cst_38 : f32 to vector<16x16xf32>
    %81 = arith.mulf %79, %80 : vector<16x16xf32>
    %cst_39 = arith.constant -1.000000e+30 : f32
    %82 = vector.broadcast %cst_39 : f32 to vector<16x16xf32>
    %83 = arith.select %34, %82, %81 : vector<16x16xi1>, vector<16x16xf32>
    %cst_40 = arith.constant dense<0xFF800000> : vector<16xf32>
    %84 = vector.multi_reduction <maximumf>, %83, %cst_40 [1] : vector<16x16xf32> to vector<16xf32>
    %85 = vector.shape_cast %84 : vector<16xf32> to vector<16x1xf32>
    %86 = vector.broadcast %85 : vector<16x1xf32> to vector<16x16xf32>
    %87 = arith.subf %83, %86 : vector<16x16xf32>
    %88 = math.exp %87 : vector<16x16xf32>
    %cst_41 = arith.constant dense<0.000000e+00> : vector<16xf32>
    %89 = vector.multi_reduction <add>, %88, %cst_41 [1] : vector<16x16xf32> to vector<16xf32>
    %90 = vector.shape_cast %89 : vector<16xf32> to vector<16x1xf32>
    %91 = tpu.reciprocal %90 {approx = true} : vector<16x1xf32> -> vector<16x1xf32>
    %92 = vector.broadcast %91 : vector<16x1xf32> to vector<16x16xf32>
    %93 = arith.mulf %88, %92 : vector<16x16xf32>
    %cst_42 = arith.constant 0.000000e+00 : f32
    %94 = vector.shape_cast %40 : vector<16x1xi1> to vector<16x1xi1>
    %95 = vector.broadcast %94 : vector<16x1xi1> to vector<16x16xi1>
    %96 = vector.broadcast %cst_42 : f32 to vector<16x16xf32>
    %97 = arith.select %95, %96, %93 : vector<16x16xi1>, vector<16x16xf32>
    %98 = arith.truncf %97 : vector<16x16xf32> to vector<16x16xbf16>
    %cst_43 = arith.constant dense<0.000000e+00> : vector<16x16xf32>
    %99 = tpu.matmul %98, %78, %cst_43 {dimension_numbers = #tpu.dot_dimension_numbers<[1], [0], [0], [1], [0, 0, 1, 1], [], []>} : vector<16x16xbf16>, vector<16x16xbf16>, vector<16x16xf32> -> vector<16x16xf32>
    %100 = vector.extract_strided_slice %72 {offsets = [0, 16], sizes = [16, 16], strides = [1, 1]} : vector<16x96xf32> to vector<16x16xf32>
    %101 = arith.truncf %100 : vector<16x16xf32> to vector<16x16xbf16>
    %102 = vector.extract_strided_slice %72 {offsets = [0, 48], sizes = [16, 16], strides = [1, 1]} : vector<16x96xf32> to vector<16x16xf32>
    %103 = arith.truncf %102 : vector<16x16xf32> to vector<16x16xbf16>
    %104 = vector.extract_strided_slice %72 {offsets = [0, 80], sizes = [16, 16], strides = [1, 1]} : vector<16x96xf32> to vector<16x16xf32>
    %105 = arith.truncf %104 : vector<16x16xf32> to vector<16x16xbf16>
    %cst_44 = arith.constant dense<0.000000e+00> : vector<16x16xf32>
    %106 = tpu.matmul %101, %103, %cst_44 {dimension_numbers = #tpu.dot_dimension_numbers<[1], [1], [0], [0], [0, 0, 1, 0], [], []>} : vector<16x16xbf16>, vector<16x16xbf16>, vector<16x16xf32> -> vector<16x16xf32>
    %cst_45 = arith.constant 2.500000e-01 : f32
    %107 = vector.broadcast %cst_45 : f32 to vector<16x16xf32>
    %108 = arith.mulf %106, %107 : vector<16x16xf32>
    %cst_46 = arith.constant -1.000000e+30 : f32
    %109 = vector.broadcast %cst_46 : f32 to vector<16x16xf32>
    %110 = arith.select %34, %109, %108 : vector<16x16xi1>, vector<16x16xf32>
    %cst_47 = arith.constant dense<0xFF800000> : vector<16xf32>
    %111 = vector.multi_reduction <maximumf>, %110, %cst_47 [1] : vector<16x16xf32> to vector<16xf32>
    %112 = vector.shape_cast %111 : vector<16xf32> to vector<16x1xf32>
    %113 = vector.broadcast %112 : vector<16x1xf32> to vector<16x16xf32>
    %114 = arith.subf %110, %113 : vector<16x16xf32>
    %115 = math.exp %114 : vector<16x16xf32>
    %cst_48 = arith.constant dense<0.000000e+00> : vector<16xf32>
    %116 = vector.multi_reduction <add>, %115, %cst_48 [1] : vector<16x16xf32> to vector<16xf32>
    %117 = vector.shape_cast %116 : vector<16xf32> to vector<16x1xf32>
    %118 = tpu.reciprocal %117 {approx = true} : vector<16x1xf32> -> vector<16x1xf32>
    %119 = vector.broadcast %118 : vector<16x1xf32> to vector<16x16xf32>
    %120 = arith.mulf %115, %119 : vector<16x16xf32>
    %cst_49 = arith.constant 0.000000e+00 : f32
    %121 = vector.shape_cast %40 : vector<16x1xi1> to vector<16x1xi1>
    %122 = vector.broadcast %121 : vector<16x1xi1> to vector<16x16xi1>
    %123 = vector.broadcast %cst_49 : f32 to vector<16x16xf32>
    %124 = arith.select %122, %123, %120 : vector<16x16xi1>, vector<16x16xf32>
    %125 = arith.truncf %124 : vector<16x16xf32> to vector<16x16xbf16>
    %cst_50 = arith.constant dense<0.000000e+00> : vector<16x16xf32>
    %126 = tpu.matmul %125, %105, %cst_50 {dimension_numbers = #tpu.dot_dimension_numbers<[1], [0], [0], [1], [0, 0, 1, 1], [], []>} : vector<16x16xbf16>, vector<16x16xbf16>, vector<16x16xf32> -> vector<16x16xf32>
    %127 = tpu.concatenate %99, %126 in 1 : vector<16x16xf32>, vector<16x16xf32> -> vector<16x32xf32>
    %128 = arith.truncf %127 : vector<16x32xf32> to vector<16x32xbf16>
    %c0_51 = arith.constant 0 : index
    %c0_52 = arith.constant 0 : index
    %c0_53 = arith.constant 0 : index
    %129 = vector.load %arg14[%c0_51, %c0_52, %c0_53] : memref<2x32x32xbf16, #tpu.memory_space<vmem>>, vector<1x32x32xbf16>
    %130 = vector.shape_cast %129 : vector<1x32x32xbf16> to vector<32x32xbf16>
    %cst_54 = arith.constant dense<0.000000e+00> : vector<16x32xf32>
    %131 = tpu.matmul %128, %130, %cst_54 {dimension_numbers = #tpu.dot_dimension_numbers<[1], [0], [0], [1], [0, 0, 1, 1], [], []>} : vector<16x32xbf16>, vector<32x32xbf16>, vector<16x32xf32> -> vector<16x32xf32>
    %132 = arith.addf %28, %131 : vector<16x32xf32>
    %c0_55 = arith.constant 0 : index
    %c0_56 = arith.constant 0 : index
    %c0_57 = arith.constant 0 : index
    %133 = vector.load %arg15[%c0_55, %c0_56, %c0_57] : memref<2x1x32xf32, #tpu.memory_space<vmem>>, vector<1x1x32xf32>
    %134 = vector.shape_cast %133 : vector<1x1x32xf32> to vector<1x32xf32>
    %135 = vector.broadcast %134 : vector<1x32xf32> to vector<16x32xf32>
    %136 = arith.addf %132, %135 : vector<16x32xf32>
    %c0_58 = arith.constant 0 : index
    %c0_59 = arith.constant 0 : index
    %c0_60 = arith.constant 0 : index
    %137 = vector.load %arg16[%c0_58, %c0_59, %c0_60] : memref<2x1x32xf32, #tpu.memory_space<vmem>>, vector<1x1x32xf32>
    %138 = vector.shape_cast %137 : vector<1x1x32xf32> to vector<1x32xf32>
    %c0_61 = arith.constant 0 : index
    %c0_62 = arith.constant 0 : index
    %c0_63 = arith.constant 0 : index
    %139 = vector.load %arg17[%c0_61, %c0_62, %c0_63] : memref<2x1x32xf32, #tpu.memory_space<vmem>>, vector<1x1x32xf32>
    %140 = vector.shape_cast %139 : vector<1x1x32xf32> to vector<1x32xf32>
    %cst_64 = arith.constant dense<0.000000e+00> : vector<16xf32>
    %141 = vector.multi_reduction <add>, %136, %cst_64 [1] : vector<16x32xf32> to vector<16xf32>
    %142 = vector.shape_cast %141 : vector<16xf32> to vector<16x1xf32>
    %cst_65 = arith.constant 3.200000e+01 : f32
    %143 = vector.broadcast %cst_65 : f32 to vector<16x1xf32>
    %144 = arith.divf %142, %143 : vector<16x1xf32>
    %145 = vector.broadcast %144 : vector<16x1xf32> to vector<16x32xf32>
    %146 = arith.subf %136, %145 : vector<16x32xf32>
    %147 = arith.mulf %146, %146 : vector<16x32xf32>
    %cst_66 = arith.constant dense<0.000000e+00> : vector<16xf32>
    %148 = vector.multi_reduction <add>, %147, %cst_66 [1] : vector<16x32xf32> to vector<16xf32>
    %149 = vector.shape_cast %148 : vector<16xf32> to vector<16x1xf32>
    %cst_67 = arith.constant 3.200000e+01 : f32
    %150 = vector.broadcast %cst_67 : f32 to vector<16x1xf32>
    %151 = arith.divf %149, %150 : vector<16x1xf32>
    %cst_68 = arith.constant 9.99999974E-6 : f32
    %152 = vector.broadcast %cst_68 : f32 to vector<16x1xf32>
    %153 = arith.addf %151, %152 : vector<16x1xf32>
    %154 = math.rsqrt %153 : vector<16x1xf32>
    %155 = vector.broadcast %154 : vector<16x1xf32> to vector<16x32xf32>
    %156 = arith.mulf %146, %155 : vector<16x32xf32>
    %157 = vector.broadcast %138 : vector<1x32xf32> to vector<16x32xf32>
    %158 = arith.mulf %156, %157 : vector<16x32xf32>
    %159 = vector.broadcast %140 : vector<1x32xf32> to vector<16x32xf32>
    %160 = arith.addf %158, %159 : vector<16x32xf32>
    %161 = arith.truncf %160 : vector<16x32xf32> to vector<16x32xbf16>
    %c0_69 = arith.constant 0 : index
    %c0_70 = arith.constant 0 : index
    %c0_71 = arith.constant 0 : index
    %162 = vector.load %arg18[%c0_69, %c0_70, %c0_71] : memref<2x32x32xbf16, #tpu.memory_space<vmem>>, vector<1x32x32xbf16>
    %163 = vector.shape_cast %162 : vector<1x32x32xbf16> to vector<32x32xbf16>
    %cst_72 = arith.constant dense<0.000000e+00> : vector<16x32xf32>
    %164 = tpu.matmul %161, %163, %cst_72 {dimension_numbers = #tpu.dot_dimension_numbers<[1], [0], [0], [1], [0, 0, 1, 1], [], []>} : vector<16x32xbf16>, vector<32x32xbf16>, vector<16x32xf32> -> vector<16x32xf32>
    %c0_73 = arith.constant 0 : index
    %c0_74 = arith.constant 0 : index
    %c0_75 = arith.constant 0 : index
    %165 = vector.load %arg19[%c0_73, %c0_74, %c0_75] : memref<2x1x32xf32, #tpu.memory_space<vmem>>, vector<1x1x32xf32>
    %166 = vector.shape_cast %165 : vector<1x1x32xf32> to vector<1x32xf32>
    %167 = vector.broadcast %166 : vector<1x32xf32> to vector<16x32xf32>
    %168 = arith.addf %164, %167 : vector<16x32xf32>
    %c0_76 = arith.constant 0 : index
    %c0_77 = arith.constant 0 : index
    %c0_78 = arith.constant 0 : index
    %169 = vector.load %arg20[%c0_76, %c0_77, %c0_78] : memref<2x32x64xbf16, #tpu.memory_space<vmem>>, vector<1x32x64xbf16>
    %170 = vector.shape_cast %169 : vector<1x32x64xbf16> to vector<32x64xbf16>
    %cst_79 = arith.constant dense<0.000000e+00> : vector<12x64xf32>
    %171 = tpu.matmul %7, %170, %cst_79 {dimension_numbers = #tpu.dot_dimension_numbers<[1], [0], [0], [1], [0, 0, 1, 1], [], []>} : vector<12x32xbf16>, vector<32x64xbf16>, vector<12x64xf32> -> vector<12x64xf32>
    %c0_80 = arith.constant 0 : index
    %c0_81 = arith.constant 0 : index
    %c0_82 = arith.constant 0 : index
    %172 = vector.load %arg21[%c0_80, %c0_81, %c0_82] : memref<2x1x64xf32, #tpu.memory_space<vmem>>, vector<1x1x64xf32>
    %173 = vector.shape_cast %172 : vector<1x1x64xf32> to vector<1x64xf32>
    %174 = vector.broadcast %173 : vector<1x64xf32> to vector<12x64xf32>
    %175 = arith.addf %171, %174 : vector<12x64xf32>
    %176 = vector.extract_strided_slice %168 {offsets = [0, 0], sizes = [16, 16], strides = [1, 1]} : vector<16x32xf32> to vector<16x16xf32>
    %177 = arith.truncf %176 : vector<16x16xf32> to vector<16x16xbf16>
    %178 = vector.extract_strided_slice %175 {offsets = [0, 0], sizes = [12, 16], strides = [1, 1]} : vector<12x64xf32> to vector<12x16xf32>
    %179 = arith.truncf %178 : vector<12x16xf32> to vector<12x16xbf16>
    %180 = vector.extract_strided_slice %175 {offsets = [0, 32], sizes = [12, 16], strides = [1, 1]} : vector<12x64xf32> to vector<12x16xf32>
    %181 = arith.truncf %180 : vector<12x16xf32> to vector<12x16xbf16>
    %cst_83 = arith.constant dense<0.000000e+00> : vector<16x12xf32>
    %182 = tpu.matmul %177, %179, %cst_83 {dimension_numbers = #tpu.dot_dimension_numbers<[1], [1], [0], [0], [0, 0, 1, 0], [], []>} : vector<16x16xbf16>, vector<12x16xbf16>, vector<16x12xf32> -> vector<16x12xf32>
    %cst_84 = arith.constant 2.500000e-01 : f32
    %183 = vector.broadcast %cst_84 : f32 to vector<16x12xf32>
    %184 = arith.mulf %182, %183 : vector<16x12xf32>
    %cst_85 = arith.constant -1.000000e+30 : f32
    %185 = vector.broadcast %cst_85 : f32 to vector<16x12xf32>
    %186 = arith.select %37, %185, %184 : vector<16x12xi1>, vector<16x12xf32>
    %cst_86 = arith.constant dense<0xFF800000> : vector<16xf32>
    %187 = vector.multi_reduction <maximumf>, %186, %cst_86 [1] : vector<16x12xf32> to vector<16xf32>
    %188 = vector.shape_cast %187 : vector<16xf32> to vector<16x1xf32>
    %189 = vector.broadcast %188 : vector<16x1xf32> to vector<16x12xf32>
    %190 = arith.subf %186, %189 : vector<16x12xf32>
    %191 = math.exp %190 : vector<16x12xf32>
    %cst_87 = arith.constant dense<0.000000e+00> : vector<16xf32>
    %192 = vector.multi_reduction <add>, %191, %cst_87 [1] : vector<16x12xf32> to vector<16xf32>
    %193 = vector.shape_cast %192 : vector<16xf32> to vector<16x1xf32>
    %194 = tpu.reciprocal %193 {approx = true} : vector<16x1xf32> -> vector<16x1xf32>
    %195 = vector.broadcast %194 : vector<16x1xf32> to vector<16x12xf32>
    %196 = arith.mulf %191, %195 : vector<16x12xf32>
    %cst_88 = arith.constant 0.000000e+00 : f32
    %197 = vector.shape_cast %40 : vector<16x1xi1> to vector<16x1xi1>
    %198 = vector.broadcast %197 : vector<16x1xi1> to vector<16x12xi1>
    %199 = vector.broadcast %cst_88 : f32 to vector<16x12xf32>
    %200 = arith.select %198, %199, %196 : vector<16x12xi1>, vector<16x12xf32>
    %201 = arith.truncf %200 : vector<16x12xf32> to vector<16x12xbf16>
    %cst_89 = arith.constant dense<0.000000e+00> : vector<16x16xf32>
    %202 = tpu.matmul %201, %181, %cst_89 {dimension_numbers = #tpu.dot_dimension_numbers<[1], [0], [0], [1], [0, 0, 1, 1], [], []>} : vector<16x12xbf16>, vector<12x16xbf16>, vector<16x16xf32> -> vector<16x16xf32>
    %203 = vector.extract_strided_slice %168 {offsets = [0, 16], sizes = [16, 16], strides = [1, 1]} : vector<16x32xf32> to vector<16x16xf32>
    %204 = arith.truncf %203 : vector<16x16xf32> to vector<16x16xbf16>
    %205 = vector.extract_strided_slice %175 {offsets = [0, 16], sizes = [12, 16], strides = [1, 1]} : vector<12x64xf32> to vector<12x16xf32>
    %206 = arith.truncf %205 : vector<12x16xf32> to vector<12x16xbf16>
    %207 = vector.extract_strided_slice %175 {offsets = [0, 48], sizes = [12, 16], strides = [1, 1]} : vector<12x64xf32> to vector<12x16xf32>
    %208 = arith.truncf %207 : vector<12x16xf32> to vector<12x16xbf16>
    %cst_90 = arith.constant dense<0.000000e+00> : vector<16x12xf32>
    %209 = tpu.matmul %204, %206, %cst_90 {dimension_numbers = #tpu.dot_dimension_numbers<[1], [1], [0], [0], [0, 0, 1, 0], [], []>} : vector<16x16xbf16>, vector<12x16xbf16>, vector<16x12xf32> -> vector<16x12xf32>
    %cst_91 = arith.constant 2.500000e-01 : f32
    %210 = vector.broadcast %cst_91 : f32 to vector<16x12xf32>
    %211 = arith.mulf %209, %210 : vector<16x12xf32>
    %cst_92 = arith.constant -1.000000e+30 : f32
    %212 = vector.broadcast %cst_92 : f32 to vector<16x12xf32>
    %213 = arith.select %37, %212, %211 : vector<16x12xi1>, vector<16x12xf32>
    %cst_93 = arith.constant dense<0xFF800000> : vector<16xf32>
    %214 = vector.multi_reduction <maximumf>, %213, %cst_93 [1] : vector<16x12xf32> to vector<16xf32>
    %215 = vector.shape_cast %214 : vector<16xf32> to vector<16x1xf32>
    %216 = vector.broadcast %215 : vector<16x1xf32> to vector<16x12xf32>
    %217 = arith.subf %213, %216 : vector<16x12xf32>
    %218 = math.exp %217 : vector<16x12xf32>
    %cst_94 = arith.constant dense<0.000000e+00> : vector<16xf32>
    %219 = vector.multi_reduction <add>, %218, %cst_94 [1] : vector<16x12xf32> to vector<16xf32>
    %220 = vector.shape_cast %219 : vector<16xf32> to vector<16x1xf32>
    %221 = tpu.reciprocal %220 {approx = true} : vector<16x1xf32> -> vector<16x1xf32>
    %222 = vector.broadcast %221 : vector<16x1xf32> to vector<16x12xf32>
    %223 = arith.mulf %218, %222 : vector<16x12xf32>
    %cst_95 = arith.constant 0.000000e+00 : f32
    %224 = vector.shape_cast %40 : vector<16x1xi1> to vector<16x1xi1>
    %225 = vector.broadcast %224 : vector<16x1xi1> to vector<16x12xi1>
    %226 = vector.broadcast %cst_95 : f32 to vector<16x12xf32>
    %227 = arith.select %225, %226, %223 : vector<16x12xi1>, vector<16x12xf32>
    %228 = arith.truncf %227 : vector<16x12xf32> to vector<16x12xbf16>
    %cst_96 = arith.constant dense<0.000000e+00> : vector<16x16xf32>
    %229 = tpu.matmul %228, %208, %cst_96 {dimension_numbers = #tpu.dot_dimension_numbers<[1], [0], [0], [1], [0, 0, 1, 1], [], []>} : vector<16x12xbf16>, vector<12x16xbf16>, vector<16x16xf32> -> vector<16x16xf32>
    %230 = tpu.concatenate %202, %229 in 1 : vector<16x16xf32>, vector<16x16xf32> -> vector<16x32xf32>
    %231 = arith.truncf %230 : vector<16x32xf32> to vector<16x32xbf16>
    %c0_97 = arith.constant 0 : index
    %c0_98 = arith.constant 0 : index
    %c0_99 = arith.constant 0 : index
    %232 = vector.load %arg22[%c0_97, %c0_98, %c0_99] : memref<2x32x32xbf16, #tpu.memory_space<vmem>>, vector<1x32x32xbf16>
    %233 = vector.shape_cast %232 : vector<1x32x32xbf16> to vector<32x32xbf16>
    %cst_100 = arith.constant dense<0.000000e+00> : vector<16x32xf32>
    %234 = tpu.matmul %231, %233, %cst_100 {dimension_numbers = #tpu.dot_dimension_numbers<[1], [0], [0], [1], [0, 0, 1, 1], [], []>} : vector<16x32xbf16>, vector<32x32xbf16>, vector<16x32xf32> -> vector<16x32xf32>
    %235 = arith.addf %136, %234 : vector<16x32xf32>
    %c0_101 = arith.constant 0 : index
    %c0_102 = arith.constant 0 : index
    %c0_103 = arith.constant 0 : index
    %236 = vector.load %arg23[%c0_101, %c0_102, %c0_103] : memref<2x1x32xf32, #tpu.memory_space<vmem>>, vector<1x1x32xf32>
    %237 = vector.shape_cast %236 : vector<1x1x32xf32> to vector<1x32xf32>
    %238 = vector.broadcast %237 : vector<1x32xf32> to vector<16x32xf32>
    %239 = arith.addf %235, %238 : vector<16x32xf32>
    %c0_104 = arith.constant 0 : index
    %c0_105 = arith.constant 0 : index
    %c0_106 = arith.constant 0 : index
    %240 = vector.load %arg24[%c0_104, %c0_105, %c0_106] : memref<2x1x32xf32, #tpu.memory_space<vmem>>, vector<1x1x32xf32>
    %241 = vector.shape_cast %240 : vector<1x1x32xf32> to vector<1x32xf32>
    %c0_107 = arith.constant 0 : index
    %c0_108 = arith.constant 0 : index
    %c0_109 = arith.constant 0 : index
    %242 = vector.load %arg25[%c0_107, %c0_108, %c0_109] : memref<2x1x32xf32, #tpu.memory_space<vmem>>, vector<1x1x32xf32>
    %243 = vector.shape_cast %242 : vector<1x1x32xf32> to vector<1x32xf32>
    %cst_110 = arith.constant dense<0.000000e+00> : vector<16xf32>
    %244 = vector.multi_reduction <add>, %239, %cst_110 [1] : vector<16x32xf32> to vector<16xf32>
    %245 = vector.shape_cast %244 : vector<16xf32> to vector<16x1xf32>
    %cst_111 = arith.constant 3.200000e+01 : f32
    %246 = vector.broadcast %cst_111 : f32 to vector<16x1xf32>
    %247 = arith.divf %245, %246 : vector<16x1xf32>
    %248 = vector.broadcast %247 : vector<16x1xf32> to vector<16x32xf32>
    %249 = arith.subf %239, %248 : vector<16x32xf32>
    %250 = arith.mulf %249, %249 : vector<16x32xf32>
    %cst_112 = arith.constant dense<0.000000e+00> : vector<16xf32>
    %251 = vector.multi_reduction <add>, %250, %cst_112 [1] : vector<16x32xf32> to vector<16xf32>
    %252 = vector.shape_cast %251 : vector<16xf32> to vector<16x1xf32>
    %cst_113 = arith.constant 3.200000e+01 : f32
    %253 = vector.broadcast %cst_113 : f32 to vector<16x1xf32>
    %254 = arith.divf %252, %253 : vector<16x1xf32>
    %cst_114 = arith.constant 9.99999974E-6 : f32
    %255 = vector.broadcast %cst_114 : f32 to vector<16x1xf32>
    %256 = arith.addf %254, %255 : vector<16x1xf32>
    %257 = math.rsqrt %256 : vector<16x1xf32>
    %258 = vector.broadcast %257 : vector<16x1xf32> to vector<16x32xf32>
    %259 = arith.mulf %249, %258 : vector<16x32xf32>
    %260 = vector.broadcast %241 : vector<1x32xf32> to vector<16x32xf32>
    %261 = arith.mulf %259, %260 : vector<16x32xf32>
    %262 = vector.broadcast %243 : vector<1x32xf32> to vector<16x32xf32>
    %263 = arith.addf %261, %262 : vector<16x32xf32>
    %264 = arith.truncf %263 : vector<16x32xf32> to vector<16x32xbf16>
    %c0_115 = arith.constant 0 : index
    %c0_116 = arith.constant 0 : index
    %c0_117 = arith.constant 0 : index
    %265 = vector.load %arg26[%c0_115, %c0_116, %c0_117] : memref<2x32x64xbf16, #tpu.memory_space<vmem>>, vector<1x32x64xbf16>
    %266 = vector.shape_cast %265 : vector<1x32x64xbf16> to vector<32x64xbf16>
    %cst_118 = arith.constant dense<0.000000e+00> : vector<16x64xf32>
    %267 = tpu.matmul %264, %266, %cst_118 {dimension_numbers = #tpu.dot_dimension_numbers<[1], [0], [0], [1], [0, 0, 1, 1], [], []>} : vector<16x32xbf16>, vector<32x64xbf16>, vector<16x64xf32> -> vector<16x64xf32>
    %c0_119 = arith.constant 0 : index
    %c0_120 = arith.constant 0 : index
    %c0_121 = arith.constant 0 : index
    %268 = vector.load %arg27[%c0_119, %c0_120, %c0_121] : memref<2x1x64xf32, #tpu.memory_space<vmem>>, vector<1x1x64xf32>
    %269 = vector.shape_cast %268 : vector<1x1x64xf32> to vector<1x64xf32>
    %270 = vector.broadcast %269 : vector<1x64xf32> to vector<16x64xf32>
    %271 = arith.addf %267, %270 : vector<16x64xf32>
    %cst_122 = arith.constant 0.000000e+00 : f32
    %272 = vector.broadcast %cst_122 : f32 to vector<16x64xf32>
    %273 = arith.maximumf %271, %272 : vector<16x64xf32>
    %274 = arith.truncf %273 : vector<16x64xf32> to vector<16x64xbf16>
    %c0_123 = arith.constant 0 : index
    %c0_124 = arith.constant 0 : index
    %c0_125 = arith.constant 0 : index
    %275 = vector.load %arg28[%c0_123, %c0_124, %c0_125] : memref<2x64x32xbf16, #tpu.memory_space<vmem>>, vector<1x64x32xbf16>
    %276 = vector.shape_cast %275 : vector<1x64x32xbf16> to vector<64x32xbf16>
    %cst_126 = arith.constant dense<0.000000e+00> : vector<16x32xf32>
    %277 = tpu.matmul %274, %276, %cst_126 {dimension_numbers = #tpu.dot_dimension_numbers<[1], [0], [0], [1], [0, 0, 1, 1], [], []>} : vector<16x64xbf16>, vector<64x32xbf16>, vector<16x32xf32> -> vector<16x32xf32>
    %278 = arith.addf %239, %277 : vector<16x32xf32>
    %c0_127 = arith.constant 0 : index
    %c0_128 = arith.constant 0 : index
    %c0_129 = arith.constant 0 : index
    %279 = vector.load %arg29[%c0_127, %c0_128, %c0_129] : memref<2x1x32xf32, #tpu.memory_space<vmem>>, vector<1x1x32xf32>
    %280 = vector.shape_cast %279 : vector<1x1x32xf32> to vector<1x32xf32>
    %281 = vector.broadcast %280 : vector<1x32xf32> to vector<16x32xf32>
    %282 = arith.addf %278, %281 : vector<16x32xf32>
    %c1 = arith.constant 1 : index
    %c0_130 = arith.constant 0 : index
    %c0_131 = arith.constant 0 : index
    %283 = vector.load %arg10[%c1, %c0_130, %c0_131] : memref<2x1x32xf32, #tpu.memory_space<vmem>>, vector<1x1x32xf32>
    %284 = vector.shape_cast %283 : vector<1x1x32xf32> to vector<1x32xf32>
    %c1_132 = arith.constant 1 : index
    %c0_133 = arith.constant 0 : index
    %c0_134 = arith.constant 0 : index
    %285 = vector.load %arg11[%c1_132, %c0_133, %c0_134] : memref<2x1x32xf32, #tpu.memory_space<vmem>>, vector<1x1x32xf32>
    %286 = vector.shape_cast %285 : vector<1x1x32xf32> to vector<1x32xf32>
    %cst_135 = arith.constant dense<0.000000e+00> : vector<16xf32>
    %287 = vector.multi_reduction <add>, %282, %cst_135 [1] : vector<16x32xf32> to vector<16xf32>
    %288 = vector.shape_cast %287 : vector<16xf32> to vector<16x1xf32>
    %cst_136 = arith.constant 3.200000e+01 : f32
    %289 = vector.broadcast %cst_136 : f32 to vector<16x1xf32>
    %290 = arith.divf %288, %289 : vector<16x1xf32>
    %291 = vector.broadcast %290 : vector<16x1xf32> to vector<16x32xf32>
    %292 = arith.subf %282, %291 : vector<16x32xf32>
    %293 = arith.mulf %292, %292 : vector<16x32xf32>
    %cst_137 = arith.constant dense<0.000000e+00> : vector<16xf32>
    %294 = vector.multi_reduction <add>, %293, %cst_137 [1] : vector<16x32xf32> to vector<16xf32>
    %295 = vector.shape_cast %294 : vector<16xf32> to vector<16x1xf32>
    %cst_138 = arith.constant 3.200000e+01 : f32
    %296 = vector.broadcast %cst_138 : f32 to vector<16x1xf32>
    %297 = arith.divf %295, %296 : vector<16x1xf32>
    %cst_139 = arith.constant 9.99999974E-6 : f32
    %298 = vector.broadcast %cst_139 : f32 to vector<16x1xf32>
    %299 = arith.addf %297, %298 : vector<16x1xf32>
    %300 = math.rsqrt %299 : vector<16x1xf32>
    %301 = vector.broadcast %300 : vector<16x1xf32> to vector<16x32xf32>
    %302 = arith.mulf %292, %301 : vector<16x32xf32>
    %303 = vector.broadcast %284 : vector<1x32xf32> to vector<16x32xf32>
    %304 = arith.mulf %302, %303 : vector<16x32xf32>
    %305 = vector.broadcast %286 : vector<1x32xf32> to vector<16x32xf32>
    %306 = arith.addf %304, %305 : vector<16x32xf32>
    %307 = arith.truncf %306 : vector<16x32xf32> to vector<16x32xbf16>
    %c1_140 = arith.constant 1 : index
    %c0_141 = arith.constant 0 : index
    %c0_142 = arith.constant 0 : index
    %308 = vector.load %arg12[%c1_140, %c0_141, %c0_142] : memref<2x32x96xbf16, #tpu.memory_space<vmem>>, vector<1x32x96xbf16>
    %309 = vector.shape_cast %308 : vector<1x32x96xbf16> to vector<32x96xbf16>
    %cst_143 = arith.constant dense<0.000000e+00> : vector<16x96xf32>
    %310 = tpu.matmul %307, %309, %cst_143 {dimension_numbers = #tpu.dot_dimension_numbers<[1], [0], [0], [1], [0, 0, 1, 1], [], []>} : vector<16x32xbf16>, vector<32x96xbf16>, vector<16x96xf32> -> vector<16x96xf32>
    %c1_144 = arith.constant 1 : index
    %c0_145 = arith.constant 0 : index
    %c0_146 = arith.constant 0 : index
    %311 = vector.load %arg13[%c1_144, %c0_145, %c0_146] : memref<2x1x96xf32, #tpu.memory_space<vmem>>, vector<1x1x96xf32>
    %312 = vector.shape_cast %311 : vector<1x1x96xf32> to vector<1x96xf32>
    %313 = vector.broadcast %312 : vector<1x96xf32> to vector<16x96xf32>
    %314 = arith.addf %310, %313 : vector<16x96xf32>
    %315 = vector.extract_strided_slice %314 {offsets = [0, 0], sizes = [16, 16], strides = [1, 1]} : vector<16x96xf32> to vector<16x16xf32>
    %316 = arith.truncf %315 : vector<16x16xf32> to vector<16x16xbf16>
    %317 = vector.extract_strided_slice %314 {offsets = [0, 32], sizes = [16, 16], strides = [1, 1]} : vector<16x96xf32> to vector<16x16xf32>
    %318 = arith.truncf %317 : vector<16x16xf32> to vector<16x16xbf16>
    %319 = vector.extract_strided_slice %314 {offsets = [0, 64], sizes = [16, 16], strides = [1, 1]} : vector<16x96xf32> to vector<16x16xf32>
    %320 = arith.truncf %319 : vector<16x16xf32> to vector<16x16xbf16>
    %cst_147 = arith.constant dense<0.000000e+00> : vector<16x16xf32>
    %321 = tpu.matmul %316, %318, %cst_147 {dimension_numbers = #tpu.dot_dimension_numbers<[1], [1], [0], [0], [0, 0, 1, 0], [], []>} : vector<16x16xbf16>, vector<16x16xbf16>, vector<16x16xf32> -> vector<16x16xf32>
    %cst_148 = arith.constant 2.500000e-01 : f32
    %322 = vector.broadcast %cst_148 : f32 to vector<16x16xf32>
    %323 = arith.mulf %321, %322 : vector<16x16xf32>
    %cst_149 = arith.constant -1.000000e+30 : f32
    %324 = vector.broadcast %cst_149 : f32 to vector<16x16xf32>
    %325 = arith.select %34, %324, %323 : vector<16x16xi1>, vector<16x16xf32>
    %cst_150 = arith.constant dense<0xFF800000> : vector<16xf32>
    %326 = vector.multi_reduction <maximumf>, %325, %cst_150 [1] : vector<16x16xf32> to vector<16xf32>
    %327 = vector.shape_cast %326 : vector<16xf32> to vector<16x1xf32>
    %328 = vector.broadcast %327 : vector<16x1xf32> to vector<16x16xf32>
    %329 = arith.subf %325, %328 : vector<16x16xf32>
    %330 = math.exp %329 : vector<16x16xf32>
    %cst_151 = arith.constant dense<0.000000e+00> : vector<16xf32>
    %331 = vector.multi_reduction <add>, %330, %cst_151 [1] : vector<16x16xf32> to vector<16xf32>
    %332 = vector.shape_cast %331 : vector<16xf32> to vector<16x1xf32>
    %333 = tpu.reciprocal %332 {approx = true} : vector<16x1xf32> -> vector<16x1xf32>
    %334 = vector.broadcast %333 : vector<16x1xf32> to vector<16x16xf32>
    %335 = arith.mulf %330, %334 : vector<16x16xf32>
    %cst_152 = arith.constant 0.000000e+00 : f32
    %336 = vector.shape_cast %40 : vector<16x1xi1> to vector<16x1xi1>
    %337 = vector.broadcast %336 : vector<16x1xi1> to vector<16x16xi1>
    %338 = vector.broadcast %cst_152 : f32 to vector<16x16xf32>
    %339 = arith.select %337, %338, %335 : vector<16x16xi1>, vector<16x16xf32>
    %340 = arith.truncf %339 : vector<16x16xf32> to vector<16x16xbf16>
    %cst_153 = arith.constant dense<0.000000e+00> : vector<16x16xf32>
    %341 = tpu.matmul %340, %320, %cst_153 {dimension_numbers = #tpu.dot_dimension_numbers<[1], [0], [0], [1], [0, 0, 1, 1], [], []>} : vector<16x16xbf16>, vector<16x16xbf16>, vector<16x16xf32> -> vector<16x16xf32>
    %342 = vector.extract_strided_slice %314 {offsets = [0, 16], sizes = [16, 16], strides = [1, 1]} : vector<16x96xf32> to vector<16x16xf32>
    %343 = arith.truncf %342 : vector<16x16xf32> to vector<16x16xbf16>
    %344 = vector.extract_strided_slice %314 {offsets = [0, 48], sizes = [16, 16], strides = [1, 1]} : vector<16x96xf32> to vector<16x16xf32>
    %345 = arith.truncf %344 : vector<16x16xf32> to vector<16x16xbf16>
    %346 = vector.extract_strided_slice %314 {offsets = [0, 80], sizes = [16, 16], strides = [1, 1]} : vector<16x96xf32> to vector<16x16xf32>
    %347 = arith.truncf %346 : vector<16x16xf32> to vector<16x16xbf16>
    %cst_154 = arith.constant dense<0.000000e+00> : vector<16x16xf32>
    %348 = tpu.matmul %343, %345, %cst_154 {dimension_numbers = #tpu.dot_dimension_numbers<[1], [1], [0], [0], [0, 0, 1, 0], [], []>} : vector<16x16xbf16>, vector<16x16xbf16>, vector<16x16xf32> -> vector<16x16xf32>
    %cst_155 = arith.constant 2.500000e-01 : f32
    %349 = vector.broadcast %cst_155 : f32 to vector<16x16xf32>
    %350 = arith.mulf %348, %349 : vector<16x16xf32>
    %cst_156 = arith.constant -1.000000e+30 : f32
    %351 = vector.broadcast %cst_156 : f32 to vector<16x16xf32>
    %352 = arith.select %34, %351, %350 : vector<16x16xi1>, vector<16x16xf32>
    %cst_157 = arith.constant dense<0xFF800000> : vector<16xf32>
    %353 = vector.multi_reduction <maximumf>, %352, %cst_157 [1] : vector<16x16xf32> to vector<16xf32>
    %354 = vector.shape_cast %353 : vector<16xf32> to vector<16x1xf32>
    %355 = vector.broadcast %354 : vector<16x1xf32> to vector<16x16xf32>
    %356 = arith.subf %352, %355 : vector<16x16xf32>
    %357 = math.exp %356 : vector<16x16xf32>
    %cst_158 = arith.constant dense<0.000000e+00> : vector<16xf32>
    %358 = vector.multi_reduction <add>, %357, %cst_158 [1] : vector<16x16xf32> to vector<16xf32>
    %359 = vector.shape_cast %358 : vector<16xf32> to vector<16x1xf32>
    %360 = tpu.reciprocal %359 {approx = true} : vector<16x1xf32> -> vector<16x1xf32>
    %361 = vector.broadcast %360 : vector<16x1xf32> to vector<16x16xf32>
    %362 = arith.mulf %357, %361 : vector<16x16xf32>
    %cst_159 = arith.constant 0.000000e+00 : f32
    %363 = vector.shape_cast %40 : vector<16x1xi1> to vector<16x1xi1>
    %364 = vector.broadcast %363 : vector<16x1xi1> to vector<16x16xi1>
    %365 = vector.broadcast %cst_159 : f32 to vector<16x16xf32>
    %366 = arith.select %364, %365, %362 : vector<16x16xi1>, vector<16x16xf32>
    %367 = arith.truncf %366 : vector<16x16xf32> to vector<16x16xbf16>
    %cst_160 = arith.constant dense<0.000000e+00> : vector<16x16xf32>
    %368 = tpu.matmul %367, %347, %cst_160 {dimension_numbers = #tpu.dot_dimension_numbers<[1], [0], [0], [1], [0, 0, 1, 1], [], []>} : vector<16x16xbf16>, vector<16x16xbf16>, vector<16x16xf32> -> vector<16x16xf32>
    %369 = tpu.concatenate %341, %368 in 1 : vector<16x16xf32>, vector<16x16xf32> -> vector<16x32xf32>
    %370 = arith.truncf %369 : vector<16x32xf32> to vector<16x32xbf16>
    %c1_161 = arith.constant 1 : index
    %c0_162 = arith.constant 0 : index
    %c0_163 = arith.constant 0 : index
    %371 = vector.load %arg14[%c1_161, %c0_162, %c0_163] : memref<2x32x32xbf16, #tpu.memory_space<vmem>>, vector<1x32x32xbf16>
    %372 = vector.shape_cast %371 : vector<1x32x32xbf16> to vector<32x32xbf16>
    %cst_164 = arith.constant dense<0.000000e+00> : vector<16x32xf32>
    %373 = tpu.matmul %370, %372, %cst_164 {dimension_numbers = #tpu.dot_dimension_numbers<[1], [0], [0], [1], [0, 0, 1, 1], [], []>} : vector<16x32xbf16>, vector<32x32xbf16>, vector<16x32xf32> -> vector<16x32xf32>
    %374 = arith.addf %282, %373 : vector<16x32xf32>
    %c1_165 = arith.constant 1 : index
    %c0_166 = arith.constant 0 : index
    %c0_167 = arith.constant 0 : index
    %375 = vector.load %arg15[%c1_165, %c0_166, %c0_167] : memref<2x1x32xf32, #tpu.memory_space<vmem>>, vector<1x1x32xf32>
    %376 = vector.shape_cast %375 : vector<1x1x32xf32> to vector<1x32xf32>
    %377 = vector.broadcast %376 : vector<1x32xf32> to vector<16x32xf32>
    %378 = arith.addf %374, %377 : vector<16x32xf32>
    %c1_168 = arith.constant 1 : index
    %c0_169 = arith.constant 0 : index
    %c0_170 = arith.constant 0 : index
    %379 = vector.load %arg16[%c1_168, %c0_169, %c0_170] : memref<2x1x32xf32, #tpu.memory_space<vmem>>, vector<1x1x32xf32>
    %380 = vector.shape_cast %379 : vector<1x1x32xf32> to vector<1x32xf32>
    %c1_171 = arith.constant 1 : index
    %c0_172 = arith.constant 0 : index
    %c0_173 = arith.constant 0 : index
    %381 = vector.load %arg17[%c1_171, %c0_172, %c0_173] : memref<2x1x32xf32, #tpu.memory_space<vmem>>, vector<1x1x32xf32>
    %382 = vector.shape_cast %381 : vector<1x1x32xf32> to vector<1x32xf32>
    %cst_174 = arith.constant dense<0.000000e+00> : vector<16xf32>
    %383 = vector.multi_reduction <add>, %378, %cst_174 [1] : vector<16x32xf32> to vector<16xf32>
    %384 = vector.shape_cast %383 : vector<16xf32> to vector<16x1xf32>
    %cst_175 = arith.constant 3.200000e+01 : f32
    %385 = vector.broadcast %cst_175 : f32 to vector<16x1xf32>
    %386 = arith.divf %384, %385 : vector<16x1xf32>
    %387 = vector.broadcast %386 : vector<16x1xf32> to vector<16x32xf32>
    %388 = arith.subf %378, %387 : vector<16x32xf32>
    %389 = arith.mulf %388, %388 : vector<16x32xf32>
    %cst_176 = arith.constant dense<0.000000e+00> : vector<16xf32>
    %390 = vector.multi_reduction <add>, %389, %cst_176 [1] : vector<16x32xf32> to vector<16xf32>
    %391 = vector.shape_cast %390 : vector<16xf32> to vector<16x1xf32>
    %cst_177 = arith.constant 3.200000e+01 : f32
    %392 = vector.broadcast %cst_177 : f32 to vector<16x1xf32>
    %393 = arith.divf %391, %392 : vector<16x1xf32>
    %cst_178 = arith.constant 9.99999974E-6 : f32
    %394 = vector.broadcast %cst_178 : f32 to vector<16x1xf32>
    %395 = arith.addf %393, %394 : vector<16x1xf32>
    %396 = math.rsqrt %395 : vector<16x1xf32>
    %397 = vector.broadcast %396 : vector<16x1xf32> to vector<16x32xf32>
    %398 = arith.mulf %388, %397 : vector<16x32xf32>
    %399 = vector.broadcast %380 : vector<1x32xf32> to vector<16x32xf32>
    %400 = arith.mulf %398, %399 : vector<16x32xf32>
    %401 = vector.broadcast %382 : vector<1x32xf32> to vector<16x32xf32>
    %402 = arith.addf %400, %401 : vector<16x32xf32>
    %403 = arith.truncf %402 : vector<16x32xf32> to vector<16x32xbf16>
    %c1_179 = arith.constant 1 : index
    %c0_180 = arith.constant 0 : index
    %c0_181 = arith.constant 0 : index
    %404 = vector.load %arg18[%c1_179, %c0_180, %c0_181] : memref<2x32x32xbf16, #tpu.memory_space<vmem>>, vector<1x32x32xbf16>
    %405 = vector.shape_cast %404 : vector<1x32x32xbf16> to vector<32x32xbf16>
    %cst_182 = arith.constant dense<0.000000e+00> : vector<16x32xf32>
    %406 = tpu.matmul %403, %405, %cst_182 {dimension_numbers = #tpu.dot_dimension_numbers<[1], [0], [0], [1], [0, 0, 1, 1], [], []>} : vector<16x32xbf16>, vector<32x32xbf16>, vector<16x32xf32> -> vector<16x32xf32>
    %c1_183 = arith.constant 1 : index
    %c0_184 = arith.constant 0 : index
    %c0_185 = arith.constant 0 : index
    %407 = vector.load %arg19[%c1_183, %c0_184, %c0_185] : memref<2x1x32xf32, #tpu.memory_space<vmem>>, vector<1x1x32xf32>
    %408 = vector.shape_cast %407 : vector<1x1x32xf32> to vector<1x32xf32>
    %409 = vector.broadcast %408 : vector<1x32xf32> to vector<16x32xf32>
    %410 = arith.addf %406, %409 : vector<16x32xf32>
    %c1_186 = arith.constant 1 : index
    %c0_187 = arith.constant 0 : index
    %c0_188 = arith.constant 0 : index
    %411 = vector.load %arg20[%c1_186, %c0_187, %c0_188] : memref<2x32x64xbf16, #tpu.memory_space<vmem>>, vector<1x32x64xbf16>
    %412 = vector.shape_cast %411 : vector<1x32x64xbf16> to vector<32x64xbf16>
    %cst_189 = arith.constant dense<0.000000e+00> : vector<12x64xf32>
    %413 = tpu.matmul %7, %412, %cst_189 {dimension_numbers = #tpu.dot_dimension_numbers<[1], [0], [0], [1], [0, 0, 1, 1], [], []>} : vector<12x32xbf16>, vector<32x64xbf16>, vector<12x64xf32> -> vector<12x64xf32>
    %c1_190 = arith.constant 1 : index
    %c0_191 = arith.constant 0 : index
    %c0_192 = arith.constant 0 : index
    %414 = vector.load %arg21[%c1_190, %c0_191, %c0_192] : memref<2x1x64xf32, #tpu.memory_space<vmem>>, vector<1x1x64xf32>
    %415 = vector.shape_cast %414 : vector<1x1x64xf32> to vector<1x64xf32>
    %416 = vector.broadcast %415 : vector<1x64xf32> to vector<12x64xf32>
    %417 = arith.addf %413, %416 : vector<12x64xf32>
    %418 = vector.extract_strided_slice %410 {offsets = [0, 0], sizes = [16, 16], strides = [1, 1]} : vector<16x32xf32> to vector<16x16xf32>
    %419 = arith.truncf %418 : vector<16x16xf32> to vector<16x16xbf16>
    %420 = vector.extract_strided_slice %417 {offsets = [0, 0], sizes = [12, 16], strides = [1, 1]} : vector<12x64xf32> to vector<12x16xf32>
    %421 = arith.truncf %420 : vector<12x16xf32> to vector<12x16xbf16>
    %422 = vector.extract_strided_slice %417 {offsets = [0, 32], sizes = [12, 16], strides = [1, 1]} : vector<12x64xf32> to vector<12x16xf32>
    %423 = arith.truncf %422 : vector<12x16xf32> to vector<12x16xbf16>
    %cst_193 = arith.constant dense<0.000000e+00> : vector<16x12xf32>
    %424 = tpu.matmul %419, %421, %cst_193 {dimension_numbers = #tpu.dot_dimension_numbers<[1], [1], [0], [0], [0, 0, 1, 0], [], []>} : vector<16x16xbf16>, vector<12x16xbf16>, vector<16x12xf32> -> vector<16x12xf32>
    %cst_194 = arith.constant 2.500000e-01 : f32
    %425 = vector.broadcast %cst_194 : f32 to vector<16x12xf32>
    %426 = arith.mulf %424, %425 : vector<16x12xf32>
    %cst_195 = arith.constant -1.000000e+30 : f32
    %427 = vector.broadcast %cst_195 : f32 to vector<16x12xf32>
    %428 = arith.select %37, %427, %426 : vector<16x12xi1>, vector<16x12xf32>
    %cst_196 = arith.constant dense<0xFF800000> : vector<16xf32>
    %429 = vector.multi_reduction <maximumf>, %428, %cst_196 [1] : vector<16x12xf32> to vector<16xf32>
    %430 = vector.shape_cast %429 : vector<16xf32> to vector<16x1xf32>
    %431 = vector.broadcast %430 : vector<16x1xf32> to vector<16x12xf32>
    %432 = arith.subf %428, %431 : vector<16x12xf32>
    %433 = math.exp %432 : vector<16x12xf32>
    %cst_197 = arith.constant dense<0.000000e+00> : vector<16xf32>
    %434 = vector.multi_reduction <add>, %433, %cst_197 [1] : vector<16x12xf32> to vector<16xf32>
    %435 = vector.shape_cast %434 : vector<16xf32> to vector<16x1xf32>
    %436 = tpu.reciprocal %435 {approx = true} : vector<16x1xf32> -> vector<16x1xf32>
    %437 = vector.broadcast %436 : vector<16x1xf32> to vector<16x12xf32>
    %438 = arith.mulf %433, %437 : vector<16x12xf32>
    %cst_198 = arith.constant 0.000000e+00 : f32
    %439 = vector.shape_cast %40 : vector<16x1xi1> to vector<16x1xi1>
    %440 = vector.broadcast %439 : vector<16x1xi1> to vector<16x12xi1>
    %441 = vector.broadcast %cst_198 : f32 to vector<16x12xf32>
    %442 = arith.select %440, %441, %438 : vector<16x12xi1>, vector<16x12xf32>
    %443 = arith.truncf %442 : vector<16x12xf32> to vector<16x12xbf16>
    %cst_199 = arith.constant dense<0.000000e+00> : vector<16x16xf32>
    %444 = tpu.matmul %443, %423, %cst_199 {dimension_numbers = #tpu.dot_dimension_numbers<[1], [0], [0], [1], [0, 0, 1, 1], [], []>} : vector<16x12xbf16>, vector<12x16xbf16>, vector<16x16xf32> -> vector<16x16xf32>
    %445 = vector.extract_strided_slice %410 {offsets = [0, 16], sizes = [16, 16], strides = [1, 1]} : vector<16x32xf32> to vector<16x16xf32>
    %446 = arith.truncf %445 : vector<16x16xf32> to vector<16x16xbf16>
    %447 = vector.extract_strided_slice %417 {offsets = [0, 16], sizes = [12, 16], strides = [1, 1]} : vector<12x64xf32> to vector<12x16xf32>
    %448 = arith.truncf %447 : vector<12x16xf32> to vector<12x16xbf16>
    %449 = vector.extract_strided_slice %417 {offsets = [0, 48], sizes = [12, 16], strides = [1, 1]} : vector<12x64xf32> to vector<12x16xf32>
    %450 = arith.truncf %449 : vector<12x16xf32> to vector<12x16xbf16>
    %cst_200 = arith.constant dense<0.000000e+00> : vector<16x12xf32>
    %451 = tpu.matmul %446, %448, %cst_200 {dimension_numbers = #tpu.dot_dimension_numbers<[1], [1], [0], [0], [0, 0, 1, 0], [], []>} : vector<16x16xbf16>, vector<12x16xbf16>, vector<16x12xf32> -> vector<16x12xf32>
    %cst_201 = arith.constant 2.500000e-01 : f32
    %452 = vector.broadcast %cst_201 : f32 to vector<16x12xf32>
    %453 = arith.mulf %451, %452 : vector<16x12xf32>
    %cst_202 = arith.constant -1.000000e+30 : f32
    %454 = vector.broadcast %cst_202 : f32 to vector<16x12xf32>
    %455 = arith.select %37, %454, %453 : vector<16x12xi1>, vector<16x12xf32>
    %cst_203 = arith.constant dense<0xFF800000> : vector<16xf32>
    %456 = vector.multi_reduction <maximumf>, %455, %cst_203 [1] : vector<16x12xf32> to vector<16xf32>
    %457 = vector.shape_cast %456 : vector<16xf32> to vector<16x1xf32>
    %458 = vector.broadcast %457 : vector<16x1xf32> to vector<16x12xf32>
    %459 = arith.subf %455, %458 : vector<16x12xf32>
    %460 = math.exp %459 : vector<16x12xf32>
    %cst_204 = arith.constant dense<0.000000e+00> : vector<16xf32>
    %461 = vector.multi_reduction <add>, %460, %cst_204 [1] : vector<16x12xf32> to vector<16xf32>
    %462 = vector.shape_cast %461 : vector<16xf32> to vector<16x1xf32>
    %463 = tpu.reciprocal %462 {approx = true} : vector<16x1xf32> -> vector<16x1xf32>
    %464 = vector.broadcast %463 : vector<16x1xf32> to vector<16x12xf32>
    %465 = arith.mulf %460, %464 : vector<16x12xf32>
    %cst_205 = arith.constant 0.000000e+00 : f32
    %466 = vector.shape_cast %40 : vector<16x1xi1> to vector<16x1xi1>
    %467 = vector.broadcast %466 : vector<16x1xi1> to vector<16x12xi1>
    %468 = vector.broadcast %cst_205 : f32 to vector<16x12xf32>
    %469 = arith.select %467, %468, %465 : vector<16x12xi1>, vector<16x12xf32>
    %470 = arith.truncf %469 : vector<16x12xf32> to vector<16x12xbf16>
    %cst_206 = arith.constant dense<0.000000e+00> : vector<16x16xf32>
    %471 = tpu.matmul %470, %450, %cst_206 {dimension_numbers = #tpu.dot_dimension_numbers<[1], [0], [0], [1], [0, 0, 1, 1], [], []>} : vector<16x12xbf16>, vector<12x16xbf16>, vector<16x16xf32> -> vector<16x16xf32>
    %472 = tpu.concatenate %444, %471 in 1 : vector<16x16xf32>, vector<16x16xf32> -> vector<16x32xf32>
    %473 = arith.truncf %472 : vector<16x32xf32> to vector<16x32xbf16>
    %c1_207 = arith.constant 1 : index
    %c0_208 = arith.constant 0 : index
    %c0_209 = arith.constant 0 : index
    %474 = vector.load %arg22[%c1_207, %c0_208, %c0_209] : memref<2x32x32xbf16, #tpu.memory_space<vmem>>, vector<1x32x32xbf16>
    %475 = vector.shape_cast %474 : vector<1x32x32xbf16> to vector<32x32xbf16>
    %cst_210 = arith.constant dense<0.000000e+00> : vector<16x32xf32>
    %476 = tpu.matmul %473, %475, %cst_210 {dimension_numbers = #tpu.dot_dimension_numbers<[1], [0], [0], [1], [0, 0, 1, 1], [], []>} : vector<16x32xbf16>, vector<32x32xbf16>, vector<16x32xf32> -> vector<16x32xf32>
    %477 = arith.addf %378, %476 : vector<16x32xf32>
    %c1_211 = arith.constant 1 : index
    %c0_212 = arith.constant 0 : index
    %c0_213 = arith.constant 0 : index
    %478 = vector.load %arg23[%c1_211, %c0_212, %c0_213] : memref<2x1x32xf32, #tpu.memory_space<vmem>>, vector<1x1x32xf32>
    %479 = vector.shape_cast %478 : vector<1x1x32xf32> to vector<1x32xf32>
    %480 = vector.broadcast %479 : vector<1x32xf32> to vector<16x32xf32>
    %481 = arith.addf %477, %480 : vector<16x32xf32>
    %c1_214 = arith.constant 1 : index
    %c0_215 = arith.constant 0 : index
    %c0_216 = arith.constant 0 : index
    %482 = vector.load %arg24[%c1_214, %c0_215, %c0_216] : memref<2x1x32xf32, #tpu.memory_space<vmem>>, vector<1x1x32xf32>
    %483 = vector.shape_cast %482 : vector<1x1x32xf32> to vector<1x32xf32>
    %c1_217 = arith.constant 1 : index
    %c0_218 = arith.constant 0 : index
    %c0_219 = arith.constant 0 : index
    %484 = vector.load %arg25[%c1_217, %c0_218, %c0_219] : memref<2x1x32xf32, #tpu.memory_space<vmem>>, vector<1x1x32xf32>
    %485 = vector.shape_cast %484 : vector<1x1x32xf32> to vector<1x32xf32>
    %cst_220 = arith.constant dense<0.000000e+00> : vector<16xf32>
    %486 = vector.multi_reduction <add>, %481, %cst_220 [1] : vector<16x32xf32> to vector<16xf32>
    %487 = vector.shape_cast %486 : vector<16xf32> to vector<16x1xf32>
    %cst_221 = arith.constant 3.200000e+01 : f32
    %488 = vector.broadcast %cst_221 : f32 to vector<16x1xf32>
    %489 = arith.divf %487, %488 : vector<16x1xf32>
    %490 = vector.broadcast %489 : vector<16x1xf32> to vector<16x32xf32>
    %491 = arith.subf %481, %490 : vector<16x32xf32>
    %492 = arith.mulf %491, %491 : vector<16x32xf32>
    %cst_222 = arith.constant dense<0.000000e+00> : vector<16xf32>
    %493 = vector.multi_reduction <add>, %492, %cst_222 [1] : vector<16x32xf32> to vector<16xf32>
    %494 = vector.shape_cast %493 : vector<16xf32> to vector<16x1xf32>
    %cst_223 = arith.constant 3.200000e+01 : f32
    %495 = vector.broadcast %cst_223 : f32 to vector<16x1xf32>
    %496 = arith.divf %494, %495 : vector<16x1xf32>
    %cst_224 = arith.constant 9.99999974E-6 : f32
    %497 = vector.broadcast %cst_224 : f32 to vector<16x1xf32>
    %498 = arith.addf %496, %497 : vector<16x1xf32>
    %499 = math.rsqrt %498 : vector<16x1xf32>
    %500 = vector.broadcast %499 : vector<16x1xf32> to vector<16x32xf32>
    %501 = arith.mulf %491, %500 : vector<16x32xf32>
    %502 = vector.broadcast %483 : vector<1x32xf32> to vector<16x32xf32>
    %503 = arith.mulf %501, %502 : vector<16x32xf32>
    %504 = vector.broadcast %485 : vector<1x32xf32> to vector<16x32xf32>
    %505 = arith.addf %503, %504 : vector<16x32xf32>
    %506 = arith.truncf %505 : vector<16x32xf32> to vector<16x32xbf16>
    %c1_225 = arith.constant 1 : index
    %c0_226 = arith.constant 0 : index
    %c0_227 = arith.constant 0 : index
    %507 = vector.load %arg26[%c1_225, %c0_226, %c0_227] : memref<2x32x64xbf16, #tpu.memory_space<vmem>>, vector<1x32x64xbf16>
    %508 = vector.shape_cast %507 : vector<1x32x64xbf16> to vector<32x64xbf16>
    %cst_228 = arith.constant dense<0.000000e+00> : vector<16x64xf32>
    %509 = tpu.matmul %506, %508, %cst_228 {dimension_numbers = #tpu.dot_dimension_numbers<[1], [0], [0], [1], [0, 0, 1, 1], [], []>} : vector<16x32xbf16>, vector<32x64xbf16>, vector<16x64xf32> -> vector<16x64xf32>
    %c1_229 = arith.constant 1 : index
    %c0_230 = arith.constant 0 : index
    %c0_231 = arith.constant 0 : index
    %510 = vector.load %arg27[%c1_229, %c0_230, %c0_231] : memref<2x1x64xf32, #tpu.memory_space<vmem>>, vector<1x1x64xf32>
    %511 = vector.shape_cast %510 : vector<1x1x64xf32> to vector<1x64xf32>
    %512 = vector.broadcast %511 : vector<1x64xf32> to vector<16x64xf32>
    %513 = arith.addf %509, %512 : vector<16x64xf32>
    %cst_232 = arith.constant 0.000000e+00 : f32
    %514 = vector.broadcast %cst_232 : f32 to vector<16x64xf32>
    %515 = arith.maximumf %513, %514 : vector<16x64xf32>
    %516 = arith.truncf %515 : vector<16x64xf32> to vector<16x64xbf16>
    %c1_233 = arith.constant 1 : index
    %c0_234 = arith.constant 0 : index
    %c0_235 = arith.constant 0 : index
    %517 = vector.load %arg28[%c1_233, %c0_234, %c0_235] : memref<2x64x32xbf16, #tpu.memory_space<vmem>>, vector<1x64x32xbf16>
    %518 = vector.shape_cast %517 : vector<1x64x32xbf16> to vector<64x32xbf16>
    %cst_236 = arith.constant dense<0.000000e+00> : vector<16x32xf32>
    %519 = tpu.matmul %516, %518, %cst_236 {dimension_numbers = #tpu.dot_dimension_numbers<[1], [0], [0], [1], [0, 0, 1, 1], [], []>} : vector<16x64xbf16>, vector<64x32xbf16>, vector<16x32xf32> -> vector<16x32xf32>
    %520 = arith.addf %481, %519 : vector<16x32xf32>
    %c1_237 = arith.constant 1 : index
    %c0_238 = arith.constant 0 : index
    %c0_239 = arith.constant 0 : index
    %521 = vector.load %arg29[%c1_237, %c0_238, %c0_239] : memref<2x1x32xf32, #tpu.memory_space<vmem>>, vector<1x1x32xf32>
    %522 = vector.shape_cast %521 : vector<1x1x32xf32> to vector<1x32xf32>
    %523 = vector.broadcast %522 : vector<1x32xf32> to vector<16x32xf32>
    %524 = arith.addf %520, %523 : vector<16x32xf32>
    %c0_240 = arith.constant 0 : index
    %c0_241 = arith.constant 0 : index
    %525 = vector.load %arg30[%c0_240, %c0_241] : memref<1x32xf32, #tpu.memory_space<vmem>>, vector<1x32xf32>
    %c0_242 = arith.constant 0 : index
    %c0_243 = arith.constant 0 : index
    %526 = vector.load %arg31[%c0_242, %c0_243] : memref<1x32xf32, #tpu.memory_space<vmem>>, vector<1x32xf32>
    %cst_244 = arith.constant dense<0.000000e+00> : vector<16xf32>
    %527 = vector.multi_reduction <add>, %524, %cst_244 [1] : vector<16x32xf32> to vector<16xf32>
    %528 = vector.shape_cast %527 : vector<16xf32> to vector<16x1xf32>
    %cst_245 = arith.constant 3.200000e+01 : f32
    %529 = vector.broadcast %cst_245 : f32 to vector<16x1xf32>
    %530 = arith.divf %528, %529 : vector<16x1xf32>
    %531 = vector.broadcast %530 : vector<16x1xf32> to vector<16x32xf32>
    %532 = arith.subf %524, %531 : vector<16x32xf32>
    %533 = arith.mulf %532, %532 : vector<16x32xf32>
    %cst_246 = arith.constant dense<0.000000e+00> : vector<16xf32>
    %534 = vector.multi_reduction <add>, %533, %cst_246 [1] : vector<16x32xf32> to vector<16xf32>
    %535 = vector.shape_cast %534 : vector<16xf32> to vector<16x1xf32>
    %cst_247 = arith.constant 3.200000e+01 : f32
    %536 = vector.broadcast %cst_247 : f32 to vector<16x1xf32>
    %537 = arith.divf %535, %536 : vector<16x1xf32>
    %cst_248 = arith.constant 9.99999974E-6 : f32
    %538 = vector.broadcast %cst_248 : f32 to vector<16x1xf32>
    %539 = arith.addf %537, %538 : vector<16x1xf32>
    %540 = math.rsqrt %539 : vector<16x1xf32>
    %541 = vector.broadcast %540 : vector<16x1xf32> to vector<16x32xf32>
    %542 = arith.mulf %532, %541 : vector<16x32xf32>
    %543 = vector.broadcast %525 : vector<1x32xf32> to vector<16x32xf32>
    %544 = arith.mulf %542, %543 : vector<16x32xf32>
    %545 = vector.broadcast %526 : vector<1x32xf32> to vector<16x32xf32>
    %546 = arith.addf %544, %545 : vector<16x32xf32>
    %547 = arith.truncf %546 : vector<16x32xf32> to vector<16x32xbf16>
    %c0_249 = arith.constant 0 : index
    %c0_250 = arith.constant 0 : index
    %548 = vector.load %arg32[%c0_249, %c0_250] : memref<32x9xbf16, #tpu.memory_space<vmem>>, vector<32x9xbf16>
    %cst_251 = arith.constant dense<0.000000e+00> : vector<16x9xf32>
    %549 = tpu.matmul %547, %548, %cst_251 {dimension_numbers = #tpu.dot_dimension_numbers<[1], [0], [0], [1], [0, 0, 1, 1], [], []>} : vector<16x32xbf16>, vector<32x9xbf16>, vector<16x9xf32> -> vector<16x9xf32>
    %c0_252 = arith.constant 0 : index
    %c0_253 = arith.constant 0 : index
    %550 = vector.load %arg33[%c0_252, %c0_253] : memref<1x9xf32, #tpu.memory_space<vmem>>, vector<1x9xf32>
    %551 = vector.broadcast %550 : vector<1x9xf32> to vector<16x9xf32>
    %552 = arith.addf %549, %551 : vector<16x9xf32>
    %553 = vector.extract_strided_slice %552 {offsets = [0, 0], sizes = [16, 8], strides = [1, 1]} : vector<16x9xf32> to vector<16x8xf32>
    %554 = vector.extract_strided_slice %552 {offsets = [0, 8], sizes = [16, 1], strides = [1, 1]} : vector<16x9xf32> to vector<16x1xf32>
    %555 = arith.truncf %553 : vector<16x8xf32> to vector<16x8xbf16>
    %cst_254 = arith.constant 0.000000e+00 : bf16
    %556 = vector.broadcast %cst_254 : bf16 to vector<1x8xbf16>
    %557 = vector.extract_strided_slice %555 {offsets = [0, 0], sizes = [15, 8], strides = [1, 1]} : vector<16x8xbf16> to vector<15x8xbf16>
    %558 = tpu.concatenate %556, %557 in 0 : vector<1x8xbf16>, vector<15x8xbf16> -> vector<16x8xbf16>
    %559 = vector.extract_strided_slice %555 {offsets = [1, 0], sizes = [15, 8], strides = [1, 1]} : vector<16x8xbf16> to vector<15x8xbf16>
    %cst_255 = arith.constant 0.000000e+00 : bf16
    %560 = vector.broadcast %cst_255 : bf16 to vector<1x8xbf16>
    %561 = tpu.concatenate %559, %560 in 0 : vector<15x8xbf16>, vector<1x8xbf16> -> vector<16x8xbf16>
    %562 = tpu.concatenate %558, %555, %561 in 1 : vector<16x8xbf16>, vector<16x8xbf16>, vector<16x8xbf16> -> vector<16x24xbf16>
    %c0_256 = arith.constant 0 : index
    %c0_257 = arith.constant 0 : index
    %563 = vector.load %arg34[%c0_256, %c0_257] : memref<24x32xbf16, #tpu.memory_space<vmem>>, vector<24x32xbf16>
    %cst_258 = arith.constant dense<0.000000e+00> : vector<16x32xf32>
    %564 = tpu.matmul %562, %563, %cst_258 {dimension_numbers = #tpu.dot_dimension_numbers<[1], [0], [0], [1], [0, 0, 1, 1], [], []>} : vector<16x24xbf16>, vector<24x32xbf16>, vector<16x32xf32> -> vector<16x32xf32>
    %c0_259 = arith.constant 0 : index
    %c0_260 = arith.constant 0 : index
    %565 = vector.load %arg35[%c0_259, %c0_260] : memref<1x32xf32, #tpu.memory_space<vmem>>, vector<1x32xf32>
    %566 = vector.broadcast %565 : vector<1x32xf32> to vector<16x32xf32>
    %567 = arith.addf %564, %566 : vector<16x32xf32>
    %568 = math.tanh %567 : vector<16x32xf32>
    %cst_261 = arith.constant 0.000000e+00 : f32
    %569 = vector.shape_cast %40 : vector<16x1xi1> to vector<16x1xi1>
    %570 = vector.broadcast %569 : vector<16x1xi1> to vector<16x32xi1>
    %571 = vector.broadcast %cst_261 : f32 to vector<16x32xf32>
    %572 = arith.select %570, %571, %568 : vector<16x32xi1>, vector<16x32xf32>
    %573 = arith.truncf %572 : vector<16x32xf32> to vector<16x32xbf16>
    %cst_262 = arith.constant 0.000000e+00 : bf16
    %574 = vector.broadcast %cst_262 : bf16 to vector<1x32xbf16>
    %575 = vector.extract_strided_slice %573 {offsets = [0, 0], sizes = [15, 32], strides = [1, 1]} : vector<16x32xbf16> to vector<15x32xbf16>
    %576 = tpu.concatenate %574, %575 in 0 : vector<1x32xbf16>, vector<15x32xbf16> -> vector<16x32xbf16>
    %577 = vector.extract_strided_slice %573 {offsets = [1, 0], sizes = [15, 32], strides = [1, 1]} : vector<16x32xbf16> to vector<15x32xbf16>
    %cst_263 = arith.constant 0.000000e+00 : bf16
    %578 = vector.broadcast %cst_263 : bf16 to vector<1x32xbf16>
    %579 = tpu.concatenate %577, %578 in 0 : vector<15x32xbf16>, vector<1x32xbf16> -> vector<16x32xbf16>
    %580 = tpu.concatenate %576, %573, %579 in 1 : vector<16x32xbf16>, vector<16x32xbf16>, vector<16x32xbf16> -> vector<16x96xbf16>
    %c0_264 = arith.constant 0 : index
    %c0_265 = arith.constant 0 : index
    %581 = vector.load %arg36[%c0_264, %c0_265] : memref<96x8xbf16, #tpu.memory_space<vmem>>, vector<96x8xbf16>
    %cst_266 = arith.constant dense<0.000000e+00> : vector<16x8xf32>
    %582 = tpu.matmul %580, %581, %cst_266 {dimension_numbers = #tpu.dot_dimension_numbers<[1], [0], [0], [1], [0, 0, 1, 1], [], []>} : vector<16x96xbf16>, vector<96x8xbf16>, vector<16x8xf32> -> vector<16x8xf32>
    %c0_267 = arith.constant 0 : index
    %c0_268 = arith.constant 0 : index
    %583 = vector.load %arg37[%c0_267, %c0_268] : memref<1x8xf32, #tpu.memory_space<vmem>>, vector<1x8xf32>
    %584 = vector.broadcast %583 : vector<1x8xf32> to vector<16x8xf32>
    %585 = arith.addf %582, %584 : vector<16x8xf32>
    %cst_269 = arith.constant 0.000000e+00 : f32
    %586 = vector.shape_cast %40 : vector<16x1xi1> to vector<16x1xi1>
    %587 = vector.broadcast %586 : vector<16x1xi1> to vector<16x8xi1>
    %588 = vector.broadcast %cst_269 : f32 to vector<16x8xf32>
    %589 = arith.select %587, %588, %585 : vector<16x8xi1>, vector<16x8xf32>
    %590 = arith.addf %553, %589 : vector<16x8xf32>
    %cst_270 = arith.constant 0.000000e+00 : f32
    %591 = vector.shape_cast %40 : vector<16x1xi1> to vector<16x1xi1>
    %592 = vector.broadcast %591 : vector<16x1xi1> to vector<16x8xi1>
    %593 = vector.broadcast %cst_270 : f32 to vector<16x8xf32>
    %594 = arith.select %592, %593, %553 : vector<16x8xi1>, vector<16x8xf32>
    %cst_271 = arith.constant 0.000000e+00 : f32
    %595 = vector.shape_cast %40 : vector<16x1xi1> to vector<16x1xi1>
    %596 = vector.broadcast %595 : vector<16x1xi1> to vector<16x8xi1>
    %597 = vector.broadcast %cst_271 : f32 to vector<16x8xf32>
    %598 = arith.select %596, %597, %590 : vector<16x8xi1>, vector<16x8xf32>
    %cst_272 = arith.constant 1.000000e+03 : f32
    %599 = vector.broadcast %cst_272 : f32 to vector<16x1xf32>
    %600 = arith.select %40, %599, %554 : vector<16x1xi1>, vector<16x1xf32>
    %c0_273 = arith.constant 0 : index
    %c0_274 = arith.constant 0 : index
    %c0_275 = arith.constant 0 : index
    %601 = vector.load %arg38[%c0_273, %c0_274, %c0_275] : memref<1x16x8xf32, #tpu.memory_space<vmem>>, vector<1x16x8xf32>
    %602 = vector.shape_cast %601 : vector<1x16x8xf32> to vector<16x8xf32>
    %603 = vector.shape_cast %594 : vector<16x8xf32> to vector<1x16x8xf32>
    tpu.vector_store %arg38[%c0_273, %c0_274, %c0_275], %603 {strides = array<i32>} : memref<1x16x8xf32, #tpu.memory_space<vmem>>, vector<1x16x8xf32>,
    %c0_276 = arith.constant 0 : index
    %c0_277 = arith.constant 0 : index
    %c0_278 = arith.constant 0 : index
    %604 = vector.load %arg39[%c0_276, %c0_277, %c0_278] : memref<1x16x8xf32, #tpu.memory_space<vmem>>, vector<1x16x8xf32>
    %605 = vector.shape_cast %604 : vector<1x16x8xf32> to vector<16x8xf32>
    %606 = vector.shape_cast %598 : vector<16x8xf32> to vector<1x16x8xf32>
    tpu.vector_store %arg39[%c0_276, %c0_277, %c0_278], %606 {strides = array<i32>} : memref<1x16x8xf32, #tpu.memory_space<vmem>>, vector<1x16x8xf32>,
    %c0_279 = arith.constant 0 : index
    %c0_280 = arith.constant 0 : index
    %c0_281 = arith.constant 0 : index
    %607 = vector.load %arg40[%c0_279, %c0_280, %c0_281] : memref<1x16x1xf32, #tpu.memory_space<vmem>>, vector<1x16x1xf32>
    %608 = vector.shape_cast %607 : vector<1x16x1xf32> to vector<16x1xf32>
    %609 = vector.shape_cast %600 : vector<16x1xf32> to vector<1x16x1xf32>
    tpu.vector_store %arg40[%c0_279, %c0_280, %c0_281], %609 {strides = array<i32>} : memref<1x16x1xf32, #tpu.memory_space<vmem>>, vector<1x16x1xf32>,
    return
  }
  func.func @transform_0(%arg0: i32, %arg1: memref<2xi32, #tpu.memory_space<smem>>, %arg2: memref<2xi32, #tpu.memory_space<smem>>) -> (i32, i32, i32) {
    %c0_i32 = arith.constant 0 : i32
    %c0_i32_0 = arith.constant 0 : i32
    %c0_i32_1 = arith.constant 0 : i32
    return %arg0, %c0_i32, %c0_i32_0 : i32, i32, i32
  }
  func.func @transform_1(%arg0: i32, %arg1: memref<2xi32, #tpu.memory_space<smem>>, %arg2: memref<2xi32, #tpu.memory_space<smem>>) -> (i32, i32, i32) {
    %c0_i32 = arith.constant 0 : i32
    %c0_i32_0 = arith.constant 0 : i32
    %c0_i32_1 = arith.constant 0 : i32
    return %arg0, %c0_i32, %c0_i32_0 : i32, i32, i32
  }
  func.func @transform_2(%arg0: i32, %arg1: memref<2xi32, #tpu.memory_space<smem>>, %arg2: memref<2xi32, #tpu.memory_space<smem>>) -> (i32, i32) {
    %c0_i32 = arith.constant 0 : i32
    %c0_i32_0 = arith.constant 0 : i32
    %c0_i32_1 = arith.constant 0 : i32
    return %c0_i32, %c0_i32_0 : i32, i32
  }
  func.func @transform_3(%arg0: i32, %arg1: memref<2xi32, #tpu.memory_space<smem>>, %arg2: memref<2xi32, #tpu.memory_space<smem>>) -> (i32, i32) {
    %c0_i32 = arith.constant 0 : i32
    %c0_i32_0 = arith.constant 0 : i32
    %c0_i32_1 = arith.constant 0 : i32
    return %c0_i32, %c0_i32_0 : i32, i32
  }
  func.func @transform_4(%arg0: i32, %arg1: memref<2xi32, #tpu.memory_space<smem>>, %arg2: memref<2xi32, #tpu.memory_space<smem>>) -> (i32, i32) {
    %c0_i32 = arith.constant 0 : i32
    %c0_i32_0 = arith.constant 0 : i32
    %c0_i32_1 = arith.constant 0 : i32
    return %c0_i32, %c0_i32_0 : i32, i32
  }
  func.func @transform_5(%arg0: i32, %arg1: memref<2xi32, #tpu.memory_space<smem>>, %arg2: memref<2xi32, #tpu.memory_space<smem>>) -> (i32, i32) {
    %c0_i32 = arith.constant 0 : i32
    %c0_i32_0 = arith.constant 0 : i32
    %c0_i32_1 = arith.constant 0 : i32
    return %c0_i32, %c0_i32_0 : i32, i32
  }
  func.func @transform_6(%arg0: i32, %arg1: memref<2xi32, #tpu.memory_space<smem>>, %arg2: memref<2xi32, #tpu.memory_space<smem>>) -> (i32, i32) {
    %c0_i32 = arith.constant 0 : i32
    %c0_i32_0 = arith.constant 0 : i32
    %c0_i32_1 = arith.constant 0 : i32
    return %c0_i32, %c0_i32_0 : i32, i32
  }
  func.func @transform_7(%arg0: i32, %arg1: memref<2xi32, #tpu.memory_space<smem>>, %arg2: memref<2xi32, #tpu.memory_space<smem>>) -> (i32, i32, i32) {
    %c0_i32 = arith.constant 0 : i32
    %c0_i32_0 = arith.constant 0 : i32
    %c0_i32_1 = arith.constant 0 : i32
    %c0_i32_2 = arith.constant 0 : i32
    return %c0_i32, %c0_i32_0, %c0_i32_1 : i32, i32, i32
  }
  func.func @transform_8(%arg0: i32, %arg1: memref<2xi32, #tpu.memory_space<smem>>, %arg2: memref<2xi32, #tpu.memory_space<smem>>) -> (i32, i32, i32) {
    %c0_i32 = arith.constant 0 : i32
    %c0_i32_0 = arith.constant 0 : i32
    %c0_i32_1 = arith.constant 0 : i32
    %c0_i32_2 = arith.constant 0 : i32
    return %c0_i32, %c0_i32_0, %c0_i32_1 : i32, i32, i32
  }
  func.func @transform_9(%arg0: i32, %arg1: memref<2xi32, #tpu.memory_space<smem>>, %arg2: memref<2xi32, #tpu.memory_space<smem>>) -> (i32, i32, i32) {
    %c0_i32 = arith.constant 0 : i32
    %c0_i32_0 = arith.constant 0 : i32
    %c0_i32_1 = arith.constant 0 : i32
    %c0_i32_2 = arith.constant 0 : i32
    return %c0_i32, %c0_i32_0, %c0_i32_1 : i32, i32, i32
  }
  func.func @transform_10(%arg0: i32, %arg1: memref<2xi32, #tpu.memory_space<smem>>, %arg2: memref<2xi32, #tpu.memory_space<smem>>) -> (i32, i32, i32) {
    %c0_i32 = arith.constant 0 : i32
    %c0_i32_0 = arith.constant 0 : i32
    %c0_i32_1 = arith.constant 0 : i32
    %c0_i32_2 = arith.constant 0 : i32
    return %c0_i32, %c0_i32_0, %c0_i32_1 : i32, i32, i32
  }
  func.func @transform_11(%arg0: i32, %arg1: memref<2xi32, #tpu.memory_space<smem>>, %arg2: memref<2xi32, #tpu.memory_space<smem>>) -> (i32, i32, i32) {
    %c0_i32 = arith.constant 0 : i32
    %c0_i32_0 = arith.constant 0 : i32
    %c0_i32_1 = arith.constant 0 : i32
    %c0_i32_2 = arith.constant 0 : i32
    return %c0_i32, %c0_i32_0, %c0_i32_1 : i32, i32, i32
  }
  func.func @transform_12(%arg0: i32, %arg1: memref<2xi32, #tpu.memory_space<smem>>, %arg2: memref<2xi32, #tpu.memory_space<smem>>) -> (i32, i32, i32) {
    %c0_i32 = arith.constant 0 : i32
    %c0_i32_0 = arith.constant 0 : i32
    %c0_i32_1 = arith.constant 0 : i32
    %c0_i32_2 = arith.constant 0 : i32
    return %c0_i32, %c0_i32_0, %c0_i32_1 : i32, i32, i32
  }
  func.func @transform_13(%arg0: i32, %arg1: memref<2xi32, #tpu.memory_space<smem>>, %arg2: memref<2xi32, #tpu.memory_space<smem>>) -> (i32, i32, i32) {
    %c0_i32 = arith.constant 0 : i32
    %c0_i32_0 = arith.constant 0 : i32
    %c0_i32_1 = arith.constant 0 : i32
    %c0_i32_2 = arith.constant 0 : i32
    return %c0_i32, %c0_i32_0, %c0_i32_1 : i32, i32, i32
  }
  func.func @transform_14(%arg0: i32, %arg1: memref<2xi32, #tpu.memory_space<smem>>, %arg2: memref<2xi32, #tpu.memory_space<smem>>) -> (i32, i32, i32) {
    %c0_i32 = arith.constant 0 : i32
    %c0_i32_0 = arith.constant 0 : i32
    %c0_i32_1 = arith.constant 0 : i32
    %c0_i32_2 = arith.constant 0 : i32
    return %c0_i32, %c0_i32_0, %c0_i32_1 : i32, i32, i32
  }
  func.func @transform_15(%arg0: i32, %arg1: memref<2xi32, #tpu.memory_space<smem>>, %arg2: memref<2xi32, #tpu.memory_space<smem>>) -> (i32, i32, i32) {
    %c0_i32 = arith.constant 0 : i32
    %c0_i32_0 = arith.constant 0 : i32
    %c0_i32_1 = arith.constant 0 : i32
    %c0_i32_2 = arith.constant 0 : i32
    return %c0_i32, %c0_i32_0, %c0_i32_1 : i32, i32, i32
  }
  func.func @transform_16(%arg0: i32, %arg1: memref<2xi32, #tpu.memory_space<smem>>, %arg2: memref<2xi32, #tpu.memory_space<smem>>) -> (i32, i32, i32) {
    %c0_i32 = arith.constant 0 : i32
    %c0_i32_0 = arith.constant 0 : i32
    %c0_i32_1 = arith.constant 0 : i32
    %c0_i32_2 = arith.constant 0 : i32
    return %c0_i32, %c0_i32_0, %c0_i32_1 : i32, i32, i32
  }
  func.func @transform_17(%arg0: i32, %arg1: memref<2xi32, #tpu.memory_space<smem>>, %arg2: memref<2xi32, #tpu.memory_space<smem>>) -> (i32, i32, i32) {
    %c0_i32 = arith.constant 0 : i32
    %c0_i32_0 = arith.constant 0 : i32
    %c0_i32_1 = arith.constant 0 : i32
    %c0_i32_2 = arith.constant 0 : i32
    return %c0_i32, %c0_i32_0, %c0_i32_1 : i32, i32, i32
  }
  func.func @transform_18(%arg0: i32, %arg1: memref<2xi32, #tpu.memory_space<smem>>, %arg2: memref<2xi32, #tpu.memory_space<smem>>) -> (i32, i32, i32) {
    %c0_i32 = arith.constant 0 : i32
    %c0_i32_0 = arith.constant 0 : i32
    %c0_i32_1 = arith.constant 0 : i32
    %c0_i32_2 = arith.constant 0 : i32
    return %c0_i32, %c0_i32_0, %c0_i32_1 : i32, i32, i32
  }
  func.func @transform_19(%arg0: i32, %arg1: memref<2xi32, #tpu.memory_space<smem>>, %arg2: memref<2xi32, #tpu.memory_space<smem>>) -> (i32, i32, i32) {
    %c0_i32 = arith.constant 0 : i32
    %c0_i32_0 = arith.constant 0 : i32
    %c0_i32_1 = arith.constant 0 : i32
    %c0_i32_2 = arith.constant 0 : i32
    return %c0_i32, %c0_i32_0, %c0_i32_1 : i32, i32, i32
  }
  func.func @transform_20(%arg0: i32, %arg1: memref<2xi32, #tpu.memory_space<smem>>, %arg2: memref<2xi32, #tpu.memory_space<smem>>) -> (i32, i32, i32) {
    %c0_i32 = arith.constant 0 : i32
    %c0_i32_0 = arith.constant 0 : i32
    %c0_i32_1 = arith.constant 0 : i32
    %c0_i32_2 = arith.constant 0 : i32
    return %c0_i32, %c0_i32_0, %c0_i32_1 : i32, i32, i32
  }
  func.func @transform_21(%arg0: i32, %arg1: memref<2xi32, #tpu.memory_space<smem>>, %arg2: memref<2xi32, #tpu.memory_space<smem>>) -> (i32, i32, i32) {
    %c0_i32 = arith.constant 0 : i32
    %c0_i32_0 = arith.constant 0 : i32
    %c0_i32_1 = arith.constant 0 : i32
    %c0_i32_2 = arith.constant 0 : i32
    return %c0_i32, %c0_i32_0, %c0_i32_1 : i32, i32, i32
  }
  func.func @transform_22(%arg0: i32, %arg1: memref<2xi32, #tpu.memory_space<smem>>, %arg2: memref<2xi32, #tpu.memory_space<smem>>) -> (i32, i32, i32) {
    %c0_i32 = arith.constant 0 : i32
    %c0_i32_0 = arith.constant 0 : i32
    %c0_i32_1 = arith.constant 0 : i32
    %c0_i32_2 = arith.constant 0 : i32
    return %c0_i32, %c0_i32_0, %c0_i32_1 : i32, i32, i32
  }
  func.func @transform_23(%arg0: i32, %arg1: memref<2xi32, #tpu.memory_space<smem>>, %arg2: memref<2xi32, #tpu.memory_space<smem>>) -> (i32, i32, i32) {
    %c0_i32 = arith.constant 0 : i32
    %c0_i32_0 = arith.constant 0 : i32
    %c0_i32_1 = arith.constant 0 : i32
    %c0_i32_2 = arith.constant 0 : i32
    return %c0_i32, %c0_i32_0, %c0_i32_1 : i32, i32, i32
  }
  func.func @transform_24(%arg0: i32, %arg1: memref<2xi32, #tpu.memory_space<smem>>, %arg2: memref<2xi32, #tpu.memory_space<smem>>) -> (i32, i32, i32) {
    %c0_i32 = arith.constant 0 : i32
    %c0_i32_0 = arith.constant 0 : i32
    %c0_i32_1 = arith.constant 0 : i32
    %c0_i32_2 = arith.constant 0 : i32
    return %c0_i32, %c0_i32_0, %c0_i32_1 : i32, i32, i32
  }
  func.func @transform_25(%arg0: i32, %arg1: memref<2xi32, #tpu.memory_space<smem>>, %arg2: memref<2xi32, #tpu.memory_space<smem>>) -> (i32, i32, i32) {
    %c0_i32 = arith.constant 0 : i32
    %c0_i32_0 = arith.constant 0 : i32
    %c0_i32_1 = arith.constant 0 : i32
    %c0_i32_2 = arith.constant 0 : i32
    return %c0_i32, %c0_i32_0, %c0_i32_1 : i32, i32, i32
  }
  func.func @transform_26(%arg0: i32, %arg1: memref<2xi32, #tpu.memory_space<smem>>, %arg2: memref<2xi32, #tpu.memory_space<smem>>) -> (i32, i32, i32) {
    %c0_i32 = arith.constant 0 : i32
    %c0_i32_0 = arith.constant 0 : i32
    %c0_i32_1 = arith.constant 0 : i32
    %c0_i32_2 = arith.constant 0 : i32
    return %c0_i32, %c0_i32_0, %c0_i32_1 : i32, i32, i32
  }
  func.func @transform_27(%arg0: i32, %arg1: memref<2xi32, #tpu.memory_space<smem>>, %arg2: memref<2xi32, #tpu.memory_space<smem>>) -> (i32, i32) {
    %c0_i32 = arith.constant 0 : i32
    %c0_i32_0 = arith.constant 0 : i32
    %c0_i32_1 = arith.constant 0 : i32
    return %c0_i32, %c0_i32_0 : i32, i32
  }
  func.func @transform_28(%arg0: i32, %arg1: memref<2xi32, #tpu.memory_space<smem>>, %arg2: memref<2xi32, #tpu.memory_space<smem>>) -> (i32, i32) {
    %c0_i32 = arith.constant 0 : i32
    %c0_i32_0 = arith.constant 0 : i32
    %c0_i32_1 = arith.constant 0 : i32
    return %c0_i32, %c0_i32_0 : i32, i32
  }
  func.func @transform_29(%arg0: i32, %arg1: memref<2xi32, #tpu.memory_space<smem>>, %arg2: memref<2xi32, #tpu.memory_space<smem>>) -> (i32, i32) {
    %c0_i32 = arith.constant 0 : i32
    %c0_i32_0 = arith.constant 0 : i32
    %c0_i32_1 = arith.constant 0 : i32
    return %c0_i32, %c0_i32_0 : i32, i32
  }
  func.func @transform_30(%arg0: i32, %arg1: memref<2xi32, #tpu.memory_space<smem>>, %arg2: memref<2xi32, #tpu.memory_space<smem>>) -> (i32, i32) {
    %c0_i32 = arith.constant 0 : i32
    %c0_i32_0 = arith.constant 0 : i32
    %c0_i32_1 = arith.constant 0 : i32
    return %c0_i32, %c0_i32_0 : i32, i32
  }
  func.func @transform_31(%arg0: i32, %arg1: memref<2xi32, #tpu.memory_space<smem>>, %arg2: memref<2xi32, #tpu.memory_space<smem>>) -> (i32, i32) {
    %c0_i32 = arith.constant 0 : i32
    %c0_i32_0 = arith.constant 0 : i32
    %c0_i32_1 = arith.constant 0 : i32
    return %c0_i32, %c0_i32_0 : i32, i32
  }
  func.func @transform_32(%arg0: i32, %arg1: memref<2xi32, #tpu.memory_space<smem>>, %arg2: memref<2xi32, #tpu.memory_space<smem>>) -> (i32, i32) {
    %c0_i32 = arith.constant 0 : i32
    %c0_i32_0 = arith.constant 0 : i32
    %c0_i32_1 = arith.constant 0 : i32
    return %c0_i32, %c0_i32_0 : i32, i32
  }
  func.func @transform_33(%arg0: i32, %arg1: memref<2xi32, #tpu.memory_space<smem>>, %arg2: memref<2xi32, #tpu.memory_space<smem>>) -> (i32, i32) {
    %c0_i32 = arith.constant 0 : i32
    %c0_i32_0 = arith.constant 0 : i32
    %c0_i32_1 = arith.constant 0 : i32
    return %c0_i32, %c0_i32_0 : i32, i32
  }
  func.func @transform_34(%arg0: i32, %arg1: memref<2xi32, #tpu.memory_space<smem>>, %arg2: memref<2xi32, #tpu.memory_space<smem>>) -> (i32, i32) {
    %c0_i32 = arith.constant 0 : i32
    %c0_i32_0 = arith.constant 0 : i32
    %c0_i32_1 = arith.constant 0 : i32
    return %c0_i32, %c0_i32_0 : i32, i32
  }
  func.func @transform_35(%arg0: i32, %arg1: memref<2xi32, #tpu.memory_space<smem>>, %arg2: memref<2xi32, #tpu.memory_space<smem>>) -> (i32, i32, i32) {
    %c0_i32 = arith.constant 0 : i32
    %c0_i32_0 = arith.constant 0 : i32
    %c0_i32_1 = arith.constant 0 : i32
    return %arg0, %c0_i32, %c0_i32_0 : i32, i32, i32
  }
  func.func @transform_36(%arg0: i32, %arg1: memref<2xi32, #tpu.memory_space<smem>>, %arg2: memref<2xi32, #tpu.memory_space<smem>>) -> (i32, i32, i32) {
    %c0_i32 = arith.constant 0 : i32
    %c0_i32_0 = arith.constant 0 : i32
    %c0_i32_1 = arith.constant 0 : i32
    return %arg0, %c0_i32, %c0_i32_0 : i32, i32, i32
  }
  func.func @transform_37(%arg0: i32, %arg1: memref<2xi32, #tpu.memory_space<smem>>, %arg2: memref<2xi32, #tpu.memory_space<smem>>) -> (i32, i32, i32) {
    %c0_i32 = arith.constant 0 : i32
    %c0_i32_0 = arith.constant 0 : i32
    %c0_i32_1 = arith.constant 0 : i32
    return %arg0, %c0_i32, %c0_i32_0 : i32, i32, i32
  }
}

</mosaic_0001>

<llo_original>
// kernel: _lambda_.2
$region0: #{_lambda_.2}
  #allocation0 [shape = 'u32[]', space=smem, size = 0x4, offset = 0x4, fixed_abs, tag = 'smem constant byte address 0x4 - core index']
  #allocation1 [shape = 'u32[72,128]{1,0:T(1,128)}', space=vmem, size = 0x9000, scoped, tag = 'internal scratch']
  #allocation2 [shape = 's32[1]{0}', space=sflag, size = 0x4, scoped, tag = 'scoped memory for _lambda_.2']
  #allocation3 [shape = 'u8[512]{0}', space=smem, size = 0x200, scoped, tag = 'prefetched SMEM operand 0']
  %s0 = inlined_call_operand.vmem [shape: s32[2], index: 0, kind: input, shape index: {}]
  %s1 = inlined_call_operand.vmem [shape: s32[2,12,1], index: 1, kind: input, shape index: {}]
  %s2 = inlined_call_operand.vmem [shape: f32[40,32], index: 2, kind: input, shape index: {}]
  %s3 = inlined_call_operand.vmem [shape: bf16[96,32], index: 3, kind: input, shape index: {}]
  %s4 = inlined_call_operand.vmem [shape: f32[1,32], index: 4, kind: input, shape index: {}]
  %s5 = inlined_call_operand.vmem [shape: bf16[96,32], index: 5, kind: input, shape index: {}]
  %s6 = inlined_call_operand.vmem [shape: f32[1,32], index: 6, kind: input, shape index: {}]
  %s7 = inlined_call_operand.vmem [shape: bf16[32,32], index: 7, kind: input, shape index: {}]
  %s8 = inlined_call_operand.vmem [shape: f32[1,32], index: 8, kind: input, shape index: {}]
  %s9 = inlined_call_operand.vmem [shape: f32[12,32], index: 9, kind: input, shape index: {}]
  %s10 = inlined_call_operand.vmem [shape: f32[2,1,32], index: 10, kind: input, shape index: {}]
  %s11 = inlined_call_operand.vmem [shape: f32[2,1,32], index: 11, kind: input, shape index: {}]
  %s12 = inlined_call_operand.vmem [shape: bf16[2,32,96], index: 12, kind: input, shape index: {}]
  %s13 = inlined_call_operand.vmem [shape: f32[2,1,96], index: 13, kind: input, shape index: {}]
  %s14 = inlined_call_operand.vmem [shape: bf16[2,32,32], index: 14, kind: input, shape index: {}]
  %s15 = inlined_call_operand.vmem [shape: f32[2,1,32], index: 15, kind: input, shape index: {}]
  %s16 = inlined_call_operand.vmem [shape: f32[2,1,32], index: 16, kind: input, shape index: {}]
  %s17 = inlined_call_operand.vmem [shape: f32[2,1,32], index: 17, kind: input, shape index: {}]
  %s18 = inlined_call_operand.vmem [shape: bf16[2,32,64], index: 18, kind: input, shape index: {}]
  %s19 = inlined_call_operand.vmem [shape: f32[2,1,64], index: 19, kind: input, shape index: {}]
  %s20 = inlined_call_operand.vmem [shape: bf16[2,64,32], index: 20, kind: input, shape index: {}]
  %s21 = inlined_call_operand.vmem [shape: f32[2,1,32], index: 21, kind: input, shape index: {}]
  %s22 = inlined_call_operand.vmem [shape: f32[1,32], index: 22, kind: input, shape index: {}]
  %s23 = inlined_call_operand.vmem [shape: f32[1,32], index: 23, kind: input, shape index: {}]
  %s24 = inlined_call_operand.vmem [shape: bf16[2,12,32], index: 24, kind: output, shape index: {}]
  %s25 = sld [smem:[#allocation0]]
  $region125: #{_lambda_.2} parent=0
    _
  %s27 = ssub.s32 1, %s25
  %s28 = scalar_select 0, %s27, %s25
  %s30 = sshll.u32 %s0, 4
  %s31 = int_to_ptr.vmem [resolvable:$true] %s30
  %33 = dma.vmem_to_smem %s31, 16, [#allocation3], [#allocation2]
  %35 = dma.done [#allocation2], 16
  %36 = sfence
  loop: start=0, step=1, limit=4
  $region2: #{_lambda_.2} parent=0 // loop_pre_header
    _
  $region3: #{_lambda_.2} parent=0 // loop_header
    %s38 = sphi 0, %s42
    %p39 = scmp.ge.s32.totalorder %s38, 4
    %s48 = sphi 0, %s50
    %s51 = sphi 0, %s48
    %s52 = sphi 0, %s51
    %s68 = sphi 0, %s52
    %s72 = sphi 0, %s72
    %s74 = sphi 0, %s72
    %s75 = sphi 0, %s74
    %s89 = sphi 0, %s75
    %s93 = sphi 0, %s93
    %s95 = sphi 0, %s93
    %s96 = sphi 0, %s95
    %s110 = sphi 0, %s96
    %s114 = sphi 0, %s114
    %s116 = sphi 0, %s114
    %s117 = sphi 0, %s116
    %s131 = sphi 0, %s117
    %s135 = sphi 0, %s135
    %s137 = sphi 0, %s135
    %s138 = sphi 0, %s137
    %s152 = sphi 0, %s138
    %s156 = sphi 0, %s156
    %s158 = sphi 0, %s156
    %s159 = sphi 0, %s158
    %s173 = sphi 0, %s159
    %s177 = sphi 0, %s177
    %s179 = sphi 0, %s177
    %s180 = sphi 0, %s179
    %s194 = sphi 0, %s180
    %s198 = sphi 0, %s198
    %s200 = sphi 0, %s198
    %s201 = sphi 0, %s200
    %s215 = sphi 0, %s201
    %s219 = sphi 0, %s219
    %s221 = sphi 0, %s219
    %s222 = sphi 0, %s221
    %s236 = sphi 0, %s222
    %s240 = sphi 0, %s240
    %s242 = sphi 0, %s240
    %s243 = sphi 0, %s242
    %s257 = sphi 0, %s243
    %s261 = sphi 0, %s261
    %s263 = sphi 0, %s261
    %s264 = sphi 0, %s263
    %s278 = sphi 0, %s264
    %s282 = sphi 0, %s282
    %s284 = sphi 0, %s282
    %s285 = sphi 0, %s284
    %s299 = sphi 0, %s285
    %s303 = sphi 0, %s303
    %s305 = sphi 0, %s303
    %s306 = sphi 0, %s305
    %s320 = sphi 0, %s306
    %s324 = sphi 0, %s324
    %s326 = sphi 0, %s324
    %s327 = sphi 0, %s326
    %s341 = sphi 0, %s327
    %s345 = sphi 0, %s345
    %s347 = sphi 0, %s345
    %s348 = sphi 0, %s347
    %s362 = sphi 0, %s348
    %s366 = sphi 0, %s366
    %s368 = sphi 0, %s366
    %s369 = sphi 0, %s368
    %s383 = sphi 0, %s369
    %s387 = sphi 0, %s387
    %s389 = sphi 0, %s387
    %s390 = sphi 0, %s389
    %s404 = sphi 0, %s390
    %s408 = sphi 0, %s408
    %s410 = sphi 0, %s408
    %s411 = sphi 0, %s410
    %s425 = sphi 0, %s411
    %s429 = sphi 0, %s429
    %s431 = sphi 0, %s429
    %s432 = sphi 0, %s431
    %s446 = sphi 0, %s432
    %s450 = sphi 0, %s450
    %s452 = sphi 0, %s450
    %s453 = sphi 0, %s452
    %s467 = sphi 0, %s453
    %s471 = sphi 0, %s471
    %s473 = sphi 0, %s471
    %s474 = sphi 0, %s473
    %s488 = sphi 0, %s474
    %s492 = sphi 0, %s492
    %s494 = sphi 0, %s492
    %s495 = sphi 0, %s494
    %s509 = sphi 0, %s495
    %s513 = sphi 0, %s513
    %s515 = sphi 0, %s513
    %s516 = sphi 0, %s515
    %s530 = sphi 0, %s516
    %s536 = sphi 0, %s538
    %s539 = sphi 0, %s536
    %s540 = sphi 0, %s539
    %s556 = sphi 0, %s540
  $region4: #{_lambda_.2} parent=0 // loop_header_branch
    %41 = sbr.rel (%p39) target = $region8
  $region5: #{_lambda_.2} parent=0 // loop_body
    %s43 = ssub.s32 %s38, 1
    %s44 = ssub.s32 %s38, 2
    %s45 = sadd.s32 %s38, 1
    %s46 = ssub.s32 %s38, %s45
    %p47 = scmp.eq.s32.totalorder %s46, 0
    %s49 = sadd.s32 %s48, 1
    %s50 = scalar_select %p47, %s48, %s49
    %p53 = pneg %p47
    %p54 = scmp.eq.s32.totalorder %s38, 1
    %p55 = por %p53, %p54
    %p56 = scmp.ne.s32.totalorder %s48, %s51
    %p57 = scmp.eq.s32.totalorder %s38, 0
    %p58 = por %p56, %p57
    %p59 = scmp.ne.s32.totalorder %s48, %s51
    %p60 = scmp.eq.s32.totalorder %s43, 1
    %p61 = por %p59, %p60
    %p62 = scmp.ne.s32.totalorder %s51, %s52
    %p63 = scmp.eq.s32.totalorder %s43, 0
    %p64 = por %p62, %p63
    %p65 = scmp.ne.s32.totalorder %s51, %s52
    %p66 = scmp.eq.s32.totalorder %s44, 1
    %p67 = por %p65, %p66
    %p69 = scmp.ne.s32.totalorder %s52, %s68
    %p70 = scmp.eq.s32.totalorder %s44, 0
    %p71 = por %p69, %p70
    %s73 = sadd.s32 %s72, 1
    %p76 = scmp.eq.s32.totalorder %s38, 1
    %p77 = scmp.ne.s32.totalorder %s72, %s74
    %p78 = scmp.eq.s32.totalorder %s38, 0
    %p79 = por %p77, %p78
    %p80 = scmp.ne.s32.totalorder %s72, %s74
    %p81 = scmp.eq.s32.totalorder %s43, 1
    %p82 = por %p80, %p81
    %p83 = scmp.ne.s32.totalorder %s74, %s75
    %p84 = scmp.eq.s32.totalorder %s43, 0
    %p85 = por %p83, %p84
    %p86 = scmp.ne.s32.totalorder %s74, %s75
    %p87 = scmp.eq.s32.totalorder %s44, 1
    %p88 = por %p86, %p87
    %p90 = scmp.ne.s32.totalorder %s75, %s89
    %p91 = scmp.eq.s32.totalorder %s44, 0
    %p92 = por %p90, %p91
    %s94 = sadd.s32 %s93, 1
    %p97 = scmp.eq.s32.totalorder %s38, 1
    %p98 = scmp.ne.s32.totalorder %s93, %s95
    %p99 = scmp.eq.s32.totalorder %s38, 0
    %p100 = por %p98, %p99
    %p101 = scmp.ne.s32.totalorder %s93, %s95
    %p102 = scmp.eq.s32.totalorder %s43, 1
    %p103 = por %p101, %p102
    %p104 = scmp.ne.s32.totalorder %s95, %s96
    %p105 = scmp.eq.s32.totalorder %s43, 0
    %p106 = por %p104, %p105
    %p107 = scmp.ne.s32.totalorder %s95, %s96
    %p108 = scmp.eq.s32.totalorder %s44, 1
    %p109 = por %p107, %p108
    %p111 = scmp.ne.s32.totalorder %s96, %s110
    %p112 = scmp.eq.s32.totalorder %s44, 0
    %p113 = por %p111, %p112
    %s115 = sadd.s32 %s114, 1
    %p118 = scmp.eq.s32.totalorder %s38, 1
    %p119 = scmp.ne.s32.totalorder %s114, %s116
    %p120 = scmp.eq.s32.totalorder %s38, 0
    %p121 = por %p119, %p120
    %p122 = scmp.ne.s32.totalorder %s114, %s116
    %p123 = scmp.eq.s32.totalorder %s43, 1
    %p124 = por %p122, %p123
    %p125 = scmp.ne.s32.totalorder %s116, %s117
    %p126 = scmp.eq.s32.totalorder %s43, 0
    %p127 = por %p125, %p126
    %p128 = scmp.ne.s32.totalorder %s116, %s117
    %p129 = scmp.eq.s32.totalorder %s44, 1
    %p130 = por %p128, %p129
    %p132 = scmp.ne.s32.totalorder %s117, %s131
    %p133 = scmp.eq.s32.totalorder %s44, 0
    %p134 = por %p132, %p133
    %s136 = sadd.s32 %s135, 1
    %p139 = scmp.eq.s32.totalorder %s38, 1
    %p140 = scmp.ne.s32.totalorder %s135, %s137
    %p141 = scmp.eq.s32.totalorder %s38, 0
    %p142 = por %p140, %p141
    %p143 = scmp.ne.s32.totalorder %s135, %s137
    %p144 = scmp.eq.s32.totalorder %s43, 1
    %p145 = por %p143, %p144
    %p146 = scmp.ne.s32.totalorder %s137, %s138
    %p147 = scmp.eq.s32.totalorder %s43, 0
    %p148 = por %p146, %p147
    %p149 = scmp.ne.s32.totalorder %s137, %s138
    %p150 = scmp.eq.s32.totalorder %s44, 1
    %p151 = por %p149, %p150
    %p153 = scmp.ne.s32.totalorder %s138, %s152
    %p154 = scmp.eq.s32.totalorder %s44, 0
    %p155 = por %p153, %p154
    %s157 = sadd.s32 %s156, 1
    %p160 = scmp.eq.s32.totalorder %s38, 1
    %p161 = scmp.ne.s32.totalorder %s156, %s158
    %p162 = scmp.eq.s32.totalorder %s38, 0
    %p163 = por %p161, %p162
    %p164 = scmp.ne.s32.totalorder %s156, %s158
    %p165 = scmp.eq.s32.totalorder %s43, 1
    %p166 = por %p164, %p165
    %p167 = scmp.ne.s32.totalorder %s158, %s159
    %p168 = scmp.eq.s32.totalorder %s43, 0
    %p169 = por %p167, %p168
    %p170 = scmp.ne.s32.totalorder %s158, %s159
    %p171 = scmp.eq.s32.totalorder %s44, 1
    %p172 = por %p170, %p171
    %p174 = scmp.ne.s32.totalorder %s159, %s173
    %p175 = scmp.eq.s32.totalorder %s44, 0
    %p176 = por %p174, %p175
    %s178 = sadd.s32 %s177, 1
    %p181 = scmp.eq.s32.totalorder %s38, 1
    %p182 = scmp.ne.s32.totalorder %s177, %s179
    %p183 = scmp.eq.s32.totalorder %s38, 0
    %p184 = por %p182, %p183
    %p185 = scmp.ne.s32.totalorder %s177, %s179
    %p186 = scmp.eq.s32.totalorder %s43, 1
    %p187 = por %p185, %p186
    %p188 = scmp.ne.s32.totalorder %s179, %s180
    %p189 = scmp.eq.s32.totalorder %s43, 0
    %p190 = por %p188, %p189
    %p191 = scmp.ne.s32.totalorder %s179, %s180
    %p192 = scmp.eq.s32.totalorder %s44, 1
    %p193 = por %p191, %p192
    %p195 = scmp.ne.s32.totalorder %s180, %s194
    %p196 = scmp.eq.s32.totalorder %s44, 0
    %p197 = por %p195, %p196
    %s199 = sadd.s32 %s198, 1
    %p202 = scmp.eq.s32.totalorder %s38, 1
    %p203 = scmp.ne.s32.totalorder %s198, %s200
    %p204 = scmp.eq.s32.totalorder %s38, 0
    %p205 = por %p203, %p204
    %p206 = scmp.ne.s32.totalorder %s198, %s200
    %p207 = scmp.eq.s32.totalorder %s43, 1
    %p208 = por %p206, %p207
    %p209 = scmp.ne.s32.totalorder %s200, %s201
    %p210 = scmp.eq.s32.totalorder %s43, 0
    %p211 = por %p209, %p210
    %p212 = scmp.ne.s32.totalorder %s200, %s201
    %p213 = scmp.eq.s32.totalorder %s44, 1
    %p214 = por %p212, %p213
    %p216 = scmp.ne.s32.totalorder %s201, %s215
    %p217 = scmp.eq.s32.totalorder %s44, 0
    %p218 = por %p216, %p217
    %s220 = sadd.s32 %s219, 1
    %p223 = scmp.eq.s32.totalorder %s38, 1
    %p224 = scmp.ne.s32.totalorder %s219, %s221
    %p225 = scmp.eq.s32.totalorder %s38, 0
    %p226 = por %p224, %p225
    %p227 = scmp.ne.s32.totalorder %s219, %s221
    %p228 = scmp.eq.s32.totalorder %s43, 1
    %p229 = por %p227, %p228
    %p230 = scmp.ne.s32.totalorder %s221, %s222
    %p231 = scmp.eq.s32.totalorder %s43, 0
    %p232 = por %p230, %p231
    %p233 = scmp.ne.s32.totalorder %s221, %s222
    %p234 = scmp.eq.s32.totalorder %s44, 1
    %p235 = por %p233, %p234
    %p237 = scmp.ne.s32.totalorder %s222, %s236
    %p238 = scmp.eq.s32.totalorder %s44, 0
    %p239 = por %p237, %p238
    %s241 = sadd.s32 %s240, 1
    %p244 = scmp.eq.s32.totalorder %s38, 1
    %p245 = scmp.ne.s32.totalorder %s240, %s242
    %p246 = scmp.eq.s32.totalorder %s38, 0
    %p247 = por %p245, %p246
    %p248 = scmp.ne.s32.totalorder %s240, %s242
    %p249 = scmp.eq.s32.totalorder %s43, 1
    %p250 = por %p248, %p249
    %p251 = scmp.ne.s32.totalorder %s242, %s243
    %p252 = scmp.eq.s32.totalorder %s43, 0
    %p253 = por %p251, %p252
    %p254 = scmp.ne.s32.totalorder %s242, %s243
    %p255 = scmp.eq.s32.totalorder %s44, 1
    %p256 = por %p254, %p255
    %p258 = scmp.ne.s32.totalorder %s243, %s257
    %p259 = scmp.eq.s32.totalorder %s44, 0
    %p260 = por %p258, %p259
    %s262 = sadd.s32 %s261, 1
    %p265 = scmp.eq.s32.totalorder %s38, 1
    %p266 = scmp.ne.s32.totalorder %s261, %s263
    %p267 = scmp.eq.s32.totalorder %s38, 0
    %p268 = por %p266, %p267
    %p269 = scmp.ne.s32.totalorder %s261, %s263
    %p270 = scmp.eq.s32.totalorder %s43, 1
    %p271 = por %p269, %p270
    %p272 = scmp.ne.s32.totalorder %s263, %s264
    %p273 = scmp.eq.s32.totalorder %s43, 0
    %p274 = por %p272, %p273
    %p275 = scmp.ne.s32.totalorder %s263, %s264
    %p276 = scmp.eq.s32.totalorder %s44, 1
    %p277 = por %p275, %p276
    %p279 = scmp.ne.s32.totalorder %s264, %s278
    %p280 = scmp.eq.s32.totalorder %s44, 0
    %p281 = por %p279, %p280
    %s283 = sadd.s32 %s282, 1
    %p286 = scmp.eq.s32.totalorder %s38, 1
    %p287 = scmp.ne.s32.totalorder %s282, %s284
    %p288 = scmp.eq.s32.totalorder %s38, 0
    %p289 = por %p287, %p288
    %p290 = scmp.ne.s32.totalorder %s282, %s284
    %p291 = scmp.eq.s32.totalorder %s43, 1
    %p292 = por %p290, %p291
    %p293 = scmp.ne.s32.totalorder %s284, %s285
    %p294 = scmp.eq.s32.totalorder %s43, 0
    %p295 = por %p293, %p294
    %p296 = scmp.ne.s32.totalorder %s284, %s285
    %p297 = scmp.eq.s32.totalorder %s44, 1
    %p298 = por %p296, %p297
    %p300 = scmp.ne.s32.totalorder %s285, %s299
    %p301 = scmp.eq.s32.totalorder %s44, 0
    %p302 = por %p300, %p301
    %s304 = sadd.s32 %s303, 1
    %p307 = scmp.eq.s32.totalorder %s38, 1
    %p308 = scmp.ne.s32.totalorder %s303, %s305
    %p309 = scmp.eq.s32.totalorder %s38, 0
    %p310 = por %p308, %p309
    %p311 = scmp.ne.s32.totalorder %s303, %s305
    %p312 = scmp.eq.s32.totalorder %s43, 1
    %p313 = por %p311, %p312
    %p314 = scmp.ne.s32.totalorder %s305, %s306
    %p315 = scmp.eq.s32.totalorder %s43, 0
    %p316 = por %p314, %p315
    %p317 = scmp.ne.s32.totalorder %s305, %s306
    %p318 = scmp.eq.s32.totalorder %s44, 1
    %p319 = por %p317, %p318
    %p321 = scmp.ne.s32.totalorder %s306, %s320
    %p322 = scmp.eq.s32.totalorder %s44, 0
    %p323 = por %p321, %p322
    %s325 = sadd.s32 %s324, 1
    %p328 = scmp.eq.s32.totalorder %s38, 1
    %p329 = scmp.ne.s32.totalorder %s324, %s326
    %p330 = scmp.eq.s32.totalorder %s38, 0
    %p331 = por %p329, %p330
    %p332 = scmp.ne.s32.totalorder %s324, %s326
    %p333 = scmp.eq.s32.totalorder %s43, 1
    %p334 = por %p332, %p333
    %p335 = scmp.ne.s32.totalorder %s326, %s327
    %p336 = scmp.eq.s32.totalorder %s43, 0
    %p337 = por %p335, %p336
    %p338 = scmp.ne.s32.totalorder %s326, %s327
    %p339 = scmp.eq.s32.totalorder %s44, 1
    %p340 = por %p338, %p339
    %p342 = scmp.ne.s32.totalorder %s327, %s341
    %p343 = scmp.eq.s32.totalorder %s44, 0
    %p344 = por %p342, %p343
    %s346 = sadd.s32 %s345, 1
    %p349 = scmp.eq.s32.totalorder %s38, 1
    %p350 = scmp.ne.s32.totalorder %s345, %s347
    %p351 = scmp.eq.s32.totalorder %s38, 0
    %p352 = por %p350, %p351
    %p353 = scmp.ne.s32.totalorder %s345, %s347
    %p354 = scmp.eq.s32.totalorder %s43, 1
    %p355 = por %p353, %p354
    %p356 = scmp.ne.s32.totalorder %s347, %s348
    %p357 = scmp.eq.s32.totalorder %s43, 0
    %p358 = por %p356, %p357
    %p359 = scmp.ne.s32.totalorder %s347, %s348
    %p360 = scmp.eq.s32.totalorder %s44, 1
    %p361 = por %p359, %p360
    %p363 = scmp.ne.s32.totalorder %s348, %s362
    %p364 = scmp.eq.s32.totalorder %s44, 0
    %p365 = por %p363, %p364
    %s367 = sadd.s32 %s366, 1
    %p370 = scmp.eq.s32.totalorder %s38, 1
    %p371 = scmp.ne.s32.totalorder %s366, %s368
    %p372 = scmp.eq.s32.totalorder %s38, 0
    %p373 = por %p371, %p372
    %p374 = scmp.ne.s32.totalorder %s366, %s368
    %p375 = scmp.eq.s32.totalorder %s43, 1
    %p376 = por %p374, %p375
    %p377 = scmp.ne.s32.totalorder %s368, %s369
    %p378 = scmp.eq.s32.totalorder %s43, 0
    %p379 = por %p377, %p378
    %p380 = scmp.ne.s32.totalorder %s368, %s369
    %p381 = scmp.eq.s32.totalorder %s44, 1
    %p382 = por %p380, %p381
    %p384 = scmp.ne.s32.totalorder %s369, %s383
    %p385 = scmp.eq.s32.totalorder %s44, 0
    %p386 = por %p384, %p385
    %s388 = sadd.s32 %s387, 1
    %p391 = scmp.eq.s32.totalorder %s38, 1
    %p392 = scmp.ne.s32.totalorder %s387, %s389
    %p393 = scmp.eq.s32.totalorder %s38, 0
    %p394 = por %p392, %p393
    %p395 = scmp.ne.s32.totalorder %s387, %s389
    %p396 = scmp.eq.s32.totalorder %s43, 1
    %p397 = por %p395, %p396
    %p398 = scmp.ne.s32.totalorder %s389, %s390
    %p399 = scmp.eq.s32.totalorder %s43, 0
    %p400 = por %p398, %p399
    %p401 = scmp.ne.s32.totalorder %s389, %s390
    %p402 = scmp.eq.s32.totalorder %s44, 1
    %p403 = por %p401, %p402
    %p405 = scmp.ne.s32.totalorder %s390, %s404
    %p406 = scmp.eq.s32.totalorder %s44, 0
    %p407 = por %p405, %p406
    %s409 = sadd.s32 %s408, 1
    %p412 = scmp.eq.s32.totalorder %s38, 1
    %p413 = scmp.ne.s32.totalorder %s408, %s410
    %p414 = scmp.eq.s32.totalorder %s38, 0
    %p415 = por %p413, %p414
    %p416 = scmp.ne.s32.totalorder %s408, %s410
    %p417 = scmp.eq.s32.totalorder %s43, 1
    %p418 = por %p416, %p417
    %p419 = scmp.ne.s32.totalorder %s410, %s411
    %p420 = scmp.eq.s32.totalorder %s43, 0
    %p421 = por %p419, %p420
    %p422 = scmp.ne.s32.totalorder %s410, %s411
    %p423 = scmp.eq.s32.totalorder %s44, 1
    %p424 = por %p422, %p423
    %p426 = scmp.ne.s32.totalorder %s411, %s425
    %p427 = scmp.eq.s32.totalorder %s44, 0
    %p428 = por %p426, %p427
    %s430 = sadd.s32 %s429, 1
    %p433 = scmp.eq.s32.totalorder %s38, 1
    %p434 = scmp.ne.s32.totalorder %s429, %s431
    %p435 = scmp.eq.s32.totalorder %s38, 0
    %p436 = por %p434, %p435
    %p437 = scmp.ne.s32.totalorder %s429, %s431
    %p438 = scmp.eq.s32.totalorder %s43, 1
    %p439 = por %p437, %p438
    %p440 = scmp.ne.s32.totalorder %s431, %s432
    %p441 = scmp.eq.s32.totalorder %s43, 0
    %p442 = por %p440, %p441
    %p443 = scmp.ne.s32.totalorder %s431, %s432
    %p444 = scmp.eq.s32.totalorder %s44, 1
    %p445 = por %p443, %p444
    %p447 = scmp.ne.s32.totalorder %s432, %s446
    %p448 = scmp.eq.s32.totalorder %s44, 0
    %p449 = por %p447, %p448
    %s451 = sadd.s32 %s450, 1
    %p454 = scmp.eq.s32.totalorder %s38, 1
    %p455 = scmp.ne.s32.totalorder %s450, %s452
    %p456 = scmp.eq.s32.totalorder %s38, 0
    %p457 = por %p455, %p456
    %p458 = scmp.ne.s32.totalorder %s450, %s452
    %p459 = scmp.eq.s32.totalorder %s43, 1
    %p460 = por %p458, %p459
    %p461 = scmp.ne.s32.totalorder %s452, %s453
    %p462 = scmp.eq.s32.totalorder %s43, 0
    %p463 = por %p461, %p462
    %p464 = scmp.ne.s32.totalorder %s452, %s453
    %p465 = scmp.eq.s32.totalorder %s44, 1
    %p466 = por %p464, %p465
    %p468 = scmp.ne.s32.totalorder %s453, %s467
    %p469 = scmp.eq.s32.totalorder %s44, 0
    %p470 = por %p468, %p469
    %s472 = sadd.s32 %s471, 1
    %p475 = scmp.eq.s32.totalorder %s38, 1
    %p476 = scmp.ne.s32.totalorder %s471, %s473
    %p477 = scmp.eq.s32.totalorder %s38, 0
    %p478 = por %p476, %p477
    %p479 = scmp.ne.s32.totalorder %s471, %s473
    %p480 = scmp.eq.s32.totalorder %s43, 1
    %p481 = por %p479, %p480
    %p482 = scmp.ne.s32.totalorder %s473, %s474
    %p483 = scmp.eq.s32.totalorder %s43, 0
    %p484 = por %p482, %p483
    %p485 = scmp.ne.s32.totalorder %s473, %s474
    %p486 = scmp.eq.s32.totalorder %s44, 1
    %p487 = por %p485, %p486
    %p489 = scmp.ne.s32.totalorder %s474, %s488
    %p490 = scmp.eq.s32.totalorder %s44, 0
    %p491 = por %p489, %p490
    %s493 = sadd.s32 %s492, 1
    %p496 = scmp.eq.s32.totalorder %s38, 1
    %p497 = scmp.ne.s32.totalorder %s492, %s494
    %p498 = scmp.eq.s32.totalorder %s38, 0
    %p499 = por %p497, %p498
    %p500 = scmp.ne.s32.totalorder %s492, %s494
    %p501 = scmp.eq.s32.totalorder %s43, 1
    %p502 = por %p500, %p501
    %p503 = scmp.ne.s32.totalorder %s494, %s495
    %p504 = scmp.eq.s32.totalorder %s43, 0
    %p505 = por %p503, %p504
    %p506 = scmp.ne.s32.totalorder %s494, %s495
    %p507 = scmp.eq.s32.totalorder %s44, 1
    %p508 = por %p506, %p507
    %p510 = scmp.ne.s32.totalorder %s495, %s509
    %p511 = scmp.eq.s32.totalorder %s44, 0
    %p512 = por %p510, %p511
    %s514 = sadd.s32 %s513, 1
    %p517 = scmp.eq.s32.totalorder %s38, 1
    %p518 = scmp.ne.s32.totalorder %s513, %s515
    %p519 = scmp.eq.s32.totalorder %s38, 0
    %p520 = por %p518, %p519
    %p521 = scmp.ne.s32.totalorder %s513, %s515
    %p522 = scmp.eq.s32.totalorder %s43, 1
    %p523 = por %p521, %p522
    %p524 = scmp.ne.s32.totalorder %s515, %s516
    %p525 = scmp.eq.s32.totalorder %s43, 0
    %p526 = por %p524, %p525
    %p527 = scmp.ne.s32.totalorder %s515, %s516
    %p528 = scmp.eq.s32.totalorder %s44, 1
    %p529 = por %p527, %p528
    %p531 = scmp.ne.s32.totalorder %s516, %s530
    %p532 = scmp.eq.s32.totalorder %s44, 0
    %p533 = por %p531, %p532
    %s534 = ssub.s32 %s38, %s45
    %p535 = scmp.eq.s32.totalorder %s534, 0
    %s537 = sadd.s32 %s536, 1
    %s538 = scalar_select %p535, %s536, %s537
    %p541 = pneg %p535
    %p542 = scmp.eq.s32.totalorder %s38, 1
    %p543 = por %p541, %p542
    %p544 = scmp.ne.s32.totalorder %s536, %s539
    %p545 = scmp.eq.s32.totalorder %s38, 0
    %p546 = por %p544, %p545
    %p547 = scmp.ne.s32.totalorder %s536, %s539
    %p548 = scmp.eq.s32.totalorder %s43, 1
    %p549 = por %p547, %p548
    %p550 = scmp.ne.s32.totalorder %s539, %s540
    %p551 = scmp.eq.s32.totalorder %s43, 0
    %p552 = por %p550, %p551
    %p553 = scmp.ne.s32.totalorder %s539, %s540
    %p554 = scmp.eq.s32.totalorder %s44, 1
    %p555 = por %p553, %p554
    %p557 = scmp.ne.s32.totalorder %s540, %s556
    %p558 = scmp.eq.s32.totalorder %s44, 0
    %p559 = por %p557, %p558
    %p560 = scmp.le.s32.totalorder 1, %s38
    %p561 = scmp.lt.s32.totalorder %s38, 3
    %p562 = pnand %p560, %p561
    %p563 = pneg %p562
    // Predicated region
    $region9: #{_lambda_.2} parent=5 // pred_check
      _
    $region10: #{_lambda_.2} parent=5 // pred_check_branch
      %565 = sbr.rel (%p562) target = $region12
    $region11: #{_lambda_.2} parent=5 // pred_region
      %s566 = ssub.s32 %s38, 1
      // Predicated region
      $region13: #{_lambda_.2} parent=11 // pred_check
        %p567 = pneg %p85
      $region14: #{_lambda_.2} parent=11 // pred_check_branch
        %569 = sbr.rel (%p567) target = $region16
      $region15: #{_lambda_.2} parent=11 // pred_region
        _
      $region16: #{_lambda_.2} parent=11 // pred_fallthru
        _
      // Predicated region
      $region17: #{_lambda_.2} parent=11 // pred_check
        %p570 = pneg %p106
      $region18: #{_lambda_.2} parent=11 // pred_check_branch
        %572 = sbr.rel (%p570) target = $region20
      $region19: #{_lambda_.2} parent=11 // pred_region
        _
      $region20: #{_lambda_.2} parent=11 // pred_fallthru
        _
      // Predicated region
      $region21: #{_lambda_.2} parent=11 // pred_check
        %p573 = pneg %p127
      $region22: #{_lambda_.2} parent=11 // pred_check_branch
        %575 = sbr.rel (%p573) target = $region24
      $region23: #{_lambda_.2} parent=11 // pred_region
        _
      $region24: #{_lambda_.2} parent=11 // pred_fallthru
        _
      // Predicated region
      $region25: #{_lambda_.2} parent=11 // pred_check
        %p576 = pneg %p148
      $region26: #{_lambda_.2} parent=11 // pred_check_branch
        %578 = sbr.rel (%p576) target = $region28
      $region27: #{_lambda_.2} parent=11 // pred_region
        _
      $region28: #{_lambda_.2} parent=11 // pred_fallthru
        _
      // Predicated region
      $region29: #{_lambda_.2} parent=11 // pred_check
        %p579 = pneg %p169
      $region30: #{_lambda_.2} parent=11 // pred_check_branch
        %581 = sbr.rel (%p579) target = $region32
      $region31: #{_lambda_.2} parent=11 // pred_region
        _
      $region32: #{_lambda_.2} parent=11 // pred_fallthru
        _
      // Predicated region
      $region33: #{_lambda_.2} parent=11 // pred_check
        %p582 = pneg %p190
      $region34: #{_lambda_.2} parent=11 // pred_check_branch
        %584 = sbr.rel (%p582) target = $region36
      $region35: #{_lambda_.2} parent=11 // pred_region
        _
      $region36: #{_lambda_.2} parent=11 // pred_fallthru
        _
      // Predicated region
      $region37: #{_lambda_.2} parent=11 // pred_check
        %p585 = pneg %p211
      $region38: #{_lambda_.2} parent=11 // pred_check_branch
        %587 = sbr.rel (%p585) target = $region40
      $region39: #{_lambda_.2} parent=11 // pred_region
        _
      $region40: #{_lambda_.2} parent=11 // pred_fallthru
        _
      // Predicated region
      $region41: #{_lambda_.2} parent=11 // pred_check
        %p588 = pneg %p232
      $region42: #{_lambda_.2} parent=11 // pred_check_branch
        %590 = sbr.rel (%p588) target = $region44
      $region43: #{_lambda_.2} parent=11 // pred_region
        _
      $region44: #{_lambda_.2} parent=11 // pred_fallthru
        _
      // Predicated region
      $region45: #{_lambda_.2} parent=11 // pred_check
        %p591 = pneg %p253
      $region46: #{_lambda_.2} parent=11 // pred_check_branch
        %593 = sbr.rel (%p591) target = $region48
      $region47: #{_lambda_.2} parent=11 // pred_region
        _
      $region48: #{_lambda_.2} parent=11 // pred_fallthru
        _
      // Predicated region
      $region49: #{_lambda_.2} parent=11 // pred_check
        %p594 = pneg %p274
      $region50: #{_lambda_.2} parent=11 // pred_check_branch
        %596 = sbr.rel (%p594) target = $region52
      $region51: #{_lambda_.2} parent=11 // pred_region
        _
      $region52: #{_lambda_.2} parent=11 // pred_fallthru
        _
      // Predicated region
      $region53: #{_lambda_.2} parent=11 // pred_check
        %p597 = pneg %p295
      $region54: #{_lambda_.2} parent=11 // pred_check_branch
        %599 = sbr.rel (%p597) target = $region56
      $region55: #{_lambda_.2} parent=11 // pred_region
        _
      $region56: #{_lambda_.2} parent=11 // pred_fallthru
        _
      // Predicated region
      $region57: #{_lambda_.2} parent=11 // pred_check
        %p600 = pneg %p316
      $region58: #{_lambda_.2} parent=11 // pred_check_branch
        %602 = sbr.rel (%p600) target = $region60
      $region59: #{_lambda_.2} parent=11 // pred_region
        _
      $region60: #{_lambda_.2} parent=11 // pred_fallthru
        _
      // Predicated region
      $region61: #{_lambda_.2} parent=11 // pred_check
        %p603 = pneg %p337
      $region62: #{_lambda_.2} parent=11 // pred_check_branch
        %605 = sbr.rel (%p603) target = $region64
      $region63: #{_lambda_.2} parent=11 // pred_region
        _
      $region64: #{_lambda_.2} parent=11 // pred_fallthru
        _
      // Predicated region
      $region65: #{_lambda_.2} parent=11 // pred_check
        %p606 = pneg %p358
      $region66: #{_lambda_.2} parent=11 // pred_check_branch
        %608 = sbr.rel (%p606) target = $region68
      $region67: #{_lambda_.2} parent=11 // pred_region
        _
      $region68: #{_lambda_.2} parent=11 // pred_fallthru
        _
      // Predicated region
      $region69: #{_lambda_.2} parent=11 // pred_check
        %p609 = pneg %p379
      $region70: #{_lambda_.2} parent=11 // pred_check_branch
        %611 = sbr.rel (%p609) target = $region72
      $region71: #{_lambda_.2} parent=11 // pred_region
        _
      $region72: #{_lambda_.2} parent=11 // pred_fallthru
        _
      // Predicated region
      $region73: #{_lambda_.2} parent=11 // pred_check
        %p612 = pneg %p400
      $region74: #{_lambda_.2} parent=11 // pred_check_branch
        %614 = sbr.rel (%p612) target = $region76
      $region75: #{_lambda_.2} parent=11 // pred_region
        _
      $region76: #{_lambda_.2} parent=11 // pred_fallthru
        _
      // Predicated region
      $region77: #{_lambda_.2} parent=11 // pred_check
        %p615 = pneg %p421
      $region78: #{_lambda_.2} parent=11 // pred_check_branch
        %617 = sbr.rel (%p615) target = $region80
      $region79: #{_lambda_.2} parent=11 // pred_region
        _
      $region80: #{_lambda_.2} parent=11 // pred_fallthru
        _
      // Predicated region
      $region81: #{_lambda_.2} parent=11 // pred_check
        %p618 = pneg %p442
      $region82: #{_lambda_.2} parent=11 // pred_check_branch
        %620 = sbr.rel (%p618) target = $region84
      $region83: #{_lambda_.2} parent=11 // pred_region
        _
      $region84: #{_lambda_.2} parent=11 // pred_fallthru
        _
      // Predicated region
      $region85: #{_lambda_.2} parent=11 // pred_check
        %p621 = pneg %p463
      $region86: #{_lambda_.2} parent=11 // pred_check_branch
        %623 = sbr.rel (%p621) target = $region88
      $region87: #{_lambda_.2} parent=11 // pred_region
        _
      $region88: #{_lambda_.2} parent=11 // pred_fallthru
        _
      // Predicated region
      $region89: #{_lambda_.2} parent=11 // pred_check
        %p624 = pneg %p484
      $region90: #{_lambda_.2} parent=11 // pred_check_branch
        %626 = sbr.rel (%p624) target = $region92
      $region91: #{_lambda_.2} parent=11 // pred_region
        _
      $region92: #{_lambda_.2} parent=11 // pred_fallthru
        _
      // Predicated region
      $region93: #{_lambda_.2} parent=11 // pred_check
        %p627 = pneg %p505
      $region94: #{_lambda_.2} parent=11 // pred_check_branch
        %629 = sbr.rel (%p627) target = $region96
      $region95: #{_lambda_.2} parent=11 // pred_region
        _
      $region96: #{_lambda_.2} parent=11 // pred_fallthru
        _
      // Predicated region
      $region97: #{_lambda_.2} parent=11 // pred_check
        %p630 = pneg %p526
      $region98: #{_lambda_.2} parent=11 // pred_check_branch
        %632 = sbr.rel (%p630) target = $region100
      $region99: #{_lambda_.2} parent=11 // pred_region
        _
      $region100: #{_lambda_.2} parent=11 // pred_fallthru
        _
    $region12: #{_lambda_.2} parent=5 // pred_fallthru
      _
    %p633 = scmp.lt.s32.totalorder %s38, 2
    // Predicated region
    $region101: #{_lambda_.2} parent=5 // pred_check
      %p634 = pneg %p633
    $region102: #{_lambda_.2} parent=5 // pred_check_branch
      %636 = sbr.rel (%p634) target = $region104
    $region103: #{_lambda_.2} parent=5 // pred_region
      // Predicated region
      $region105: #{_lambda_.2} parent=103 // pred_check
        %p637 = pneg %p58
      $region106: #{_lambda_.2} parent=103 // pred_check_branch
        %639 = sbr.rel (%p637) target = $region108
      $region107: #{_lambda_.2} parent=103 // pred_region
        %p640 = scmp.lt.s32.totalorder %s38, 1
        %s641 = scalar_select %p640, %s38, 1
        %s642 = smul.addr %s641, 2
        %s643 = smul.addr %s642, 8
        %s644 = scalar_lea.vmem %s1, %s643
      $region108: #{_lambda_.2} parent=103 // pred_fallthru
        _
    $region104: #{_lambda_.2} parent=5 // pred_fallthru
      _
    %p645 = scmp.le.s32.totalorder 1, %s38
    %p646 = scmp.lt.s32.totalorder %s38, 3
    %p647 = pnand %p645, %p646
    %p648 = pneg %p647
    // Predicated region
    $region109: #{_lambda_.2} parent=5 // pred_check
      _
    $region110: #{_lambda_.2} parent=5 // pred_check_branch
      %650 = sbr.rel (%p647) target = $region112
    $region111: #{_lambda_.2} parent=5 // pred_region
      %s651 = ssub.s32 %s38, 1
      %p652 = scmp.lt.s32.totalorder %s43, 1
      %s653 = scalar_select %p652, %s43, 1
      %s654 = smul.addr %s653, 2
      %s655 = smul.addr %s654, 8
      %s656 = scalar_lea.vmem %s1, %s655
      %p657 = pneg %p64
      %p658 = pneg %p61
      %p659 = pneg %p85
      %p660 = pneg %p82
      %p661 = pneg %p106
      %p662 = pneg %p103
      %p663 = pneg %p127
      %p664 = pneg %p124
      %p665 = pneg %p148
      %p666 = pneg %p145
      %p667 = pneg %p169
      %p668 = pneg %p166
      %p669 = pneg %p190
      %p670 = pneg %p187
      %p671 = pneg %p211
      %p672 = pneg %p208
      %p673 = pneg %p232
      %p674 = pneg %p229
      %p675 = pneg %p253
      %p676 = pneg %p250
      %p677 = pneg %p274
      %p678 = pneg %p271
      %p679 = pneg %p295
      %p680 = pneg %p292
      %p681 = pneg %p316
      %p682 = pneg %p313
      %p683 = pneg %p337
      %p684 = pneg %p334
      %p685 = pneg %p358
      %p686 = pneg %p355
      %p687 = pneg %p379
      %p688 = pneg %p376
      %p689 = pneg %p400
      %p690 = pneg %p397
      %p691 = pneg %p421
      %p692 = pneg %p418
      %p693 = pneg %p442
      %p694 = pneg %p439
      %p695 = pneg %p463
      %p696 = pneg %p460
      %p697 = pneg %p484
      %p698 = pneg %p481
      %p699 = pneg %p505
      %p700 = pneg %p502
      %p701 = pneg %p526
      %p702 = pneg %p523
      %p703 = pneg %p552
      %p704 = pneg %p549
      %p705 = scmp.lt.s32.totalorder %s43, 1
      %s706 = scalar_select %p705, %s43, 1
      %s707 = smul.addr %s706, 2
      %s708 = smul.addr %s707, 4
      %s709 = scalar_lea.vmem %s24, %s708
      %p710 = scmp.lt.s32.totalorder %s43, 1
      %s711 = scalar_select %p710, %s43, 1
      %s712 = smul.addr %s711, 2
      %s713 = smul.addr %s712, 8
      %s714 = scalar_lea.vmem %s1, %s713
      %p715 = scmp.lt.s32.totalorder %s43, 1
      %s716 = scalar_select %p715, %s43, 1
      %s717 = smul.addr %s716, 2
      %s718 = smul.addr %s717, 4
      %s719 = scalar_lea.vmem %s24, %s718
      %s721 = sld [smem:[#allocation3 + %s43]]
      %v722 = vld [vmem:[%s714] sm:$0xff]
      %v723 = vld [vmem:[%s714 + $0x8] sm:$0xf]
      %v724 = vlaneseq
      %v725 = vand.u32 %v724, 127
      %726 = vset.pattern.permute.xlu0 0
      %727 = vperm.xlu0 %726, %v722
      %v728 = vpop.permute.xlu0 %727
      %729 = vset.pattern.permute.xlu0 0
      %730 = vperm.xlu0 %729, %v723
      %v731 = vpop.permute.xlu0 %730
      %vm732 = vcmp.eq.s32.totalorder %v725, %v728
      %vm733 = vcmp.eq.s32.totalorder %v725, %v731
      %v734 = vsel %vm732, 1, 0
      %v735 = vsel %vm733, 1, 0
      %v736 = vcvt.s32.f32 %v734
      %v737 = vcvt.s32.f32 %v735
      %v738 = vpack.c.bf16 %v737, %v736
      %v739 = vld [vmem:[%s2] sm:$0xff]
      %v740 = vld [vmem:[%s2 + $0x8] sm:$0xff]
      %v741 = vld [vmem:[%s2 + $0x10] sm:$0xff]
      %v742 = vld [vmem:[%s2 + $0x18] sm:$0xff]
      %v743 = vld [vmem:[%s2 + $0x20] sm:$0xff]
      %v744 = vpack.c.bf16 %v740, %v739
      %v745 = vpack.c.bf16 %v742, %v741
      %v746 = vpack.c.bf16 %v743, %v743
      %vm747 = vcmask 326656
      %v749 = vsel %vm747, %v738, 0
      %vm751 = vcmask 1043456
      %v753 = vsel %vm751, %v746, 0
      %755 = vmatpush.bf16.msra.mxu0 0
      %756 = vmatpush.bf16.msra.mxu0 0
      %757 = vmatpush.bf16.msra.mxu0 0
      %758 = vmatpush.bf16.msra.mxu0 0
      %759 = vmatpush.bf16.msra.mxu0 0
      %760 = vmatpush.bf16.msra.mxu0 %v753
      %761 = vmatpush.bf16.msra.mxu0 %v745
      %762 = vmatpush.bf16.msra.mxu0 %v744
      %763 = vmatmul.bf16.gmra.mxu0 %v749
      %v764 = vpop.f32.mrf.mxu0
      %v765 = vadd.f32 0.0, %v764
      %v766 = vpop.f32.mrf.mxu0
      %v767 = vadd.f32 0.0, %v766
      %768 = vdwg.mxu0
      %v769 = vpack.c.bf16 %v765, %v765
      %v770 = vpack.c.bf16 %v767, %v767
      %v773 = vunpack.c.l.b16 %v769
      %v774 = vunpack.c.l.b16 %v770
      %v775 = vpack.c.b16 %v774, %v773
      %v777 = vshrl.u32 %v775, 16
      %v779 = vrot.slane %v777, 7
      %v780 = vshll.u32 %v775, 16
      %v782 = vor.u32 %v779, %v780
      %vm784 = vcmask 1040384
      %vm785 = vsmask.f32 256
      %vm786 = vmand %vm784, %vm785
      %v787 = vsel %vm786, 0, %v782
      %v788 = vrot.slane %v780, 1
      %v789 = vor.u32 %v777, %v788
      %vm791 = vcmask 1045504
      %vm792 = vsmask.f32 5376
      %vm793 = vmand %vm791, %vm792
      %v794 = vsel %vm793, %v789, 0
      %795 = vrot.lane.b32.xlu0 %v775, 32
      %v796 = vpop.permute.xlu0 %795
      %798 = vrot.lane.b32.xlu0 %v794, 64
      %v799 = vpop.permute.xlu0 %798
      %vm800 = vcmask 261120
      %v803 = vsel %vm800, %v787, %v796
      %vm804 = vcmask 523264
      %v806 = vsel %vm804, %v803, %v799
      %v807 = vld [vmem:[%s3] sm:$0xf]
      %v808 = vld [vmem:[%s3 + $0x4] sm:$0xf]
      %v809 = vld [vmem:[%s3 + $0x8] sm:$0xf]
      %v810 = vld [vmem:[%s3 + $0xc] sm:$0xf]
      %v811 = vld [vmem:[%s3 + $0x10] sm:$0xf]
      %v812 = vld [vmem:[%s3 + $0x14] sm:$0xf]
      %v813 = vld [vmem:[%s3 + $0x18] sm:$0xf]
      %v814 = vld [vmem:[%s3 + $0x1c] sm:$0xf]
      %v815 = vld [vmem:[%s3 + $0x20] sm:$0xf]
      %v816 = vld [vmem:[%s3 + $0x24] sm:$0xf]
      %v817 = vld [vmem:[%s3 + $0x28] sm:$0xf]
      %v818 = vld [vmem:[%s3 + $0x2c] sm:$0xf]
      %v819 = vld [vmem:[%s4] sm:$0x1]
      %v821 = vperm.slane %v819, 0
      %v835 = vunpack.c.l.b16 %v807
      %v836 = vunpack.c.l.b16 %v808
      %v837 = vunpack.c.l.b16 %v809
      %v838 = vunpack.c.l.b16 %v810
      %v839 = vunpack.c.l.b16 %v811
      %v840 = vunpack.c.l.b16 %v812
      %v841 = vunpack.c.l.b16 %v813
      %v842 = vunpack.c.l.b16 %v814
      %v843 = vunpack.c.l.b16 %v815
      %v844 = vunpack.c.l.b16 %v816
      %v845 = vunpack.c.l.b16 %v817
      %v846 = vunpack.c.l.b16 %v818
      %v847 = vpack.c.b16 %v836, %v835
      %v848 = vpack.c.b16 %v838, %v837
      %v849 = vpack.c.b16 %v840, %v839
      %v850 = vpack.c.b16 %v842, %v841
      %v851 = vpack.c.b16 %v844, %v843
      %v852 = vpack.c.b16 %v846, %v845
      %vm859 = vcmask 785408
      %v860 = vsel %vm859, %v806, 0
      %862 = vmatpush.bf16.msra.mxu0 0
      %863 = vmatpush.bf16.msra.mxu0 0
      %864 = vmatpush.bf16.msra.mxu0 %v852
      %865 = vmatpush.bf16.msra.mxu0 %v851
      %866 = vmatpush.bf16.msra.mxu0 %v850
      %867 = vmatpush.bf16.msra.mxu0 %v849
      %868 = vmatpush.bf16.msra.mxu0 %v848
      %869 = vmatpush.bf16.msra.mxu0 %v847
      %870 = vmatmul.bf16.gmra.mxu0 %v860
      %v871 = vpop.f32.mrf.mxu0
      %v872 = vadd.f32 %v821, %v871
      %v873 = vpop.f32.mrf.mxu0
      %v874 = vadd.f32 %v821, %v873
      %875 = vdwg.mxu0
      %v876 = vmax.f32 %v872, 0.0
      %v877 = vmax.f32 %v874, 0.0
      %v878 = vpack.c.bf16 %v876, %v876
      %v879 = vpack.c.bf16 %v877, %v877
      %v882 = vunpack.c.l.b16 %v878
      %v883 = vunpack.c.l.b16 %v879
      %v884 = vpack.c.b16 %v883, %v882
      %v886 = vshrl.u32 %v884, 16
      %v888 = vrot.slane %v886, 7
      %v889 = vshll.u32 %v884, 16
      %v891 = vor.u32 %v888, %v889
      %v893 = vsel %vm786, 0, %v891
      %v894 = vrot.slane %v889, 1
      %v895 = vor.u32 %v886, %v894
      %v897 = vsel %vm793, %v895, 0
      %898 = vrot.lane.b32.xlu0 %v884, 32
      %v899 = vpop.permute.xlu0 %898
      %901 = vrot.lane.b32.xlu0 %v897, 64
      %v902 = vpop.permute.xlu0 %901
      %v905 = vsel %vm800, %v893, %v899
      %v907 = vsel %vm804, %v905, %v902
      %v908 = vld [vmem:[%s5] sm:$0xf]
      %v909 = vld [vmem:[%s5 + $0x4] sm:$0xf]
      %v910 = vld [vmem:[%s5 + $0x8] sm:$0xf]
      %v911 = vld [vmem:[%s5 + $0xc] sm:$0xf]
      %v912 = vld [vmem:[%s5 + $0x10] sm:$0xf]
      %v913 = vld [vmem:[%s5 + $0x14] sm:$0xf]
      %v914 = vld [vmem:[%s5 + $0x18] sm:$0xf]
      %v915 = vld [vmem:[%s5 + $0x1c] sm:$0xf]
      %v916 = vld [vmem:[%s5 + $0x20] sm:$0xf]
      %v917 = vld [vmem:[%s5 + $0x24] sm:$0xf]
      %v918 = vld [vmem:[%s5 + $0x28] sm:$0xf]
      %v919 = vld [vmem:[%s5 + $0x2c] sm:$0xf]
      %v920 = vld [vmem:[%s6] sm:$0x1]
      %v922 = vperm.slane %v920, 0
      %v936 = vunpack.c.l.b16 %v908
      %v937 = vunpack.c.l.b16 %v909
      %v938 = vunpack.c.l.b16 %v910
      %v939 = vunpack.c.l.b16 %v911
      %v940 = vunpack.c.l.b16 %v912
      %v941 = vunpack.c.l.b16 %v913
      %v942 = vunpack.c.l.b16 %v914
      %v943 = vunpack.c.l.b16 %v915
      %v944 = vunpack.c.l.b16 %v916
      %v945 = vunpack.c.l.b16 %v917
      %v946 = vunpack.c.l.b16 %v918
      %v947 = vunpack.c.l.b16 %v919
      %v948 = vpack.c.b16 %v937, %v936
      %v949 = vpack.c.b16 %v939, %v938
      %v950 = vpack.c.b16 %v941, %v940
      %v951 = vpack.c.b16 %v943, %v942
      %v952 = vpack.c.b16 %v945, %v944
      %v953 = vpack.c.b16 %v947, %v946
      %v960 = vsel %vm859, %v907, 0
      %962 = vmatpush.bf16.msra.mxu0 0
      %963 = vmatpush.bf16.msra.mxu0 0
      %964 = vmatpush.bf16.msra.mxu0 %v953
      %965 = vmatpush.bf16.msra.mxu0 %v952
      %966 = vmatpush.bf16.msra.mxu0 %v951
      %967 = vmatpush.bf16.msra.mxu0 %v950
      %968 = vmatpush.bf16.msra.mxu0 %v949
      %969 = vmatpush.bf16.msra.mxu0 %v948
      %970 = vmatmul.bf16.gmra.mxu0 %v960
      %v971 = vpop.f32.mrf.mxu0
      %v972 = vadd.f32 %v922, %v971
      %v973 = vpop.f32.mrf.mxu0
      %v974 = vadd.f32 %v922, %v973
      %975 = vdwg.mxu0
      %v976 = vmax.f32 %v972, 0.0
      %v977 = vmax.f32 %v974, 0.0
      %v978 = vpack.c.bf16 %v977, %v976
      %v979 = vld [vmem:[%s7] sm:$0xf]
      %v980 = vld [vmem:[%s7 + $0x4] sm:$0xf]
      %v981 = vld [vmem:[%s7 + $0x8] sm:$0xf]
      %v982 = vld [vmem:[%s7 + $0xc] sm:$0xf]
      %v983 = vld [vmem:[%s8] sm:$0x1]
      %v985 = vperm.slane %v983, 0
      %v991 = vunpack.c.l.b16 %v979
      %v992 = vunpack.c.l.b16 %v980
      %v993 = vunpack.c.l.b16 %v981
      %v994 = vunpack.c.l.b16 %v982
      %v995 = vpack.c.b16 %v992, %v991
      %v996 = vpack.c.b16 %v994, %v993
      %v1000 = vsel %vm800, %v978, 0
      %1002 = vmatpush.bf16.msra.mxu0 0
      %1003 = vmatpush.bf16.msra.mxu0 0
      %1004 = vmatpush.bf16.msra.mxu0 0
      %1005 = vmatpush.bf16.msra.mxu0 0
      %1006 = vmatpush.bf16.msra.mxu0 0
      %1007 = vmatpush.bf16.msra.mxu0 0
      %1008 = vmatpush.bf16.msra.mxu0 %v996
      %1009 = vmatpush.bf16.msra.mxu0 %v995
      %1010 = vmatmul.bf16.gmra.mxu0 %v1000
      %v1011 = vpop.f32.mrf.mxu0
      %v1012 = vadd.f32 %v985, %v1011
      %v1013 = vpop.f32.mrf.mxu0
      %v1014 = vadd.f32 %v985, %v1013
      %1015 = vdwg.mxu0
      %v1016 = vld [vmem:[%s9] sm:$0xff]
      %v1017 = vld [vmem:[%s9 + $0x8] sm:$0xf]
      %v1018 = vadd.f32 %v1012, %v1016
      %v1019 = vadd.f32 %v1014, %v1017
      %v1020 = vstv %s721
      %vm1021 = vcmp.ge.s32.totalorder %v725, %v1020
      %v1022 = vlaneseq
      %v1023 = vshrl.u32 %v1022, 7
      %v1024 = vadd.s32 %v1023, 8
      %vm1025 = vcmp.ge.s32.totalorder %v1023, %v1020
      %vm1026 = vcmp.ge.s32.totalorder %v1024, %v1020
      %v1027 = vld [vmem:[%s10] sm:$0x1]
      %v1028 = vld [vmem:[%s11] sm:$0x1]
      %v1029 = vsel %vm800, %v1018, 0.0
      %1030 = vadd.xlane.f32.xlu0 %v1029
      %v1031 = vpop.xlane.xlu0 %1030
      %vm1032 = vcmask 257024
      %v1033 = vsel %vm1032, %v1019, 0.0
      %1034 = vadd.xlane.f32.xlu0 %v1033
      %v1035 = vpop.xlane.xlu0 %1034
      %v1036 = vrcp.pop 32.0
      %v1037 = vmul.f32 32.0, %v1036
      %v1038 = vsub.f32 1.0, %v1037
      %v1039 = vmul.f32 %v1036, %v1038
      %v1040 = vadd.f32 %v1036, %v1039
      %vm1041 = vweird.f32 %v1036
      %v1042 = vsel %vm1041, %v1036, %v1040
      %v1043 = vmul.f32 %v1031, %v1042
      %v1044 = vmul.f32 %v1035, %v1042
      %v1045 = vsub.f32 %v1018, %v1043
      %v1046 = vsub.f32 %v1019, %v1044
      %v1047 = vmul.f32 %v1045, %v1045
      %v1048 = vmul.f32 %v1046, %v1046
      %v1049 = vsel %vm800, %v1047, 0.0
      %1050 = vadd.xlane.f32.xlu0 %v1049
      %v1051 = vpop.xlane.xlu0 %1050
      %v1052 = vsel %vm1032, %v1048, 0.0
      %1053 = vadd.xlane.f32.xlu0 %v1052
      %v1054 = vpop.xlane.xlu0 %1053
      %v1055 = vmul.f32 %v1051, %v1042
      %v1056 = vmul.f32 %v1054, %v1042
      %v1057 = vadd.f32 %v1055, 1e-05
      %v1058 = vadd.f32 %v1056, 1e-05
      %v1059 = vrsqrt.pop %v1057
      %v1060 = vmul.f32 %v1059, %v1057
      %v1061 = vmul.f32 %v1060, %v1059
      %v1062 = vmul.f32 0.5, %v1061
      %v1063 = vsub.f32 1.5, %v1062
      %v1064 = vmul.f32 %v1059, %v1063
      %vm1065 = vweird.f32 %v1057
      %vm1066 = vweird.f32 %v1059
      %vm1067 = vmor %vm1065, %vm1066
      %v1068 = vsel %vm1067, %v1059, %v1064
      %v1069 = vrsqrt.pop %v1058
      %v1070 = vmul.f32 %v1069, %v1058
      %v1071 = vmul.f32 %v1070, %v1069
      %v1072 = vmul.f32 0.5, %v1071
      %v1073 = vsub.f32 1.5, %v1072
      %v1074 = vmul.f32 %v1069, %v1073
      %vm1075 = vweird.f32 %v1058
      %vm1076 = vweird.f32 %v1069
      %vm1077 = vmor %vm1075, %vm1076
      %v1078 = vsel %vm1077, %v1069, %v1074
      %v1079 = vmul.f32 %v1045, %v1068
      %v1080 = vmul.f32 %v1046, %v1078
      %v1082 = vperm.slane %v1027, 0
      %v1084 = vmul.f32 %v1079, %v1082
      %v1085 = vmul.f32 %v1080, %v1082
      %v1087 = vperm.slane %v1028, 0
      %v1089 = vadd.f32 %v1084, %v1087
      %v1090 = vadd.f32 %v1085, %v1087
      %v1091 = vpack.c.bf16 %v1090, %v1089
      %v1092 = vld [vmem:[%s12] sm:$0xf]
      %v1093 = vld [vmem:[%s12 + $0x4] sm:$0xf]
      %v1094 = vld [vmem:[%s12 + $0x8] sm:$0xf]
      %v1095 = vld [vmem:[%s12 + $0xc] sm:$0xf]
      %v1096 = vld [vmem:[%s13] sm:$0x1]
      %v1098 = vperm.slane %v1096, 0
      %v1104 = vunpack.c.l.b16 %v1092
      %v1105 = vunpack.c.l.b16 %v1093
      %v1106 = vunpack.c.l.b16 %v1094
      %v1107 = vunpack.c.l.b16 %v1095
      %v1108 = vpack.c.b16 %v1105, %v1104
      %v1109 = vpack.c.b16 %v1107, %v1106
      %v1113 = vsel %vm800, %v1091, 0
      %1115 = vmatpush.bf16.msra.mxu0 0
      %1116 = vmatpush.bf16.msra.mxu0 0
      %1117 = vmatpush.bf16.msra.mxu0 0
      %1118 = vmatpush.bf16.msra.mxu0 0
      %1119 = vmatpush.bf16.msra.mxu0 0
      %1120 = vmatpush.bf16.msra.mxu0 0
      %1121 = vmatpush.bf16.msra.mxu0 %v1109
      %1122 = vmatpush.bf16.msra.mxu0 %v1108
      %1123 = vmatmul.bf16.gmra.mxu0 %v1113
      %v1124 = vpop.f32.mrf.mxu0
      %v1125 = vadd.f32 %v1098, %v1124
      %v1126 = vpop.f32.mrf.mxu0
      %v1127 = vadd.f32 %v1098, %v1126
      %1128 = vdwg.mxu0
      %v1129 = vpack.c.bf16 %v1127, %v1125
      %1131 = vrot.lane.b32.xlu0 %v1129, 96
      %v1132 = vpop.permute.xlu0 %1131
      %vm1133 = vcmask 130048
      %v1135 = vsel %vm1133, %v1129, 0
      %v1138 = vsel %vm1133, %v1132, 0
      %1140 = vmatpush.bf16.xpose.msra.mxu0 0
      %1141 = vmatpush.bf16.xpose.msra.mxu0 0
      %1142 = vmatpush.bf16.xpose.msra.mxu0 0
      %1143 = vmatpush.bf16.xpose.msra.mxu0 0
      %1144 = vmatpush.bf16.xpose.msra.mxu0 0
      %1145 = vmatpush.bf16.xpose.msra.mxu0 0
      %1146 = vmatpush.bf16.xpose.msra.mxu0 0
      %1147 = vmatpush.bf16.xpose.msra.mxu0 %v1138
      %1148 = vmatmul.bf16.gmra.mxu0 %v1135
      %v1149 = vpop.f32.mrf.mxu0
      %v1150 = vadd.f32 0.0, %v1149
      %v1151 = vpop.f32.mrf.mxu0
      %v1152 = vadd.f32 0.0, %v1151
      %1153 = vdwg.mxu0
      %v1154 = vmul.f32 %v1150, 0.25
      %v1155 = vmul.f32 %v1152, 0.25
      %v1156 = vsel %vm1021, -1e+30, %v1154
      %v1157 = vsel %vm1021, -1e+30, %v1155
      %vm1158 = vcmask 97280
      %v1159 = vsel %vm1158, %v1156, -inf
      %1160 = vmax.xlane.f32.xlu0 %v1159
      %v1161 = vpop.xlane.xlu0 %1160
      %vm1162 = vcmask 93184
      %v1163 = vsel %vm1162, %v1157, -inf
      %1164 = vmax.xlane.f32.xlu0 %v1163
      %v1165 = vpop.xlane.xlu0 %1164
      %v1166 = vsub.f32 %v1156, %v1161
      %v1167 = vsub.f32 %v1157, %v1165
      %v1168 = vmul.f32 %v1166, 1.442695
      %v1169 = vpow.pop %v1168
      %v1170 = vmul.f32 %v1167, 1.442695
      %v1171 = vpow.pop %v1170
      %v1172 = vsel %vm1158, %v1169, 0.0
      %1173 = vadd.xlane.f32.xlu0 %v1172
      %v1174 = vpop.xlane.xlu0 %1173
      %v1175 = vsel %vm1162, %v1171, 0.0
      %1176 = vadd.xlane.f32.xlu0 %v1175
      %v1177 = vpop.xlane.xlu0 %1176
      %v1178 = vrcp.pop %v1174
      %v1179 = vrcp.pop %v1177
      %v1180 = vmul.f32 %v1169, %v1178
      %v1181 = vmul.f32 %v1171, %v1179
      %v1182 = vsel %vm1025, 1, 0
      %v1183 = vsel %vm1026, 1, 0
      %vm1184 = vcmp.eq.s32.totalorder %v1182, 1
      %vm1185 = vcmp.eq.s32.totalorder %v1183, 1
      %v1186 = vsel %vm1184, 0.0, %v1180
      %v1187 = vsel %vm1185, 0.0, %v1181
      %v1188 = vpack.c.bf16 %v1187, %v1186
      %1189 = vrot.lane.b32.xlu0 %v1129, 64
      %v1190 = vpop.permute.xlu0 %1189
      %v1192 = vsel %vm1158, %v1188, 0
      %vm1194 = vcmask 1045504
      %v1196 = vsel %vm1194, %v1190, 0
      %1198 = vmatpush.bf16.msra.mxu0 0
      %1199 = vmatpush.bf16.msra.mxu0 0
      %1200 = vmatpush.bf16.msra.mxu0 0
      %1201 = vmatpush.bf16.msra.mxu0 0
      %1202 = vmatpush.bf16.msra.mxu0 0
      %1203 = vmatpush.bf16.msra.mxu0 0
      %1204 = vmatpush.bf16.msra.mxu0 0
      %1205 = vmatpush.bf16.msra.mxu0 %v1196
      %1206 = vmatmul.bf16.gmra.mxu0 %v1192
      %v1207 = vpop.f32.mrf.mxu0
      %v1208 = vadd.f32 0.0, %v1207
      %v1209 = vpop.f32.mrf.mxu0
      %v1210 = vadd.f32 0.0, %v1209
      %1211 = vdwg.mxu0
      %1212 = vrot.lane.b32.xlu0 %v1129, 112
      %v1213 = vpop.permute.xlu0 %1212
      %1214 = vrot.lane.b32.xlu0 %v1129, 80
      %v1215 = vpop.permute.xlu0 %1214
      %v1217 = vsel %vm1133, %v1213, 0
      %v1220 = vsel %vm1133, %v1215, 0
      %1222 = vmatpush.bf16.xpose.msra.mxu0 0
      %1223 = vmatpush.bf16.xpose.msra.mxu0 0
      %1224 = vmatpush.bf16.xpose.msra.mxu0 0
      %1225 = vmatpush.bf16.xpose.msra.mxu0 0
      %1226 = vmatpush.bf16.xpose.msra.mxu0 0
      %1227 = vmatpush.bf16.xpose.msra.mxu0 0
      %1228 = vmatpush.bf16.xpose.msra.mxu0 0
      %1229 = vmatpush.bf16.xpose.msra.mxu0 %v1220
      %1230 = vmatmul.bf16.gmra.mxu0 %v1217
      %v1231 = vpop.f32.mrf.mxu0
      %v1232 = vadd.f32 0.0, %v1231
      %v1233 = vpop.f32.mrf.mxu0
      %v1234 = vadd.f32 0.0, %v1233
      %1235 = vdwg.mxu0
      %v1236 = vmul.f32 %v1232, 0.25
      %v1237 = vmul.f32 %v1234, 0.25
      %v1238 = vsel %vm1021, -1e+30, %v1236
      %v1239 = vsel %vm1021, -1e+30, %v1237
      %v1240 = vsel %vm1158, %v1238, -inf
      %1241 = vmax.xlane.f32.xlu0 %v1240
      %v1242 = vpop.xlane.xlu0 %1241
      %v1243 = vsel %vm1162, %v1239, -inf
      %1244 = vmax.xlane.f32.xlu0 %v1243
      %v1245 = vpop.xlane.xlu0 %1244
      %v1246 = vsub.f32 %v1238, %v1242
      %v1247 = vsub.f32 %v1239, %v1245
      %v1248 = vmul.f32 %v1246, 1.442695
      %v1249 = vpow.pop %v1248
      %v1250 = vmul.f32 %v1247, 1.442695
      %v1251 = vpow.pop %v1250
      %v1252 = vsel %vm1158, %v1249, 0.0
      %1253 = vadd.xlane.f32.xlu0 %v1252
      %v1254 = vpop.xlane.xlu0 %1253
      %v1255 = vsel %vm1162, %v1251, 0.0
      %1256 = vadd.xlane.f32.xlu0 %v1255
      %v1257 = vpop.xlane.xlu0 %1256
      %v1258 = vrcp.pop %v1254
      %v1259 = vrcp.pop %v1257
      %v1260 = vmul.f32 %v1249, %v1258
      %v1261 = vmul.f32 %v1251, %v1259
      %v1262 = vsel %vm1184, 0.0, %v1260
      %v1263 = vsel %vm1185, 0.0, %v1261
      %v1264 = vpack.c.bf16 %v1263, %v1262
      %1265 = vrot.lane.b32.xlu0 %v1129, 48
      %v1266 = vpop.permute.xlu0 %1265
      %v1268 = vsel %vm1158, %v1264, 0
      %v1271 = vsel %vm1194, %v1266, 0
      %1273 = vmatpush.bf16.msra.mxu0 0
      %1274 = vmatpush.bf16.msra.mxu0 0
      %1275 = vmatpush.bf16.msra.mxu0 0
      %1276 = vmatpush.bf16.msra.mxu0 0
      %1277 = vmatpush.bf16.msra.mxu0 0
      %1278 = vmatpush.bf16.msra.mxu0 0
      %1279 = vmatpush.bf16.msra.mxu0 0
      %1280 = vmatpush.bf16.msra.mxu0 %v1271
      %1281 = vmatmul.bf16.gmra.mxu0 %v1268
      %v1282 = vpop.f32.mrf.mxu0
      %v1283 = vadd.f32 0.0, %v1282
      %v1284 = vpop.f32.mrf.mxu0
      %v1285 = vadd.f32 0.0, %v1284
      %1286 = vdwg.mxu0
      %1289 = vrot.lane.b32.xlu0 %v1283, 16
      %v1290 = vpop.permute.xlu0 %1289
      %1291 = vrot.lane.b32.xlu0 %v1285, 16
      %v1292 = vpop.permute.xlu0 %1291
      %v1295 = vsel %vm1133, %v1208, %v1290
      %v1296 = vsel %vm1133, %v1210, %v1292
      %v1297 = vpack.c.bf16 %v1296, %v1295
      %v1298 = vld [vmem:[%s14] sm:$0xf]
      %v1299 = vld [vmem:[%s14 + $0x4] sm:$0xf]
      %v1300 = vld [vmem:[%s14 + $0x8] sm:$0xf]
      %v1301 = vld [vmem:[%s14 + $0xc] sm:$0xf]
      %v1306 = vunpack.c.l.b16 %v1298
      %v1307 = vunpack.c.l.b16 %v1299
      %v1308 = vunpack.c.l.b16 %v1300
      %v1309 = vunpack.c.l.b16 %v1301
      %v1310 = vpack.c.b16 %v1307, %v1306
      %v1311 = vpack.c.b16 %v1309, %v1308
      %v1315 = vsel %vm800, %v1297, 0
      %1317 = vmatpush.bf16.msra.mxu0 0
      %1318 = vmatpush.bf16.msra.mxu0 0
      %1319 = vmatpush.bf16.msra.mxu0 0
      %1320 = vmatpush.bf16.msra.mxu0 0
      %1321 = vmatpush.bf16.msra.mxu0 0
      %1322 = vmatpush.bf16.msra.mxu0 0
      %1323 = vmatpush.bf16.msra.mxu0 %v1311
      %1324 = vmatpush.bf16.msra.mxu0 %v1310
      %1325 = vmatmul.bf16.gmra.mxu0 %v1315
      %v1326 = vpop.f32.mrf.mxu0
      %v1327 = vadd.f32 0.0, %v1326
      %v1328 = vpop.f32.mrf.mxu0
      %v1329 = vadd.f32 0.0, %v1328
      %1330 = vdwg.mxu0
      %v1331 = vadd.f32 %v1018, %v1327
      %v1332 = vadd.f32 %v1019, %v1329
      %v1333 = vld [vmem:[%s15] sm:$0x1]
      %v1335 = vperm.slane %v1333, 0
      %v1337 = vadd.f32 %v1331, %v1335
      %v1338 = vadd.f32 %v1332, %v1335
      %v1339 = vld [vmem:[%s16] sm:$0x1]
      %v1340 = vld [vmem:[%s17] sm:$0x1]
      %v1341 = vsel %vm800, %v1337, 0.0
      %1342 = vadd.xlane.f32.xlu0 %v1341
      %v1343 = vpop.xlane.xlu0 %1342
      %v1344 = vsel %vm1032, %v1338, 0.0
      %1345 = vadd.xlane.f32.xlu0 %v1344
      %v1346 = vpop.xlane.xlu0 %1345
      %v1347 = vmul.f32 %v1343, %v1042
      %v1348 = vmul.f32 %v1346, %v1042
      %v1349 = vsub.f32 %v1337, %v1347
      %v1350 = vsub.f32 %v1338, %v1348
      %v1351 = vmul.f32 %v1349, %v1349
      %v1352 = vmul.f32 %v1350, %v1350
      %v1353 = vsel %vm800, %v1351, 0.0
      %1354 = vadd.xlane.f32.xlu0 %v1353
      %v1355 = vpop.xlane.xlu0 %1354
      %v1356 = vsel %vm1032, %v1352, 0.0
      %1357 = vadd.xlane.f32.xlu0 %v1356
      %v1358 = vpop.xlane.xlu0 %1357
      %v1359 = vmul.f32 %v1355, %v1042
      %v1360 = vmul.f32 %v1358, %v1042
      %v1361 = vadd.f32 %v1359, 1e-05
      %v1362 = vadd.f32 %v1360, 1e-05
      %v1363 = vrsqrt.pop %v1361
      %v1364 = vmul.f32 %v1363, %v1361
      %v1365 = vmul.f32 %v1364, %v1363
      %v1366 = vmul.f32 0.5, %v1365
      %v1367 = vsub.f32 1.5, %v1366
      %v1368 = vmul.f32 %v1363, %v1367
      %vm1369 = vweird.f32 %v1361
      %vm1370 = vweird.f32 %v1363
      %vm1371 = vmor %vm1369, %vm1370
      %v1372 = vsel %vm1371, %v1363, %v1368
      %v1373 = vrsqrt.pop %v1362
      %v1374 = vmul.f32 %v1373, %v1362
      %v1375 = vmul.f32 %v1374, %v1373
      %v1376 = vmul.f32 0.5, %v1375
      %v1377 = vsub.f32 1.5, %v1376
      %v1378 = vmul.f32 %v1373, %v1377
      %vm1379 = vweird.f32 %v1362
      %vm1380 = vweird.f32 %v1373
      %vm1381 = vmor %vm1379, %vm1380
      %v1382 = vsel %vm1381, %v1373, %v1378
      %v1383 = vmul.f32 %v1349, %v1372
      %v1384 = vmul.f32 %v1350, %v1382
      %v1386 = vperm.slane %v1339, 0
      %v1388 = vmul.f32 %v1383, %v1386
      %v1389 = vmul.f32 %v1384, %v1386
      %v1391 = vperm.slane %v1340, 0
      %v1393 = vadd.f32 %v1388, %v1391
      %v1394 = vadd.f32 %v1389, %v1391
      %v1395 = vpack.c.bf16 %v1394, %v1393
      %v1396 = vld [vmem:[%s18] sm:$0xf]
      %v1397 = vld [vmem:[%s18 + $0x4] sm:$0xf]
      %v1398 = vld [vmem:[%s18 + $0x8] sm:$0xf]
      %v1399 = vld [vmem:[%s18 + $0xc] sm:$0xf]
      %v1400 = vld [vmem:[%s19] sm:$0x1]
      %v1402 = vperm.slane %v1400, 0
      %v1408 = vunpack.c.l.b16 %v1396
      %v1409 = vunpack.c.l.b16 %v1397
      %v1410 = vunpack.c.l.b16 %v1398
      %v1411 = vunpack.c.l.b16 %v1399
      %v1412 = vpack.c.b16 %v1409, %v1408
      %v1413 = vpack.c.b16 %v1411, %v1410
      %v1417 = vsel %vm800, %v1395, 0
      %1419 = vmatpush.bf16.msra.mxu0 0
      %1420 = vmatpush.bf16.msra.mxu0 0
      %1421 = vmatpush.bf16.msra.mxu0 0
      %1422 = vmatpush.bf16.msra.mxu0 0
      %1423 = vmatpush.bf16.msra.mxu0 0
      %1424 = vmatpush.bf16.msra.mxu0 0
      %1425 = vmatpush.bf16.msra.mxu0 %v1413
      %1426 = vmatpush.bf16.msra.mxu0 %v1412
      %1427 = vmatmul.bf16.gmra.mxu0 %v1417
      %v1428 = vpop.f32.mrf.mxu0
      %v1429 = vadd.f32 %v1402, %v1428
      %v1430 = vpop.f32.mrf.mxu0
      %v1431 = vadd.f32 %v1402, %v1430
      %1432 = vdwg.mxu0
      %v1433 = vmax.f32 %v1429, 0.0
      %v1434 = vmax.f32 %v1431, 0.0
      %v1435 = vpack.c.bf16 %v1434, %v1433
      %v1436 = vld [vmem:[%s20] sm:$0xf]
      %v1437 = vld [vmem:[%s20 + $0x4] sm:$0xf]
      %v1438 = vld [vmem:[%s20 + $0x8] sm:$0xf]
      %v1439 = vld [vmem:[%s20 + $0xc] sm:$0xf]
      %v1440 = vld [vmem:[%s20 + $0x10] sm:$0xf]
      %v1441 = vld [vmem:[%s20 + $0x14] sm:$0xf]
      %v1442 = vld [vmem:[%s20 + $0x18] sm:$0xf]
      %v1443 = vld [vmem:[%s20 + $0x1c] sm:$0xf]
      %v1452 = vunpack.c.l.b16 %v1436
      %v1453 = vunpack.c.l.b16 %v1437
      %v1454 = vunpack.c.l.b16 %v1438
      %v1455 = vunpack.c.l.b16 %v1439
      %v1456 = vunpack.c.l.b16 %v1440
      %v1457 = vunpack.c.l.b16 %v1441
      %v1458 = vunpack.c.l.b16 %v1442
      %v1459 = vunpack.c.l.b16 %v1443
      %v1460 = vpack.c.b16 %v1453, %v1452
      %v1461 = vpack.c.b16 %v1455, %v1454
      %v1462 = vpack.c.b16 %v1457, %v1456
      %v1463 = vpack.c.b16 %v1459, %v1458
      %v1469 = vsel %vm804, %v1435, 0
      %1471 = vmatpush.bf16.msra.mxu0 0
      %1472 = vmatpush.bf16.msra.mxu0 0
      %1473 = vmatpush.bf16.msra.mxu0 0
      %1474 = vmatpush.bf16.msra.mxu0 0
      %1475 = vmatpush.bf16.msra.mxu0 %v1463
      %1476 = vmatpush.bf16.msra.mxu0 %v1462
      %1477 = vmatpush.bf16.msra.mxu0 %v1461
      %1478 = vmatpush.bf16.msra.mxu0 %v1460
      %1479 = vmatmul.bf16.gmra.mxu0 %v1469
      %v1480 = vpop.f32.mrf.mxu0
      %v1481 = vadd.f32 0.0, %v1480
      %v1482 = vpop.f32.mrf.mxu0
      %v1483 = vadd.f32 0.0, %v1482
      %1484 = vdwg.mxu0
      %v1485 = vadd.f32 %v1337, %v1481
      %v1486 = vadd.f32 %v1338, %v1483
      %v1487 = vld [vmem:[%s21] sm:$0x1]
      %v1489 = vperm.slane %v1487, 0
      %v1491 = vadd.f32 %v1485, %v1489
      %v1492 = vadd.f32 %v1486, %v1489
      %s1493 = scalar_lea.vmem %s10, 1
      %v1494 = vld [vmem:[%s1493] sm:$0x1]
      %s1495 = scalar_lea.vmem %s11, 1
      %v1496 = vld [vmem:[%s1495] sm:$0x1]
      %v1497 = vsel %vm800, %v1491, 0.0
      %1498 = vadd.xlane.f32.xlu0 %v1497
      %v1499 = vpop.xlane.xlu0 %1498
      %v1500 = vsel %vm1032, %v1492, 0.0
      %1501 = vadd.xlane.f32.xlu0 %v1500
      %v1502 = vpop.xlane.xlu0 %1501
      %v1503 = vmul.f32 %v1499, %v1042
      %v1504 = vmul.f32 %v1502, %v1042
      %v1505 = vsub.f32 %v1491, %v1503
      %v1506 = vsub.f32 %v1492, %v1504
      %v1507 = vmul.f32 %v1505, %v1505
      %v1508 = vmul.f32 %v1506, %v1506
      %v1509 = vsel %vm800, %v1507, 0.0
      %1510 = vadd.xlane.f32.xlu0 %v1509
      %v1511 = vpop.xlane.xlu0 %1510
      %v1512 = vsel %vm1032, %v1508, 0.0
      %1513 = vadd.xlane.f32.xlu0 %v1512
      %v1514 = vpop.xlane.xlu0 %1513
      %v1515 = vmul.f32 %v1511, %v1042
      %v1516 = vmul.f32 %v1514, %v1042
      %v1517 = vadd.f32 %v1515, 1e-05
      %v1518 = vadd.f32 %v1516, 1e-05
      %v1519 = vrsqrt.pop %v1517
      %v1520 = vmul.f32 %v1519, %v1517
      %v1521 = vmul.f32 %v1520, %v1519
      %v1522 = vmul.f32 0.5, %v1521
      %v1523 = vsub.f32 1.5, %v1522
      %v1524 = vmul.f32 %v1519, %v1523
      %vm1525 = vweird.f32 %v1517
      %vm1526 = vweird.f32 %v1519
      %vm1527 = vmor %vm1525, %vm1526
      %v1528 = vsel %vm1527, %v1519, %v1524
      %v1529 = vrsqrt.pop %v1518
      %v1530 = vmul.f32 %v1529, %v1518
      %v1531 = vmul.f32 %v1530, %v1529
      %v1532 = vmul.f32 0.5, %v1531
      %v1533 = vsub.f32 1.5, %v1532
      %v1534 = vmul.f32 %v1529, %v1533
      %vm1535 = vweird.f32 %v1518
      %vm1536 = vweird.f32 %v1529
      %vm1537 = vmor %vm1535, %vm1536
      %v1538 = vsel %vm1537, %v1529, %v1534
      %v1539 = vmul.f32 %v1505, %v1528
      %v1540 = vmul.f32 %v1506, %v1538
      %v1542 = vperm.slane %v1494, 0
      %v1544 = vmul.f32 %v1539, %v1542
      %v1545 = vmul.f32 %v1540, %v1542
      %v1547 = vperm.slane %v1496, 0
      %v1549 = vadd.f32 %v1544, %v1547
      %v1550 = vadd.f32 %v1545, %v1547
      %v1551 = vpack.c.bf16 %v1550, %v1549
      %s1552 = scalar_lea.vmem %s12, 16
      %v1553 = vld [vmem:[%s1552] sm:$0xf]
      %v1554 = vld [vmem:[%s1552 + $0x4] sm:$0xf]
      %v1555 = vld [vmem:[%s1552 + $0x8] sm:$0xf]
      %v1556 = vld [vmem:[%s1552 + $0xc] sm:$0xf]
      %s1557 = scalar_lea.vmem %s13, 1
      %v1558 = vld [vmem:[%s1557] sm:$0x1]
      %v1560 = vperm.slane %v1558, 0
      %v1566 = vunpack.c.l.b16 %v1553
      %v1567 = vunpack.c.l.b16 %v1554
      %v1568 = vunpack.c.l.b16 %v1555
      %v1569 = vunpack.c.l.b16 %v1556
      %v1570 = vpack.c.b16 %v1567, %v1566
      %v1571 = vpack.c.b16 %v1569, %v1568
      %v1575 = vsel %vm800, %v1551, 0
      %1577 = vmatpush.bf16.msra.mxu0 0
      %1578 = vmatpush.bf16.msra.mxu0 0
      %1579 = vmatpush.bf16.msra.mxu0 0
      %1580 = vmatpush.bf16.msra.mxu0 0
      %1581 = vmatpush.bf16.msra.mxu0 0
      %1582 = vmatpush.bf16.msra.mxu0 0
      %1583 = vmatpush.bf16.msra.mxu0 %v1571
      %1584 = vmatpush.bf16.msra.mxu0 %v1570
      %1585 = vmatmul.bf16.gmra.mxu0 %v1575
      %v1586 = vpop.f32.mrf.mxu0
      %v1587 = vadd.f32 %v1560, %v1586
      %v1588 = vpop.f32.mrf.mxu0
      %v1589 = vadd.f32 %v1560, %v1588
      %1590 = vdwg.mxu0
      %v1591 = vpack.c.bf16 %v1589, %v1587
      %1593 = vrot.lane.b32.xlu0 %v1591, 96
      %v1594 = vpop.permute.xlu0 %1593
      %v1596 = vsel %vm1133, %v1591, 0
      %v1599 = vsel %vm1133, %v1594, 0
      %1601 = vmatpush.bf16.xpose.msra.mxu0 0
      %1602 = vmatpush.bf16.xpose.msra.mxu0 0
      %1603 = vmatpush.bf16.xpose.msra.mxu0 0
      %1604 = vmatpush.bf16.xpose.msra.mxu0 0
      %1605 = vmatpush.bf16.xpose.msra.mxu0 0
      %1606 = vmatpush.bf16.xpose.msra.mxu0 0
      %1607 = vmatpush.bf16.xpose.msra.mxu0 0
      %1608 = vmatpush.bf16.xpose.msra.mxu0 %v1599
      %1609 = vmatmul.bf16.gmra.mxu0 %v1596
      %v1610 = vpop.f32.mrf.mxu0
      %v1611 = vadd.f32 0.0, %v1610
      %v1612 = vpop.f32.mrf.mxu0
      %v1613 = vadd.f32 0.0, %v1612
      %1614 = vdwg.mxu0
      %v1615 = vmul.f32 %v1611, 0.25
      %v1616 = vmul.f32 %v1613, 0.25
      %v1617 = vsel %vm1021, -1e+30, %v1615
      %v1618 = vsel %vm1021, -1e+30, %v1616
      %v1619 = vsel %vm1158, %v1617, -inf
      %1620 = vmax.xlane.f32.xlu0 %v1619
      %v1621 = vpop.xlane.xlu0 %1620
      %v1622 = vsel %vm1162, %v1618, -inf
      %1623 = vmax.xlane.f32.xlu0 %v1622
      %v1624 = vpop.xlane.xlu0 %1623
      %v1625 = vsub.f32 %v1617, %v1621
      %v1626 = vsub.f32 %v1618, %v1624
      %v1627 = vmul.f32 %v1625, 1.442695
      %v1628 = vpow.pop %v1627
      %v1629 = vmul.f32 %v1626, 1.442695
      %v1630 = vpow.pop %v1629
      %v1631 = vsel %vm1158, %v1628, 0.0
      %1632 = vadd.xlane.f32.xlu0 %v1631
      %v1633 = vpop.xlane.xlu0 %1632
      %v1634 = vsel %vm1162, %v1630, 0.0
      %1635 = vadd.xlane.f32.xlu0 %v1634
      %v1636 = vpop.xlane.xlu0 %1635
      %v1637 = vrcp.pop %v1633
      %v1638 = vrcp.pop %v1636
      %v1639 = vmul.f32 %v1628, %v1637
      %v1640 = vmul.f32 %v1630, %v1638
      %v1641 = vsel %vm1184, 0.0, %v1639
      %v1642 = vsel %vm1185, 0.0, %v1640
      %v1643 = vpack.c.bf16 %v1642, %v1641
      %1644 = vrot.lane.b32.xlu0 %v1591, 64
      %v1645 = vpop.permute.xlu0 %1644
      %v1647 = vsel %vm1158, %v1643, 0
      %v1650 = vsel %vm1194, %v1645, 0
      %1652 = vmatpush.bf16.msra.mxu0 0
      %1653 = vmatpush.bf16.msra.mxu0 0
      %1654 = vmatpush.bf16.msra.mxu0 0
      %1655 = vmatpush.bf16.msra.mxu0 0
      %1656 = vmatpush.bf16.msra.mxu0 0
      %1657 = vmatpush.bf16.msra.mxu0 0
      %1658 = vmatpush.bf16.msra.mxu0 0
      %1659 = vmatpush.bf16.msra.mxu0 %v1650
      %1660 = vmatmul.bf16.gmra.mxu0 %v1647
      %v1661 = vpop.f32.mrf.mxu0
      %v1662 = vadd.f32 0.0, %v1661
      %v1663 = vpop.f32.mrf.mxu0
      %v1664 = vadd.f32 0.0, %v1663
      %1665 = vdwg.mxu0
      %1666 = vrot.lane.b32.xlu0 %v1591, 112
      %v1667 = vpop.permute.xlu0 %1666
      %1668 = vrot.lane.b32.xlu0 %v1591, 80
      %v1669 = vpop.permute.xlu0 %1668
      %v1671 = vsel %vm1133, %v1667, 0
      %v1674 = vsel %vm1133, %v1669, 0
      %1676 = vmatpush.bf16.xpose.msra.mxu0 0
      %1677 = vmatpush.bf16.xpose.msra.mxu0 0
      %1678 = vmatpush.bf16.xpose.msra.mxu0 0
      %1679 = vmatpush.bf16.xpose.msra.mxu0 0
      %1680 = vmatpush.bf16.xpose.msra.mxu0 0
      %1681 = vmatpush.bf16.xpose.msra.mxu0 0
      %1682 = vmatpush.bf16.xpose.msra.mxu0 0
      %1683 = vmatpush.bf16.xpose.msra.mxu0 %v1674
      %1684 = vmatmul.bf16.gmra.mxu0 %v1671
      %v1685 = vpop.f32.mrf.mxu0
      %v1686 = vadd.f32 0.0, %v1685
      %v1687 = vpop.f32.mrf.mxu0
      %v1688 = vadd.f32 0.0, %v1687
      %1689 = vdwg.mxu0
      %v1690 = vmul.f32 %v1686, 0.25
      %v1691 = vmul.f32 %v1688, 0.25
      %v1692 = vsel %vm1021, -1e+30, %v1690
      %v1693 = vsel %vm1021, -1e+30, %v1691
      %v1694 = vsel %vm1158, %v1692, -inf
      %1695 = vmax.xlane.f32.xlu0 %v1694
      %v1696 = vpop.xlane.xlu0 %1695
      %v1697 = vsel %vm1162, %v1693, -inf
      %1698 = vmax.xlane.f32.xlu0 %v1697
      %v1699 = vpop.xlane.xlu0 %1698
      %v1700 = vsub.f32 %v1692, %v1696
      %v1701 = vsub.f32 %v1693, %v1699
      %v1702 = vmul.f32 %v1700, 1.442695
      %v1703 = vpow.pop %v1702
      %v1704 = vmul.f32 %v1701, 1.442695
      %v1705 = vpow.pop %v1704
      %v1706 = vsel %vm1158, %v1703, 0.0
      %1707 = vadd.xlane.f32.xlu0 %v1706
      %v1708 = vpop.xlane.xlu0 %1707
      %v1709 = vsel %vm1162, %v1705, 0.0
      %1710 = vadd.xlane.f32.xlu0 %v1709
      %v1711 = vpop.xlane.xlu0 %1710
      %v1712 = vrcp.pop %v1708
      %v1713 = vrcp.pop %v1711
      %v1714 = vmul.f32 %v1703, %v1712
      %v1715 = vmul.f32 %v1705, %v1713
      %v1716 = vsel %vm1184, 0.0, %v1714
      %v1717 = vsel %vm1185, 0.0, %v1715
      %v1718 = vpack.c.bf16 %v1717, %v1716
      %1719 = vrot.lane.b32.xlu0 %v1591, 48
      %v1720 = vpop.permute.xlu0 %1719
      %v1722 = vsel %vm1158, %v1718, 0
      %v1725 = vsel %vm1194, %v1720, 0
      %1727 = vmatpush.bf16.msra.mxu0 0
      %1728 = vmatpush.bf16.msra.mxu0 0
      %1729 = vmatpush.bf16.msra.mxu0 0
      %1730 = vmatpush.bf16.msra.mxu0 0
      %1731 = vmatpush.bf16.msra.mxu0 0
      %1732 = vmatpush.bf16.msra.mxu0 0
      %1733 = vmatpush.bf16.msra.mxu0 0
      %1734 = vmatpush.bf16.msra.mxu0 %v1725
      %1735 = vmatmul.bf16.gmra.mxu0 %v1722
      %v1736 = vpop.f32.mrf.mxu0
      %v1737 = vadd.f32 0.0, %v1736
      %v1738 = vpop.f32.mrf.mxu0
      %v1739 = vadd.f32 0.0, %v1738
      %1740 = vdwg.mxu0
      %1743 = vrot.lane.b32.xlu0 %v1737, 16
      %v1744 = vpop.permute.xlu0 %1743
      %1745 = vrot.lane.b32.xlu0 %v1739, 16
      %v1746 = vpop.permute.xlu0 %1745
      %v1749 = vsel %vm1133, %v1662, %v1744
      %v1750 = vsel %vm1133, %v1664, %v1746
      %v1751 = vpack.c.bf16 %v1750, %v1749
      %s1752 = scalar_lea.vmem %s14, 16
      %v1753 = vld [vmem:[%s1752] sm:$0xf]
      %v1754 = vld [vmem:[%s1752 + $0x4] sm:$0xf]
      %v1755 = vld [vmem:[%s1752 + $0x8] sm:$0xf]
      %v1756 = vld [vmem:[%s1752 + $0xc] sm:$0xf]
      %v1761 = vunpack.c.l.b16 %v1753
      %v1762 = vunpack.c.l.b16 %v1754
      %v1763 = vunpack.c.l.b16 %v1755
      %v1764 = vunpack.c.l.b16 %v1756
      %v1765 = vpack.c.b16 %v1762, %v1761
      %v1766 = vpack.c.b16 %v1764, %v1763
      %v1770 = vsel %vm800, %v1751, 0
      %1772 = vmatpush.bf16.msra.mxu0 0
      %1773 = vmatpush.bf16.msra.mxu0 0
      %1774 = vmatpush.bf16.msra.mxu0 0
      %1775 = vmatpush.bf16.msra.mxu0 0
      %1776 = vmatpush.bf16.msra.mxu0 0
      %1777 = vmatpush.bf16.msra.mxu0 0
      %1778 = vmatpush.bf16.msra.mxu0 %v1766
      %1779 = vmatpush.bf16.msra.mxu0 %v1765
      %1780 = vmatmul.bf16.gmra.mxu0 %v1770
      %v1781 = vpop.f32.mrf.mxu0
      %v1782 = vadd.f32 0.0, %v1781
      %v1783 = vpop.f32.mrf.mxu0
      %v1784 = vadd.f32 0.0, %v1783
      %1785 = vdwg.mxu0
      %v1786 = vadd.f32 %v1491, %v1782
      %v1787 = vadd.f32 %v1492, %v1784
      %s1788 = scalar_lea.vmem %s15, 1
      %v1789 = vld [vmem:[%s1788] sm:$0x1]
      %v1791 = vperm.slane %v1789, 0
      %v1793 = vadd.f32 %v1786, %v1791
      %v1794 = vadd.f32 %v1787, %v1791
      %s1795 = scalar_lea.vmem %s16, 1
      %v1796 = vld [vmem:[%s1795] sm:$0x1]
      %s1797 = scalar_lea.vmem %s17, 1
      %v1798 = vld [vmem:[%s1797] sm:$0x1]
      %v1799 = vsel %vm800, %v1793, 0.0
      %1800 = vadd.xlane.f32.xlu0 %v1799
      %v1801 = vpop.xlane.xlu0 %1800
      %v1802 = vsel %vm1032, %v1794, 0.0
      %1803 = vadd.xlane.f32.xlu0 %v1802
      %v1804 = vpop.xlane.xlu0 %1803
      %v1805 = vmul.f32 %v1801, %v1042
      %v1806 = vmul.f32 %v1804, %v1042
      %v1807 = vsub.f32 %v1793, %v1805
      %v1808 = vsub.f32 %v1794, %v1806
      %v1809 = vmul.f32 %v1807, %v1807
      %v1810 = vmul.f32 %v1808, %v1808
      %v1811 = vsel %vm800, %v1809, 0.0
      %1812 = vadd.xlane.f32.xlu0 %v1811
      %v1813 = vpop.xlane.xlu0 %1812
      %v1814 = vsel %vm1032, %v1810, 0.0
      %1815 = vadd.xlane.f32.xlu0 %v1814
      %v1816 = vpop.xlane.xlu0 %1815
      %v1817 = vmul.f32 %v1813, %v1042
      %v1818 = vmul.f32 %v1816, %v1042
      %v1819 = vadd.f32 %v1817, 1e-05
      %v1820 = vadd.f32 %v1818, 1e-05
      %v1821 = vrsqrt.pop %v1819
      %v1822 = vmul.f32 %v1821, %v1819
      %v1823 = vmul.f32 %v1822, %v1821
      %v1824 = vmul.f32 0.5, %v1823
      %v1825 = vsub.f32 1.5, %v1824
      %v1826 = vmul.f32 %v1821, %v1825
      %vm1827 = vweird.f32 %v1819
      %vm1828 = vweird.f32 %v1821
      %vm1829 = vmor %vm1827, %vm1828
      %v1830 = vsel %vm1829, %v1821, %v1826
      %v1831 = vrsqrt.pop %v1820
      %v1832 = vmul.f32 %v1831, %v1820
      %v1833 = vmul.f32 %v1832, %v1831
      %v1834 = vmul.f32 0.5, %v1833
      %v1835 = vsub.f32 1.5, %v1834
      %v1836 = vmul.f32 %v1831, %v1835
      %vm1837 = vweird.f32 %v1820
      %vm1838 = vweird.f32 %v1831
      %vm1839 = vmor %vm1837, %vm1838
      %v1840 = vsel %vm1839, %v1831, %v1836
      %v1841 = vmul.f32 %v1807, %v1830
      %v1842 = vmul.f32 %v1808, %v1840
      %v1844 = vperm.slane %v1796, 0
      %v1846 = vmul.f32 %v1841, %v1844
      %v1847 = vmul.f32 %v1842, %v1844
      %v1849 = vperm.slane %v1798, 0
      %v1851 = vadd.f32 %v1846, %v1849
      %v1852 = vadd.f32 %v1847, %v1849
      %v1853 = vpack.c.bf16 %v1852, %v1851
      %s1854 = scalar_lea.vmem %s18, 16
      %v1855 = vld [vmem:[%s1854] sm:$0xf]
      %v1856 = vld [vmem:[%s1854 + $0x4] sm:$0xf]
      %v1857 = vld [vmem:[%s1854 + $0x8] sm:$0xf]
      %v1858 = vld [vmem:[%s1854 + $0xc] sm:$0xf]
      %s1859 = scalar_lea.vmem %s19, 1
      %v1860 = vld [vmem:[%s1859] sm:$0x1]
      %v1862 = vperm.slane %v1860, 0
      %v1868 = vunpack.c.l.b16 %v1855
      %v1869 = vunpack.c.l.b16 %v1856
      %v1870 = vunpack.c.l.b16 %v1857
      %v1871 = vunpack.c.l.b16 %v1858
      %v1872 = vpack.c.b16 %v1869, %v1868
      %v1873 = vpack.c.b16 %v1871, %v1870
      %v1877 = vsel %vm800, %v1853, 0
      %1879 = vmatpush.bf16.msra.mxu0 0
      %1880 = vmatpush.bf16.msra.mxu0 0
      %1881 = vmatpush.bf16.msra.mxu0 0
      %1882 = vmatpush.bf16.msra.mxu0 0
      %1883 = vmatpush.bf16.msra.mxu0 0
      %1884 = vmatpush.bf16.msra.mxu0 0
      %1885 = vmatpush.bf16.msra.mxu0 %v1873
      %1886 = vmatpush.bf16.msra.mxu0 %v1872
      %1887 = vmatmul.bf16.gmra.mxu0 %v1877
      %v1888 = vpop.f32.mrf.mxu0
      %v1889 = vadd.f32 %v1862, %v1888
      %v1890 = vpop.f32.mrf.mxu0
      %v1891 = vadd.f32 %v1862, %v1890
      %1892 = vdwg.mxu0
      %v1893 = vmax.f32 %v1889, 0.0
      %v1894 = vmax.f32 %v1891, 0.0
      %v1895 = vpack.c.bf16 %v1894, %v1893
      %s1896 = scalar_lea.vmem %s20, 32
      %v1897 = vld [vmem:[%s1896] sm:$0xf]
      %v1898 = vld [vmem:[%s1896 + $0x4] sm:$0xf]
      %v1899 = vld [vmem:[%s1896 + $0x8] sm:$0xf]
      %v1900 = vld [vmem:[%s1896 + $0xc] sm:$0xf]
      %v1901 = vld [vmem:[%s1896 + $0x10] sm:$0xf]
      %v1902 = vld [vmem:[%s1896 + $0x14] sm:$0xf]
      %v1903 = vld [vmem:[%s1896 + $0x18] sm:$0xf]
      %v1904 = vld [vmem:[%s1896 + $0x1c] sm:$0xf]
      %v1913 = vunpack.c.l.b16 %v1897
      %v1914 = vunpack.c.l.b16 %v1898
      %v1915 = vunpack.c.l.b16 %v1899
      %v1916 = vunpack.c.l.b16 %v1900
      %v1917 = vunpack.c.l.b16 %v1901
      %v1918 = vunpack.c.l.b16 %v1902
      %v1919 = vunpack.c.l.b16 %v1903
      %v1920 = vunpack.c.l.b16 %v1904
      %v1921 = vpack.c.b16 %v1914, %v1913
      %v1922 = vpack.c.b16 %v1916, %v1915
      %v1923 = vpack.c.b16 %v1918, %v1917
      %v1924 = vpack.c.b16 %v1920, %v1919
      %v1930 = vsel %vm804, %v1895, 0
      %1932 = vmatpush.bf16.msra.mxu0 0
      %1933 = vmatpush.bf16.msra.mxu0 0
      %1934 = vmatpush.bf16.msra.mxu0 0
      %1935 = vmatpush.bf16.msra.mxu0 0
      %1936 = vmatpush.bf16.msra.mxu0 %v1924
      %1937 = vmatpush.bf16.msra.mxu0 %v1923
      %1938 = vmatpush.bf16.msra.mxu0 %v1922
      %1939 = vmatpush.bf16.msra.mxu0 %v1921
      %1940 = vmatmul.bf16.gmra.mxu0 %v1930
      %v1941 = vpop.f32.mrf.mxu0
      %v1942 = vadd.f32 0.0, %v1941
      %v1943 = vpop.f32.mrf.mxu0
      %v1944 = vadd.f32 0.0, %v1943
      %1945 = vdwg.mxu0
      %v1946 = vadd.f32 %v1793, %v1942
      %v1947 = vadd.f32 %v1794, %v1944
      %s1948 = scalar_lea.vmem %s21, 1
      %v1949 = vld [vmem:[%s1948] sm:$0x1]
      %v1951 = vperm.slane %v1949, 0
      %v1953 = vadd.f32 %v1946, %v1951
      %v1954 = vadd.f32 %v1947, %v1951
      %v1955 = vld [vmem:[%s22] sm:$0x1]
      %v1956 = vld [vmem:[%s23] sm:$0x1]
      %v1957 = vsel %vm800, %v1953, 0.0
      %1958 = vadd.xlane.f32.xlu0 %v1957
      %v1959 = vpop.xlane.xlu0 %1958
      %v1960 = vsel %vm1032, %v1954, 0.0
      %1961 = vadd.xlane.f32.xlu0 %v1960
      %v1962 = vpop.xlane.xlu0 %1961
      %v1963 = vmul.f32 %v1959, %v1042
      %v1964 = vmul.f32 %v1962, %v1042
      %v1965 = vsub.f32 %v1953, %v1963
      %v1966 = vsub.f32 %v1954, %v1964
      %v1967 = vmul.f32 %v1965, %v1965
      %v1968 = vmul.f32 %v1966, %v1966
      %v1969 = vsel %vm800, %v1967, 0.0
      %1970 = vadd.xlane.f32.xlu0 %v1969
      %v1971 = vpop.xlane.xlu0 %1970
      %v1972 = vsel %vm1032, %v1968, 0.0
      %1973 = vadd.xlane.f32.xlu0 %v1972
      %v1974 = vpop.xlane.xlu0 %1973
      %v1975 = vmul.f32 %v1971, %v1042
      %v1976 = vmul.f32 %v1974, %v1042
      %v1977 = vadd.f32 %v1975, 1e-05
      %v1978 = vadd.f32 %v1976, 1e-05
      %v1979 = vrsqrt.pop %v1977
      %v1980 = vmul.f32 %v1979, %v1977
      %v1981 = vmul.f32 %v1980, %v1979
      %v1982 = vmul.f32 0.5, %v1981
      %v1983 = vsub.f32 1.5, %v1982
      %v1984 = vmul.f32 %v1979, %v1983
      %vm1985 = vweird.f32 %v1977
      %vm1986 = vweird.f32 %v1979
      %vm1987 = vmor %vm1985, %vm1986
      %v1988 = vsel %vm1987, %v1979, %v1984
      %v1989 = vrsqrt.pop %v1978
      %v1990 = vmul.f32 %v1989, %v1978
      %v1991 = vmul.f32 %v1990, %v1989
      %v1992 = vmul.f32 0.5, %v1991
      %v1993 = vsub.f32 1.5, %v1992
      %v1994 = vmul.f32 %v1989, %v1993
      %vm1995 = vweird.f32 %v1978
      %vm1996 = vweird.f32 %v1989
      %vm1997 = vmor %vm1995, %vm1996
      %v1998 = vsel %vm1997, %v1989, %v1994
      %v1999 = vmul.f32 %v1965, %v1988
      %v2000 = vmul.f32 %v1966, %v1998
      %v2002 = vperm.slane %v1955, 0
      %v2004 = vmul.f32 %v1999, %v2002
      %v2005 = vmul.f32 %v2000, %v2002
      %v2007 = vperm.slane %v1956, 0
      %v2009 = vadd.f32 %v2004, %v2007
      %v2010 = vadd.f32 %v2005, %v2007
      %v2011 = vpack.c.bf16 %v2009, %v2009
      %v2012 = vpack.c.bf16 %v2010, %v2010
      %2013 = vst.msk [vmem:[%s719] sm:$0xf] %vm1032, %v2011
      %vm2014 = vcmask 254976
      %2015 = vst.msk [vmem:[%s719 + $0x4] sm:$0x3] %vm2014, %v2012
      %p2016 = scmp.lt.s32.totalorder %s43, 1
      %s2017 = scalar_select %p2016, %s43, 1
      %s2018 = smul.addr %s2017, 2
      %s2019 = smul.addr %s2018, 4
      %s2020 = scalar_lea.vmem %s24, %s2019
      // Predicated region
      $region113: #{_lambda_.2} parent=111 // pred_check
        %p2021 = pneg %p549
      $region114: #{_lambda_.2} parent=111 // pred_check_branch
        %2023 = sbr.rel (%p2021) target = $region116
      $region115: #{_lambda_.2} parent=111 // pred_region
        _
      $region116: #{_lambda_.2} parent=111 // pred_fallthru
        _
    $region112: #{_lambda_.2} parent=5 // pred_fallthru
      _
    %p2024 = scmp.le.s32.totalorder 2, %s38
    // Predicated region
    $region117: #{_lambda_.2} parent=5 // pred_check
      %p2025 = pneg %p2024
    $region118: #{_lambda_.2} parent=5 // pred_check_branch
      %2027 = sbr.rel (%p2025) target = $region120
    $region119: #{_lambda_.2} parent=5 // pred_region
      %s2028 = ssub.s32 %s38, 2
      // Predicated region
      $region121: #{_lambda_.2} parent=119 // pred_check
        %p2029 = pneg %p555
      $region122: #{_lambda_.2} parent=119 // pred_check_branch
        %2031 = sbr.rel (%p2029) target = $region124
      $region123: #{_lambda_.2} parent=119 // pred_region
        %p2032 = scmp.lt.s32.totalorder %s44, 1
        %s2033 = scalar_select %p2032, %s44, 1
        %s2034 = smul.addr %s2033, 2
        %s2035 = smul.addr %s2034, 4
        %s2036 = scalar_lea.vmem %s24, %s2035
      $region124: #{_lambda_.2} parent=119 // pred_fallthru
        _
    $region120: #{_lambda_.2} parent=5 // pred_fallthru
      _
  $region6: #{_lambda_.2} parent=0 // loop_footer
    %s42 = sadd.s32 1, %s38
  $region7: #{_lambda_.2} parent=0 // loop_footer_branch
    %37 = sbr.rel target = $region3
  $region8: #{_lambda_.2} parent=0 // loop_exit
    _

// kernel: _lambda_.3
$region0: #{_lambda_.3}
  #allocation0 [shape = 'u32[]', space=smem, size = 0x4, offset = 0x4, fixed_abs, tag = 'smem constant byte address 0x4 - core index']
  #allocation1 [shape = 'u32[72,128]{1,0:T(1,128)}', space=vmem, size = 0x9000, scoped, tag = 'internal scratch']
  #allocation2 [shape = 's32[1]{0}', space=sflag, size = 0x4, scoped, tag = 'scoped memory for _lambda_.3']
  #allocation3 [shape = 'u8[512]{0}', space=smem, size = 0x200, scoped, tag = 'prefetched SMEM operand 0']
  #allocation4 [shape = 'u8[512]{0}', space=smem, size = 0x200, scoped, tag = 'prefetched SMEM operand 1']
  %s0 = inlined_call_operand.smem [shape: u32[40], index: -1, kind: input, shape index: {}]
  %s1 = sld [smem:[%s0]]
  %s2 = scalar_lea.smem %s0, 1
  %s3 = sld [smem:[%s2]]
  %s4 = scalar_lea.smem %s0, 2
  %s5 = sld [smem:[%s4]]
  %s6 = scalar_lea.smem %s0, 3
  %s7 = sld [smem:[%s6]]
  %s8 = scalar_lea.smem %s0, 4
  %s9 = sld [smem:[%s8]]
  %s10 = scalar_lea.smem %s0, 5
  %s11 = sld [smem:[%s10]]
  %s12 = scalar_lea.smem %s0, 6
  %s13 = sld [smem:[%s12]]
  %s14 = scalar_lea.smem %s0, 7
  %s15 = sld [smem:[%s14]]
  %s16 = scalar_lea.smem %s0, 8
  %s17 = sld [smem:[%s16]]
  %s18 = scalar_lea.smem %s0, 9
  %s19 = sld [smem:[%s18]]
  %s20 = scalar_lea.smem %s0, 10
  %s21 = sld [smem:[%s20]]
  %s22 = scalar_lea.smem %s0, 11
  %s23 = sld [smem:[%s22]]
  %s24 = scalar_lea.smem %s0, 12
  %s25 = sld [smem:[%s24]]
  %s26 = scalar_lea.smem %s0, 13
  %s27 = sld [smem:[%s26]]
  %s28 = scalar_lea.smem %s0, 14
  %s29 = sld [smem:[%s28]]
  %s30 = scalar_lea.smem %s0, 15
  %s31 = sld [smem:[%s30]]
  %s32 = scalar_lea.smem %s0, 16
  %s33 = sld [smem:[%s32]]
  %s34 = scalar_lea.smem %s0, 17
  %s35 = sld [smem:[%s34]]
  %s36 = scalar_lea.smem %s0, 18
  %s37 = sld [smem:[%s36]]
  %s38 = scalar_lea.smem %s0, 19
  %s39 = sld [smem:[%s38]]
  %s40 = scalar_lea.smem %s0, 20
  %s41 = sld [smem:[%s40]]
  %s42 = scalar_lea.smem %s0, 21
  %s43 = sld [smem:[%s42]]
  %s44 = scalar_lea.smem %s0, 22
  %s45 = sld [smem:[%s44]]
  %s46 = scalar_lea.smem %s0, 23
  %s47 = sld [smem:[%s46]]
  %s48 = scalar_lea.smem %s0, 24
  %s49 = sld [smem:[%s48]]
  %s50 = scalar_lea.smem %s0, 25
  %s51 = sld [smem:[%s50]]
  %s52 = scalar_lea.smem %s0, 26
  %s53 = sld [smem:[%s52]]
  %s54 = scalar_lea.smem %s0, 27
  %s55 = sld [smem:[%s54]]
  %s56 = scalar_lea.smem %s0, 28
  %s57 = sld [smem:[%s56]]
  %s58 = scalar_lea.smem %s0, 29
  %s59 = sld [smem:[%s58]]
  %s60 = scalar_lea.smem %s0, 30
  %s61 = sld [smem:[%s60]]
  %s62 = scalar_lea.smem %s0, 31
  %s63 = sld [smem:[%s62]]
  %s64 = scalar_lea.smem %s0, 32
  %s65 = sld [smem:[%s64]]
  %s66 = scalar_lea.smem %s0, 33
  %s67 = sld [smem:[%s66]]
  %s68 = scalar_lea.smem %s0, 34
  %s69 = sld [smem:[%s68]]
  %s70 = scalar_lea.smem %s0, 35
  %s71 = sld [smem:[%s70]]
  %s72 = scalar_lea.smem %s0, 36
  %s73 = sld [smem:[%s72]]
  %s74 = scalar_lea.smem %s0, 37
  %s75 = sld [smem:[%s74]]
  %s76 = scalar_lea.smem %s0, 38
  %s77 = sld [smem:[%s76]]
  %s78 = scalar_lea.smem %s0, 39
  %s79 = sld [smem:[%s78]]
  %80 = xla_tuple %s75, %s77, %s79
  %s81 = sld [smem:[#allocation0]]
  $region233: #{_lambda_.3} parent=0
    _
  %s83 = ssub.s32 1, %s81
  %s84 = scalar_select 0, %s83, %s81
  %s86 = sshll.u32 %s1, 4
  %s87 = int_to_ptr.vmem [resolvable:$true] %s86
  %89 = dma.vmem_to_smem %s87, 16, [#allocation3], [#allocation2]
  %s91 = sshll.u32 %s3, 4
  %s92 = int_to_ptr.hbm [resolvable:$true] %s91
  %94 = dma.hbm_to_smem %s92, 16, [#allocation4], [#allocation2]
  %96 = dma.done [#allocation2], 32
  %97 = sfence
  $region1: #{_lambda_.3} parent=0
    #allocation5 [shape = 'u8[512]{0}', space=vmem, size = 0x400, scoped, tag = 'input window, operand 5, single buffered']
    #allocation6 [shape = 's32[2]{0}', space=sflag, size = 0x8, scoped, tag = 'scoped memory for _lambda_.3']
    #allocation7 [shape = 'u8[512]{0}', space=vmem, size = 0x400, scoped, tag = 'input window, operand 7, single buffered']
    #allocation8 [shape = 's32[1]{0}', space=sflag, size = 0x4, scoped, tag = 'scoped memory for _lambda_.3']
    #allocation9 [shape = 'u8[1024]{0}', space=vmem, size = 0x400, scoped, tag = 'input window, operand 23, single buffered']
    #allocation10 [shape = 'u8[1024]{0}', space=vmem, size = 0x400, scoped, tag = 'input window, operand 24, single buffered']
    #allocation11 [shape = 's32[1]{0}', space=sflag, size = 0x4, scoped, tag = 'scoped memory for _lambda_.3']
    #allocation12 [shape = 'u8[1024]{0}', space=vmem, size = 0x400, scoped, tag = 'input window, operand 26, single buffered']
    #allocation13 [shape = 'u8[1024]{0}', space=vmem, size = 0x400, scoped, tag = 'input window, operand 28, single buffered']
    #allocation14 [shape = 's32[1]{0}', space=sflag, size = 0x4, scoped, tag = 'scoped memory for _lambda_.3']
    #allocation15 [shape = 'u8[512]{0}', space=vmem, size = 0x400, scoped, tag = 'input window, operand 29, single buffered']
    #allocation16 [shape = 'u8[512]{0}', space=vmem, size = 0x400, scoped, tag = 'input window, operand 30, single buffered']
    #allocation17 [shape = 's32[1]{0}', space=sflag, size = 0x4, scoped, tag = 'scoped memory for _lambda_.3']
    #allocation18 [shape = 'u8[512]{0}', space=vmem, size = 0x400, scoped, tag = 'input window, operand 32, single buffered']
    #allocation19 [shape = 'u8[512]{0}', space=vmem, size = 0x400, scoped, tag = 'input window, operand 34, single buffered']
    #allocation20 [shape = 's32[1]{0}', space=sflag, size = 0x4, scoped, tag = 'scoped memory for _lambda_.3']
    #allocation21 [shape = 'u8[512]{0}', space=vmem, size = 0x400, scoped, tag = 'input window, operand 36, single buffered']
    %98 = vsyncpa [#allocation6], 0
    %99 = vsyncpa [#allocation8], 0
    %100 = vsyncpa [#allocation11], 0
    %101 = vsyncpa [#allocation14], 0
    %102 = vsyncpa [#allocation17], 0
    %103 = vsyncpa [#allocation20], 0
    loop: start=0, step=1, limit=4
    $region2: #{_lambda_.3} parent=1 // loop_pre_header
      _
    $region3: #{_lambda_.3} parent=1 // loop_header
      %s105 = sphi 0, %s109
      %p106 = scmp.ge.s32.totalorder %s105, 4
      %s115 = sphi 0, %s117
      %s118 = sphi 0, %s115
      %s119 = sphi 0, %s118
      %s135 = sphi 0, %s119
      %s141 = sphi 0, %s143
      %s144 = sphi 0, %s141
      %s145 = sphi 0, %s144
      %s161 = sphi 0, %s145
      %s165 = sphi 0, %s165
      %s167 = sphi 0, %s165
      %s168 = sphi 0, %s167
      %s182 = sphi 0, %s168
      %s186 = sphi 0, %s186
      %s188 = sphi 0, %s186
      %s189 = sphi 0, %s188
      %s203 = sphi 0, %s189
      %s207 = sphi 0, %s207
      %s209 = sphi 0, %s207
      %s210 = sphi 0, %s209
      %s224 = sphi 0, %s210
      %s228 = sphi 0, %s228
      %s230 = sphi 0, %s228
      %s231 = sphi 0, %s230
      %s245 = sphi 0, %s231
      %s249 = sphi 0, %s249
      %s251 = sphi 0, %s249
      %s252 = sphi 0, %s251
      %s266 = sphi 0, %s252
      %s270 = sphi 0, %s270
      %s272 = sphi 0, %s270
      %s273 = sphi 0, %s272
      %s287 = sphi 0, %s273
      %s291 = sphi 0, %s291
      %s293 = sphi 0, %s291
      %s294 = sphi 0, %s293
      %s308 = sphi 0, %s294
      %s312 = sphi 0, %s312
      %s314 = sphi 0, %s312
      %s315 = sphi 0, %s314
      %s329 = sphi 0, %s315
      %s333 = sphi 0, %s333
      %s335 = sphi 0, %s333
      %s336 = sphi 0, %s335
      %s350 = sphi 0, %s336
      %s354 = sphi 0, %s354
      %s356 = sphi 0, %s354
      %s357 = sphi 0, %s356
      %s371 = sphi 0, %s357
      %s375 = sphi 0, %s375
      %s377 = sphi 0, %s375
      %s378 = sphi 0, %s377
      %s392 = sphi 0, %s378
      %s396 = sphi 0, %s396
      %s398 = sphi 0, %s396
      %s399 = sphi 0, %s398
      %s413 = sphi 0, %s399
      %s417 = sphi 0, %s417
      %s419 = sphi 0, %s417
      %s420 = sphi 0, %s419
      %s434 = sphi 0, %s420
      %s438 = sphi 0, %s438
      %s440 = sphi 0, %s438
      %s441 = sphi 0, %s440
      %s455 = sphi 0, %s441
      %s459 = sphi 0, %s459
      %s461 = sphi 0, %s459
      %s462 = sphi 0, %s461
      %s476 = sphi 0, %s462
      %s480 = sphi 0, %s480
      %s482 = sphi 0, %s480
      %s483 = sphi 0, %s482
      %s497 = sphi 0, %s483
      %s501 = sphi 0, %s501
      %s503 = sphi 0, %s501
      %s504 = sphi 0, %s503
      %s518 = sphi 0, %s504
      %s522 = sphi 0, %s522
      %s524 = sphi 0, %s522
      %s525 = sphi 0, %s524
      %s539 = sphi 0, %s525
      %s543 = sphi 0, %s543
      %s545 = sphi 0, %s543
      %s546 = sphi 0, %s545
      %s560 = sphi 0, %s546
      %s564 = sphi 0, %s564
      %s566 = sphi 0, %s564
      %s567 = sphi 0, %s566
      %s581 = sphi 0, %s567
      %s585 = sphi 0, %s585
      %s587 = sphi 0, %s585
      %s588 = sphi 0, %s587
      %s602 = sphi 0, %s588
      %s606 = sphi 0, %s606
      %s608 = sphi 0, %s606
      %s609 = sphi 0, %s608
      %s623 = sphi 0, %s609
      %s627 = sphi 0, %s627
      %s629 = sphi 0, %s627
      %s630 = sphi 0, %s629
      %s644 = sphi 0, %s630
      %s648 = sphi 0, %s648
      %s650 = sphi 0, %s648
      %s651 = sphi 0, %s650
      %s665 = sphi 0, %s651
      %s669 = sphi 0, %s669
      %s671 = sphi 0, %s669
      %s672 = sphi 0, %s671
      %s686 = sphi 0, %s672
      %s690 = sphi 0, %s690
      %s692 = sphi 0, %s690
      %s693 = sphi 0, %s692
      %s707 = sphi 0, %s693
      %s711 = sphi 0, %s711
      %s713 = sphi 0, %s711
      %s714 = sphi 0, %s713
      %s728 = sphi 0, %s714
      %s732 = sphi 0, %s732
      %s734 = sphi 0, %s732
      %s735 = sphi 0, %s734
      %s749 = sphi 0, %s735
      %s753 = sphi 0, %s753
      %s755 = sphi 0, %s753
      %s756 = sphi 0, %s755
      %s770 = sphi 0, %s756
      %s774 = sphi 0, %s774
      %s776 = sphi 0, %s774
      %s777 = sphi 0, %s776
      %s791 = sphi 0, %s777
      %s795 = sphi 0, %s795
      %s797 = sphi 0, %s795
      %s798 = sphi 0, %s797
      %s812 = sphi 0, %s798
      %s816 = sphi 0, %s816
      %s818 = sphi 0, %s816
      %s819 = sphi 0, %s818
      %s833 = sphi 0, %s819
      %s837 = sphi 0, %s837
      %s839 = sphi 0, %s837
      %s840 = sphi 0, %s839
      %s854 = sphi 0, %s840
      %s860 = sphi 0, %s862
      %s863 = sphi 0, %s860
      %s864 = sphi 0, %s863
      %s880 = sphi 0, %s864
      %s886 = sphi 0, %s888
      %s889 = sphi 0, %s886
      %s890 = sphi 0, %s889
      %s906 = sphi 0, %s890
      %s912 = sphi 0, %s914
      %s915 = sphi 0, %s912
      %s916 = sphi 0, %s915
      %s932 = sphi 0, %s916
    $region4: #{_lambda_.3} parent=1 // loop_header_branch
      %108 = sbr.rel (%p106) target = $region8
    $region5: #{_lambda_.3} parent=1 // loop_body
      %s110 = ssub.s32 %s105, 1
      %s111 = ssub.s32 %s105, 2
      %s112 = sadd.s32 %s105, 1
      %s113 = ssub.s32 %s105, %s112
      %p114 = scmp.eq.s32.totalorder %s113, 0
      %s116 = sadd.s32 %s115, 1
      %s117 = scalar_select %p114, %s115, %s116
      %p120 = pneg %p114
      %p121 = scmp.eq.s32.totalorder %s105, 1
      %p122 = por %p120, %p121
      %p123 = scmp.ne.s32.totalorder %s115, %s118
      %p124 = scmp.eq.s32.totalorder %s105, 0
      %p125 = por %p123, %p124
      %p126 = scmp.ne.s32.totalorder %s115, %s118
      %p127 = scmp.eq.s32.totalorder %s110, 1
      %p128 = por %p126, %p127
      %p129 = scmp.ne.s32.totalorder %s118, %s119
      %p130 = scmp.eq.s32.totalorder %s110, 0
      %p131 = por %p129, %p130
      %p132 = scmp.ne.s32.totalorder %s118, %s119
      %p133 = scmp.eq.s32.totalorder %s111, 1
      %p134 = por %p132, %p133
      %p136 = scmp.ne.s32.totalorder %s119, %s135
      %p137 = scmp.eq.s32.totalorder %s111, 0
      %p138 = por %p136, %p137
      %s139 = ssub.s32 %s105, %s112
      %p140 = scmp.eq.s32.totalorder %s139, 0
      %s142 = sadd.s32 %s141, 1
      %s143 = scalar_select %p140, %s141, %s142
      %p146 = pneg %p140
      %p147 = scmp.eq.s32.totalorder %s105, 1
      %p148 = por %p146, %p147
      %p149 = scmp.ne.s32.totalorder %s141, %s144
      %p150 = scmp.eq.s32.totalorder %s105, 0
      %p151 = por %p149, %p150
      %p152 = scmp.ne.s32.totalorder %s141, %s144
      %p153 = scmp.eq.s32.totalorder %s110, 1
      %p154 = por %p152, %p153
      %p155 = scmp.ne.s32.totalorder %s144, %s145
      %p156 = scmp.eq.s32.totalorder %s110, 0
      %p157 = por %p155, %p156
      %p158 = scmp.ne.s32.totalorder %s144, %s145
      %p159 = scmp.eq.s32.totalorder %s111, 1
      %p160 = por %p158, %p159
      %p162 = scmp.ne.s32.totalorder %s145, %s161
      %p163 = scmp.eq.s32.totalorder %s111, 0
      %p164 = por %p162, %p163
      %s166 = sadd.s32 %s165, 1
      %p169 = scmp.eq.s32.totalorder %s105, 1
      %p170 = scmp.ne.s32.totalorder %s165, %s167
      %p171 = scmp.eq.s32.totalorder %s105, 0
      %p172 = por %p170, %p171
      %p173 = scmp.ne.s32.totalorder %s165, %s167
      %p174 = scmp.eq.s32.totalorder %s110, 1
      %p175 = por %p173, %p174
      %p176 = scmp.ne.s32.totalorder %s167, %s168
      %p177 = scmp.eq.s32.totalorder %s110, 0
      %p178 = por %p176, %p177
      %p179 = scmp.ne.s32.totalorder %s167, %s168
      %p180 = scmp.eq.s32.totalorder %s111, 1
      %p181 = por %p179, %p180
      %p183 = scmp.ne.s32.totalorder %s168, %s182
      %p184 = scmp.eq.s32.totalorder %s111, 0
      %p185 = por %p183, %p184
      %s187 = sadd.s32 %s186, 1
      %p190 = scmp.eq.s32.totalorder %s105, 1
      %p191 = scmp.ne.s32.totalorder %s186, %s188
      %p192 = scmp.eq.s32.totalorder %s105, 0
      %p193 = por %p191, %p192
      %p194 = scmp.ne.s32.totalorder %s186, %s188
      %p195 = scmp.eq.s32.totalorder %s110, 1
      %p196 = por %p194, %p195
      %p197 = scmp.ne.s32.totalorder %s188, %s189
      %p198 = scmp.eq.s32.totalorder %s110, 0
      %p199 = por %p197, %p198
      %p200 = scmp.ne.s32.totalorder %s188, %s189
      %p201 = scmp.eq.s32.totalorder %s111, 1
      %p202 = por %p200, %p201
      %p204 = scmp.ne.s32.totalorder %s189, %s203
      %p205 = scmp.eq.s32.totalorder %s111, 0
      %p206 = por %p204, %p205
      %s208 = sadd.s32 %s207, 1
      %p211 = scmp.eq.s32.totalorder %s105, 1
      %p212 = scmp.ne.s32.totalorder %s207, %s209
      %p213 = scmp.eq.s32.totalorder %s105, 0
      %p214 = por %p212, %p213
      %p215 = scmp.ne.s32.totalorder %s207, %s209
      %p216 = scmp.eq.s32.totalorder %s110, 1
      %p217 = por %p215, %p216
      %p218 = scmp.ne.s32.totalorder %s209, %s210
      %p219 = scmp.eq.s32.totalorder %s110, 0
      %p220 = por %p218, %p219
      %p221 = scmp.ne.s32.totalorder %s209, %s210
      %p222 = scmp.eq.s32.totalorder %s111, 1
      %p223 = por %p221, %p222
      %p225 = scmp.ne.s32.totalorder %s210, %s224
      %p226 = scmp.eq.s32.totalorder %s111, 0
      %p227 = por %p225, %p226
      %s229 = sadd.s32 %s228, 1
      %p232 = scmp.eq.s32.totalorder %s105, 1
      %p233 = scmp.ne.s32.totalorder %s228, %s230
      %p234 = scmp.eq.s32.totalorder %s105, 0
      %p235 = por %p233, %p234
      %p236 = scmp.ne.s32.totalorder %s228, %s230
      %p237 = scmp.eq.s32.totalorder %s110, 1
      %p238 = por %p236, %p237
      %p239 = scmp.ne.s32.totalorder %s230, %s231
      %p240 = scmp.eq.s32.totalorder %s110, 0
      %p241 = por %p239, %p240
      %p242 = scmp.ne.s32.totalorder %s230, %s231
      %p243 = scmp.eq.s32.totalorder %s111, 1
      %p244 = por %p242, %p243
      %p246 = scmp.ne.s32.totalorder %s231, %s245
      %p247 = scmp.eq.s32.totalorder %s111, 0
      %p248 = por %p246, %p247
      %s250 = sadd.s32 %s249, 1
      %p253 = scmp.eq.s32.totalorder %s105, 1
      %p254 = scmp.ne.s32.totalorder %s249, %s251
      %p255 = scmp.eq.s32.totalorder %s105, 0
      %p256 = por %p254, %p255
      %p257 = scmp.ne.s32.totalorder %s249, %s251
      %p258 = scmp.eq.s32.totalorder %s110, 1
      %p259 = por %p257, %p258
      %p260 = scmp.ne.s32.totalorder %s251, %s252
      %p261 = scmp.eq.s32.totalorder %s110, 0
      %p262 = por %p260, %p261
      %p263 = scmp.ne.s32.totalorder %s251, %s252
      %p264 = scmp.eq.s32.totalorder %s111, 1
      %p265 = por %p263, %p264
      %p267 = scmp.ne.s32.totalorder %s252, %s266
      %p268 = scmp.eq.s32.totalorder %s111, 0
      %p269 = por %p267, %p268
      %s271 = sadd.s32 %s270, 1
      %p274 = scmp.eq.s32.totalorder %s105, 1
      %p275 = scmp.ne.s32.totalorder %s270, %s272
      %p276 = scmp.eq.s32.totalorder %s105, 0
      %p277 = por %p275, %p276
      %p278 = scmp.ne.s32.totalorder %s270, %s272
      %p279 = scmp.eq.s32.totalorder %s110, 1
      %p280 = por %p278, %p279
      %p281 = scmp.ne.s32.totalorder %s272, %s273
      %p282 = scmp.eq.s32.totalorder %s110, 0
      %p283 = por %p281, %p282
      %p284 = scmp.ne.s32.totalorder %s272, %s273
      %p285 = scmp.eq.s32.totalorder %s111, 1
      %p286 = por %p284, %p285
      %p288 = scmp.ne.s32.totalorder %s273, %s287
      %p289 = scmp.eq.s32.totalorder %s111, 0
      %p290 = por %p288, %p289
      %s292 = sadd.s32 %s291, 1
      %p295 = scmp.eq.s32.totalorder %s105, 1
      %p296 = scmp.ne.s32.totalorder %s291, %s293
      %p297 = scmp.eq.s32.totalorder %s105, 0
      %p298 = por %p296, %p297
      %p299 = scmp.ne.s32.totalorder %s291, %s293
      %p300 = scmp.eq.s32.totalorder %s110, 1
      %p301 = por %p299, %p300
      %p302 = scmp.ne.s32.totalorder %s293, %s294
      %p303 = scmp.eq.s32.totalorder %s110, 0
      %p304 = por %p302, %p303
      %p305 = scmp.ne.s32.totalorder %s293, %s294
      %p306 = scmp.eq.s32.totalorder %s111, 1
      %p307 = por %p305, %p306
      %p309 = scmp.ne.s32.totalorder %s294, %s308
      %p310 = scmp.eq.s32.totalorder %s111, 0
      %p311 = por %p309, %p310
      %s313 = sadd.s32 %s312, 1
      %p316 = scmp.eq.s32.totalorder %s105, 1
      %p317 = scmp.ne.s32.totalorder %s312, %s314
      %p318 = scmp.eq.s32.totalorder %s105, 0
      %p319 = por %p317, %p318
      %p320 = scmp.ne.s32.totalorder %s312, %s314
      %p321 = scmp.eq.s32.totalorder %s110, 1
      %p322 = por %p320, %p321
      %p323 = scmp.ne.s32.totalorder %s314, %s315
      %p324 = scmp.eq.s32.totalorder %s110, 0
      %p325 = por %p323, %p324
      %p326 = scmp.ne.s32.totalorder %s314, %s315
      %p327 = scmp.eq.s32.totalorder %s111, 1
      %p328 = por %p326, %p327
      %p330 = scmp.ne.s32.totalorder %s315, %s329
      %p331 = scmp.eq.s32.totalorder %s111, 0
      %p332 = por %p330, %p331
      %s334 = sadd.s32 %s333, 1
      %p337 = scmp.eq.s32.totalorder %s105, 1
      %p338 = scmp.ne.s32.totalorder %s333, %s335
      %p339 = scmp.eq.s32.totalorder %s105, 0
      %p340 = por %p338, %p339
      %p341 = scmp.ne.s32.totalorder %s333, %s335
      %p342 = scmp.eq.s32.totalorder %s110, 1
      %p343 = por %p341, %p342
      %p344 = scmp.ne.s32.totalorder %s335, %s336
      %p345 = scmp.eq.s32.totalorder %s110, 0
      %p346 = por %p344, %p345
      %p347 = scmp.ne.s32.totalorder %s335, %s336
      %p348 = scmp.eq.s32.totalorder %s111, 1
      %p349 = por %p347, %p348
      %p351 = scmp.ne.s32.totalorder %s336, %s350
      %p352 = scmp.eq.s32.totalorder %s111, 0
      %p353 = por %p351, %p352
      %s355 = sadd.s32 %s354, 1
      %p358 = scmp.eq.s32.totalorder %s105, 1
      %p359 = scmp.ne.s32.totalorder %s354, %s356
      %p360 = scmp.eq.s32.totalorder %s105, 0
      %p361 = por %p359, %p360
      %p362 = scmp.ne.s32.totalorder %s354, %s356
      %p363 = scmp.eq.s32.totalorder %s110, 1
      %p364 = por %p362, %p363
      %p365 = scmp.ne.s32.totalorder %s356, %s357
      %p366 = scmp.eq.s32.totalorder %s110, 0
      %p367 = por %p365, %p366
      %p368 = scmp.ne.s32.totalorder %s356, %s357
      %p369 = scmp.eq.s32.totalorder %s111, 1
      %p370 = por %p368, %p369
      %p372 = scmp.ne.s32.totalorder %s357, %s371
      %p373 = scmp.eq.s32.totalorder %s111, 0
      %p374 = por %p372, %p373
      %s376 = sadd.s32 %s375, 1
      %p379 = scmp.eq.s32.totalorder %s105, 1
      %p380 = scmp.ne.s32.totalorder %s375, %s377
      %p381 = scmp.eq.s32.totalorder %s105, 0
      %p382 = por %p380, %p381
      %p383 = scmp.ne.s32.totalorder %s375, %s377
      %p384 = scmp.eq.s32.totalorder %s110, 1
      %p385 = por %p383, %p384
      %p386 = scmp.ne.s32.totalorder %s377, %s378
      %p387 = scmp.eq.s32.totalorder %s110, 0
      %p388 = por %p386, %p387
      %p389 = scmp.ne.s32.totalorder %s377, %s378
      %p390 = scmp.eq.s32.totalorder %s111, 1
      %p391 = por %p389, %p390
      %p393 = scmp.ne.s32.totalorder %s378, %s392
      %p394 = scmp.eq.s32.totalorder %s111, 0
      %p395 = por %p393, %p394
      %s397 = sadd.s32 %s396, 1
      %p400 = scmp.eq.s32.totalorder %s105, 1
      %p401 = scmp.ne.s32.totalorder %s396, %s398
      %p402 = scmp.eq.s32.totalorder %s105, 0
      %p403 = por %p401, %p402
      %p404 = scmp.ne.s32.totalorder %s396, %s398
      %p405 = scmp.eq.s32.totalorder %s110, 1
      %p406 = por %p404, %p405
      %p407 = scmp.ne.s32.totalorder %s398, %s399
      %p408 = scmp.eq.s32.totalorder %s110, 0
      %p409 = por %p407, %p408
      %p410 = scmp.ne.s32.totalorder %s398, %s399
      %p411 = scmp.eq.s32.totalorder %s111, 1
      %p412 = por %p410, %p411
      %p414 = scmp.ne.s32.totalorder %s399, %s413
      %p415 = scmp.eq.s32.totalorder %s111, 0
      %p416 = por %p414, %p415
      %s418 = sadd.s32 %s417, 1
      %p421 = scmp.eq.s32.totalorder %s105, 1
      %p422 = scmp.ne.s32.totalorder %s417, %s419
      %p423 = scmp.eq.s32.totalorder %s105, 0
      %p424 = por %p422, %p423
      %p425 = scmp.ne.s32.totalorder %s417, %s419
      %p426 = scmp.eq.s32.totalorder %s110, 1
      %p427 = por %p425, %p426
      %p428 = scmp.ne.s32.totalorder %s419, %s420
      %p429 = scmp.eq.s32.totalorder %s110, 0
      %p430 = por %p428, %p429
      %p431 = scmp.ne.s32.totalorder %s419, %s420
      %p432 = scmp.eq.s32.totalorder %s111, 1
      %p433 = por %p431, %p432
      %p435 = scmp.ne.s32.totalorder %s420, %s434
      %p436 = scmp.eq.s32.totalorder %s111, 0
      %p437 = por %p435, %p436
      %s439 = sadd.s32 %s438, 1
      %p442 = scmp.eq.s32.totalorder %s105, 1
      %p443 = scmp.ne.s32.totalorder %s438, %s440
      %p444 = scmp.eq.s32.totalorder %s105, 0
      %p445 = por %p443, %p444
      %p446 = scmp.ne.s32.totalorder %s438, %s440
      %p447 = scmp.eq.s32.totalorder %s110, 1
      %p448 = por %p446, %p447
      %p449 = scmp.ne.s32.totalorder %s440, %s441
      %p450 = scmp.eq.s32.totalorder %s110, 0
      %p451 = por %p449, %p450
      %p452 = scmp.ne.s32.totalorder %s440, %s441
      %p453 = scmp.eq.s32.totalorder %s111, 1
      %p454 = por %p452, %p453
      %p456 = scmp.ne.s32.totalorder %s441, %s455
      %p457 = scmp.eq.s32.totalorder %s111, 0
      %p458 = por %p456, %p457
      %s460 = sadd.s32 %s459, 1
      %p463 = scmp.eq.s32.totalorder %s105, 1
      %p464 = scmp.ne.s32.totalorder %s459, %s461
      %p465 = scmp.eq.s32.totalorder %s105, 0
      %p466 = por %p464, %p465
      %p467 = scmp.ne.s32.totalorder %s459, %s461
      %p468 = scmp.eq.s32.totalorder %s110, 1
      %p469 = por %p467, %p468
      %p470 = scmp.ne.s32.totalorder %s461, %s462
      %p471 = scmp.eq.s32.totalorder %s110, 0
      %p472 = por %p470, %p471
      %p473 = scmp.ne.s32.totalorder %s461, %s462
      %p474 = scmp.eq.s32.totalorder %s111, 1
      %p475 = por %p473, %p474
      %p477 = scmp.ne.s32.totalorder %s462, %s476
      %p478 = scmp.eq.s32.totalorder %s111, 0
      %p479 = por %p477, %p478
      %s481 = sadd.s32 %s480, 1
      %p484 = scmp.eq.s32.totalorder %s105, 1
      %p485 = scmp.ne.s32.totalorder %s480, %s482
      %p486 = scmp.eq.s32.totalorder %s105, 0
      %p487 = por %p485, %p486
      %p488 = scmp.ne.s32.totalorder %s480, %s482
      %p489 = scmp.eq.s32.totalorder %s110, 1
      %p490 = por %p488, %p489
      %p491 = scmp.ne.s32.totalorder %s482, %s483
      %p492 = scmp.eq.s32.totalorder %s110, 0
      %p493 = por %p491, %p492
      %p494 = scmp.ne.s32.totalorder %s482, %s483
      %p495 = scmp.eq.s32.totalorder %s111, 1
      %p496 = por %p494, %p495
      %p498 = scmp.ne.s32.totalorder %s483, %s497
      %p499 = scmp.eq.s32.totalorder %s111, 0
      %p500 = por %p498, %p499
      %s502 = sadd.s32 %s501, 1
      %p505 = scmp.eq.s32.totalorder %s105, 1
      %p506 = scmp.ne.s32.totalorder %s501, %s503
      %p507 = scmp.eq.s32.totalorder %s105, 0
      %p508 = por %p506, %p507
      %p509 = scmp.ne.s32.totalorder %s501, %s503
      %p510 = scmp.eq.s32.totalorder %s110, 1
      %p511 = por %p509, %p510
      %p512 = scmp.ne.s32.totalorder %s503, %s504
      %p513 = scmp.eq.s32.totalorder %s110, 0
      %p514 = por %p512, %p513
      %p515 = scmp.ne.s32.totalorder %s503, %s504
      %p516 = scmp.eq.s32.totalorder %s111, 1
      %p517 = por %p515, %p516
      %p519 = scmp.ne.s32.totalorder %s504, %s518
      %p520 = scmp.eq.s32.totalorder %s111, 0
      %p521 = por %p519, %p520
      %s523 = sadd.s32 %s522, 1
      %p526 = scmp.eq.s32.totalorder %s105, 1
      %p527 = scmp.ne.s32.totalorder %s522, %s524
      %p528 = scmp.eq.s32.totalorder %s105, 0
      %p529 = por %p527, %p528
      %p530 = scmp.ne.s32.totalorder %s522, %s524
      %p531 = scmp.eq.s32.totalorder %s110, 1
      %p532 = por %p530, %p531
      %p533 = scmp.ne.s32.totalorder %s524, %s525
      %p534 = scmp.eq.s32.totalorder %s110, 0
      %p535 = por %p533, %p534
      %p536 = scmp.ne.s32.totalorder %s524, %s525
      %p537 = scmp.eq.s32.totalorder %s111, 1
      %p538 = por %p536, %p537
      %p540 = scmp.ne.s32.totalorder %s525, %s539
      %p541 = scmp.eq.s32.totalorder %s111, 0
      %p542 = por %p540, %p541
      %s544 = sadd.s32 %s543, 1
      %p547 = scmp.eq.s32.totalorder %s105, 1
      %p548 = scmp.ne.s32.totalorder %s543, %s545
      %p549 = scmp.eq.s32.totalorder %s105, 0
      %p550 = por %p548, %p549
      %p551 = scmp.ne.s32.totalorder %s543, %s545
      %p552 = scmp.eq.s32.totalorder %s110, 1
      %p553 = por %p551, %p552
      %p554 = scmp.ne.s32.totalorder %s545, %s546
      %p555 = scmp.eq.s32.totalorder %s110, 0
      %p556 = por %p554, %p555
      %p557 = scmp.ne.s32.totalorder %s545, %s546
      %p558 = scmp.eq.s32.totalorder %s111, 1
      %p559 = por %p557, %p558
      %p561 = scmp.ne.s32.totalorder %s546, %s560
      %p562 = scmp.eq.s32.totalorder %s111, 0
      %p563 = por %p561, %p562
      %s565 = sadd.s32 %s564, 1
      %p568 = scmp.eq.s32.totalorder %s105, 1
      %p569 = scmp.ne.s32.totalorder %s564, %s566
      %p570 = scmp.eq.s32.totalorder %s105, 0
      %p571 = por %p569, %p570
      %p572 = scmp.ne.s32.totalorder %s564, %s566
      %p573 = scmp.eq.s32.totalorder %s110, 1
      %p574 = por %p572, %p573
      %p575 = scmp.ne.s32.totalorder %s566, %s567
      %p576 = scmp.eq.s32.totalorder %s110, 0
      %p577 = por %p575, %p576
      %p578 = scmp.ne.s32.totalorder %s566, %s567
      %p579 = scmp.eq.s32.totalorder %s111, 1
      %p580 = por %p578, %p579
      %p582 = scmp.ne.s32.totalorder %s567, %s581
      %p583 = scmp.eq.s32.totalorder %s111, 0
      %p584 = por %p582, %p583
      %s586 = sadd.s32 %s585, 1
      %p589 = scmp.eq.s32.totalorder %s105, 1
      %p590 = scmp.ne.s32.totalorder %s585, %s587
      %p591 = scmp.eq.s32.totalorder %s105, 0
      %p592 = por %p590, %p591
      %p593 = scmp.ne.s32.totalorder %s585, %s587
      %p594 = scmp.eq.s32.totalorder %s110, 1
      %p595 = por %p593, %p594
      %p596 = scmp.ne.s32.totalorder %s587, %s588
      %p597 = scmp.eq.s32.totalorder %s110, 0
      %p598 = por %p596, %p597
      %p599 = scmp.ne.s32.totalorder %s587, %s588
      %p600 = scmp.eq.s32.totalorder %s111, 1
      %p601 = por %p599, %p600
      %p603 = scmp.ne.s32.totalorder %s588, %s602
      %p604 = scmp.eq.s32.totalorder %s111, 0
      %p605 = por %p603, %p604
      %s607 = sadd.s32 %s606, 1
      %p610 = scmp.eq.s32.totalorder %s105, 1
      %p611 = scmp.ne.s32.totalorder %s606, %s608
      %p612 = scmp.eq.s32.totalorder %s105, 0
      %p613 = por %p611, %p612
      %p614 = scmp.ne.s32.totalorder %s606, %s608
      %p615 = scmp.eq.s32.totalorder %s110, 1
      %p616 = por %p614, %p615
      %p617 = scmp.ne.s32.totalorder %s608, %s609
      %p618 = scmp.eq.s32.totalorder %s110, 0
      %p619 = por %p617, %p618
      %p620 = scmp.ne.s32.totalorder %s608, %s609
      %p621 = scmp.eq.s32.totalorder %s111, 1
      %p622 = por %p620, %p621
      %p624 = scmp.ne.s32.totalorder %s609, %s623
      %p625 = scmp.eq.s32.totalorder %s111, 0
      %p626 = por %p624, %p625
      %s628 = sadd.s32 %s627, 1
      %p631 = scmp.eq.s32.totalorder %s105, 1
      %p632 = scmp.ne.s32.totalorder %s627, %s629
      %p633 = scmp.eq.s32.totalorder %s105, 0
      %p634 = por %p632, %p633
      %p635 = scmp.ne.s32.totalorder %s627, %s629
      %p636 = scmp.eq.s32.totalorder %s110, 1
      %p637 = por %p635, %p636
      %p638 = scmp.ne.s32.totalorder %s629, %s630
      %p639 = scmp.eq.s32.totalorder %s110, 0
      %p640 = por %p638, %p639
      %p641 = scmp.ne.s32.totalorder %s629, %s630
      %p642 = scmp.eq.s32.totalorder %s111, 1
      %p643 = por %p641, %p642
      %p645 = scmp.ne.s32.totalorder %s630, %s644
      %p646 = scmp.eq.s32.totalorder %s111, 0
      %p647 = por %p645, %p646
      %s649 = sadd.s32 %s648, 1
      %p652 = scmp.eq.s32.totalorder %s105, 1
      %p653 = scmp.ne.s32.totalorder %s648, %s650
      %p654 = scmp.eq.s32.totalorder %s105, 0
      %p655 = por %p653, %p654
      %p656 = scmp.ne.s32.totalorder %s648, %s650
      %p657 = scmp.eq.s32.totalorder %s110, 1
      %p658 = por %p656, %p657
      %p659 = scmp.ne.s32.totalorder %s650, %s651
      %p660 = scmp.eq.s32.totalorder %s110, 0
      %p661 = por %p659, %p660
      %p662 = scmp.ne.s32.totalorder %s650, %s651
      %p663 = scmp.eq.s32.totalorder %s111, 1
      %p664 = por %p662, %p663
      %p666 = scmp.ne.s32.totalorder %s651, %s665
      %p667 = scmp.eq.s32.totalorder %s111, 0
      %p668 = por %p666, %p667
      %s670 = sadd.s32 %s669, 1
      %p673 = scmp.eq.s32.totalorder %s105, 1
      %p674 = scmp.ne.s32.totalorder %s669, %s671
      %p675 = scmp.eq.s32.totalorder %s105, 0
      %p676 = por %p674, %p675
      %p677 = scmp.ne.s32.totalorder %s669, %s671
      %p678 = scmp.eq.s32.totalorder %s110, 1
      %p679 = por %p677, %p678
      %p680 = scmp.ne.s32.totalorder %s671, %s672
      %p681 = scmp.eq.s32.totalorder %s110, 0
      %p682 = por %p680, %p681
      %p683 = scmp.ne.s32.totalorder %s671, %s672
      %p684 = scmp.eq.s32.totalorder %s111, 1
      %p685 = por %p683, %p684
      %p687 = scmp.ne.s32.totalorder %s672, %s686
      %p688 = scmp.eq.s32.totalorder %s111, 0
      %p689 = por %p687, %p688
      %s691 = sadd.s32 %s690, 1
      %p694 = scmp.eq.s32.totalorder %s105, 1
      %p695 = scmp.ne.s32.totalorder %s690, %s692
      %p696 = scmp.eq.s32.totalorder %s105, 0
      %p697 = por %p695, %p696
      %p698 = scmp.ne.s32.totalorder %s690, %s692
      %p699 = scmp.eq.s32.totalorder %s110, 1
      %p700 = por %p698, %p699
      %p701 = scmp.ne.s32.totalorder %s692, %s693
      %p702 = scmp.eq.s32.totalorder %s110, 0
      %p703 = por %p701, %p702
      %p704 = scmp.ne.s32.totalorder %s692, %s693
      %p705 = scmp.eq.s32.totalorder %s111, 1
      %p706 = por %p704, %p705
      %p708 = scmp.ne.s32.totalorder %s693, %s707
      %p709 = scmp.eq.s32.totalorder %s111, 0
      %p710 = por %p708, %p709
      %s712 = sadd.s32 %s711, 1
      %p715 = scmp.eq.s32.totalorder %s105, 1
      %p716 = scmp.ne.s32.totalorder %s711, %s713
      %p717 = scmp.eq.s32.totalorder %s105, 0
      %p718 = por %p716, %p717
      %p719 = scmp.ne.s32.totalorder %s711, %s713
      %p720 = scmp.eq.s32.totalorder %s110, 1
      %p721 = por %p719, %p720
      %p722 = scmp.ne.s32.totalorder %s713, %s714
      %p723 = scmp.eq.s32.totalorder %s110, 0
      %p724 = por %p722, %p723
      %p725 = scmp.ne.s32.totalorder %s713, %s714
      %p726 = scmp.eq.s32.totalorder %s111, 1
      %p727 = por %p725, %p726
      %p729 = scmp.ne.s32.totalorder %s714, %s728
      %p730 = scmp.eq.s32.totalorder %s111, 0
      %p731 = por %p729, %p730
      %s733 = sadd.s32 %s732, 1
      %p736 = scmp.eq.s32.totalorder %s105, 1
      %p737 = scmp.ne.s32.totalorder %s732, %s734
      %p738 = scmp.eq.s32.totalorder %s105, 0
      %p739 = por %p737, %p738
      %p740 = scmp.ne.s32.totalorder %s732, %s734
      %p741 = scmp.eq.s32.totalorder %s110, 1
      %p742 = por %p740, %p741
      %p743 = scmp.ne.s32.totalorder %s734, %s735
      %p744 = scmp.eq.s32.totalorder %s110, 0
      %p745 = por %p743, %p744
      %p746 = scmp.ne.s32.totalorder %s734, %s735
      %p747 = scmp.eq.s32.totalorder %s111, 1
      %p748 = por %p746, %p747
      %p750 = scmp.ne.s32.totalorder %s735, %s749
      %p751 = scmp.eq.s32.totalorder %s111, 0
      %p752 = por %p750, %p751
      %s754 = sadd.s32 %s753, 1
      %p757 = scmp.eq.s32.totalorder %s105, 1
      %p758 = scmp.ne.s32.totalorder %s753, %s755
      %p759 = scmp.eq.s32.totalorder %s105, 0
      %p760 = por %p758, %p759
      %p761 = scmp.ne.s32.totalorder %s753, %s755
      %p762 = scmp.eq.s32.totalorder %s110, 1
      %p763 = por %p761, %p762
      %p764 = scmp.ne.s32.totalorder %s755, %s756
      %p765 = scmp.eq.s32.totalorder %s110, 0
      %p766 = por %p764, %p765
      %p767 = scmp.ne.s32.totalorder %s755, %s756
      %p768 = scmp.eq.s32.totalorder %s111, 1
      %p769 = por %p767, %p768
      %p771 = scmp.ne.s32.totalorder %s756, %s770
      %p772 = scmp.eq.s32.totalorder %s111, 0
      %p773 = por %p771, %p772
      %s775 = sadd.s32 %s774, 1
      %p778 = scmp.eq.s32.totalorder %s105, 1
      %p779 = scmp.ne.s32.totalorder %s774, %s776
      %p780 = scmp.eq.s32.totalorder %s105, 0
      %p781 = por %p779, %p780
      %p782 = scmp.ne.s32.totalorder %s774, %s776
      %p783 = scmp.eq.s32.totalorder %s110, 1
      %p784 = por %p782, %p783
      %p785 = scmp.ne.s32.totalorder %s776, %s777
      %p786 = scmp.eq.s32.totalorder %s110, 0
      %p787 = por %p785, %p786
      %p788 = scmp.ne.s32.totalorder %s776, %s777
      %p789 = scmp.eq.s32.totalorder %s111, 1
      %p790 = por %p788, %p789
      %p792 = scmp.ne.s32.totalorder %s777, %s791
      %p793 = scmp.eq.s32.totalorder %s111, 0
      %p794 = por %p792, %p793
      %s796 = sadd.s32 %s795, 1
      %p799 = scmp.eq.s32.totalorder %s105, 1
      %p800 = scmp.ne.s32.totalorder %s795, %s797
      %p801 = scmp.eq.s32.totalorder %s105, 0
      %p802 = por %p800, %p801
      %p803 = scmp.ne.s32.totalorder %s795, %s797
      %p804 = scmp.eq.s32.totalorder %s110, 1
      %p805 = por %p803, %p804
      %p806 = scmp.ne.s32.totalorder %s797, %s798
      %p807 = scmp.eq.s32.totalorder %s110, 0
      %p808 = por %p806, %p807
      %p809 = scmp.ne.s32.totalorder %s797, %s798
      %p810 = scmp.eq.s32.totalorder %s111, 1
      %p811 = por %p809, %p810
      %p813 = scmp.ne.s32.totalorder %s798, %s812
      %p814 = scmp.eq.s32.totalorder %s111, 0
      %p815 = por %p813, %p814
      %s817 = sadd.s32 %s816, 1
      %p820 = scmp.eq.s32.totalorder %s105, 1
      %p821 = scmp.ne.s32.totalorder %s816, %s818
      %p822 = scmp.eq.s32.totalorder %s105, 0
      %p823 = por %p821, %p822
      %p824 = scmp.ne.s32.totalorder %s816, %s818
      %p825 = scmp.eq.s32.totalorder %s110, 1
      %p826 = por %p824, %p825
      %p827 = scmp.ne.s32.totalorder %s818, %s819
      %p828 = scmp.eq.s32.totalorder %s110, 0
      %p829 = por %p827, %p828
      %p830 = scmp.ne.s32.totalorder %s818, %s819
      %p831 = scmp.eq.s32.totalorder %s111, 1
      %p832 = por %p830, %p831
      %p834 = scmp.ne.s32.totalorder %s819, %s833
      %p835 = scmp.eq.s32.totalorder %s111, 0
      %p836 = por %p834, %p835
      %s838 = sadd.s32 %s837, 1
      %p841 = scmp.eq.s32.totalorder %s105, 1
      %p842 = scmp.ne.s32.totalorder %s837, %s839
      %p843 = scmp.eq.s32.totalorder %s105, 0
      %p844 = por %p842, %p843
      %p845 = scmp.ne.s32.totalorder %s837, %s839
      %p846 = scmp.eq.s32.totalorder %s110, 1
      %p847 = por %p845, %p846
      %p848 = scmp.ne.s32.totalorder %s839, %s840
      %p849 = scmp.eq.s32.totalorder %s110, 0
      %p850 = por %p848, %p849
      %p851 = scmp.ne.s32.totalorder %s839, %s840
      %p852 = scmp.eq.s32.totalorder %s111, 1
      %p853 = por %p851, %p852
      %p855 = scmp.ne.s32.totalorder %s840, %s854
      %p856 = scmp.eq.s32.totalorder %s111, 0
      %p857 = por %p855, %p856
      %s858 = ssub.s32 %s105, %s112
      %p859 = scmp.eq.s32.totalorder %s858, 0
      %s861 = sadd.s32 %s860, 1
      %s862 = scalar_select %p859, %s860, %s861
      %p865 = pneg %p859
      %p866 = scmp.eq.s32.totalorder %s105, 1
      %p867 = por %p865, %p866
      %p868 = scmp.ne.s32.totalorder %s860, %s863
      %p869 = scmp.eq.s32.totalorder %s105, 0
      %p870 = por %p868, %p869
      %p871 = scmp.ne.s32.totalorder %s860, %s863
      %p872 = scmp.eq.s32.totalorder %s110, 1
      %p873 = por %p871, %p872
      %p874 = scmp.ne.s32.totalorder %s863, %s864
      %p875 = scmp.eq.s32.totalorder %s110, 0
      %p876 = por %p874, %p875
      %p877 = scmp.ne.s32.totalorder %s863, %s864
      %p878 = scmp.eq.s32.totalorder %s111, 1
      %p879 = por %p877, %p878
      %p881 = scmp.ne.s32.totalorder %s864, %s880
      %p882 = scmp.eq.s32.totalorder %s111, 0
      %p883 = por %p881, %p882
      %s884 = ssub.s32 %s105, %s112
      %p885 = scmp.eq.s32.totalorder %s884, 0
      %s887 = sadd.s32 %s886, 1
      %s888 = scalar_select %p885, %s886, %s887
      %p891 = pneg %p885
      %p892 = scmp.eq.s32.totalorder %s105, 1
      %p893 = por %p891, %p892
      %p894 = scmp.ne.s32.totalorder %s886, %s889
      %p895 = scmp.eq.s32.totalorder %s105, 0
      %p896 = por %p894, %p895
      %p897 = scmp.ne.s32.totalorder %s886, %s889
      %p898 = scmp.eq.s32.totalorder %s110, 1
      %p899 = por %p897, %p898
      %p900 = scmp.ne.s32.totalorder %s889, %s890
      %p901 = scmp.eq.s32.totalorder %s110, 0
      %p902 = por %p900, %p901
      %p903 = scmp.ne.s32.totalorder %s889, %s890
      %p904 = scmp.eq.s32.totalorder %s111, 1
      %p905 = por %p903, %p904
      %p907 = scmp.ne.s32.totalorder %s890, %s906
      %p908 = scmp.eq.s32.totalorder %s111, 0
      %p909 = por %p907, %p908
      %s910 = ssub.s32 %s105, %s112
      %p911 = scmp.eq.s32.totalorder %s910, 0
      %s913 = sadd.s32 %s912, 1
      %s914 = scalar_select %p911, %s912, %s913
      %p917 = pneg %p911
      %p918 = scmp.eq.s32.totalorder %s105, 1
      %p919 = por %p917, %p918
      %p920 = scmp.ne.s32.totalorder %s912, %s915
      %p921 = scmp.eq.s32.totalorder %s105, 0
      %p922 = por %p920, %p921
      %p923 = scmp.ne.s32.totalorder %s912, %s915
      %p924 = scmp.eq.s32.totalorder %s110, 1
      %p925 = por %p923, %p924
      %p926 = scmp.ne.s32.totalorder %s915, %s916
      %p927 = scmp.eq.s32.totalorder %s110, 0
      %p928 = por %p926, %p927
      %p929 = scmp.ne.s32.totalorder %s915, %s916
      %p930 = scmp.eq.s32.totalorder %s111, 1
      %p931 = por %p929, %p930
      %p933 = scmp.ne.s32.totalorder %s916, %s932
      %p934 = scmp.eq.s32.totalorder %s111, 0
      %p935 = por %p933, %p934
      %p936 = scmp.le.s32.totalorder 1, %s105
      %p937 = scmp.lt.s32.totalorder %s105, 3
      %p938 = pnand %p936, %p937
      %p939 = pneg %p938
      // Predicated region
      $region9: #{_lambda_.3} parent=5 // pred_check
        _
      $region10: #{_lambda_.3} parent=5 // pred_check_branch
        %941 = sbr.rel (%p938) target = $region12
      $region11: #{_lambda_.3} parent=5 // pred_region
        %s942 = ssub.s32 %s105, 1
        // Predicated region
        $region13: #{_lambda_.3} parent=11 // pred_check
          %p943 = pneg %p178
        $region14: #{_lambda_.3} parent=11 // pred_check_branch
          %945 = sbr.rel (%p943) target = $region16
        $region15: #{_lambda_.3} parent=11 // pred_region
          _
        $region16: #{_lambda_.3} parent=11 // pred_fallthru
          _
        // Predicated region
        $region17: #{_lambda_.3} parent=11 // pred_check
          %p946 = pneg %p199
        $region18: #{_lambda_.3} parent=11 // pred_check_branch
          %948 = sbr.rel (%p946) target = $region20
        $region19: #{_lambda_.3} parent=11 // pred_region
          %950 = vsyncadd [#allocation6], 0
          %s952 = sshll.u32 %s11, 4
          %s953 = int_to_ptr.hbm [resolvable:$true] %s952
          %s954 = sshll.u32 [#allocation5], 4
          %s955 = int_to_ptr.vmem [resolvable:$true] %s954
          %957 = dma.hbm_to_vmem [thread:$0]  %s953, 16, %s955, [#allocation6]
        $region20: #{_lambda_.3} parent=11 // pred_fallthru
          _
        // Predicated region
        $region21: #{_lambda_.3} parent=11 // pred_check
          %p958 = pneg %p220
        $region22: #{_lambda_.3} parent=11 // pred_check_branch
          %960 = sbr.rel (%p958) target = $region24
        $region23: #{_lambda_.3} parent=11 // pred_region
          _
        $region24: #{_lambda_.3} parent=11 // pred_fallthru
          _
        // Predicated region
        $region25: #{_lambda_.3} parent=11 // pred_check
          %p961 = pneg %p241
        $region26: #{_lambda_.3} parent=11 // pred_check_branch
          %963 = sbr.rel (%p961) target = $region28
        $region27: #{_lambda_.3} parent=11 // pred_region
          %965 = vsyncadd [#allocation8], 0
          %s967 = sshll.u32 %s15, 4
          %s968 = int_to_ptr.hbm [resolvable:$true] %s967
          %s969 = sshll.u32 [#allocation7], 4
          %s970 = int_to_ptr.vmem [resolvable:$true] %s969
          %972 = dma.hbm_to_vmem [thread:$0]  %s968, 16, %s970, [#allocation8]
        $region28: #{_lambda_.3} parent=11 // pred_fallthru
          _
        // Predicated region
        $region29: #{_lambda_.3} parent=11 // pred_check
          %p973 = pneg %p262
        $region30: #{_lambda_.3} parent=11 // pred_check_branch
          %975 = sbr.rel (%p973) target = $region32
        $region31: #{_lambda_.3} parent=11 // pred_region
          _
        $region32: #{_lambda_.3} parent=11 // pred_fallthru
          _
        // Predicated region
        $region33: #{_lambda_.3} parent=11 // pred_check
          %p976 = pneg %p283
        $region34: #{_lambda_.3} parent=11 // pred_check_branch
          %978 = sbr.rel (%p976) target = $region36
        $region35: #{_lambda_.3} parent=11 // pred_region
          _
        $region36: #{_lambda_.3} parent=11 // pred_fallthru
          _
        // Predicated region
        $region37: #{_lambda_.3} parent=11 // pred_check
          %p979 = pneg %p304
        $region38: #{_lambda_.3} parent=11 // pred_check_branch
          %981 = sbr.rel (%p979) target = $region40
        $region39: #{_lambda_.3} parent=11 // pred_region
          _
        $region40: #{_lambda_.3} parent=11 // pred_fallthru
          _
        // Predicated region
        $region41: #{_lambda_.3} parent=11 // pred_check
          %p982 = pneg %p325
        $region42: #{_lambda_.3} parent=11 // pred_check_branch
          %984 = sbr.rel (%p982) target = $region44
        $region43: #{_lambda_.3} parent=11 // pred_region
          _
        $region44: #{_lambda_.3} parent=11 // pred_fallthru
          _
        // Predicated region
        $region45: #{_lambda_.3} parent=11 // pred_check
          %p985 = pneg %p346
        $region46: #{_lambda_.3} parent=11 // pred_check_branch
          %987 = sbr.rel (%p985) target = $region48
        $region47: #{_lambda_.3} parent=11 // pred_region
          _
        $region48: #{_lambda_.3} parent=11 // pred_fallthru
          _
        // Predicated region
        $region49: #{_lambda_.3} parent=11 // pred_check
          %p988 = pneg %p367
        $region50: #{_lambda_.3} parent=11 // pred_check_branch
          %990 = sbr.rel (%p988) target = $region52
        $region51: #{_lambda_.3} parent=11 // pred_region
          _
        $region52: #{_lambda_.3} parent=11 // pred_fallthru
          _
        // Predicated region
        $region53: #{_lambda_.3} parent=11 // pred_check
          %p991 = pneg %p388
        $region54: #{_lambda_.3} parent=11 // pred_check_branch
          %993 = sbr.rel (%p991) target = $region56
        $region55: #{_lambda_.3} parent=11 // pred_region
          _
        $region56: #{_lambda_.3} parent=11 // pred_fallthru
          _
        // Predicated region
        $region57: #{_lambda_.3} parent=11 // pred_check
          %p994 = pneg %p409
        $region58: #{_lambda_.3} parent=11 // pred_check_branch
          %996 = sbr.rel (%p994) target = $region60
        $region59: #{_lambda_.3} parent=11 // pred_region
          _
        $region60: #{_lambda_.3} parent=11 // pred_fallthru
          _
        // Predicated region
        $region61: #{_lambda_.3} parent=11 // pred_check
          %p997 = pneg %p430
        $region62: #{_lambda_.3} parent=11 // pred_check_branch
          %999 = sbr.rel (%p997) target = $region64
        $region63: #{_lambda_.3} parent=11 // pred_region
          _
        $region64: #{_lambda_.3} parent=11 // pred_fallthru
          _
        // Predicated region
        $region65: #{_lambda_.3} parent=11 // pred_check
          %p1000 = pneg %p451
        $region66: #{_lambda_.3} parent=11 // pred_check_branch
          %1002 = sbr.rel (%p1000) target = $region68
        $region67: #{_lambda_.3} parent=11 // pred_region
          _
        $region68: #{_lambda_.3} parent=11 // pred_fallthru
          _
        // Predicated region
        $region69: #{_lambda_.3} parent=11 // pred_check
          %p1003 = pneg %p472
        $region70: #{_lambda_.3} parent=11 // pred_check_branch
          %1005 = sbr.rel (%p1003) target = $region72
        $region71: #{_lambda_.3} parent=11 // pred_region
          _
        $region72: #{_lambda_.3} parent=11 // pred_fallthru
          _
        // Predicated region
        $region73: #{_lambda_.3} parent=11 // pred_check
          %p1006 = pneg %p493
        $region74: #{_lambda_.3} parent=11 // pred_check_branch
          %1008 = sbr.rel (%p1006) target = $region76
        $region75: #{_lambda_.3} parent=11 // pred_region
          _
        $region76: #{_lambda_.3} parent=11 // pred_fallthru
          _
        // Predicated region
        $region77: #{_lambda_.3} parent=11 // pred_check
          %p1009 = pneg %p514
        $region78: #{_lambda_.3} parent=11 // pred_check_branch
          %1011 = sbr.rel (%p1009) target = $region80
        $region79: #{_lambda_.3} parent=11 // pred_region
          _
        $region80: #{_lambda_.3} parent=11 // pred_fallthru
          _
        // Predicated region
        $region81: #{_lambda_.3} parent=11 // pred_check
          %p1012 = pneg %p535
        $region82: #{_lambda_.3} parent=11 // pred_check_branch
          %1014 = sbr.rel (%p1012) target = $region84
        $region83: #{_lambda_.3} parent=11 // pred_region
          _
        $region84: #{_lambda_.3} parent=11 // pred_fallthru
          _
        // Predicated region
        $region85: #{_lambda_.3} parent=11 // pred_check
          %p1015 = pneg %p556
        $region86: #{_lambda_.3} parent=11 // pred_check_branch
          %1017 = sbr.rel (%p1015) target = $region88
        $region87: #{_lambda_.3} parent=11 // pred_region
          _
        $region88: #{_lambda_.3} parent=11 // pred_fallthru
          _
        // Predicated region
        $region89: #{_lambda_.3} parent=11 // pred_check
          %p1018 = pneg %p577
        $region90: #{_lambda_.3} parent=11 // pred_check_branch
          %1020 = sbr.rel (%p1018) target = $region92
        $region91: #{_lambda_.3} parent=11 // pred_region
          %1022 = vsyncadd [#allocation8], 0
          %s1023 = sshll.u32 %s47, 4
          %s1024 = int_to_ptr.hbm [resolvable:$true] %s1023
          %s1025 = sshll.u32 [#allocation9], 4
          %s1026 = int_to_ptr.vmem [resolvable:$true] %s1025
          %1031 = dma.hbm_to_vmem [thread:$0]  %s1024, 32, %s1026, [#allocation8], 16, 16, 1
        $region92: #{_lambda_.3} parent=11 // pred_fallthru
          _
        // Predicated region
        $region93: #{_lambda_.3} parent=11 // pred_check
          %p1032 = pneg %p598
        $region94: #{_lambda_.3} parent=11 // pred_check_branch
          %1034 = sbr.rel (%p1032) target = $region96
        $region95: #{_lambda_.3} parent=11 // pred_region
          %1036 = vsyncadd [#allocation11], 0
          %s1037 = sshll.u32 %s49, 4
          %s1038 = int_to_ptr.hbm [resolvable:$true] %s1037
          %s1039 = sshll.u32 [#allocation10], 4
          %s1040 = int_to_ptr.vmem [resolvable:$true] %s1039
          %1045 = dma.hbm_to_vmem [thread:$0]  %s1038, 32, %s1040, [#allocation11], 16, 16, 1
        $region96: #{_lambda_.3} parent=11 // pred_fallthru
          _
        // Predicated region
        $region97: #{_lambda_.3} parent=11 // pred_check
          %p1046 = pneg %p619
        $region98: #{_lambda_.3} parent=11 // pred_check_branch
          %1048 = sbr.rel (%p1046) target = $region100
        $region99: #{_lambda_.3} parent=11 // pred_region
          _
        $region100: #{_lambda_.3} parent=11 // pred_fallthru
          _
        // Predicated region
        $region101: #{_lambda_.3} parent=11 // pred_check
          %p1049 = pneg %p640
        $region102: #{_lambda_.3} parent=11 // pred_check_branch
          %1051 = sbr.rel (%p1049) target = $region104
        $region103: #{_lambda_.3} parent=11 // pred_region
          %1053 = vsyncadd [#allocation11], 0
          %s1054 = sshll.u32 %s53, 4
          %s1055 = int_to_ptr.hbm [resolvable:$true] %s1054
          %s1056 = sshll.u32 [#allocation12], 4
          %s1057 = int_to_ptr.vmem [resolvable:$true] %s1056
          %1062 = dma.hbm_to_vmem [thread:$0]  %s1055, 32, %s1057, [#allocation11], 16, 16, 1
        $region104: #{_lambda_.3} parent=11 // pred_fallthru
          _
        // Predicated region
        $region105: #{_lambda_.3} parent=11 // pred_check
          %p1063 = pneg %p661
        $region106: #{_lambda_.3} parent=11 // pred_check_branch
          %1065 = sbr.rel (%p1063) target = $region108
        $region107: #{_lambda_.3} parent=11 // pred_region
          _
        $region108: #{_lambda_.3} parent=11 // pred_fallthru
          _
        // Predicated region
        $region109: #{_lambda_.3} parent=11 // pred_check
          %p1066 = pneg %p682
        $region110: #{_lambda_.3} parent=11 // pred_check_branch
          %1068 = sbr.rel (%p1066) target = $region112
        $region111: #{_lambda_.3} parent=11 // pred_region
          %1070 = vsyncadd [#allocation14], 0
          %s1071 = sshll.u32 %s57, 4
          %s1072 = int_to_ptr.hbm [resolvable:$true] %s1071
          %s1073 = sshll.u32 [#allocation13], 4
          %s1074 = int_to_ptr.vmem [resolvable:$true] %s1073
          %1079 = dma.hbm_to_vmem [thread:$0]  %s1072, 32, %s1074, [#allocation14], 16, 16, 1
        $region112: #{_lambda_.3} parent=11 // pred_fallthru
          _
        // Predicated region
        $region113: #{_lambda_.3} parent=11 // pred_check
          %p1080 = pneg %p703
        $region114: #{_lambda_.3} parent=11 // pred_check_branch
          %1082 = sbr.rel (%p1080) target = $region116
        $region115: #{_lambda_.3} parent=11 // pred_region
          %1084 = vsyncadd [#allocation14], 0
          %s1086 = sshll.u32 %s59, 4
          %s1087 = int_to_ptr.hbm [resolvable:$true] %s1086
          %s1088 = sshll.u32 [#allocation15], 4
          %s1089 = int_to_ptr.vmem [resolvable:$true] %s1088
          %1091 = dma.hbm_to_vmem [thread:$0]  %s1087, 16, %s1089, [#allocation14]
        $region116: #{_lambda_.3} parent=11 // pred_fallthru
          _
        // Predicated region
        $region117: #{_lambda_.3} parent=11 // pred_check
          %p1092 = pneg %p724
        $region118: #{_lambda_.3} parent=11 // pred_check_branch
          %1094 = sbr.rel (%p1092) target = $region120
        $region119: #{_lambda_.3} parent=11 // pred_region
          %1096 = vsyncadd [#allocation17], 0
          %s1098 = sshll.u32 %s61, 4
          %s1099 = int_to_ptr.hbm [resolvable:$true] %s1098
          %s1100 = sshll.u32 [#allocation16], 4
          %s1101 = int_to_ptr.vmem [resolvable:$true] %s1100
          %1103 = dma.hbm_to_vmem [thread:$0]  %s1099, 16, %s1101, [#allocation17]
        $region120: #{_lambda_.3} parent=11 // pred_fallthru
          _
        // Predicated region
        $region121: #{_lambda_.3} parent=11 // pred_check
          %p1104 = pneg %p745
        $region122: #{_lambda_.3} parent=11 // pred_check_branch
          %1106 = sbr.rel (%p1104) target = $region124
        $region123: #{_lambda_.3} parent=11 // pred_region
          _
        $region124: #{_lambda_.3} parent=11 // pred_fallthru
          _
        // Predicated region
        $region125: #{_lambda_.3} parent=11 // pred_check
          %p1107 = pneg %p766
        $region126: #{_lambda_.3} parent=11 // pred_check_branch
          %1109 = sbr.rel (%p1107) target = $region128
        $region127: #{_lambda_.3} parent=11 // pred_region
          %1111 = vsyncadd [#allocation17], 0
          %s1113 = sshll.u32 %s65, 4
          %s1114 = int_to_ptr.hbm [resolvable:$true] %s1113
          %s1115 = sshll.u32 [#allocation18], 4
          %s1116 = int_to_ptr.vmem [resolvable:$true] %s1115
          %1118 = dma.hbm_to_vmem [thread:$0]  %s1114, 16, %s1116, [#allocation17]
        $region128: #{_lambda_.3} parent=11 // pred_fallthru
          _
        // Predicated region
        $region129: #{_lambda_.3} parent=11 // pred_check
          %p1119 = pneg %p787
        $region130: #{_lambda_.3} parent=11 // pred_check_branch
          %1121 = sbr.rel (%p1119) target = $region132
        $region131: #{_lambda_.3} parent=11 // pred_region
          _
        $region132: #{_lambda_.3} parent=11 // pred_fallthru
          _
        // Predicated region
        $region133: #{_lambda_.3} parent=11 // pred_check
          %p1122 = pneg %p808
        $region134: #{_lambda_.3} parent=11 // pred_check_branch
          %1124 = sbr.rel (%p1122) target = $region136
        $region135: #{_lambda_.3} parent=11 // pred_region
          %1126 = vsyncadd [#allocation20], 0
          %s1128 = sshll.u32 %s69, 4
          %s1129 = int_to_ptr.hbm [resolvable:$true] %s1128
          %s1130 = sshll.u32 [#allocation19], 4
          %s1131 = int_to_ptr.vmem [resolvable:$true] %s1130
          %1133 = dma.hbm_to_vmem [thread:$0]  %s1129, 16, %s1131, [#allocation20]
        $region136: #{_lambda_.3} parent=11 // pred_fallthru
          _
        // Predicated region
        $region137: #{_lambda_.3} parent=11 // pred_check
          %p1134 = pneg %p829
        $region138: #{_lambda_.3} parent=11 // pred_check_branch
          %1136 = sbr.rel (%p1134) target = $region140
        $region139: #{_lambda_.3} parent=11 // pred_region
          _
        $region140: #{_lambda_.3} parent=11 // pred_fallthru
          _
        // Predicated region
        $region141: #{_lambda_.3} parent=11 // pred_check
          %p1137 = pneg %p850
        $region142: #{_lambda_.3} parent=11 // pred_check_branch
          %1139 = sbr.rel (%p1137) target = $region144
        $region143: #{_lambda_.3} parent=11 // pred_region
          %1141 = vsyncadd [#allocation20], 0
          %s1143 = sshll.u32 %s73, 4
          %s1144 = int_to_ptr.hbm [resolvable:$true] %s1143
          %s1145 = sshll.u32 [#allocation21], 4
          %s1146 = int_to_ptr.vmem [resolvable:$true] %s1145
          %1148 = dma.hbm_to_vmem [thread:$0]  %s1144, 16, %s1146, [#allocation20]
        $region144: #{_lambda_.3} parent=11 // pred_fallthru
          _
      $region12: #{_lambda_.3} parent=5 // pred_fallthru
        _
      %p1149 = scmp.lt.s32.totalorder %s105, 2
      // Predicated region
      $region145: #{_lambda_.3} parent=5 // pred_check
        %p1150 = pneg %p1149
      $region146: #{_lambda_.3} parent=5 // pred_check_branch
        %1152 = sbr.rel (%p1150) target = $region148
      $region147: #{_lambda_.3} parent=5 // pred_region
        // Predicated region
        $region149: #{_lambda_.3} parent=147 // pred_check
          %p1153 = pneg %p125
        $region150: #{_lambda_.3} parent=147 // pred_check_branch
          %1155 = sbr.rel (%p1153) target = $region152
        $region151: #{_lambda_.3} parent=147 // pred_region
          %p1156 = scmp.lt.s32.totalorder %s105, 1
          %s1157 = scalar_select %p1156, %s105, 1
          %s1158 = smul.addr %s1157, 2
          %s1159 = smul.addr %s1158, 8
          %s1160 = scalar_lea.vmem %s5, %s1159
        $region152: #{_lambda_.3} parent=147 // pred_fallthru
          _
        // Predicated region
        $region153: #{_lambda_.3} parent=147 // pred_check
          %p1161 = pneg %p151
        $region154: #{_lambda_.3} parent=147 // pred_check_branch
          %1163 = sbr.rel (%p1161) target = $region156
        $region155: #{_lambda_.3} parent=147 // pred_region
          %p1164 = scmp.lt.s32.totalorder %s105, 1
          %s1165 = scalar_select %p1164, %s105, 1
          %s1166 = smul.addr %s1165, 2
          %s1167 = smul.addr %s1166, 4
          %s1168 = scalar_lea.vmem %s7, %s1167
        $region156: #{_lambda_.3} parent=147 // pred_fallthru
          _
      $region148: #{_lambda_.3} parent=5 // pred_fallthru
        _
      %p1169 = scmp.le.s32.totalorder 1, %s105
      %p1170 = scmp.lt.s32.totalorder %s105, 3
      %p1171 = pnand %p1169, %p1170
      %p1172 = pneg %p1171
      // Predicated region
      $region157: #{_lambda_.3} parent=5 // pred_check
        _
      $region158: #{_lambda_.3} parent=5 // pred_check_branch
        %1174 = sbr.rel (%p1171) target = $region160
      $region159: #{_lambda_.3} parent=5 // pred_region
        %s1175 = ssub.s32 %s105, 1
        // Predicated region
        $region161: #{_lambda_.3} parent=159 // pred_check
          %p1176 = pneg %p199
        $region162: #{_lambda_.3} parent=159 // pred_check_branch
          %1178 = sbr.rel (%p1176) target = $region164
        $region163: #{_lambda_.3} parent=159 // pred_region
          %1180 = dma.done [#allocation6], 16
        $region164: #{_lambda_.3} parent=159 // pred_fallthru
          _
        // Predicated region
        $region165: #{_lambda_.3} parent=159 // pred_check
          %p1181 = pneg %p241
        $region166: #{_lambda_.3} parent=159 // pred_check_branch
          %1183 = sbr.rel (%p1181) target = $region168
        $region167: #{_lambda_.3} parent=159 // pred_region
          %1185 = dma.done [#allocation8], 16
        $region168: #{_lambda_.3} parent=159 // pred_fallthru
          _
        // Predicated region
        $region169: #{_lambda_.3} parent=159 // pred_check
          %p1186 = pneg %p577
        $region170: #{_lambda_.3} parent=159 // pred_check_branch
          %1188 = sbr.rel (%p1186) target = $region172
        $region171: #{_lambda_.3} parent=159 // pred_region
          %1190 = dma.done [#allocation8], 32
        $region172: #{_lambda_.3} parent=159 // pred_fallthru
          _
        // Predicated region
        $region173: #{_lambda_.3} parent=159 // pred_check
          %p1191 = pneg %p598
        $region174: #{_lambda_.3} parent=159 // pred_check_branch
          %1193 = sbr.rel (%p1191) target = $region176
        $region175: #{_lambda_.3} parent=159 // pred_region
          %1195 = dma.done [#allocation11], 32
        $region176: #{_lambda_.3} parent=159 // pred_fallthru
          _
        // Predicated region
        $region177: #{_lambda_.3} parent=159 // pred_check
          %p1196 = pneg %p640
        $region178: #{_lambda_.3} parent=159 // pred_check_branch
          %1198 = sbr.rel (%p1196) target = $region180
        $region179: #{_lambda_.3} parent=159 // pred_region
          %1200 = dma.done [#allocation11], 32
        $region180: #{_lambda_.3} parent=159 // pred_fallthru
          _
        // Predicated region
        $region181: #{_lambda_.3} parent=159 // pred_check
          %p1201 = pneg %p682
        $region182: #{_lambda_.3} parent=159 // pred_check_branch
          %1203 = sbr.rel (%p1201) target = $region184
        $region183: #{_lambda_.3} parent=159 // pred_region
          %1205 = dma.done [#allocation14], 32
        $region184: #{_lambda_.3} parent=159 // pred_fallthru
          _
        // Predicated region
        $region185: #{_lambda_.3} parent=159 // pred_check
          %p1206 = pneg %p703
        $region186: #{_lambda_.3} parent=159 // pred_check_branch
          %1208 = sbr.rel (%p1206) target = $region188
        $region187: #{_lambda_.3} parent=159 // pred_region
          %1210 = dma.done [#allocation14], 16
        $region188: #{_lambda_.3} parent=159 // pred_fallthru
          _
        // Predicated region
        $region189: #{_lambda_.3} parent=159 // pred_check
          %p1211 = pneg %p724
        $region190: #{_lambda_.3} parent=159 // pred_check_branch
          %1213 = sbr.rel (%p1211) target = $region192
        $region191: #{_lambda_.3} parent=159 // pred_region
          %1215 = dma.done [#allocation17], 16
        $region192: #{_lambda_.3} parent=159 // pred_fallthru
          _
        // Predicated region
        $region193: #{_lambda_.3} parent=159 // pred_check
          %p1216 = pneg %p766
        $region194: #{_lambda_.3} parent=159 // pred_check_branch
          %1218 = sbr.rel (%p1216) target = $region196
        $region195: #{_lambda_.3} parent=159 // pred_region
          %1220 = dma.done [#allocation17], 16
        $region196: #{_lambda_.3} parent=159 // pred_fallthru
          _
        // Predicated region
        $region197: #{_lambda_.3} parent=159 // pred_check
          %p1221 = pneg %p808
        $region198: #{_lambda_.3} parent=159 // pred_check_branch
          %1223 = sbr.rel (%p1221) target = $region200
        $region199: #{_lambda_.3} parent=159 // pred_region
          %1225 = dma.done [#allocation20], 16
        $region200: #{_lambda_.3} parent=159 // pred_fallthru
          _
        // Predicated region
        $region201: #{_lambda_.3} parent=159 // pred_check
          %p1226 = pneg %p850
        $region202: #{_lambda_.3} parent=159 // pred_check_branch
          %1228 = sbr.rel (%p1226) target = $region204
        $region203: #{_lambda_.3} parent=159 // pred_region
          %1230 = dma.done [#allocation20], 16
        $region204: #{_lambda_.3} parent=159 // pred_fallthru
          _
        %p1231 = scmp.lt.s32.totalorder %s110, 1
        %s1232 = scalar_select %p1231, %s110, 1
        %s1233 = smul.addr %s1232, 2
        %s1234 = smul.addr %s1233, 8
        %s1235 = scalar_lea.vmem %s5, %s1234
        %p1236 = pneg %p131
        %p1237 = pneg %p128
        %p1238 = scmp.lt.s32.totalorder %s110, 1
        %s1239 = scalar_select %p1238, %s110, 1
        %s1240 = smul.addr %s1239, 2
        %s1241 = smul.addr %s1240, 4
        %s1242 = scalar_lea.vmem %s7, %s1241
        %p1243 = pneg %p157
        %p1244 = pneg %p154
        %p1245 = pneg %p178
        %p1246 = pneg %p175
        %p1247 = pneg %p199
        %p1248 = pneg %p196
        %p1249 = pneg %p220
        %p1250 = pneg %p217
        %p1251 = pneg %p241
        %p1252 = pneg %p238
        %p1253 = pneg %p262
        %p1254 = pneg %p259
        %p1255 = pneg %p283
        %p1256 = pneg %p280
        %p1257 = pneg %p304
        %p1258 = pneg %p301
        %p1259 = pneg %p325
        %p1260 = pneg %p322
        %p1261 = pneg %p346
        %p1262 = pneg %p343
        %p1263 = pneg %p367
        %p1264 = pneg %p364
        %p1265 = pneg %p388
        %p1266 = pneg %p385
        %p1267 = pneg %p409
        %p1268 = pneg %p406
        %p1269 = pneg %p430
        %p1270 = pneg %p427
        %p1271 = pneg %p451
        %p1272 = pneg %p448
        %p1273 = pneg %p472
        %p1274 = pneg %p469
        %p1275 = pneg %p493
        %p1276 = pneg %p490
        %p1277 = pneg %p514
        %p1278 = pneg %p511
        %p1279 = pneg %p535
        %p1280 = pneg %p532
        %p1281 = pneg %p556
        %p1282 = pneg %p553
        %p1283 = pneg %p577
        %p1284 = pneg %p574
        %p1285 = pneg %p598
        %p1286 = pneg %p595
        %p1287 = pneg %p619
        %p1288 = pneg %p616
        %p1289 = pneg %p640
        %p1290 = pneg %p637
        %p1291 = pneg %p661
        %p1292 = pneg %p658
        %p1293 = pneg %p682
        %p1294 = pneg %p679
        %p1295 = pneg %p703
        %p1296 = pneg %p700
        %p1297 = pneg %p724
        %p1298 = pneg %p721
        %p1299 = pneg %p745
        %p1300 = pneg %p742
        %p1301 = pneg %p766
        %p1302 = pneg %p763
        %p1303 = pneg %p787
        %p1304 = pneg %p784
        %p1305 = pneg %p808
        %p1306 = pneg %p805
        %p1307 = pneg %p829
        %p1308 = pneg %p826
        %p1309 = pneg %p850
        %p1310 = pneg %p847
        %p1311 = pneg %p876
        %p1312 = pneg %p873
        %p1313 = scmp.lt.s32.totalorder %s110, 1
        %s1314 = scalar_select %p1313, %s110, 1
        %s1315 = smul.addr %s1314, 2
        %s1316 = smul.addr %s1315, 8
        %s1317 = scalar_lea.vmem %s75, %s1316
        %p1318 = pneg %p902
        %p1319 = pneg %p899
        %p1320 = scmp.lt.s32.totalorder %s110, 1
        %s1321 = scalar_select %p1320, %s110, 1
        %s1322 = smul.addr %s1321, 2
        %s1323 = smul.addr %s1322, 8
        %s1324 = scalar_lea.vmem %s77, %s1323
        %p1325 = pneg %p928
        %p1326 = pneg %p925
        %p1327 = scmp.lt.s32.totalorder %s110, 1
        %s1328 = scalar_select %p1327, %s110, 1
        %s1329 = smul.addr %s1328, 2
        %s1330 = smul.addr %s1329, 8
        %s1331 = scalar_lea.vmem %s79, %s1330
        %p1332 = scmp.lt.s32.totalorder %s110, 1
        %s1333 = scalar_select %p1332, %s110, 1
        %s1334 = smul.addr %s1333, 2
        %s1335 = smul.addr %s1334, 8
        %s1336 = scalar_lea.vmem %s5, %s1335
        %p1337 = scmp.lt.s32.totalorder %s110, 1
        %s1338 = scalar_select %p1337, %s110, 1
        %s1339 = smul.addr %s1338, 2
        %s1340 = smul.addr %s1339, 4
        %s1341 = scalar_lea.vmem %s7, %s1340
        %p1342 = scmp.lt.s32.totalorder %s110, 1
        %s1343 = scalar_select %p1342, %s110, 1
        %s1344 = smul.addr %s1343, 2
        %s1345 = smul.addr %s1344, 8
        %s1346 = scalar_lea.vmem %s75, %s1345
        %p1347 = scmp.lt.s32.totalorder %s110, 1
        %s1348 = scalar_select %p1347, %s110, 1
        %s1349 = smul.addr %s1348, 2
        %s1350 = smul.addr %s1349, 8
        %s1351 = scalar_lea.vmem %s77, %s1350
        %p1352 = scmp.lt.s32.totalorder %s110, 1
        %s1353 = scalar_select %p1352, %s110, 1
        %s1354 = smul.addr %s1353, 2
        %s1355 = smul.addr %s1354, 8
        %s1356 = scalar_lea.vmem %s79, %s1355
        %s1358 = sld [smem:[#allocation3 + %s110]]
        %s1359 = sld [smem:[#allocation4 + %s110]]
        %v1360 = vld [vmem:[%s1336] sm:$0xff]
        %v1361 = vld [vmem:[%s1336 + $0x8] sm:$0xff]
        %v1362 = vld [vmem:[%s1341] sm:$0xf]
        %v1363 = vld [vmem:[%s1341 + $0x4] sm:$0x3]
        %vm1366 = vcmask 1040384
        %v1367 = vrot.slane %v1360, 7
        %v1368 = vrot.slane %v1361, 7
        %v1369 = vsel %vm1366, %v1367, %v1368
        %v1372 = vsel %vm1366, 0.0, %v1367
        %v1373 = vld [vmem:[%s9] sm:$0xf]
        %v1374 = vld [vmem:[#allocation5] sm:$0x1]
        %v1375 = vpack.c.bf16 %v1369, %v1372
        %v1377 = vperm.slane %v1374, 0
        %vm1379 = vcmask 64512
        %v1381 = vsel %vm1379, %v1375, 0
        %vm1383 = vcmask 1043456
        %v1385 = vsel %vm1383, %v1373, 0
        %1387 = vmatpush.bf16.msra.mxu0 0
        %1388 = vmatpush.bf16.msra.mxu0 0
        %1389 = vmatpush.bf16.msra.mxu0 0
        %1390 = vmatpush.bf16.msra.mxu0 0
        %1391 = vmatpush.bf16.msra.mxu0 0
        %1392 = vmatpush.bf16.msra.mxu0 0
        %1393 = vmatpush.bf16.msra.mxu0 0
        %1394 = vmatpush.bf16.msra.mxu0 %v1385
        %1395 = vmatmul.bf16.gmra.mxu0 %v1381
        %v1396 = vpop.f32.mrf.mxu0
        %v1397 = vadd.f32 %v1377, %v1396
        %v1398 = vpop.f32.mrf.mxu0
        %v1399 = vadd.f32 %v1377, %v1398
        %1400 = vdwg.mxu0
        %v1401 = vmax.f32 %v1397, 0.0
        %v1402 = vmax.f32 %v1399, 0.0
        %v1403 = vld [vmem:[%s13] sm:$0xf]
        %v1404 = vld [vmem:[%s13 + $0x4] sm:$0xf]
        %v1405 = vld [vmem:[%s13 + $0x8] sm:$0xf]
        %v1406 = vld [vmem:[%s13 + $0xc] sm:$0xf]
        %v1407 = vld [vmem:[#allocation7] sm:$0x1]
        %v1408 = vpack.c.bf16 %v1402, %v1401
        %v1410 = vperm.slane %v1407, 0
        %v1416 = vunpack.c.l.b16 %v1403
        %v1417 = vunpack.c.l.b16 %v1404
        %v1418 = vunpack.c.l.b16 %v1405
        %v1419 = vunpack.c.l.b16 %v1406
        %v1420 = vpack.c.b16 %v1417, %v1416
        %v1421 = vpack.c.b16 %v1419, %v1418
        %vm1424 = vcmask 261120
        %v1426 = vsel %vm1424, %v1408, 0
        %1428 = vmatpush.bf16.msra.mxu0 0
        %1429 = vmatpush.bf16.msra.mxu0 0
        %1430 = vmatpush.bf16.msra.mxu0 0
        %1431 = vmatpush.bf16.msra.mxu0 0
        %1432 = vmatpush.bf16.msra.mxu0 0
        %1433 = vmatpush.bf16.msra.mxu0 0
        %1434 = vmatpush.bf16.msra.mxu0 %v1421
        %1435 = vmatpush.bf16.msra.mxu0 %v1420
        %1436 = vmatmul.bf16.gmra.mxu0 %v1426
        %v1437 = vpop.f32.mrf.mxu0
        %v1438 = vadd.f32 %v1410, %v1437
        %v1439 = vpop.f32.mrf.mxu0
        %v1440 = vadd.f32 %v1410, %v1439
        %1441 = vdwg.mxu0
        %v1442 = vmax.f32 %v1438, 0.0
        %v1443 = vmax.f32 %v1440, 0.0
        %v1444 = vld [vmem:[%s17] sm:$0xff]
        %v1445 = vld [vmem:[%s17 + $0x8] sm:$0xff]
        %v1446 = vadd.f32 %v1442, %v1444
        %v1447 = vadd.f32 %v1443, %v1445
        %v1448 = vlaneseq
        %v1449 = vand.u32 %v1448, 127
        %v1450 = vlaneseq
        %v1451 = vshrl.u32 %v1450, 7
        %v1452 = vadd.s32 %v1451, 8
        %v1453 = vstv %s1359
        %vm1454 = vcmp.ge.s32.totalorder %v1449, %v1453
        %vm1455 = vcmp.gt.s32.totalorder %v1449, %v1451
        %vm1456 = vcmp.gt.s32.totalorder %v1449, %v1452
        %vm1457 = vmor %vm1454, %vm1455
        %vm1458 = vmor %vm1454, %vm1456
        %v1459 = vstv %s1358
        %vm1460 = vcmp.ge.s32.totalorder %v1449, %v1459
        %vm1461 = vcmp.ge.s32.totalorder %v1451, %v1453
        %vm1462 = vcmp.ge.s32.totalorder %v1452, %v1453
        %v1463 = vld [vmem:[%s19] sm:$0x1]
        %v1464 = vld [vmem:[%s21] sm:$0x1]
        %v1465 = vsel %vm1424, %v1446, 0.0
        %1466 = vadd.xlane.f32.xlu0 %v1465
        %v1467 = vpop.xlane.xlu0 %1466
        %v1468 = vsel %vm1424, %v1447, 0.0
        %1469 = vadd.xlane.f32.xlu0 %v1468
        %v1470 = vpop.xlane.xlu0 %1469
        %v1471 = vrcp.pop 32.0
        %v1472 = vmul.f32 32.0, %v1471
        %v1473 = vsub.f32 1.0, %v1472
        %v1474 = vmul.f32 %v1471, %v1473
        %v1475 = vadd.f32 %v1471, %v1474
        %vm1476 = vweird.f32 %v1471
        %v1477 = vsel %vm1476, %v1471, %v1475
        %v1478 = vmul.f32 %v1467, %v1477
        %v1479 = vmul.f32 %v1470, %v1477
        %v1480 = vsub.f32 %v1446, %v1478
        %v1481 = vsub.f32 %v1447, %v1479
        %v1482 = vmul.f32 %v1480, %v1480
        %v1483 = vmul.f32 %v1481, %v1481
        %v1484 = vsel %vm1424, %v1482, 0.0
        %1485 = vadd.xlane.f32.xlu0 %v1484
        %v1486 = vpop.xlane.xlu0 %1485
        %v1487 = vsel %vm1424, %v1483, 0.0
        %1488 = vadd.xlane.f32.xlu0 %v1487
        %v1489 = vpop.xlane.xlu0 %1488
        %v1490 = vmul.f32 %v1486, %v1477
        %v1491 = vmul.f32 %v1489, %v1477
        %v1492 = vadd.f32 %v1490, 1e-05
        %v1493 = vadd.f32 %v1491, 1e-05
        %v1494 = vrsqrt.pop %v1492
        %v1495 = vmul.f32 %v1494, %v1492
        %v1496 = vmul.f32 %v1495, %v1494
        %v1497 = vmul.f32 0.5, %v1496
        %v1498 = vsub.f32 1.5, %v1497
        %v1499 = vmul.f32 %v1494, %v1498
        %vm1500 = vweird.f32 %v1492
        %vm1501 = vweird.f32 %v1494
        %vm1502 = vmor %vm1500, %vm1501
        %v1503 = vsel %vm1502, %v1494, %v1499
        %v1504 = vrsqrt.pop %v1493
        %v1505 = vmul.f32 %v1504, %v1493
        %v1506 = vmul.f32 %v1505, %v1504
        %v1507 = vmul.f32 0.5, %v1506
        %v1508 = vsub.f32 1.5, %v1507
        %v1509 = vmul.f32 %v1504, %v1508
        %vm1510 = vweird.f32 %v1493
        %vm1511 = vweird.f32 %v1504
        %vm1512 = vmor %vm1510, %vm1511
        %v1513 = vsel %vm1512, %v1504, %v1509
        %v1514 = vmul.f32 %v1480, %v1503
        %v1515 = vmul.f32 %v1481, %v1513
        %v1517 = vperm.slane %v1463, 0
        %v1519 = vmul.f32 %v1514, %v1517
        %v1520 = vmul.f32 %v1515, %v1517
        %v1522 = vperm.slane %v1464, 0
        %v1524 = vadd.f32 %v1519, %v1522
        %v1525 = vadd.f32 %v1520, %v1522
        %v1526 = vpack.c.bf16 %v1525, %v1524
        %v1527 = vld [vmem:[%s23] sm:$0xf]
        %v1528 = vld [vmem:[%s23 + $0x4] sm:$0xf]
        %v1529 = vld [vmem:[%s23 + $0x8] sm:$0xf]
        %v1530 = vld [vmem:[%s23 + $0xc] sm:$0xf]
        %v1531 = vld [vmem:[%s25] sm:$0x1]
        %v1533 = vperm.slane %v1531, 0
        %v1539 = vunpack.c.l.b16 %v1527
        %v1540 = vunpack.c.l.b16 %v1528
        %v1541 = vunpack.c.l.b16 %v1529
        %v1542 = vunpack.c.l.b16 %v1530
        %v1543 = vpack.c.b16 %v1540, %v1539
        %v1544 = vpack.c.b16 %v1542, %v1541
        %v1548 = vsel %vm1424, %v1526, 0
        %1550 = vmatpush.bf16.msra.mxu0 0
        %1551 = vmatpush.bf16.msra.mxu0 0
        %1552 = vmatpush.bf16.msra.mxu0 0
        %1553 = vmatpush.bf16.msra.mxu0 0
        %1554 = vmatpush.bf16.msra.mxu0 0
        %1555 = vmatpush.bf16.msra.mxu0 0
        %1556 = vmatpush.bf16.msra.mxu0 %v1544
        %1557 = vmatpush.bf16.msra.mxu0 %v1543
        %1558 = vmatmul.bf16.gmra.mxu0 %v1548
        %v1559 = vpop.f32.mrf.mxu0
        %v1560 = vadd.f32 %v1533, %v1559
        %v1561 = vpop.f32.mrf.mxu0
        %v1562 = vadd.f32 %v1533, %v1561
        %1563 = vdwg.mxu0
        %v1564 = vpack.c.bf16 %v1562, %v1560
        %1566 = vrot.lane.b32.xlu0 %v1564, 96
        %v1567 = vpop.permute.xlu0 %1566
        %vm1568 = vcmask 130048
        %v1570 = vsel %vm1568, %v1564, 0
        %v1573 = vsel %vm1568, %v1567, 0
        %1575 = vmatpush.bf16.xpose.msra.mxu0 0
        %1576 = vmatpush.bf16.xpose.msra.mxu0 0
        %1577 = vmatpush.bf16.xpose.msra.mxu0 0
        %1578 = vmatpush.bf16.xpose.msra.mxu0 0
        %1579 = vmatpush.bf16.xpose.msra.mxu0 0
        %1580 = vmatpush.bf16.xpose.msra.mxu0 0
        %1581 = vmatpush.bf16.xpose.msra.mxu0 0
        %1582 = vmatpush.bf16.xpose.msra.mxu0 %v1573
        %1583 = vmatmul.bf16.gmra.mxu0 %v1570
        %v1584 = vpop.f32.mrf.mxu0
        %v1585 = vadd.f32 0.0, %v1584
        %v1586 = vpop.f32.mrf.mxu0
        %v1587 = vadd.f32 0.0, %v1586
        %1588 = vdwg.mxu0
        %v1589 = vmul.f32 %v1585, 0.25
        %v1590 = vmul.f32 %v1587, 0.25
        %v1591 = vsel %vm1457, -1e+30, %v1589
        %v1592 = vsel %vm1458, -1e+30, %v1590
        %v1593 = vsel %vm1568, %v1591, -inf
        %1594 = vmax.xlane.f32.xlu0 %v1593
        %v1595 = vpop.xlane.xlu0 %1594
        %v1596 = vsel %vm1568, %v1592, -inf
        %1597 = vmax.xlane.f32.xlu0 %v1596
        %v1598 = vpop.xlane.xlu0 %1597
        %v1599 = vsub.f32 %v1591, %v1595
        %v1600 = vsub.f32 %v1592, %v1598
        %v1601 = vmul.f32 %v1599, 1.442695
        %v1602 = vpow.pop %v1601
        %v1603 = vmul.f32 %v1600, 1.442695
        %v1604 = vpow.pop %v1603
        %v1605 = vsel %vm1568, %v1602, 0.0
        %1606 = vadd.xlane.f32.xlu0 %v1605
        %v1607 = vpop.xlane.xlu0 %1606
        %v1608 = vsel %vm1568, %v1604, 0.0
        %1609 = vadd.xlane.f32.xlu0 %v1608
        %v1610 = vpop.xlane.xlu0 %1609
        %v1611 = vrcp.pop %v1607
        %v1612 = vrcp.pop %v1610
        %v1613 = vmul.f32 %v1602, %v1611
        %v1614 = vmul.f32 %v1604, %v1612
        %v1615 = vsel %vm1461, 1, 0
        %v1616 = vsel %vm1462, 1, 0
        %vm1617 = vcmp.eq.s32.totalorder %v1615, 1
        %vm1618 = vcmp.eq.s32.totalorder %v1616, 1
        %v1619 = vsel %vm1617, 0.0, %v1613
        %v1620 = vsel %vm1618, 0.0, %v1614
        %v1621 = vpack.c.bf16 %v1620, %v1619
        %1622 = vrot.lane.b32.xlu0 %v1564, 64
        %v1623 = vpop.permute.xlu0 %1622
        %v1626 = vsel %vm1568, %v1621, 0
        %1628 = vmatpush.bf16.msra.mxu0 0
        %1629 = vmatpush.bf16.msra.mxu0 0
        %1630 = vmatpush.bf16.msra.mxu0 0
        %1631 = vmatpush.bf16.msra.mxu0 0
        %1632 = vmatpush.bf16.msra.mxu0 0
        %1633 = vmatpush.bf16.msra.mxu0 0
        %1634 = vmatpush.bf16.msra.mxu0 0
        %1635 = vmatpush.bf16.msra.mxu0 %v1623
        %1636 = vmatmul.bf16.gmra.mxu0 %v1626
        %v1637 = vpop.f32.mrf.mxu0
        %v1638 = vadd.f32 0.0, %v1637
        %v1639 = vpop.f32.mrf.mxu0
        %v1640 = vadd.f32 0.0, %v1639
        %1641 = vdwg.mxu0
        %1642 = vrot.lane.b32.xlu0 %v1564, 112
        %v1643 = vpop.permute.xlu0 %1642
        %1644 = vrot.lane.b32.xlu0 %v1564, 80
        %v1645 = vpop.permute.xlu0 %1644
        %v1647 = vsel %vm1568, %v1643, 0
        %v1650 = vsel %vm1568, %v1645, 0
        %1652 = vmatpush.bf16.xpose.msra.mxu0 0
        %1653 = vmatpush.bf16.xpose.msra.mxu0 0
        %1654 = vmatpush.bf16.xpose.msra.mxu0 0
        %1655 = vmatpush.bf16.xpose.msra.mxu0 0
        %1656 = vmatpush.bf16.xpose.msra.mxu0 0
        %1657 = vmatpush.bf16.xpose.msra.mxu0 0
        %1658 = vmatpush.bf16.xpose.msra.mxu0 0
        %1659 = vmatpush.bf16.xpose.msra.mxu0 %v1650
        %1660 = vmatmul.bf16.gmra.mxu0 %v1647
        %v1661 = vpop.f32.mrf.mxu0
        %v1662 = vadd.f32 0.0, %v1661
        %v1663 = vpop.f32.mrf.mxu0
        %v1664 = vadd.f32 0.0, %v1663
        %1665 = vdwg.mxu0
        %v1666 = vmul.f32 %v1662, 0.25
        %v1667 = vmul.f32 %v1664, 0.25
        %v1668 = vsel %vm1457, -1e+30, %v1666
        %v1669 = vsel %vm1458, -1e+30, %v1667
        %v1670 = vsel %vm1568, %v1668, -inf
        %1671 = vmax.xlane.f32.xlu0 %v1670
        %v1672 = vpop.xlane.xlu0 %1671
        %v1673 = vsel %vm1568, %v1669, -inf
        %1674 = vmax.xlane.f32.xlu0 %v1673
        %v1675 = vpop.xlane.xlu0 %1674
        %v1676 = vsub.f32 %v1668, %v1672
        %v1677 = vsub.f32 %v1669, %v1675
        %v1678 = vmul.f32 %v1676, 1.442695
        %v1679 = vpow.pop %v1678
        %v1680 = vmul.f32 %v1677, 1.442695
        %v1681 = vpow.pop %v1680
        %v1682 = vsel %vm1568, %v1679, 0.0
        %1683 = vadd.xlane.f32.xlu0 %v1682
        %v1684 = vpop.xlane.xlu0 %1683
        %v1685 = vsel %vm1568, %v1681, 0.0
        %1686 = vadd.xlane.f32.xlu0 %v1685
        %v1687 = vpop.xlane.xlu0 %1686
        %v1688 = vrcp.pop %v1684
        %v1689 = vrcp.pop %v1687
        %v1690 = vmul.f32 %v1679, %v1688
        %v1691 = vmul.f32 %v1681, %v1689
        %v1692 = vsel %vm1617, 0.0, %v1690
        %v1693 = vsel %vm1618, 0.0, %v1691
        %v1694 = vpack.c.bf16 %v1693, %v1692
        %1695 = vrot.lane.b32.xlu0 %v1564, 48
        %v1696 = vpop.permute.xlu0 %1695
        %v1699 = vsel %vm1568, %v1694, 0
        %1701 = vmatpush.bf16.msra.mxu0 0
        %1702 = vmatpush.bf16.msra.mxu0 0
        %1703 = vmatpush.bf16.msra.mxu0 0
        %1704 = vmatpush.bf16.msra.mxu0 0
        %1705 = vmatpush.bf16.msra.mxu0 0
        %1706 = vmatpush.bf16.msra.mxu0 0
        %1707 = vmatpush.bf16.msra.mxu0 0
        %1708 = vmatpush.bf16.msra.mxu0 %v1696
        %1709 = vmatmul.bf16.gmra.mxu0 %v1699
        %v1710 = vpop.f32.mrf.mxu0
        %v1711 = vadd.f32 0.0, %v1710
        %v1712 = vpop.f32.mrf.mxu0
        %v1713 = vadd.f32 0.0, %v1712
        %1714 = vdwg.mxu0
        %1717 = vrot.lane.b32.xlu0 %v1711, 16
        %v1718 = vpop.permute.xlu0 %1717
        %1719 = vrot.lane.b32.xlu0 %v1713, 16
        %v1720 = vpop.permute.xlu0 %1719
        %v1723 = vsel %vm1568, %v1638, %v1718
        %v1724 = vsel %vm1568, %v1640, %v1720
        %v1725 = vpack.c.bf16 %v1724, %v1723
        %v1726 = vld [vmem:[%s27] sm:$0xf]
        %v1727 = vld [vmem:[%s27 + $0x4] sm:$0xf]
        %v1728 = vld [vmem:[%s27 + $0x8] sm:$0xf]
        %v1729 = vld [vmem:[%s27 + $0xc] sm:$0xf]
        %v1734 = vunpack.c.l.b16 %v1726
        %v1735 = vunpack.c.l.b16 %v1727
        %v1736 = vunpack.c.l.b16 %v1728
        %v1737 = vunpack.c.l.b16 %v1729
        %v1738 = vpack.c.b16 %v1735, %v1734
        %v1739 = vpack.c.b16 %v1737, %v1736
        %v1743 = vsel %vm1424, %v1725, 0
        %1745 = vmatpush.bf16.msra.mxu0 0
        %1746 = vmatpush.bf16.msra.mxu0 0
        %1747 = vmatpush.bf16.msra.mxu0 0
        %1748 = vmatpush.bf16.msra.mxu0 0
        %1749 = vmatpush.bf16.msra.mxu0 0
        %1750 = vmatpush.bf16.msra.mxu0 0
        %1751 = vmatpush.bf16.msra.mxu0 %v1739
        %1752 = vmatpush.bf16.msra.mxu0 %v1738
        %1753 = vmatmul.bf16.gmra.mxu0 %v1743
        %v1754 = vpop.f32.mrf.mxu0
        %v1755 = vadd.f32 0.0, %v1754
        %v1756 = vpop.f32.mrf.mxu0
        %v1757 = vadd.f32 0.0, %v1756
        %1758 = vdwg.mxu0
        %v1759 = vadd.f32 %v1446, %v1755
        %v1760 = vadd.f32 %v1447, %v1757
        %v1761 = vld [vmem:[%s29] sm:$0x1]
        %v1763 = vperm.slane %v1761, 0
        %v1765 = vadd.f32 %v1759, %v1763
        %v1766 = vadd.f32 %v1760, %v1763
        %v1767 = vld [vmem:[%s31] sm:$0x1]
        %v1768 = vld [vmem:[%s33] sm:$0x1]
        %v1769 = vsel %vm1424, %v1765, 0.0
        %1770 = vadd.xlane.f32.xlu0 %v1769
        %v1771 = vpop.xlane.xlu0 %1770
        %v1772 = vsel %vm1424, %v1766, 0.0
        %1773 = vadd.xlane.f32.xlu0 %v1772
        %v1774 = vpop.xlane.xlu0 %1773
        %v1775 = vmul.f32 %v1771, %v1477
        %v1776 = vmul.f32 %v1774, %v1477
        %v1777 = vsub.f32 %v1765, %v1775
        %v1778 = vsub.f32 %v1766, %v1776
        %v1779 = vmul.f32 %v1777, %v1777
        %v1780 = vmul.f32 %v1778, %v1778
        %v1781 = vsel %vm1424, %v1779, 0.0
        %1782 = vadd.xlane.f32.xlu0 %v1781
        %v1783 = vpop.xlane.xlu0 %1782
        %v1784 = vsel %vm1424, %v1780, 0.0
        %1785 = vadd.xlane.f32.xlu0 %v1784
        %v1786 = vpop.xlane.xlu0 %1785
        %v1787 = vmul.f32 %v1783, %v1477
        %v1788 = vmul.f32 %v1786, %v1477
        %v1789 = vadd.f32 %v1787, 1e-05
        %v1790 = vadd.f32 %v1788, 1e-05
        %v1791 = vrsqrt.pop %v1789
        %v1792 = vmul.f32 %v1791, %v1789
        %v1793 = vmul.f32 %v1792, %v1791
        %v1794 = vmul.f32 0.5, %v1793
        %v1795 = vsub.f32 1.5, %v1794
        %v1796 = vmul.f32 %v1791, %v1795
        %vm1797 = vweird.f32 %v1789
        %vm1798 = vweird.f32 %v1791
        %vm1799 = vmor %vm1797, %vm1798
        %v1800 = vsel %vm1799, %v1791, %v1796
        %v1801 = vrsqrt.pop %v1790
        %v1802 = vmul.f32 %v1801, %v1790
        %v1803 = vmul.f32 %v1802, %v1801
        %v1804 = vmul.f32 0.5, %v1803
        %v1805 = vsub.f32 1.5, %v1804
        %v1806 = vmul.f32 %v1801, %v1805
        %vm1807 = vweird.f32 %v1790
        %vm1808 = vweird.f32 %v1801
        %vm1809 = vmor %vm1807, %vm1808
        %v1810 = vsel %vm1809, %v1801, %v1806
        %v1811 = vmul.f32 %v1777, %v1800
        %v1812 = vmul.f32 %v1778, %v1810
        %v1814 = vperm.slane %v1767, 0
        %v1816 = vmul.f32 %v1811, %v1814
        %v1817 = vmul.f32 %v1812, %v1814
        %v1819 = vperm.slane %v1768, 0
        %v1821 = vadd.f32 %v1816, %v1819
        %v1822 = vadd.f32 %v1817, %v1819
        %v1823 = vpack.c.bf16 %v1822, %v1821
        %v1824 = vld [vmem:[%s35] sm:$0xf]
        %v1825 = vld [vmem:[%s35 + $0x4] sm:$0xf]
        %v1826 = vld [vmem:[%s35 + $0x8] sm:$0xf]
        %v1827 = vld [vmem:[%s35 + $0xc] sm:$0xf]
        %v1828 = vld [vmem:[%s37] sm:$0x1]
        %v1830 = vperm.slane %v1828, 0
        %v1836 = vunpack.c.l.b16 %v1824
        %v1837 = vunpack.c.l.b16 %v1825
        %v1838 = vunpack.c.l.b16 %v1826
        %v1839 = vunpack.c.l.b16 %v1827
        %v1840 = vpack.c.b16 %v1837, %v1836
        %v1841 = vpack.c.b16 %v1839, %v1838
        %v1845 = vsel %vm1424, %v1823, 0
        %1847 = vmatpush.bf16.msra.mxu0 0
        %1848 = vmatpush.bf16.msra.mxu0 0
        %1849 = vmatpush.bf16.msra.mxu0 0
        %1850 = vmatpush.bf16.msra.mxu0 0
        %1851 = vmatpush.bf16.msra.mxu0 0
        %1852 = vmatpush.bf16.msra.mxu0 0
        %1853 = vmatpush.bf16.msra.mxu0 %v1841
        %1854 = vmatpush.bf16.msra.mxu0 %v1840
        %1855 = vmatmul.bf16.gmra.mxu0 %v1845
        %v1856 = vpop.f32.mrf.mxu0
        %v1857 = vadd.f32 %v1830, %v1856
        %v1858 = vpop.f32.mrf.mxu0
        %v1859 = vadd.f32 %v1830, %v1858
        %1860 = vdwg.mxu0
        %v1861 = vld [vmem:[%s39] sm:$0xf]
        %v1862 = vld [vmem:[%s39 + $0x4] sm:$0xf]
        %v1863 = vld [vmem:[%s39 + $0x8] sm:$0xf]
        %v1864 = vld [vmem:[%s39 + $0xc] sm:$0xf]
        %v1865 = vld [vmem:[%s41] sm:$0x1]
        %v1867 = vperm.slane %v1865, 0
        %v1871 = vunpack.c.l.b16 %v1362
        %v1872 = vunpack.c.l.b16 %v1363
        %v1873 = vpack.c.b16 %v1872, %v1871
        %v1878 = vunpack.c.l.b16 %v1861
        %v1879 = vunpack.c.l.b16 %v1862
        %v1880 = vunpack.c.l.b16 %v1863
        %v1881 = vunpack.c.l.b16 %v1864
        %v1882 = vpack.c.b16 %v1879, %v1878
        %v1883 = vpack.c.b16 %v1881, %v1880
        %v1887 = vsel %vm1424, %v1873, 0
        %1889 = vmatpush.bf16.msra.mxu0 0
        %1890 = vmatpush.bf16.msra.mxu0 0
        %1891 = vmatpush.bf16.msra.mxu0 0
        %1892 = vmatpush.bf16.msra.mxu0 0
        %1893 = vmatpush.bf16.msra.mxu0 0
        %1894 = vmatpush.bf16.msra.mxu0 0
        %1895 = vmatpush.bf16.msra.mxu0 %v1883
        %1896 = vmatpush.bf16.msra.mxu0 %v1882
        %1897 = vmatmul.bf16.gmra.mxu0 %v1887
        %v1898 = vpop.f32.mrf.mxu0
        %v1899 = vadd.f32 %v1867, %v1898
        %v1900 = vpop.f32.mrf.mxu0
        %v1901 = vadd.f32 %v1867, %v1900
        %1902 = vdwg.mxu0
        %v1903 = vpack.c.bf16 %v1859, %v1857
        %v1904 = vpack.c.bf16 %v1901, %v1899
        %v1906 = vsel %vm1568, %v1903, 0
        %v1909 = vsel %vm1568, %v1904, 0
        %1911 = vmatpush.bf16.xpose.msra.mxu0 0
        %1912 = vmatpush.bf16.xpose.msra.mxu0 0
        %1913 = vmatpush.bf16.xpose.msra.mxu0 0
        %1914 = vmatpush.bf16.xpose.msra.mxu0 0
        %1915 = vmatpush.bf16.xpose.msra.mxu0 0
        %1916 = vmatpush.bf16.xpose.msra.mxu0 0
        %1917 = vmatpush.bf16.xpose.msra.mxu0 0
        %1918 = vmatpush.bf16.xpose.msra.mxu0 %v1909
        %1919 = vmatmul.bf16.gmra.mxu0 %v1906
        %v1920 = vpop.f32.mrf.mxu0
        %v1921 = vadd.f32 0.0, %v1920
        %v1922 = vpop.f32.mrf.mxu0
        %v1923 = vadd.f32 0.0, %v1922
        %1924 = vdwg.mxu0
        %v1925 = vmul.f32 %v1921, 0.25
        %v1926 = vmul.f32 %v1923, 0.25
        %v1927 = vsel %vm1460, -1e+30, %v1925
        %v1928 = vsel %vm1460, -1e+30, %v1926
        %vm1929 = vcmask 97280
        %v1930 = vsel %vm1929, %v1927, -inf
        %1931 = vmax.xlane.f32.xlu0 %v1930
        %v1932 = vpop.xlane.xlu0 %1931
        %v1933 = vsel %vm1929, %v1928, -inf
        %1934 = vmax.xlane.f32.xlu0 %v1933
        %v1935 = vpop.xlane.xlu0 %1934
        %v1936 = vsub.f32 %v1927, %v1932
        %v1937 = vsub.f32 %v1928, %v1935
        %v1938 = vmul.f32 %v1936, 1.442695
        %v1939 = vpow.pop %v1938
        %v1940 = vmul.f32 %v1937, 1.442695
        %v1941 = vpow.pop %v1940
        %v1942 = vsel %vm1929, %v1939, 0.0
        %1943 = vadd.xlane.f32.xlu0 %v1942
        %v1944 = vpop.xlane.xlu0 %1943
        %v1945 = vsel %vm1929, %v1941, 0.0
        %1946 = vadd.xlane.f32.xlu0 %v1945
        %v1947 = vpop.xlane.xlu0 %1946
        %v1948 = vrcp.pop %v1944
        %v1949 = vrcp.pop %v1947
        %v1950 = vmul.f32 %v1939, %v1948
        %v1951 = vmul.f32 %v1941, %v1949
        %v1952 = vsel %vm1617, 0.0, %v1950
        %v1953 = vsel %vm1618, 0.0, %v1951
        %v1954 = vpack.c.bf16 %v1953, %v1952
        %1956 = vrot.lane.b32.xlu0 %v1904, 96
        %v1957 = vpop.permute.xlu0 %1956
        %v1959 = vsel %vm1929, %v1954, 0
        %vm1961 = vcmask 1045504
        %v1963 = vsel %vm1961, %v1957, 0
        %1965 = vmatpush.bf16.msra.mxu0 0
        %1966 = vmatpush.bf16.msra.mxu0 0
        %1967 = vmatpush.bf16.msra.mxu0 0
        %1968 = vmatpush.bf16.msra.mxu0 0
        %1969 = vmatpush.bf16.msra.mxu0 0
        %1970 = vmatpush.bf16.msra.mxu0 0
        %1971 = vmatpush.bf16.msra.mxu0 0
        %1972 = vmatpush.bf16.msra.mxu0 %v1963
        %1973 = vmatmul.bf16.gmra.mxu0 %v1959
        %v1974 = vpop.f32.mrf.mxu0
        %v1975 = vadd.f32 0.0, %v1974
        %v1976 = vpop.f32.mrf.mxu0
        %v1977 = vadd.f32 0.0, %v1976
        %1978 = vdwg.mxu0
        %1980 = vrot.lane.b32.xlu0 %v1903, 112
        %v1981 = vpop.permute.xlu0 %1980
        %1982 = vrot.lane.b32.xlu0 %v1904, 112
        %v1983 = vpop.permute.xlu0 %1982
        %v1985 = vsel %vm1568, %v1981, 0
        %v1988 = vsel %vm1568, %v1983, 0
        %1990 = vmatpush.bf16.xpose.msra.mxu0 0
        %1991 = vmatpush.bf16.xpose.msra.mxu0 0
        %1992 = vmatpush.bf16.xpose.msra.mxu0 0
        %1993 = vmatpush.bf16.xpose.msra.mxu0 0
        %1994 = vmatpush.bf16.xpose.msra.mxu0 0
        %1995 = vmatpush.bf16.xpose.msra.mxu0 0
        %1996 = vmatpush.bf16.xpose.msra.mxu0 0
        %1997 = vmatpush.bf16.xpose.msra.mxu0 %v1988
        %1998 = vmatmul.bf16.gmra.mxu0 %v1985
        %v1999 = vpop.f32.mrf.mxu0
        %v2000 = vadd.f32 0.0, %v1999
        %v2001 = vpop.f32.mrf.mxu0
        %v2002 = vadd.f32 0.0, %v2001
        %2003 = vdwg.mxu0
        %v2004 = vmul.f32 %v2000, 0.25
        %v2005 = vmul.f32 %v2002, 0.25
        %v2006 = vsel %vm1460, -1e+30, %v2004
        %v2007 = vsel %vm1460, -1e+30, %v2005
        %v2008 = vsel %vm1929, %v2006, -inf
        %2009 = vmax.xlane.f32.xlu0 %v2008
        %v2010 = vpop.xlane.xlu0 %2009
        %v2011 = vsel %vm1929, %v2007, -inf
        %2012 = vmax.xlane.f32.xlu0 %v2011
        %v2013 = vpop.xlane.xlu0 %2012
        %v2014 = vsub.f32 %v2006, %v2010
        %v2015 = vsub.f32 %v2007, %v2013
        %v2016 = vmul.f32 %v2014, 1.442695
        %v2017 = vpow.pop %v2016
        %v2018 = vmul.f32 %v2015, 1.442695
        %v2019 = vpow.pop %v2018
        %v2020 = vsel %vm1929, %v2017, 0.0
        %2021 = vadd.xlane.f32.xlu0 %v2020
        %v2022 = vpop.xlane.xlu0 %2021
        %v2023 = vsel %vm1929, %v2019, 0.0
        %2024 = vadd.xlane.f32.xlu0 %v2023
        %v2025 = vpop.xlane.xlu0 %2024
        %v2026 = vrcp.pop %v2022
        %v2027 = vrcp.pop %v2025
        %v2028 = vmul.f32 %v2017, %v2026
        %v2029 = vmul.f32 %v2019, %v2027
        %v2030 = vsel %vm1617, 0.0, %v2028
        %v2031 = vsel %vm1618, 0.0, %v2029
        %v2032 = vpack.c.bf16 %v2031, %v2030
        %2033 = vrot.lane.b32.xlu0 %v1904, 80
        %v2034 = vpop.permute.xlu0 %2033
        %v2036 = vsel %vm1929, %v2032, 0
        %v2039 = vsel %vm1961, %v2034, 0
        %2041 = vmatpush.bf16.msra.mxu0 0
        %2042 = vmatpush.bf16.msra.mxu0 0
        %2043 = vmatpush.bf16.msra.mxu0 0
        %2044 = vmatpush.bf16.msra.mxu0 0
        %2045 = vmatpush.bf16.msra.mxu0 0
        %2046 = vmatpush.bf16.msra.mxu0 0
        %2047 = vmatpush.bf16.msra.mxu0 0
        %2048 = vmatpush.bf16.msra.mxu0 %v2039
        %2049 = vmatmul.bf16.gmra.mxu0 %v2036
        %v2050 = vpop.f32.mrf.mxu0
        %v2051 = vadd.f32 0.0, %v2050
        %v2052 = vpop.f32.mrf.mxu0
        %v2053 = vadd.f32 0.0, %v2052
        %2054 = vdwg.mxu0
        %2057 = vrot.lane.b32.xlu0 %v2051, 16
        %v2058 = vpop.permute.xlu0 %2057
        %2059 = vrot.lane.b32.xlu0 %v2053, 16
        %v2060 = vpop.permute.xlu0 %2059
        %v2063 = vsel %vm1568, %v1975, %v2058
        %v2064 = vsel %vm1568, %v1977, %v2060
        %v2065 = vpack.c.bf16 %v2064, %v2063
        %v2066 = vld [vmem:[%s43] sm:$0xf]
        %v2067 = vld [vmem:[%s43 + $0x4] sm:$0xf]
        %v2068 = vld [vmem:[%s43 + $0x8] sm:$0xf]
        %v2069 = vld [vmem:[%s43 + $0xc] sm:$0xf]
        %v2074 = vunpack.c.l.b16 %v2066
        %v2075 = vunpack.c.l.b16 %v2067
        %v2076 = vunpack.c.l.b16 %v2068
        %v2077 = vunpack.c.l.b16 %v2069
        %v2078 = vpack.c.b16 %v2075, %v2074
        %v2079 = vpack.c.b16 %v2077, %v2076
        %v2083 = vsel %vm1424, %v2065, 0
        %2085 = vmatpush.bf16.msra.mxu0 0
        %2086 = vmatpush.bf16.msra.mxu0 0
        %2087 = vmatpush.bf16.msra.mxu0 0
        %2088 = vmatpush.bf16.msra.mxu0 0
        %2089 = vmatpush.bf16.msra.mxu0 0
        %2090 = vmatpush.bf16.msra.mxu0 0
        %2091 = vmatpush.bf16.msra.mxu0 %v2079
        %2092 = vmatpush.bf16.msra.mxu0 %v2078
        %2093 = vmatmul.bf16.gmra.mxu0 %v2083
        %v2094 = vpop.f32.mrf.mxu0
        %v2095 = vadd.f32 0.0, %v2094
        %v2096 = vpop.f32.mrf.mxu0
        %v2097 = vadd.f32 0.0, %v2096
        %2098 = vdwg.mxu0
        %v2099 = vadd.f32 %v1765, %v2095
        %v2100 = vadd.f32 %v1766, %v2097
        %v2101 = vld [vmem:[%s45] sm:$0x1]
        %v2103 = vperm.slane %v2101, 0
        %v2105 = vadd.f32 %v2099, %v2103
        %v2106 = vadd.f32 %v2100, %v2103
        %v2107 = vld [vmem:[#allocation9] sm:$0x1]
        %v2108 = vld [vmem:[#allocation10] sm:$0x1]
        %v2109 = vsel %vm1424, %v2105, 0.0
        %2110 = vadd.xlane.f32.xlu0 %v2109
        %v2111 = vpop.xlane.xlu0 %2110
        %v2112 = vsel %vm1424, %v2106, 0.0
        %2113 = vadd.xlane.f32.xlu0 %v2112
        %v2114 = vpop.xlane.xlu0 %2113
        %v2115 = vmul.f32 %v2111, %v1477
        %v2116 = vmul.f32 %v2114, %v1477
        %v2117 = vsub.f32 %v2105, %v2115
        %v2118 = vsub.f32 %v2106, %v2116
        %v2119 = vmul.f32 %v2117, %v2117
        %v2120 = vmul.f32 %v2118, %v2118
        %v2121 = vsel %vm1424, %v2119, 0.0
        %2122 = vadd.xlane.f32.xlu0 %v2121
        %v2123 = vpop.xlane.xlu0 %2122
        %v2124 = vsel %vm1424, %v2120, 0.0
        %2125 = vadd.xlane.f32.xlu0 %v2124
        %v2126 = vpop.xlane.xlu0 %2125
        %v2127 = vmul.f32 %v2123, %v1477
        %v2128 = vmul.f32 %v2126, %v1477
        %v2129 = vadd.f32 %v2127, 1e-05
        %v2130 = vadd.f32 %v2128, 1e-05
        %v2131 = vrsqrt.pop %v2129
        %v2132 = vmul.f32 %v2131, %v2129
        %v2133 = vmul.f32 %v2132, %v2131
        %v2134 = vmul.f32 0.5, %v2133
        %v2135 = vsub.f32 1.5, %v2134
        %v2136 = vmul.f32 %v2131, %v2135
        %vm2137 = vweird.f32 %v2129
        %vm2138 = vweird.f32 %v2131
        %vm2139 = vmor %vm2137, %vm2138
        %v2140 = vsel %vm2139, %v2131, %v2136
        %v2141 = vrsqrt.pop %v2130
        %v2142 = vmul.f32 %v2141, %v2130
        %v2143 = vmul.f32 %v2142, %v2141
        %v2144 = vmul.f32 0.5, %v2143
        %v2145 = vsub.f32 1.5, %v2144
        %v2146 = vmul.f32 %v2141, %v2145
        %vm2147 = vweird.f32 %v2130
        %vm2148 = vweird.f32 %v2141
        %vm2149 = vmor %vm2147, %vm2148
        %v2150 = vsel %vm2149, %v2141, %v2146
        %v2151 = vmul.f32 %v2117, %v2140
        %v2152 = vmul.f32 %v2118, %v2150
        %v2154 = vperm.slane %v2107, 0
        %v2156 = vmul.f32 %v2151, %v2154
        %v2157 = vmul.f32 %v2152, %v2154
        %v2159 = vperm.slane %v2108, 0
        %v2161 = vadd.f32 %v2156, %v2159
        %v2162 = vadd.f32 %v2157, %v2159
        %v2163 = vpack.c.bf16 %v2162, %v2161
        %v2164 = vld [vmem:[%s51] sm:$0xf]
        %v2165 = vld [vmem:[%s51 + $0x4] sm:$0xf]
        %v2166 = vld [vmem:[%s51 + $0x8] sm:$0xf]
        %v2167 = vld [vmem:[%s51 + $0xc] sm:$0xf]
        %v2168 = vld [vmem:[#allocation12] sm:$0x1]
        %v2170 = vperm.slane %v2168, 0
        %v2176 = vunpack.c.l.b16 %v2164
        %v2177 = vunpack.c.l.b16 %v2165
        %v2178 = vunpack.c.l.b16 %v2166
        %v2179 = vunpack.c.l.b16 %v2167
        %v2180 = vpack.c.b16 %v2177, %v2176
        %v2181 = vpack.c.b16 %v2179, %v2178
        %v2185 = vsel %vm1424, %v2163, 0
        %2187 = vmatpush.bf16.msra.mxu0 0
        %2188 = vmatpush.bf16.msra.mxu0 0
        %2189 = vmatpush.bf16.msra.mxu0 0
        %2190 = vmatpush.bf16.msra.mxu0 0
        %2191 = vmatpush.bf16.msra.mxu0 0
        %2192 = vmatpush.bf16.msra.mxu0 0
        %2193 = vmatpush.bf16.msra.mxu0 %v2181
        %2194 = vmatpush.bf16.msra.mxu0 %v2180
        %2195 = vmatmul.bf16.gmra.mxu0 %v2185
        %v2196 = vpop.f32.mrf.mxu0
        %v2197 = vadd.f32 %v2170, %v2196
        %v2198 = vpop.f32.mrf.mxu0
        %v2199 = vadd.f32 %v2170, %v2198
        %2200 = vdwg.mxu0
        %v2201 = vmax.f32 %v2197, 0.0
        %v2202 = vmax.f32 %v2199, 0.0
        %v2203 = vpack.c.bf16 %v2202, %v2201
        %v2204 = vld [vmem:[%s55] sm:$0xf]
        %v2205 = vld [vmem:[%s55 + $0x4] sm:$0xf]
        %v2206 = vld [vmem:[%s55 + $0x8] sm:$0xf]
        %v2207 = vld [vmem:[%s55 + $0xc] sm:$0xf]
        %v2208 = vld [vmem:[%s55 + $0x10] sm:$0xf]
        %v2209 = vld [vmem:[%s55 + $0x14] sm:$0xf]
        %v2210 = vld [vmem:[%s55 + $0x18] sm:$0xf]
        %v2211 = vld [vmem:[%s55 + $0x1c] sm:$0xf]
        %v2220 = vunpack.c.l.b16 %v2204
        %v2221 = vunpack.c.l.b16 %v2205
        %v2222 = vunpack.c.l.b16 %v2206
        %v2223 = vunpack.c.l.b16 %v2207
        %v2224 = vunpack.c.l.b16 %v2208
        %v2225 = vunpack.c.l.b16 %v2209
        %v2226 = vunpack.c.l.b16 %v2210
        %v2227 = vunpack.c.l.b16 %v2211
        %v2228 = vpack.c.b16 %v2221, %v2220
        %v2229 = vpack.c.b16 %v2223, %v2222
        %v2230 = vpack.c.b16 %v2225, %v2224
        %v2231 = vpack.c.b16 %v2227, %v2226
        %vm2236 = vcmask 523264
        %v2238 = vsel %vm2236, %v2203, 0
        %2240 = vmatpush.bf16.msra.mxu0 0
        %2241 = vmatpush.bf16.msra.mxu0 0
        %2242 = vmatpush.bf16.msra.mxu0 0
        %2243 = vmatpush.bf16.msra.mxu0 0
        %2244 = vmatpush.bf16.msra.mxu0 %v2231
        %2245 = vmatpush.bf16.msra.mxu0 %v2230
        %2246 = vmatpush.bf16.msra.mxu0 %v2229
        %2247 = vmatpush.bf16.msra.mxu0 %v2228
        %2248 = vmatmul.bf16.gmra.mxu0 %v2238
        %v2249 = vpop.f32.mrf.mxu0
        %v2250 = vadd.f32 0.0, %v2249
        %v2251 = vpop.f32.mrf.mxu0
        %v2252 = vadd.f32 0.0, %v2251
        %2253 = vdwg.mxu0
        %v2254 = vadd.f32 %v2105, %v2250
        %v2255 = vadd.f32 %v2106, %v2252
        %v2256 = vld [vmem:[#allocation13] sm:$0x1]
        %v2258 = vperm.slane %v2256, 0
        %v2260 = vadd.f32 %v2254, %v2258
        %v2261 = vadd.f32 %v2255, %v2258
        %s2262 = scalar_lea.vmem %s19, 1
        %v2263 = vld [vmem:[%s2262] sm:$0x1]
        %s2264 = scalar_lea.vmem %s21, 1
        %v2265 = vld [vmem:[%s2264] sm:$0x1]
        %v2266 = vsel %vm1424, %v2260, 0.0
        %2267 = vadd.xlane.f32.xlu0 %v2266
        %v2268 = vpop.xlane.xlu0 %2267
        %v2269 = vsel %vm1424, %v2261, 0.0
        %2270 = vadd.xlane.f32.xlu0 %v2269
        %v2271 = vpop.xlane.xlu0 %2270
        %v2272 = vmul.f32 %v2268, %v1477
        %v2273 = vmul.f32 %v2271, %v1477
        %v2274 = vsub.f32 %v2260, %v2272
        %v2275 = vsub.f32 %v2261, %v2273
        %v2276 = vmul.f32 %v2274, %v2274
        %v2277 = vmul.f32 %v2275, %v2275
        %v2278 = vsel %vm1424, %v2276, 0.0
        %2279 = vadd.xlane.f32.xlu0 %v2278
        %v2280 = vpop.xlane.xlu0 %2279
        %v2281 = vsel %vm1424, %v2277, 0.0
        %2282 = vadd.xlane.f32.xlu0 %v2281
        %v2283 = vpop.xlane.xlu0 %2282
        %v2284 = vmul.f32 %v2280, %v1477
        %v2285 = vmul.f32 %v2283, %v1477
        %v2286 = vadd.f32 %v2284, 1e-05
        %v2287 = vadd.f32 %v2285, 1e-05
        %v2288 = vrsqrt.pop %v2286
        %v2289 = vmul.f32 %v2288, %v2286
        %v2290 = vmul.f32 %v2289, %v2288
        %v2291 = vmul.f32 0.5, %v2290
        %v2292 = vsub.f32 1.5, %v2291
        %v2293 = vmul.f32 %v2288, %v2292
        %vm2294 = vweird.f32 %v2286
        %vm2295 = vweird.f32 %v2288
        %vm2296 = vmor %vm2294, %vm2295
        %v2297 = vsel %vm2296, %v2288, %v2293
        %v2298 = vrsqrt.pop %v2287
        %v2299 = vmul.f32 %v2298, %v2287
        %v2300 = vmul.f32 %v2299, %v2298
        %v2301 = vmul.f32 0.5, %v2300
        %v2302 = vsub.f32 1.5, %v2301
        %v2303 = vmul.f32 %v2298, %v2302
        %vm2304 = vweird.f32 %v2287
        %vm2305 = vweird.f32 %v2298
        %vm2306 = vmor %vm2304, %vm2305
        %v2307 = vsel %vm2306, %v2298, %v2303
        %v2308 = vmul.f32 %v2274, %v2297
        %v2309 = vmul.f32 %v2275, %v2307
        %v2311 = vperm.slane %v2263, 0
        %v2313 = vmul.f32 %v2308, %v2311
        %v2314 = vmul.f32 %v2309, %v2311
        %v2316 = vperm.slane %v2265, 0
        %v2318 = vadd.f32 %v2313, %v2316
        %v2319 = vadd.f32 %v2314, %v2316
        %v2320 = vpack.c.bf16 %v2319, %v2318
        %s2321 = scalar_lea.vmem %s23, 16
        %v2322 = vld [vmem:[%s2321] sm:$0xf]
        %v2323 = vld [vmem:[%s2321 + $0x4] sm:$0xf]
        %v2324 = vld [vmem:[%s2321 + $0x8] sm:$0xf]
        %v2325 = vld [vmem:[%s2321 + $0xc] sm:$0xf]
        %s2326 = scalar_lea.vmem %s25, 1
        %v2327 = vld [vmem:[%s2326] sm:$0x1]
        %v2329 = vperm.slane %v2327, 0
        %v2335 = vunpack.c.l.b16 %v2322
        %v2336 = vunpack.c.l.b16 %v2323
        %v2337 = vunpack.c.l.b16 %v2324
        %v2338 = vunpack.c.l.b16 %v2325
        %v2339 = vpack.c.b16 %v2336, %v2335
        %v2340 = vpack.c.b16 %v2338, %v2337
        %v2344 = vsel %vm1424, %v2320, 0
        %2346 = vmatpush.bf16.msra.mxu0 0
        %2347 = vmatpush.bf16.msra.mxu0 0
        %2348 = vmatpush.bf16.msra.mxu0 0
        %2349 = vmatpush.bf16.msra.mxu0 0
        %2350 = vmatpush.bf16.msra.mxu0 0
        %2351 = vmatpush.bf16.msra.mxu0 0
        %2352 = vmatpush.bf16.msra.mxu0 %v2340
        %2353 = vmatpush.bf16.msra.mxu0 %v2339
        %2354 = vmatmul.bf16.gmra.mxu0 %v2344
        %v2355 = vpop.f32.mrf.mxu0
        %v2356 = vadd.f32 %v2329, %v2355
        %v2357 = vpop.f32.mrf.mxu0
        %v2358 = vadd.f32 %v2329, %v2357
        %2359 = vdwg.mxu0
        %v2360 = vpack.c.bf16 %v2358, %v2356
        %2362 = vrot.lane.b32.xlu0 %v2360, 96
        %v2363 = vpop.permute.xlu0 %2362
        %v2365 = vsel %vm1568, %v2360, 0
        %v2368 = vsel %vm1568, %v2363, 0
        %2370 = vmatpush.bf16.xpose.msra.mxu0 0
        %2371 = vmatpush.bf16.xpose.msra.mxu0 0
        %2372 = vmatpush.bf16.xpose.msra.mxu0 0
        %2373 = vmatpush.bf16.xpose.msra.mxu0 0
        %2374 = vmatpush.bf16.xpose.msra.mxu0 0
        %2375 = vmatpush.bf16.xpose.msra.mxu0 0
        %2376 = vmatpush.bf16.xpose.msra.mxu0 0
        %2377 = vmatpush.bf16.xpose.msra.mxu0 %v2368
        %2378 = vmatmul.bf16.gmra.mxu0 %v2365
        %v2379 = vpop.f32.mrf.mxu0
        %v2380 = vadd.f32 0.0, %v2379
        %v2381 = vpop.f32.mrf.mxu0
        %v2382 = vadd.f32 0.0, %v2381
        %2383 = vdwg.mxu0
        %v2384 = vmul.f32 %v2380, 0.25
        %v2385 = vmul.f32 %v2382, 0.25
        %v2386 = vsel %vm1457, -1e+30, %v2384
        %v2387 = vsel %vm1458, -1e+30, %v2385
        %v2388 = vsel %vm1568, %v2386, -inf
        %2389 = vmax.xlane.f32.xlu0 %v2388
        %v2390 = vpop.xlane.xlu0 %2389
        %v2391 = vsel %vm1568, %v2387, -inf
        %2392 = vmax.xlane.f32.xlu0 %v2391
        %v2393 = vpop.xlane.xlu0 %2392
        %v2394 = vsub.f32 %v2386, %v2390
        %v2395 = vsub.f32 %v2387, %v2393
        %v2396 = vmul.f32 %v2394, 1.442695
        %v2397 = vpow.pop %v2396
        %v2398 = vmul.f32 %v2395, 1.442695
        %v2399 = vpow.pop %v2398
        %v2400 = vsel %vm1568, %v2397, 0.0
        %2401 = vadd.xlane.f32.xlu0 %v2400
        %v2402 = vpop.xlane.xlu0 %2401
        %v2403 = vsel %vm1568, %v2399, 0.0
        %2404 = vadd.xlane.f32.xlu0 %v2403
        %v2405 = vpop.xlane.xlu0 %2404
        %v2406 = vrcp.pop %v2402
        %v2407 = vrcp.pop %v2405
        %v2408 = vmul.f32 %v2397, %v2406
        %v2409 = vmul.f32 %v2399, %v2407
        %v2410 = vsel %vm1617, 0.0, %v2408
        %v2411 = vsel %vm1618, 0.0, %v2409
        %v2412 = vpack.c.bf16 %v2411, %v2410
        %2413 = vrot.lane.b32.xlu0 %v2360, 64
        %v2414 = vpop.permute.xlu0 %2413
        %v2417 = vsel %vm1568, %v2412, 0
        %2419 = vmatpush.bf16.msra.mxu0 0
        %2420 = vmatpush.bf16.msra.mxu0 0
        %2421 = vmatpush.bf16.msra.mxu0 0
        %2422 = vmatpush.bf16.msra.mxu0 0
        %2423 = vmatpush.bf16.msra.mxu0 0
        %2424 = vmatpush.bf16.msra.mxu0 0
        %2425 = vmatpush.bf16.msra.mxu0 0
        %2426 = vmatpush.bf16.msra.mxu0 %v2414
        %2427 = vmatmul.bf16.gmra.mxu0 %v2417
        %v2428 = vpop.f32.mrf.mxu0
        %v2429 = vadd.f32 0.0, %v2428
        %v2430 = vpop.f32.mrf.mxu0
        %v2431 = vadd.f32 0.0, %v2430
        %2432 = vdwg.mxu0
        %2433 = vrot.lane.b32.xlu0 %v2360, 112
        %v2434 = vpop.permute.xlu0 %2433
        %2435 = vrot.lane.b32.xlu0 %v2360, 80
        %v2436 = vpop.permute.xlu0 %2435
        %v2438 = vsel %vm1568, %v2434, 0
        %v2441 = vsel %vm1568, %v2436, 0
        %2443 = vmatpush.bf16.xpose.msra.mxu0 0
        %2444 = vmatpush.bf16.xpose.msra.mxu0 0
        %2445 = vmatpush.bf16.xpose.msra.mxu0 0
        %2446 = vmatpush.bf16.xpose.msra.mxu0 0
        %2447 = vmatpush.bf16.xpose.msra.mxu0 0
        %2448 = vmatpush.bf16.xpose.msra.mxu0 0
        %2449 = vmatpush.bf16.xpose.msra.mxu0 0
        %2450 = vmatpush.bf16.xpose.msra.mxu0 %v2441
        %2451 = vmatmul.bf16.gmra.mxu0 %v2438
        %v2452 = vpop.f32.mrf.mxu0
        %v2453 = vadd.f32 0.0, %v2452
        %v2454 = vpop.f32.mrf.mxu0
        %v2455 = vadd.f32 0.0, %v2454
        %2456 = vdwg.mxu0
        %v2457 = vmul.f32 %v2453, 0.25
        %v2458 = vmul.f32 %v2455, 0.25
        %v2459 = vsel %vm1457, -1e+30, %v2457
        %v2460 = vsel %vm1458, -1e+30, %v2458
        %v2461 = vsel %vm1568, %v2459, -inf
        %2462 = vmax.xlane.f32.xlu0 %v2461
        %v2463 = vpop.xlane.xlu0 %2462
        %v2464 = vsel %vm1568, %v2460, -inf
        %2465 = vmax.xlane.f32.xlu0 %v2464
        %v2466 = vpop.xlane.xlu0 %2465
        %v2467 = vsub.f32 %v2459, %v2463
        %v2468 = vsub.f32 %v2460, %v2466
        %v2469 = vmul.f32 %v2467, 1.442695
        %v2470 = vpow.pop %v2469
        %v2471 = vmul.f32 %v2468, 1.442695
        %v2472 = vpow.pop %v2471
        %v2473 = vsel %vm1568, %v2470, 0.0
        %2474 = vadd.xlane.f32.xlu0 %v2473
        %v2475 = vpop.xlane.xlu0 %2474
        %v2476 = vsel %vm1568, %v2472, 0.0
        %2477 = vadd.xlane.f32.xlu0 %v2476
        %v2478 = vpop.xlane.xlu0 %2477
        %v2479 = vrcp.pop %v2475
        %v2480 = vrcp.pop %v2478
        %v2481 = vmul.f32 %v2470, %v2479
        %v2482 = vmul.f32 %v2472, %v2480
        %v2483 = vsel %vm1617, 0.0, %v2481
        %v2484 = vsel %vm1618, 0.0, %v2482
        %v2485 = vpack.c.bf16 %v2484, %v2483
        %2486 = vrot.lane.b32.xlu0 %v2360, 48
        %v2487 = vpop.permute.xlu0 %2486
        %v2490 = vsel %vm1568, %v2485, 0
        %2492 = vmatpush.bf16.msra.mxu0 0
        %2493 = vmatpush.bf16.msra.mxu0 0
        %2494 = vmatpush.bf16.msra.mxu0 0
        %2495 = vmatpush.bf16.msra.mxu0 0
        %2496 = vmatpush.bf16.msra.mxu0 0
        %2497 = vmatpush.bf16.msra.mxu0 0
        %2498 = vmatpush.bf16.msra.mxu0 0
        %2499 = vmatpush.bf16.msra.mxu0 %v2487
        %2500 = vmatmul.bf16.gmra.mxu0 %v2490
        %v2501 = vpop.f32.mrf.mxu0
        %v2502 = vadd.f32 0.0, %v2501
        %v2503 = vpop.f32.mrf.mxu0
        %v2504 = vadd.f32 0.0, %v2503
        %2505 = vdwg.mxu0
        %2508 = vrot.lane.b32.xlu0 %v2502, 16
        %v2509 = vpop.permute.xlu0 %2508
        %2510 = vrot.lane.b32.xlu0 %v2504, 16
        %v2511 = vpop.permute.xlu0 %2510
        %v2514 = vsel %vm1568, %v2429, %v2509
        %v2515 = vsel %vm1568, %v2431, %v2511
        %v2516 = vpack.c.bf16 %v2515, %v2514
        %s2517 = scalar_lea.vmem %s27, 16
        %v2518 = vld [vmem:[%s2517] sm:$0xf]
        %v2519 = vld [vmem:[%s2517 + $0x4] sm:$0xf]
        %v2520 = vld [vmem:[%s2517 + $0x8] sm:$0xf]
        %v2521 = vld [vmem:[%s2517 + $0xc] sm:$0xf]
        %v2526 = vunpack.c.l.b16 %v2518
        %v2527 = vunpack.c.l.b16 %v2519
        %v2528 = vunpack.c.l.b16 %v2520
        %v2529 = vunpack.c.l.b16 %v2521
        %v2530 = vpack.c.b16 %v2527, %v2526
        %v2531 = vpack.c.b16 %v2529, %v2528
        %v2535 = vsel %vm1424, %v2516, 0
        %2537 = vmatpush.bf16.msra.mxu0 0
        %2538 = vmatpush.bf16.msra.mxu0 0
        %2539 = vmatpush.bf16.msra.mxu0 0
        %2540 = vmatpush.bf16.msra.mxu0 0
        %2541 = vmatpush.bf16.msra.mxu0 0
        %2542 = vmatpush.bf16.msra.mxu0 0
        %2543 = vmatpush.bf16.msra.mxu0 %v2531
        %2544 = vmatpush.bf16.msra.mxu0 %v2530
        %2545 = vmatmul.bf16.gmra.mxu0 %v2535
        %v2546 = vpop.f32.mrf.mxu0
        %v2547 = vadd.f32 0.0, %v2546
        %v2548 = vpop.f32.mrf.mxu0
        %v2549 = vadd.f32 0.0, %v2548
        %2550 = vdwg.mxu0
        %v2551 = vadd.f32 %v2260, %v2547
        %v2552 = vadd.f32 %v2261, %v2549
        %s2553 = scalar_lea.vmem %s29, 1
        %v2554 = vld [vmem:[%s2553] sm:$0x1]
        %v2556 = vperm.slane %v2554, 0
        %v2558 = vadd.f32 %v2551, %v2556
        %v2559 = vadd.f32 %v2552, %v2556
        %s2560 = scalar_lea.vmem %s31, 1
        %v2561 = vld [vmem:[%s2560] sm:$0x1]
        %s2562 = scalar_lea.vmem %s33, 1
        %v2563 = vld [vmem:[%s2562] sm:$0x1]
        %v2564 = vsel %vm1424, %v2558, 0.0
        %2565 = vadd.xlane.f32.xlu0 %v2564
        %v2566 = vpop.xlane.xlu0 %2565
        %v2567 = vsel %vm1424, %v2559, 0.0
        %2568 = vadd.xlane.f32.xlu0 %v2567
        %v2569 = vpop.xlane.xlu0 %2568
        %v2570 = vmul.f32 %v2566, %v1477
        %v2571 = vmul.f32 %v2569, %v1477
        %v2572 = vsub.f32 %v2558, %v2570
        %v2573 = vsub.f32 %v2559, %v2571
        %v2574 = vmul.f32 %v2572, %v2572
        %v2575 = vmul.f32 %v2573, %v2573
        %v2576 = vsel %vm1424, %v2574, 0.0
        %2577 = vadd.xlane.f32.xlu0 %v2576
        %v2578 = vpop.xlane.xlu0 %2577
        %v2579 = vsel %vm1424, %v2575, 0.0
        %2580 = vadd.xlane.f32.xlu0 %v2579
        %v2581 = vpop.xlane.xlu0 %2580
        %v2582 = vmul.f32 %v2578, %v1477
        %v2583 = vmul.f32 %v2581, %v1477
        %v2584 = vadd.f32 %v2582, 1e-05
        %v2585 = vadd.f32 %v2583, 1e-05
        %v2586 = vrsqrt.pop %v2584
        %v2587 = vmul.f32 %v2586, %v2584
        %v2588 = vmul.f32 %v2587, %v2586
        %v2589 = vmul.f32 0.5, %v2588
        %v2590 = vsub.f32 1.5, %v2589
        %v2591 = vmul.f32 %v2586, %v2590
        %vm2592 = vweird.f32 %v2584
        %vm2593 = vweird.f32 %v2586
        %vm2594 = vmor %vm2592, %vm2593
        %v2595 = vsel %vm2594, %v2586, %v2591
        %v2596 = vrsqrt.pop %v2585
        %v2597 = vmul.f32 %v2596, %v2585
        %v2598 = vmul.f32 %v2597, %v2596
        %v2599 = vmul.f32 0.5, %v2598
        %v2600 = vsub.f32 1.5, %v2599
        %v2601 = vmul.f32 %v2596, %v2600
        %vm2602 = vweird.f32 %v2585
        %vm2603 = vweird.f32 %v2596
        %vm2604 = vmor %vm2602, %vm2603
        %v2605 = vsel %vm2604, %v2596, %v2601
        %v2606 = vmul.f32 %v2572, %v2595
        %v2607 = vmul.f32 %v2573, %v2605
        %v2609 = vperm.slane %v2561, 0
        %v2611 = vmul.f32 %v2606, %v2609
        %v2612 = vmul.f32 %v2607, %v2609
        %v2614 = vperm.slane %v2563, 0
        %v2616 = vadd.f32 %v2611, %v2614
        %v2617 = vadd.f32 %v2612, %v2614
        %v2618 = vpack.c.bf16 %v2617, %v2616
        %s2619 = scalar_lea.vmem %s35, 16
        %v2620 = vld [vmem:[%s2619] sm:$0xf]
        %v2621 = vld [vmem:[%s2619 + $0x4] sm:$0xf]
        %v2622 = vld [vmem:[%s2619 + $0x8] sm:$0xf]
        %v2623 = vld [vmem:[%s2619 + $0xc] sm:$0xf]
        %s2624 = scalar_lea.vmem %s37, 1
        %v2625 = vld [vmem:[%s2624] sm:$0x1]
        %v2627 = vperm.slane %v2625, 0
        %v2633 = vunpack.c.l.b16 %v2620
        %v2634 = vunpack.c.l.b16 %v2621
        %v2635 = vunpack.c.l.b16 %v2622
        %v2636 = vunpack.c.l.b16 %v2623
        %v2637 = vpack.c.b16 %v2634, %v2633
        %v2638 = vpack.c.b16 %v2636, %v2635
        %v2642 = vsel %vm1424, %v2618, 0
        %2644 = vmatpush.bf16.msra.mxu0 0
        %2645 = vmatpush.bf16.msra.mxu0 0
        %2646 = vmatpush.bf16.msra.mxu0 0
        %2647 = vmatpush.bf16.msra.mxu0 0
        %2648 = vmatpush.bf16.msra.mxu0 0
        %2649 = vmatpush.bf16.msra.mxu0 0
        %2650 = vmatpush.bf16.msra.mxu0 %v2638
        %2651 = vmatpush.bf16.msra.mxu0 %v2637
        %2652 = vmatmul.bf16.gmra.mxu0 %v2642
        %v2653 = vpop.f32.mrf.mxu0
        %v2654 = vadd.f32 %v2627, %v2653
        %v2655 = vpop.f32.mrf.mxu0
        %v2656 = vadd.f32 %v2627, %v2655
        %2657 = vdwg.mxu0
        %s2658 = scalar_lea.vmem %s39, 16
        %v2659 = vld [vmem:[%s2658] sm:$0xf]
        %v2660 = vld [vmem:[%s2658 + $0x4] sm:$0xf]
        %v2661 = vld [vmem:[%s2658 + $0x8] sm:$0xf]
        %v2662 = vld [vmem:[%s2658 + $0xc] sm:$0xf]
        %s2663 = scalar_lea.vmem %s41, 1
        %v2664 = vld [vmem:[%s2663] sm:$0x1]
        %v2666 = vperm.slane %v2664, 0
        %v2672 = vunpack.c.l.b16 %v2659
        %v2673 = vunpack.c.l.b16 %v2660
        %v2674 = vunpack.c.l.b16 %v2661
        %v2675 = vunpack.c.l.b16 %v2662
        %v2676 = vpack.c.b16 %v2673, %v2672
        %v2677 = vpack.c.b16 %v2675, %v2674
        %2680 = vmatpush.bf16.msra.mxu0 0
        %2681 = vmatpush.bf16.msra.mxu0 0
        %2682 = vmatpush.bf16.msra.mxu0 0
        %2683 = vmatpush.bf16.msra.mxu0 0
        %2684 = vmatpush.bf16.msra.mxu0 0
        %2685 = vmatpush.bf16.msra.mxu0 0
        %2686 = vmatpush.bf16.msra.mxu0 %v2677
        %2687 = vmatpush.bf16.msra.mxu0 %v2676
        %2688 = vmatmul.bf16.gmra.mxu0 %v1887
        %v2689 = vpop.f32.mrf.mxu0
        %v2690 = vadd.f32 %v2666, %v2689
        %v2691 = vpop.f32.mrf.mxu0
        %v2692 = vadd.f32 %v2666, %v2691
        %2693 = vdwg.mxu0
        %v2694 = vpack.c.bf16 %v2656, %v2654
        %v2695 = vpack.c.bf16 %v2692, %v2690
        %v2697 = vsel %vm1568, %v2694, 0
        %v2700 = vsel %vm1568, %v2695, 0
        %2702 = vmatpush.bf16.xpose.msra.mxu0 0
        %2703 = vmatpush.bf16.xpose.msra.mxu0 0
        %2704 = vmatpush.bf16.xpose.msra.mxu0 0
        %2705 = vmatpush.bf16.xpose.msra.mxu0 0
        %2706 = vmatpush.bf16.xpose.msra.mxu0 0
        %2707 = vmatpush.bf16.xpose.msra.mxu0 0
        %2708 = vmatpush.bf16.xpose.msra.mxu0 0
        %2709 = vmatpush.bf16.xpose.msra.mxu0 %v2700
        %2710 = vmatmul.bf16.gmra.mxu0 %v2697
        %v2711 = vpop.f32.mrf.mxu0
        %v2712 = vadd.f32 0.0, %v2711
        %v2713 = vpop.f32.mrf.mxu0
        %v2714 = vadd.f32 0.0, %v2713
        %2715 = vdwg.mxu0
        %v2716 = vmul.f32 %v2712, 0.25
        %v2717 = vmul.f32 %v2714, 0.25
        %v2718 = vsel %vm1460, -1e+30, %v2716
        %v2719 = vsel %vm1460, -1e+30, %v2717
        %v2720 = vsel %vm1929, %v2718, -inf
        %2721 = vmax.xlane.f32.xlu0 %v2720
        %v2722 = vpop.xlane.xlu0 %2721
        %v2723 = vsel %vm1929, %v2719, -inf
        %2724 = vmax.xlane.f32.xlu0 %v2723
        %v2725 = vpop.xlane.xlu0 %2724
        %v2726 = vsub.f32 %v2718, %v2722
        %v2727 = vsub.f32 %v2719, %v2725
        %v2728 = vmul.f32 %v2726, 1.442695
        %v2729 = vpow.pop %v2728
        %v2730 = vmul.f32 %v2727, 1.442695
        %v2731 = vpow.pop %v2730
        %v2732 = vsel %vm1929, %v2729, 0.0
        %2733 = vadd.xlane.f32.xlu0 %v2732
        %v2734 = vpop.xlane.xlu0 %2733
        %v2735 = vsel %vm1929, %v2731, 0.0
        %2736 = vadd.xlane.f32.xlu0 %v2735
        %v2737 = vpop.xlane.xlu0 %2736
        %v2738 = vrcp.pop %v2734
        %v2739 = vrcp.pop %v2737
        %v2740 = vmul.f32 %v2729, %v2738
        %v2741 = vmul.f32 %v2731, %v2739
        %v2742 = vsel %vm1617, 0.0, %v2740
        %v2743 = vsel %vm1618, 0.0, %v2741
        %v2744 = vpack.c.bf16 %v2743, %v2742
        %2746 = vrot.lane.b32.xlu0 %v2695, 96
        %v2747 = vpop.permute.xlu0 %2746
        %v2749 = vsel %vm1929, %v2744, 0
        %v2752 = vsel %vm1961, %v2747, 0
        %2754 = vmatpush.bf16.msra.mxu0 0
        %2755 = vmatpush.bf16.msra.mxu0 0
        %2756 = vmatpush.bf16.msra.mxu0 0
        %2757 = vmatpush.bf16.msra.mxu0 0
        %2758 = vmatpush.bf16.msra.mxu0 0
        %2759 = vmatpush.bf16.msra.mxu0 0
        %2760 = vmatpush.bf16.msra.mxu0 0
        %2761 = vmatpush.bf16.msra.mxu0 %v2752
        %2762 = vmatmul.bf16.gmra.mxu0 %v2749
        %v2763 = vpop.f32.mrf.mxu0
        %v2764 = vadd.f32 0.0, %v2763
        %v2765 = vpop.f32.mrf.mxu0
        %v2766 = vadd.f32 0.0, %v2765
        %2767 = vdwg.mxu0
        %2769 = vrot.lane.b32.xlu0 %v2694, 112
        %v2770 = vpop.permute.xlu0 %2769
        %2771 = vrot.lane.b32.xlu0 %v2695, 112
        %v2772 = vpop.permute.xlu0 %2771
        %v2774 = vsel %vm1568, %v2770, 0
        %v2777 = vsel %vm1568, %v2772, 0
        %2779 = vmatpush.bf16.xpose.msra.mxu0 0
        %2780 = vmatpush.bf16.xpose.msra.mxu0 0
        %2781 = vmatpush.bf16.xpose.msra.mxu0 0
        %2782 = vmatpush.bf16.xpose.msra.mxu0 0
        %2783 = vmatpush.bf16.xpose.msra.mxu0 0
        %2784 = vmatpush.bf16.xpose.msra.mxu0 0
        %2785 = vmatpush.bf16.xpose.msra.mxu0 0
        %2786 = vmatpush.bf16.xpose.msra.mxu0 %v2777
        %2787 = vmatmul.bf16.gmra.mxu0 %v2774
        %v2788 = vpop.f32.mrf.mxu0
        %v2789 = vadd.f32 0.0, %v2788
        %v2790 = vpop.f32.mrf.mxu0
        %v2791 = vadd.f32 0.0, %v2790
        %2792 = vdwg.mxu0
        %v2793 = vmul.f32 %v2789, 0.25
        %v2794 = vmul.f32 %v2791, 0.25
        %v2795 = vsel %vm1460, -1e+30, %v2793
        %v2796 = vsel %vm1460, -1e+30, %v2794
        %v2797 = vsel %vm1929, %v2795, -inf
        %2798 = vmax.xlane.f32.xlu0 %v2797
        %v2799 = vpop.xlane.xlu0 %2798
        %v2800 = vsel %vm1929, %v2796, -inf
        %2801 = vmax.xlane.f32.xlu0 %v2800
        %v2802 = vpop.xlane.xlu0 %2801
        %v2803 = vsub.f32 %v2795, %v2799
        %v2804 = vsub.f32 %v2796, %v2802
        %v2805 = vmul.f32 %v2803, 1.442695
        %v2806 = vpow.pop %v2805
        %v2807 = vmul.f32 %v2804, 1.442695
        %v2808 = vpow.pop %v2807
        %v2809 = vsel %vm1929, %v2806, 0.0
        %2810 = vadd.xlane.f32.xlu0 %v2809
        %v2811 = vpop.xlane.xlu0 %2810
        %v2812 = vsel %vm1929, %v2808, 0.0
        %2813 = vadd.xlane.f32.xlu0 %v2812
        %v2814 = vpop.xlane.xlu0 %2813
        %v2815 = vrcp.pop %v2811
        %v2816 = vrcp.pop %v2814
        %v2817 = vmul.f32 %v2806, %v2815
        %v2818 = vmul.f32 %v2808, %v2816
        %v2819 = vsel %vm1617, 0.0, %v2817
        %v2820 = vsel %vm1618, 0.0, %v2818
        %v2821 = vpack.c.bf16 %v2820, %v2819
        %2822 = vrot.lane.b32.xlu0 %v2695, 80
        %v2823 = vpop.permute.xlu0 %2822
        %v2825 = vsel %vm1929, %v2821, 0
        %v2828 = vsel %vm1961, %v2823, 0
        %2830 = vmatpush.bf16.msra.mxu0 0
        %2831 = vmatpush.bf16.msra.mxu0 0
        %2832 = vmatpush.bf16.msra.mxu0 0
        %2833 = vmatpush.bf16.msra.mxu0 0
        %2834 = vmatpush.bf16.msra.mxu0 0
        %2835 = vmatpush.bf16.msra.mxu0 0
        %2836 = vmatpush.bf16.msra.mxu0 0
        %2837 = vmatpush.bf16.msra.mxu0 %v2828
        %2838 = vmatmul.bf16.gmra.mxu0 %v2825
        %v2839 = vpop.f32.mrf.mxu0
        %v2840 = vadd.f32 0.0, %v2839
        %v2841 = vpop.f32.mrf.mxu0
        %v2842 = vadd.f32 0.0, %v2841
        %2843 = vdwg.mxu0
        %2846 = vrot.lane.b32.xlu0 %v2840, 16
        %v2847 = vpop.permute.xlu0 %2846
        %2848 = vrot.lane.b32.xlu0 %v2842, 16
        %v2849 = vpop.permute.xlu0 %2848
        %v2852 = vsel %vm1568, %v2764, %v2847
        %v2853 = vsel %vm1568, %v2766, %v2849
        %v2854 = vpack.c.bf16 %v2853, %v2852
        %s2855 = scalar_lea.vmem %s43, 16
        %v2856 = vld [vmem:[%s2855] sm:$0xf]
        %v2857 = vld [vmem:[%s2855 + $0x4] sm:$0xf]
        %v2858 = vld [vmem:[%s2855 + $0x8] sm:$0xf]
        %v2859 = vld [vmem:[%s2855 + $0xc] sm:$0xf]
        %v2864 = vunpack.c.l.b16 %v2856
        %v2865 = vunpack.c.l.b16 %v2857
        %v2866 = vunpack.c.l.b16 %v2858
        %v2867 = vunpack.c.l.b16 %v2859
        %v2868 = vpack.c.b16 %v2865, %v2864
        %v2869 = vpack.c.b16 %v2867, %v2866
        %v2873 = vsel %vm1424, %v2854, 0
        %2875 = vmatpush.bf16.msra.mxu0 0
        %2876 = vmatpush.bf16.msra.mxu0 0
        %2877 = vmatpush.bf16.msra.mxu0 0
        %2878 = vmatpush.bf16.msra.mxu0 0
        %2879 = vmatpush.bf16.msra.mxu0 0
        %2880 = vmatpush.bf16.msra.mxu0 0
        %2881 = vmatpush.bf16.msra.mxu0 %v2869
        %2882 = vmatpush.bf16.msra.mxu0 %v2868
        %2883 = vmatmul.bf16.gmra.mxu0 %v2873
        %v2884 = vpop.f32.mrf.mxu0
        %v2885 = vadd.f32 0.0, %v2884
        %v2886 = vpop.f32.mrf.mxu0
        %v2887 = vadd.f32 0.0, %v2886
        %2888 = vdwg.mxu0
        %v2889 = vadd.f32 %v2558, %v2885
        %v2890 = vadd.f32 %v2559, %v2887
        %s2891 = scalar_lea.vmem %s45, 1
        %v2892 = vld [vmem:[%s2891] sm:$0x1]
        %v2894 = vperm.slane %v2892, 0
        %v2896 = vadd.f32 %v2889, %v2894
        %v2897 = vadd.f32 %v2890, %v2894
        %s2898 = scalar_lea.vmem [#allocation9], 1
        %v2899 = vld [vmem:[%s2898] sm:$0x1]
        %s2900 = scalar_lea.vmem [#allocation10], 1
        %v2901 = vld [vmem:[%s2900] sm:$0x1]
        %v2902 = vsel %vm1424, %v2896, 0.0
        %2903 = vadd.xlane.f32.xlu0 %v2902
        %v2904 = vpop.xlane.xlu0 %2903
        %v2905 = vsel %vm1424, %v2897, 0.0
        %2906 = vadd.xlane.f32.xlu0 %v2905
        %v2907 = vpop.xlane.xlu0 %2906
        %v2908 = vmul.f32 %v2904, %v1477
        %v2909 = vmul.f32 %v2907, %v1477
        %v2910 = vsub.f32 %v2896, %v2908
        %v2911 = vsub.f32 %v2897, %v2909
        %v2912 = vmul.f32 %v2910, %v2910
        %v2913 = vmul.f32 %v2911, %v2911
        %v2914 = vsel %vm1424, %v2912, 0.0
        %2915 = vadd.xlane.f32.xlu0 %v2914
        %v2916 = vpop.xlane.xlu0 %2915
        %v2917 = vsel %vm1424, %v2913, 0.0
        %2918 = vadd.xlane.f32.xlu0 %v2917
        %v2919 = vpop.xlane.xlu0 %2918
        %v2920 = vmul.f32 %v2916, %v1477
        %v2921 = vmul.f32 %v2919, %v1477
        %v2922 = vadd.f32 %v2920, 1e-05
        %v2923 = vadd.f32 %v2921, 1e-05
        %v2924 = vrsqrt.pop %v2922
        %v2925 = vmul.f32 %v2924, %v2922
        %v2926 = vmul.f32 %v2925, %v2924
        %v2927 = vmul.f32 0.5, %v2926
        %v2928 = vsub.f32 1.5, %v2927
        %v2929 = vmul.f32 %v2924, %v2928
        %vm2930 = vweird.f32 %v2922
        %vm2931 = vweird.f32 %v2924
        %vm2932 = vmor %vm2930, %vm2931
        %v2933 = vsel %vm2932, %v2924, %v2929
        %v2934 = vrsqrt.pop %v2923
        %v2935 = vmul.f32 %v2934, %v2923
        %v2936 = vmul.f32 %v2935, %v2934
        %v2937 = vmul.f32 0.5, %v2936
        %v2938 = vsub.f32 1.5, %v2937
        %v2939 = vmul.f32 %v2934, %v2938
        %vm2940 = vweird.f32 %v2923
        %vm2941 = vweird.f32 %v2934
        %vm2942 = vmor %vm2940, %vm2941
        %v2943 = vsel %vm2942, %v2934, %v2939
        %v2944 = vmul.f32 %v2910, %v2933
        %v2945 = vmul.f32 %v2911, %v2943
        %v2947 = vperm.slane %v2899, 0
        %v2949 = vmul.f32 %v2944, %v2947
        %v2950 = vmul.f32 %v2945, %v2947
        %v2952 = vperm.slane %v2901, 0
        %v2954 = vadd.f32 %v2949, %v2952
        %v2955 = vadd.f32 %v2950, %v2952
        %v2956 = vpack.c.bf16 %v2955, %v2954
        %s2957 = scalar_lea.vmem %s51, 16
        %v2958 = vld [vmem:[%s2957] sm:$0xf]
        %v2959 = vld [vmem:[%s2957 + $0x4] sm:$0xf]
        %v2960 = vld [vmem:[%s2957 + $0x8] sm:$0xf]
        %v2961 = vld [vmem:[%s2957 + $0xc] sm:$0xf]
        %s2962 = scalar_lea.vmem [#allocation12], 1
        %v2963 = vld [vmem:[%s2962] sm:$0x1]
        %v2965 = vperm.slane %v2963, 0
        %v2971 = vunpack.c.l.b16 %v2958
        %v2972 = vunpack.c.l.b16 %v2959
        %v2973 = vunpack.c.l.b16 %v2960
        %v2974 = vunpack.c.l.b16 %v2961
        %v2975 = vpack.c.b16 %v2972, %v2971
        %v2976 = vpack.c.b16 %v2974, %v2973
        %v2980 = vsel %vm1424, %v2956, 0
        %2982 = vmatpush.bf16.msra.mxu0 0
        %2983 = vmatpush.bf16.msra.mxu0 0
        %2984 = vmatpush.bf16.msra.mxu0 0
        %2985 = vmatpush.bf16.msra.mxu0 0
        %2986 = vmatpush.bf16.msra.mxu0 0
        %2987 = vmatpush.bf16.msra.mxu0 0
        %2988 = vmatpush.bf16.msra.mxu0 %v2976
        %2989 = vmatpush.bf16.msra.mxu0 %v2975
        %2990 = vmatmul.bf16.gmra.mxu0 %v2980
        %v2991 = vpop.f32.mrf.mxu0
        %v2992 = vadd.f32 %v2965, %v2991
        %v2993 = vpop.f32.mrf.mxu0
        %v2994 = vadd.f32 %v2965, %v2993
        %2995 = vdwg.mxu0
        %v2996 = vmax.f32 %v2992, 0.0
        %v2997 = vmax.f32 %v2994, 0.0
        %v2998 = vpack.c.bf16 %v2997, %v2996
        %s2999 = scalar_lea.vmem %s55, 32
        %v3000 = vld [vmem:[%s2999] sm:$0xf]
        %v3001 = vld [vmem:[%s2999 + $0x4] sm:$0xf]
        %v3002 = vld [vmem:[%s2999 + $0x8] sm:$0xf]
        %v3003 = vld [vmem:[%s2999 + $0xc] sm:$0xf]
        %v3004 = vld [vmem:[%s2999 + $0x10] sm:$0xf]
        %v3005 = vld [vmem:[%s2999 + $0x14] sm:$0xf]
        %v3006 = vld [vmem:[%s2999 + $0x18] sm:$0xf]
        %v3007 = vld [vmem:[%s2999 + $0x1c] sm:$0xf]
        %v3016 = vunpack.c.l.b16 %v3000
        %v3017 = vunpack.c.l.b16 %v3001
        %v3018 = vunpack.c.l.b16 %v3002
        %v3019 = vunpack.c.l.b16 %v3003
        %v3020 = vunpack.c.l.b16 %v3004
        %v3021 = vunpack.c.l.b16 %v3005
        %v3022 = vunpack.c.l.b16 %v3006
        %v3023 = vunpack.c.l.b16 %v3007
        %v3024 = vpack.c.b16 %v3017, %v3016
        %v3025 = vpack.c.b16 %v3019, %v3018
        %v3026 = vpack.c.b16 %v3021, %v3020
        %v3027 = vpack.c.b16 %v3023, %v3022
        %v3033 = vsel %vm2236, %v2998, 0
        %3035 = vmatpush.bf16.msra.mxu0 0
        %3036 = vmatpush.bf16.msra.mxu0 0
        %3037 = vmatpush.bf16.msra.mxu0 0
        %3038 = vmatpush.bf16.msra.mxu0 0
        %3039 = vmatpush.bf16.msra.mxu0 %v3027
        %3040 = vmatpush.bf16.msra.mxu0 %v3026
        %3041 = vmatpush.bf16.msra.mxu0 %v3025
        %3042 = vmatpush.bf16.msra.mxu0 %v3024
        %3043 = vmatmul.bf16.gmra.mxu0 %v3033
        %v3044 = vpop.f32.mrf.mxu0
        %v3045 = vadd.f32 0.0, %v3044
        %v3046 = vpop.f32.mrf.mxu0
        %v3047 = vadd.f32 0.0, %v3046
        %3048 = vdwg.mxu0
        %v3049 = vadd.f32 %v2896, %v3045
        %v3050 = vadd.f32 %v2897, %v3047
        %s3051 = scalar_lea.vmem [#allocation13], 1
        %v3052 = vld [vmem:[%s3051] sm:$0x1]
        %v3054 = vperm.slane %v3052, 0
        %v3056 = vadd.f32 %v3049, %v3054
        %v3057 = vadd.f32 %v3050, %v3054
        %v3058 = vld [vmem:[#allocation15] sm:$0x1]
        %v3059 = vld [vmem:[#allocation16] sm:$0x1]
        %v3060 = vsel %vm1424, %v3056, 0.0
        %3061 = vadd.xlane.f32.xlu0 %v3060
        %v3062 = vpop.xlane.xlu0 %3061
        %v3063 = vsel %vm1424, %v3057, 0.0
        %3064 = vadd.xlane.f32.xlu0 %v3063
        %v3065 = vpop.xlane.xlu0 %3064
        %v3066 = vmul.f32 %v3062, %v1477
        %v3067 = vmul.f32 %v3065, %v1477
        %v3068 = vsub.f32 %v3056, %v3066
        %v3069 = vsub.f32 %v3057, %v3067
        %v3070 = vmul.f32 %v3068, %v3068
        %v3071 = vmul.f32 %v3069, %v3069
        %v3072 = vsel %vm1424, %v3070, 0.0
        %3073 = vadd.xlane.f32.xlu0 %v3072
        %v3074 = vpop.xlane.xlu0 %3073
        %v3075 = vsel %vm1424, %v3071, 0.0
        %3076 = vadd.xlane.f32.xlu0 %v3075
        %v3077 = vpop.xlane.xlu0 %3076
        %v3078 = vmul.f32 %v3074, %v1477
        %v3079 = vmul.f32 %v3077, %v1477
        %v3080 = vadd.f32 %v3078, 1e-05
        %v3081 = vadd.f32 %v3079, 1e-05
        %v3082 = vrsqrt.pop %v3080
        %v3083 = vmul.f32 %v3082, %v3080
        %v3084 = vmul.f32 %v3083, %v3082
        %v3085 = vmul.f32 0.5, %v3084
        %v3086 = vsub.f32 1.5, %v3085
        %v3087 = vmul.f32 %v3082, %v3086
        %vm3088 = vweird.f32 %v3080
        %vm3089 = vweird.f32 %v3082
        %vm3090 = vmor %vm3088, %vm3089
        %v3091 = vsel %vm3090, %v3082, %v3087
        %v3092 = vrsqrt.pop %v3081
        %v3093 = vmul.f32 %v3092, %v3081
        %v3094 = vmul.f32 %v3093, %v3092
        %v3095 = vmul.f32 0.5, %v3094
        %v3096 = vsub.f32 1.5, %v3095
        %v3097 = vmul.f32 %v3092, %v3096
        %vm3098 = vweird.f32 %v3081
        %vm3099 = vweird.f32 %v3092
        %vm3100 = vmor %vm3098, %vm3099
        %v3101 = vsel %vm3100, %v3092, %v3097
        %v3102 = vmul.f32 %v3068, %v3091
        %v3103 = vmul.f32 %v3069, %v3101
        %v3105 = vperm.slane %v3058, 0
        %v3107 = vmul.f32 %v3102, %v3105
        %v3108 = vmul.f32 %v3103, %v3105
        %v3110 = vperm.slane %v3059, 0
        %v3112 = vadd.f32 %v3107, %v3110
        %v3113 = vadd.f32 %v3108, %v3110
        %v3114 = vpack.c.bf16 %v3113, %v3112
        %v3115 = vld [vmem:[%s63] sm:$0xf]
        %v3116 = vld [vmem:[%s63 + $0x4] sm:$0xf]
        %v3117 = vld [vmem:[%s63 + $0x8] sm:$0xf]
        %v3118 = vld [vmem:[%s63 + $0xc] sm:$0xf]
        %v3119 = vld [vmem:[#allocation18] sm:$0x1]
        %v3121 = vperm.slane %v3119, 0
        %v3127 = vunpack.c.l.b16 %v3115
        %v3128 = vunpack.c.l.b16 %v3116
        %v3129 = vunpack.c.l.b16 %v3117
        %v3130 = vunpack.c.l.b16 %v3118
        %v3131 = vpack.c.b16 %v3128, %v3127
        %v3132 = vpack.c.b16 %v3130, %v3129
        %v3136 = vsel %vm1424, %v3114, 0
        %3138 = vmatpush.bf16.msra.mxu0 0
        %3139 = vmatpush.bf16.msra.mxu0 0
        %3140 = vmatpush.bf16.msra.mxu0 0
        %3141 = vmatpush.bf16.msra.mxu0 0
        %3142 = vmatpush.bf16.msra.mxu0 0
        %3143 = vmatpush.bf16.msra.mxu0 0
        %3144 = vmatpush.bf16.msra.mxu0 %v3132
        %3145 = vmatpush.bf16.msra.mxu0 %v3131
        %3146 = vmatmul.bf16.gmra.mxu0 %v3136
        %v3147 = vpop.f32.mrf.mxu0
        %v3148 = vadd.f32 %v3121, %v3147
        %v3149 = vpop.f32.mrf.mxu0
        %v3150 = vadd.f32 %v3121, %v3149
        %3151 = vdwg.mxu0
        %v3152 = vpack.c.bf16 %v3148, %v3148
        %v3153 = vpack.c.bf16 %v3150, %v3150
        %v3156 = vunpack.c.l.b16 %v3152
        %v3157 = vunpack.c.l.b16 %v3153
        %v3158 = vpack.c.b16 %v3157, %v3156
        %v3160 = vshrl.u32 %v3158, 16
        %v3162 = vrot.slane %v3160, 7
        %v3163 = vshll.u32 %v3158, 16
        %v3165 = vor.u32 %v3162, %v3163
        %vm3167 = vcmask 1040384
        %vm3168 = vsmask.f32 256
        %vm3169 = vmand %vm3167, %vm3168
        %v3170 = vsel %vm3169, 0, %v3165
        %v3171 = vrot.slane %v3163, 1
        %v3172 = vor.u32 %v3160, %v3171
        %vm3174 = vcmask 1047552
        %vm3175 = vsmask.f32 7424
        %vm3176 = vmand %vm3174, %vm3175
        %v3177 = vsel %vm3176, %v3172, 0
        %3178 = vrot.lane.b32.xlu0 %v3158, 8
        %v3179 = vpop.permute.xlu0 %3178
        %3181 = vrot.lane.b32.xlu0 %v3177, 16
        %v3182 = vpop.permute.xlu0 %3181
        %v3185 = vsel %vm1379, %v3170, %v3179
        %v3187 = vsel %vm1568, %v3185, %v3182
        %v3188 = vld [vmem:[%s67] sm:$0xf]
        %v3189 = vld [vmem:[%s67 + $0x4] sm:$0xf]
        %v3190 = vld [vmem:[%s67 + $0x8] sm:$0xf]
        %v3191 = vld [vmem:[#allocation19] sm:$0x1]
        %v3193 = vperm.slane %v3191, 0
        %v3198 = vunpack.c.l.b16 %v3188
        %v3199 = vunpack.c.l.b16 %v3189
        %v3200 = vunpack.c.l.b16 %v3190
        %v3201 = vpack.c.b16 %v3199, %v3198
        %v3202 = vpack.c.b16 %v3200, %v3200
        %vm3204 = vcmask 195584
        %v3205 = vsel %vm3204, %v3187, 0
        %v3208 = vsel %vm1383, %v3202, 0
        %3210 = vmatpush.bf16.msra.mxu0 0
        %3211 = vmatpush.bf16.msra.mxu0 0
        %3212 = vmatpush.bf16.msra.mxu0 0
        %3213 = vmatpush.bf16.msra.mxu0 0
        %3214 = vmatpush.bf16.msra.mxu0 0
        %3215 = vmatpush.bf16.msra.mxu0 0
        %3216 = vmatpush.bf16.msra.mxu0 %v3208
        %3217 = vmatpush.bf16.msra.mxu0 %v3201
        %3218 = vmatmul.bf16.gmra.mxu0 %v3205
        %v3219 = vpop.f32.mrf.mxu0
        %v3220 = vadd.f32 %v3193, %v3219
        %v3221 = vpop.f32.mrf.mxu0
        %v3222 = vadd.f32 %v3193, %v3221
        %3223 = vdwg.mxu0
        %v3224 = vtanh.pop %v3220
        %v3225 = vtanh.pop %v3222
        %v3226 = vsel %vm1617, 0.0, %v3224
        %v3227 = vsel %vm1618, 0.0, %v3225
        %v3228 = vpack.c.bf16 %v3226, %v3226
        %v3229 = vpack.c.bf16 %v3227, %v3227
        %v3232 = vunpack.c.l.b16 %v3228
        %v3233 = vunpack.c.l.b16 %v3229
        %v3234 = vpack.c.b16 %v3233, %v3232
        %v3236 = vshrl.u32 %v3234, 16
        %v3238 = vrot.slane %v3236, 7
        %v3239 = vshll.u32 %v3234, 16
        %v3241 = vor.u32 %v3238, %v3239
        %v3243 = vsel %vm3169, 0, %v3241
        %v3244 = vrot.slane %v3239, 1
        %v3245 = vor.u32 %v3236, %v3244
        %v3247 = vsel %vm3176, %v3245, 0
        %3248 = vrot.lane.b32.xlu0 %v3234, 32
        %v3249 = vpop.permute.xlu0 %3248
        %3251 = vrot.lane.b32.xlu0 %v3247, 64
        %v3252 = vpop.permute.xlu0 %3251
        %v3255 = vsel %vm1424, %v3243, %v3249
        %v3257 = vsel %vm2236, %v3255, %v3252
        %v3258 = vld [vmem:[%s71] sm:$0xf]
        %v3259 = vld [vmem:[%s71 + $0x4] sm:$0xf]
        %v3260 = vld [vmem:[%s71 + $0x8] sm:$0xf]
        %v3261 = vld [vmem:[%s71 + $0xc] sm:$0xf]
        %v3262 = vld [vmem:[%s71 + $0x10] sm:$0xf]
        %v3263 = vld [vmem:[%s71 + $0x14] sm:$0xf]
        %v3264 = vld [vmem:[%s71 + $0x18] sm:$0xf]
        %v3265 = vld [vmem:[%s71 + $0x1c] sm:$0xf]
        %v3266 = vld [vmem:[%s71 + $0x20] sm:$0xf]
        %v3267 = vld [vmem:[%s71 + $0x24] sm:$0xf]
        %v3268 = vld [vmem:[%s71 + $0x28] sm:$0xf]
        %v3269 = vld [vmem:[%s71 + $0x2c] sm:$0xf]
        %v3270 = vld [vmem:[#allocation21] sm:$0x1]
        %v3272 = vperm.slane %v3270, 0
        %v3286 = vunpack.c.l.b16 %v3258
        %v3287 = vunpack.c.l.b16 %v3259
        %v3288 = vunpack.c.l.b16 %v3260
        %v3289 = vunpack.c.l.b16 %v3261
        %v3290 = vunpack.c.l.b16 %v3262
        %v3291 = vunpack.c.l.b16 %v3263
        %v3292 = vunpack.c.l.b16 %v3264
        %v3293 = vunpack.c.l.b16 %v3265
        %v3294 = vunpack.c.l.b16 %v3266
        %v3295 = vunpack.c.l.b16 %v3267
        %v3296 = vunpack.c.l.b16 %v3268
        %v3297 = vunpack.c.l.b16 %v3269
        %v3298 = vpack.c.b16 %v3287, %v3286
        %v3299 = vpack.c.b16 %v3289, %v3288
        %v3300 = vpack.c.b16 %v3291, %v3290
        %v3301 = vpack.c.b16 %v3293, %v3292
        %v3302 = vpack.c.b16 %v3295, %v3294
        %v3303 = vpack.c.b16 %v3297, %v3296
        %vm3310 = vcmask 785408
        %v3311 = vsel %vm3310, %v3257, 0
        %3313 = vmatpush.bf16.msra.mxu0 0
        %3314 = vmatpush.bf16.msra.mxu0 0
        %3315 = vmatpush.bf16.msra.mxu0 %v3303
        %3316 = vmatpush.bf16.msra.mxu0 %v3302
        %3317 = vmatpush.bf16.msra.mxu0 %v3301
        %3318 = vmatpush.bf16.msra.mxu0 %v3300
        %3319 = vmatpush.bf16.msra.mxu0 %v3299
        %3320 = vmatpush.bf16.msra.mxu0 %v3298
        %3321 = vmatmul.bf16.gmra.mxu0 %v3311
        %v3322 = vpop.f32.mrf.mxu0
        %v3323 = vadd.f32 %v3272, %v3322
        %v3324 = vpop.f32.mrf.mxu0
        %v3325 = vadd.f32 %v3272, %v3324
        %3326 = vdwg.mxu0
        %v3327 = vsel %vm1617, 0.0, %v3323
        %v3328 = vsel %vm1618, 0.0, %v3325
        %v3329 = vadd.f32 %v3148, %v3327
        %v3330 = vadd.f32 %v3150, %v3328
        %v3331 = vsel %vm1617, 0.0, %v3148
        %v3332 = vsel %vm1618, 0.0, %v3150
        %v3333 = vsel %vm1617, 0.0, %v3329
        %v3334 = vsel %vm1618, 0.0, %v3330
        %v3335 = vsel %vm1461, 1000.0, %v3148
        %v3336 = vsel %vm1462, 1000.0, %v3150
        %3337 = vst.msk [vmem:[%s1346] sm:$0xff] %vm1379, %v3331
        %3338 = vst.msk [vmem:[%s1346 + $0x8] sm:$0xff] %vm1379, %v3332
        %3339 = vst.msk [vmem:[%s1351] sm:$0xff] %vm1379, %v3333
        %3340 = vst.msk [vmem:[%s1351 + $0x8] sm:$0xff] %vm1379, %v3334
        %3343 = vrot.lane.b32.xlu0 %v3335, 120
        %v3344 = vpop.permute.xlu0 %3343
        %3345 = vrot.lane.b32.xlu0 %v3336, 120
        %v3346 = vpop.permute.xlu0 %3345
        %vm3349 = vcmask 7168
        %3350 = vst.msk [vmem:[%s1356] sm:$0xff] %vm3349, %v3344
        %3351 = vst.msk [vmem:[%s1356 + $0x8] sm:$0xff] %vm3349, %v3346
        %p3352 = scmp.lt.s32.totalorder %s110, 1
        %s3353 = scalar_select %p3352, %s110, 1
        %s3354 = smul.addr %s3353, 2
        %s3355 = smul.addr %s3354, 8
        %s3356 = scalar_lea.vmem %s75, %s3355
        %p3357 = scmp.lt.s32.totalorder %s110, 1
        %s3358 = scalar_select %p3357, %s110, 1
        %s3359 = smul.addr %s3358, 2
        %s3360 = smul.addr %s3359, 8
        %s3361 = scalar_lea.vmem %s77, %s3360
        %p3362 = scmp.lt.s32.totalorder %s110, 1
        %s3363 = scalar_select %p3362, %s110, 1
        %s3364 = smul.addr %s3363, 2
        %s3365 = smul.addr %s3364, 8
        %s3366 = scalar_lea.vmem %s79, %s3365
        // Predicated region
        $region205: #{_lambda_.3} parent=159 // pred_check
          %p3367 = pneg %p873
        $region206: #{_lambda_.3} parent=159 // pred_check_branch
          %3369 = sbr.rel (%p3367) target = $region208
        $region207: #{_lambda_.3} parent=159 // pred_region
          _
        $region208: #{_lambda_.3} parent=159 // pred_fallthru
          _
        // Predicated region
        $region209: #{_lambda_.3} parent=159 // pred_check
          %p3370 = pneg %p899
        $region210: #{_lambda_.3} parent=159 // pred_check_branch
          %3372 = sbr.rel (%p3370) target = $region212
        $region211: #{_lambda_.3} parent=159 // pred_region
          _
        $region212: #{_lambda_.3} parent=159 // pred_fallthru
          _
        // Predicated region
        $region213: #{_lambda_.3} parent=159 // pred_check
          %p3373 = pneg %p925
        $region214: #{_lambda_.3} parent=159 // pred_check_branch
          %3375 = sbr.rel (%p3373) target = $region216
        $region215: #{_lambda_.3} parent=159 // pred_region
          _
        $region216: #{_lambda_.3} parent=159 // pred_fallthru
          _
      $region160: #{_lambda_.3} parent=5 // pred_fallthru
        _
      %p3376 = scmp.le.s32.totalorder 2, %s105
      // Predicated region
      $region217: #{_lambda_.3} parent=5 // pred_check
        %p3377 = pneg %p3376
      $region218: #{_lambda_.3} parent=5 // pred_check_branch
        %3379 = sbr.rel (%p3377) target = $region220
      $region219: #{_lambda_.3} parent=5 // pred_region
        %s3380 = ssub.s32 %s105, 2
        // Predicated region
        $region221: #{_lambda_.3} parent=219 // pred_check
          %p3381 = pneg %p879
        $region222: #{_lambda_.3} parent=219 // pred_check_branch
          %3383 = sbr.rel (%p3381) target = $region224
        $region223: #{_lambda_.3} parent=219 // pred_region
          %p3384 = scmp.lt.s32.totalorder %s111, 1
          %s3385 = scalar_select %p3384, %s111, 1
          %s3386 = smul.addr %s3385, 2
          %s3387 = smul.addr %s3386, 8
          %s3388 = scalar_lea.vmem %s75, %s3387
        $region224: #{_lambda_.3} parent=219 // pred_fallthru
          _
        // Predicated region
        $region225: #{_lambda_.3} parent=219 // pred_check
          %p3389 = pneg %p905
        $region226: #{_lambda_.3} parent=219 // pred_check_branch
          %3391 = sbr.rel (%p3389) target = $region228
        $region227: #{_lambda_.3} parent=219 // pred_region
          %p3392 = scmp.lt.s32.totalorder %s111, 1
          %s3393 = scalar_select %p3392, %s111, 1
          %s3394 = smul.addr %s3393, 2
          %s3395 = smul.addr %s3394, 8
          %s3396 = scalar_lea.vmem %s77, %s3395
        $region228: #{_lambda_.3} parent=219 // pred_fallthru
          _
        // Predicated region
        $region229: #{_lambda_.3} parent=219 // pred_check
          %p3397 = pneg %p931
        $region230: #{_lambda_.3} parent=219 // pred_check_branch
          %3399 = sbr.rel (%p3397) target = $region232
        $region231: #{_lambda_.3} parent=219 // pred_region
          %p3400 = scmp.lt.s32.totalorder %s111, 1
          %s3401 = scalar_select %p3400, %s111, 1
          %s3402 = smul.addr %s3401, 2
          %s3403 = smul.addr %s3402, 8
          %s3404 = scalar_lea.vmem %s79, %s3403
        $region232: #{_lambda_.3} parent=219 // pred_fallthru
          _
      $region220: #{_lambda_.3} parent=5 // pred_fallthru
        _
    $region6: #{_lambda_.3} parent=1 // loop_footer
      %s109 = sadd.s32 1, %s105
    $region7: #{_lambda_.3} parent=1 // loop_footer_branch
      %104 = sbr.rel target = $region3
    $region8: #{_lambda_.3} parent=1 // loop_exit
      _
    %3405 = vsyncpa [#allocation6], 1
    %s3406 = scalar_lea.sflag [#allocation6], 1
    %3407 = vsyncpa %s3406, 1
    %3408 = vsyncpa [#allocation8], 1
    %3409 = vsyncpa [#allocation11], 1
    %3410 = vsyncpa [#allocation14], 1
    %3411 = vsyncpa [#allocation17], 1
    %3412 = vsyncpa [#allocation20], 1

</llo_original>
